<compile_context>
chip_gen: v7x
topology: tpu7x:2x2x1
jax: 0.10.0
libtpu: 0.0.40
codegen_flags: <defaults>
</compile_context>

<pallas_src>
import functools

import jax
import jax.numpy as jnp
import numpy as np
from jax.experimental import pallas as pl
from jax.experimental.pallas import tpu as pltpu

# ----------------------------- game / net config -----------------------------
ENC_CH = 3                      # encoding channels (board planes)
ROWS = 6                        # board rows
COLS = 7                        # board columns
NUM_HIDDEN = 32                 # trunk channels
NUM_RES_BLOCKS = 2
ACTION_SIZE = 7                 # one move per column
VALUE_OUTPUT_HEADS = 1
BN_EPS = 1e-5

HPAD = ROWS + 2                                   # zero-padded board rows       -> 8
COLS_PAD = COLS + 1                               # board cols + 1 dummy col     -> 8
LANES = COLS_PAD * NUM_HIDDEN                     # trunk lanes (col, channel)   -> 256
HEAD_LANES = 2 * LANES                            # fused policy+value head conv -> 512
LANES_IN = COLS * ENC_CH                          # raw-input lanes              -> 21
LANES_IN_PAD = 32                                 # raw-input lanes, padded
HEAD_WIDTH = ACTION_SIZE + VALUE_OUTPUT_HEADS     # fused policy+value FC width  -> 8
NUM_TRUNK_CONVS = 2 * NUM_RES_BLOCKS              # res-block convs (start is separate)
ROW_OFF = 16                                      # slab data offset (bf16 tile aligned)
ROW_PAD = 32                                      # extra slab rows (16 head + 16 tail)
ACT_DTYPE = jnp.bfloat16

assert HEAD_WIDTH == 8
assert LANES_IN_PAD >= LANES_IN


# --------------------------------- kernel ------------------------------------
def _fused_net_kernel(x_ref, w0_ref, wc_ref, bias_ref, whc_ref, bhc_ref,
                      whead_ref, bhead_ref, out_ref,
                      buf_a, buf_b, head_buf, *, tn):
    """One grid step = `tn` board positions; the whole network runs out of VMEM."""
    f32 = jnp.float32
    m = tn * HPAD  # rows of the activation slab handled by this grid step

    # Row-interior mask: slab row i holds (sample i//8, padded board row i%8).
    # Padded rows 0 and 7 must be stored as exact zeros (they are the vertical zero
    # padding read back by the next conv).  jnp.where (select, not multiply) so that
    # never-initialised scratch edge rows cannot leak NaN/Inf through the mask.
    q = jax.lax.broadcasted_iota(jnp.int32, (m, 1), 0) % HPAD
    keep = jnp.logical_and(q != 0, q != HPAD - 1)

    def band_conv(src_ref, w_ref, widx=None):
        """3x3 conv as 3 row-shifted K-lane -> N-lane MXU matmuls over the padded slab."""
        acc = None
        for dy in range(3):
            wmat = w_ref[dy] if widx is None else w_ref[widx, dy]
            lhs = src_ref[pl.ds(ROW_OFF - 1 + dy, m), :]
            part = jnp.dot(lhs, wmat, preferred_element_type=f32)
            acc = part if acc is None else acc + part
        return acc

    def trunk_layer(src_ref, dst_ref, w_ref, widx, bidx, res=None):
        """conv (BN scale pre-folded into weights) + bias [+ residual] + ReLU + store."""
        acc = band_conv(src_ref, w_ref, widx) + bias_ref[bidx]
        if res is not None:
            acc = acc + res
        y = jnp.where(keep, jnp.maximum(acc, 0.0), 0.0)
        dst_ref[pl.ds(ROW_OFF, m), :] = y.astype(ACT_DTYPE)
        return y

    # ---- startBlock: Conv + BN + ReLU ----
    y = trunk_layer(x_ref, buf_a, w0_ref, None, 0)

    # ---- backBone: residual blocks (residual carried in f32 registers) ----
    for b in range(NUM_RES_BLOCKS):
        res = y
        trunk_layer(buf_a, buf_b, wc_ref, 2 * b, 1 + 2 * b)
        y = trunk_layer(buf_b, buf_a, wc_ref, 2 * b + 1, 2 + 2 * b, res=res)

    # ---- fused policy+value head conv (policy -> lanes 0:256, value -> 256:512) ----
    acc = band_conv(buf_a, whc_ref) + bhc_ref[...]
    head_buf[...] = jnp.maximum(acc, 0.0).reshape(tn, HPAD, HEAD_LANES)

    # ---- fused policy+value FC (NCHW flatten folded into per-row weights) ----
    fc = None
    for h in range(ROWS):
        part = jnp.dot(head_buf[:, 1 + h, :], whead_ref[h],
                       preferred_element_type=f32)
        fc = part if fc is None else fc + part
    fc = fc + bhead_ref[...]
    col = jax.lax.broadcasted_iota(jnp.int32, (tn, HEAD_WIDTH), 1)
    out_ref[...] = jnp.where(col == ACTION_SIZE, jnp.tanh(fc), fc)


# ------------------------------- wrapper --------------------------------------
def _round_up(a, b):
    return (a + b - 1) // b * b


def _pick_tile(n, tile_n):
    """Multiple of 8, >= 8, capped so large batches give >= 2 grid steps (v7x megacore)."""
    half = _round_up(max(1, (n + 1) // 2), 8)
    return max(8, min(int(tile_n) // 8 * 8, half))


def _prep_input(x_nchw, n_padded, tn):
    """NCHW f32 -> (num_tiles, tn*8 + 32, 32) bf16 padded row slabs."""
    n = x_nchw.shape[0]
    x = jnp.transpose(x_nchw, (0, 2, 3, 1)).reshape(n, ROWS, LANES_IN)
    x = jnp.pad(x, ((0, n_padded - n), (1, 1), (0, LANES_IN_PAD - LANES_IN)))
    x = x.reshape(n_padded // tn, tn * HPAD, LANES_IN_PAD)
    x = jnp.pad(x, ((0, 0), (ROW_OFF, ROW_PAD - ROW_OFF), (0, 0)))
    return x.astype(ACT_DTYPE)


def network_forward(prep, x_nchw, *, tile_n=128):
    """x_nchw: (N, ENC_CH, ROWS, COLS) f32 -> (policy_logits (N,7), value (N,1)) f32."""
    n = x_nchw.shape[0]
    tn = _pick_tile(n, tile_n)
    n_padded = _round_up(n, tn)
    num_tiles = n_padded // tn
    slab_rows = tn * HPAD + ROW_PAD

    x = _prep_input(x_nchw, n_padded, tn)
    kernel = functools.partial(_fused_net_kernel, tn=tn)

    grid_spec = pltpu.PrefetchScalarGridSpec(
        num_scalar_prefetch=0,
        grid=(num_tiles,),
        in_specs=[
            pl.BlockSpec((None, slab_rows, LANES_IN_PAD), lambda i: (i, 0, 0)),
            pl.BlockSpec((3, LANES_IN_PAD, LANES), lambda i: (0, 0, 0)),
            pl.BlockSpec((NUM_TRUNK_CONVS, 3, LANES, LANES), lambda i: (0, 0, 0, 0)),
            pl.BlockSpec((NUM_TRUNK_CONVS + 1, 1, LANES), lambda i: (0, 0, 0)),
            pl.BlockSpec((3, LANES, HEAD_LANES), lambda i: (0, 0, 0)),
            pl.BlockSpec((1, HEAD_LANES), lambda i: (0, 0)),
            pl.BlockSpec((ROWS, HEAD_LANES, HEAD_WIDTH), lambda i: (0, 0, 0)),
            pl.BlockSpec((1, HEAD_WIDTH), lambda i: (0, 0)),
        ],
        out_specs=pl.BlockSpec((tn, HEAD_WIDTH), lambda i: (i, 0)),
        scratch_shapes=[
            pltpu.VMEM((slab_rows, LANES), ACT_DTYPE),       # trunk ping
            pltpu.VMEM((slab_rows, LANES), ACT_DTYPE),       # trunk pong
            pltpu.VMEM((tn, HPAD, HEAD_LANES), jnp.float32),  # fused head conv output
        ],
    )

    out = pl.pallas_call(
        kernel,
        out_shape=jax.ShapeDtypeStruct((n_padded, HEAD_WIDTH), jnp.float32),
        grid_spec=grid_spec,
        compiler_params=pltpu.CompilerParams(
            dimension_semantics=("parallel",),
            vmem_limit_bytes=64 * 1024 * 1024),
    )(x, prep["w0"], prep["wc"], prep["bias"], prep["whc"], prep["bhc"],
      prep["whead"], prep["bhead"])
    return out[:n, :ACTION_SIZE], out[:n, ACTION_SIZE:HEAD_WIDTH]


# --------------------------- parameter construction ---------------------------
def _conv_bn_init(key, cin, cout):
    kw, kb, kg, kbt, km, kv = jax.random.split(key, 6)
    return dict(
        w=0.1 * jax.random.normal(kw, (3, 3, cin, cout), jnp.float32),  # HWIO
        b=0.05 * jax.random.normal(kb, (cout,), jnp.float32),
        gamma=1.0 + 0.05 * jax.random.normal(kg, (cout,), jnp.float32),
        beta=0.05 * jax.random.normal(kbt, (cout,), jnp.float32),
        mean=0.05 * jax.random.normal(km, (cout,), jnp.float32),
        var=1.0 + 0.05 * jnp.abs(jax.random.normal(kv, (cout,), jnp.float32)),
    )


def _linear_init(key, fin, fout):
    kw, kb = jax.random.split(key)
    return dict(w=0.05 * jax.random.normal(kw, (fin, fout), jnp.float32),
                b=0.05 * jax.random.normal(kb, (fout,), jnp.float32))


def init_params(key):
    keys = jax.random.split(key, 5 + 2 * NUM_RES_BLOCKS)
    i = 0
    params = {"start": _conv_bn_init(keys[i], ENC_CH, NUM_HIDDEN)}; i += 1
    blocks = []
    for _ in range(NUM_RES_BLOCKS):
        c1 = _conv_bn_init(keys[i], NUM_HIDDEN, NUM_HIDDEN); i += 1
        c2 = _conv_bn_init(keys[i], NUM_HIDDEN, NUM_HIDDEN); i += 1
        blocks.append({"conv1": c1, "conv2": c2})
    params["blocks"] = blocks
    params["policy_conv"] = _conv_bn_init(keys[i], NUM_HIDDEN, NUM_HIDDEN); i += 1
    params["policy_fc"] = _linear_init(keys[i], NUM_HIDDEN * ROWS * COLS, ACTION_SIZE); i += 1
    params["value_conv"] = _conv_bn_init(keys[i], NUM_HIDDEN, NUM_HIDDEN); i += 1
    params["value_fc"] = _linear_init(keys[i], NUM_HIDDEN * ROWS * COLS, VALUE_OUTPUT_HEADS); i += 1
    return params


def _fold_bn(cp):
    """Eval-mode BN (+ conv bias) -> per-output-channel (scale, bias)."""
    s = np.asarray(cp["gamma"], np.float32) / np.sqrt(np.asarray(cp["var"], np.float32) + BN_EPS)
    b = (np.asarray(cp["beta"], np.float32)
         + (np.asarray(cp["b"], np.float32) - np.asarray(cp["mean"], np.float32)) * s)
    return s, b


def _band_weight(w, scale, in_stride, k_lanes):
    """(3,3,cin,32) HWIO kernel (BN scale folded into cout) -> (3, k_lanes, 256) band weights.

    Input lane  = input_col * in_stride + cin_channel   (dummy/unused lanes stay zero).
    Output lane = output_col * 32 + cout_channel        (dummy column lanes 224..255 zero)."""
    w = np.asarray(w, np.float32) * np.asarray(scale, np.float32)[None, None, None, :]
    cin = w.shape[2]
    out = np.zeros((3, k_lanes, LANES), np.float32)
    for dy in range(3):
        for wo in range(COLS):
            for dx in range(3):
                wi = wo + dx - 1
                if 0 <= wi < COLS:
                    out[dy, wi * in_stride:wi * in_stride + cin,
                        wo * NUM_HIDDEN:(wo + 1) * NUM_HIDDEN] = w[dy, dx]
    return out


def _lane_bias(b):
    """Per-channel bias -> per (col, channel) output lane, dummy-column lanes zero."""
    return np.concatenate([np.tile(np.asarray(b, np.float32), COLS),
                           np.zeros(NUM_HIDDEN, np.float32)])


def _head_fc_weight(wfc, heads):
    """(32*6*7, k) FC weight in PyTorch NCHW-flatten row order -> (6, 256, k) per-row weights."""
    wfc = np.asarray(wfc, np.float32)
    t = wfc.reshape(NUM_HIDDEN, ROWS, COLS, heads).transpose(1, 2, 0, 3)
    t = t.reshape(ROWS, COLS * NUM_HIDDEN, heads)
    out = np.zeros((ROWS, LANES, heads), np.float32)
    out[:, :COLS * NUM_HIDDEN, :] = t
    return out


def prepare_params(params):
    """Fold BN into conv weights, build band conv weights, fuse the two heads."""
    assert ACTION_SIZE + VALUE_OUTPUT_HEADS == HEAD_WIDTH  # fused head layout

    s0, b0 = _fold_bn(params["start"])
    w0 = _band_weight(params["start"]["w"], s0, ENC_CH, LANES_IN_PAD)

    trunk_w, trunk_b = [], [_lane_bias(b0)]
    for blk in params["blocks"]:
        for name in ("conv1", "conv2"):
            s, b = _fold_bn(blk[name])
            trunk_w.append(_band_weight(blk[name]["w"], s, NUM_HIDDEN, LANES))
            trunk_b.append(_lane_bias(b))

    sp, bp = _fold_bn(params["policy_conv"])
    sv, bv = _fold_bn(params["value_conv"])
    whc = np.concatenate(
        [_band_weight(params["policy_conv"]["w"], sp, NUM_HIDDEN, LANES),
         _band_weight(params["value_conv"]["w"], sv, NUM_HIDDEN, LANES)], axis=2)
    bhc = np.concatenate([_lane_bias(bp), _lane_bias(bv)])[None, :]

    whead = np.zeros((ROWS, HEAD_LANES, HEAD_WIDTH), np.float32)
    whead[:, :LANES, :ACTION_SIZE] = _head_fc_weight(params["policy_fc"]["w"], ACTION_SIZE)
    whead[:, LANES:, ACTION_SIZE:] = _head_fc_weight(params["value_fc"]["w"], VALUE_OUTPUT_HEADS)
    bhead = np.concatenate([np.asarray(params["policy_fc"]["b"], np.float32),
                            np.asarray(params["value_fc"]["b"], np.float32)])[None, :]

    return {
        "w0": jnp.asarray(w0, ACT_DTYPE),
        "wc": jnp.asarray(np.stack(trunk_w), ACT_DTYPE),
        "bias": jnp.asarray(np.stack(trunk_b)[:, None, :], jnp.float32),
        "whc": jnp.asarray(whc, ACT_DTYPE),
        "bhc": jnp.asarray(bhc, jnp.float32),
        "whead": jnp.asarray(whead, jnp.float32),
        "bhead": jnp.asarray(bhead, jnp.float32),
    }


# ------------------------------ pure-JAX reference ----------------------------
def _reference_forward(params, x_nchw):
    """f32 reference with the same semantics as the PyTorch module (eval-mode BN)."""
    def conv_bn(x, cp, relu=True):
        y = jax.lax.conv_general_dilated(
            x, cp["w"], window_strides=(1, 1), padding="SAME",
            dimension_numbers=("NHWC", "HWIO", "NHWC")) + cp["b"]
        y = (y - cp["mean"]) * (cp["gamma"] / jnp.sqrt(cp["var"] + BN_EPS)) + cp["beta"]
        return jnp.maximum(y, 0.0) if relu else y

    x = jnp.transpose(x_nchw, (0, 2, 3, 1))
    x = conv_bn(x, params["start"])
    for blk in params["blocks"]:
        h = conv_bn(x, blk["conv1"])
        x = jnp.maximum(conv_bn(h, blk["conv2"], relu=False) + x, 0.0)

    def head(conv_p, fc_p):
        p = conv_bn(x, conv_p)
        flat = jnp.transpose(p, (0, 3, 1, 2)).reshape(p.shape[0], -1)  # PyTorch NCHW flatten
        return flat @ fc_p["w"] + fc_p["b"]

    policy = head(params["policy_conv"], params["policy_fc"])
    value = jnp.tanh(head(params["value_conv"], params["value_fc"]))
    return policy, value


# ----------------------------------- main --------------------------------------
if __name__ == "__main__":
    key = jax.random.PRNGKey(0)
    pkey, xkey, xkey2 = jax.random.split(key, 3)
    params = init_params(pkey)
    prep = prepare_params(params)

    fwd = jax.jit(network_forward)

    # small batch (single grid step)
    batch = 2
    x = jax.random.normal(xkey, (batch, ENC_CH, ROWS, COLS), jnp.float32)
    policy, value = fwd(prep, x)
    jax.block_until_ready((policy, value))
    assert policy.shape == (batch, ACTION_SIZE)
    assert value.shape == (batch, VALUE_OUTPUT_HEADS)

    ref_policy, ref_value = _reference_forward(params, x)
    np.testing.assert_allclose(np.asarray(policy), np.asarray(ref_policy),
                               atol=0.35, rtol=0.1)
    np.testing.assert_allclose(np.asarray(value), np.asarray(ref_value),
                               atol=0.35, rtol=0.1)

    # larger batch (multi-tile grid, batch padding, "parallel" axis)
    batch2 = 24
    x2 = jax.random.normal(xkey2, (batch2, ENC_CH, ROWS, COLS), jnp.float32)
    policy2, value2 = fwd(prep, x2)
    jax.block_until_ready((policy2, value2))
    ref_policy2, ref_value2 = _reference_forward(params, x2)
    np.testing.assert_allclose(np.asarray(policy2), np.asarray(ref_policy2),
                               atol=0.35, rtol=0.1)
    np.testing.assert_allclose(np.asarray(value2), np.asarray(ref_value2),
                               atol=0.35, rtol=0.1)

    print("KERNEL_OK")
</pallas_src>

<mosaic_0001>
module attributes {stable_mosaic.version = 11 : i64} {
  func.func @_fused_net_kernel(%arg0: i32, %arg1: memref<1x96x32xbf16, #tpu.memory_space<vmem>>, %arg2: memref<3x32x256xbf16, #tpu.memory_space<vmem>>, %arg3: memref<4x3x256x256xbf16, #tpu.memory_space<vmem>>, %arg4: memref<5x1x256xf32, #tpu.memory_space<vmem>>, %arg5: memref<3x256x512xbf16, #tpu.memory_space<vmem>>, %arg6: memref<1x512xf32, #tpu.memory_space<vmem>>, %arg7: memref<6x512x8xf32, #tpu.memory_space<vmem>>, %arg8: memref<1x8xf32, #tpu.memory_space<vmem>>, %arg9: memref<8x8xf32, #tpu.memory_space<vmem>>, %arg10: memref<96x256xbf16, #tpu.memory_space<vmem>>, %arg11: memref<96x256xbf16, #tpu.memory_space<vmem>>, %arg12: memref<8x8x512xf32, #tpu.memory_space<vmem>>) attributes {dimension_semantics = [#tpu.dimension_semantics<parallel>], iteration_bounds = array<i64: 1>, scalar_prefetch = 0 : i64, scratch_operands = 3 : i64, tpu.core_type = #tpu.core_type<tc>, window_params = [{transform_indices = @transform_0, window_bounds = array<i64: 1, 96, 32>}, {pipeline_mode = #tpu.pipeline_mode<synchronous>, transform_indices = @transform_1, window_bounds = array<i64: 3, 32, 256>}, {pipeline_mode = #tpu.pipeline_mode<synchronous>, transform_indices = @transform_2, window_bounds = array<i64: 4, 3, 256, 256>}, {pipeline_mode = #tpu.pipeline_mode<synchronous>, transform_indices = @transform_3, window_bounds = array<i64: 5, 1, 256>}, {pipeline_mode = #tpu.pipeline_mode<synchronous>, transform_indices = @transform_4, window_bounds = array<i64: 3, 256, 512>}, {pipeline_mode = #tpu.pipeline_mode<synchronous>, transform_indices = @transform_5, window_bounds = array<i64: 1, 512>}, {pipeline_mode = #tpu.pipeline_mode<synchronous>, transform_indices = @transform_6, window_bounds = array<i64: 6, 512, 8>}, {pipeline_mode = #tpu.pipeline_mode<synchronous>, transform_indices = @transform_7, window_bounds = array<i64: 1, 8>}, {transform_indices = @transform_8, window_bounds = array<i64: 8, 8>}]} {
    %0 = tpu.iota {dimensions = array<i32: 0>} : vector<64x1xi32>
    %c8_i32 = arith.constant 8 : i32
    %c0_i32 = arith.constant 0 : i32
    %1 = arith.cmpi eq, %c8_i32, %c0_i32 : i32
    %c1_i32 = arith.constant 1 : i32
    %2 = arith.select %1, %c1_i32, %c8_i32 : i32
    %3 = vector.broadcast %2 : i32 to vector<64x1xi32>
    %4 = arith.remsi %0, %3 : vector<64x1xi32>
    %c0_i32_0 = arith.constant 0 : i32
    %5 = vector.broadcast %c0_i32_0 : i32 to vector<64x1xi32>
    %6 = arith.cmpi ne, %4, %5 : vector<64x1xi32>
    %c0_i32_1 = arith.constant 0 : i32
    %7 = vector.broadcast %c0_i32_1 : i32 to vector<64x1xi32>
    %8 = arith.cmpi slt, %4, %7 : vector<64x1xi32>
    %c0_i32_2 = arith.constant 0 : i32
    %9 = arith.cmpi slt, %2, %c0_i32_2 : i32
    %10 = vector.broadcast %9 : i1 to vector<64x1xi1>
    %11 = vector.broadcast %10 : vector<64x1xi1> to vector<64x1xi1>
    %12 = arith.xori %8, %11 : vector<64x1xi1>
    %13 = arith.andi %12, %6 : vector<64x1xi1>
    %14 = vector.broadcast %2 : i32 to vector<64x1xi32>
    %15 = arith.addi %4, %14 : vector<64x1xi32>
    %16 = arith.select %13, %15, %4 : vector<64x1xi1>, vector<64x1xi32>
    %c0_i32_3 = arith.constant 0 : i32
    %17 = vector.broadcast %c0_i32_3 : i32 to vector<64x1xi32>
    %18 = arith.cmpi ne, %16, %17 : vector<64x1xi32>
    %c7_i32 = arith.constant 7 : i32
    %19 = vector.broadcast %c7_i32 : i32 to vector<64x1xi32>
    %20 = arith.cmpi ne, %16, %19 : vector<64x1xi32>
    %21 = arith.andi %18, %20 : vector<64x1xi1>
    %c0 = arith.constant 0 : index
    %c0_4 = arith.constant 0 : index
    %c0_5 = arith.constant 0 : index
    %22 = vector.load %arg2[%c0, %c0_4, %c0_5] : memref<3x32x256xbf16, #tpu.memory_space<vmem>>, vector<1x32x256xbf16>
    %23 = vector.shape_cast %22 : vector<1x32x256xbf16> to vector<32x256xbf16>
    %c0_6 = arith.constant 0 : index
    %c15 = arith.constant 15 : index
    %c0_7 = arith.constant 0 : index
    %24 = vector.load %arg1[%c0_6, %c15, %c0_7] : memref<1x96x32xbf16, #tpu.memory_space<vmem>>, vector<1x64x32xbf16>
    %25 = vector.shape_cast %24 : vector<1x64x32xbf16> to vector<64x32xbf16>
    %cst = arith.constant dense<0.000000e+00> : vector<64x256xf32>
    %26 = tpu.matmul %25, %23, %cst {dimension_numbers = #tpu.dot_dimension_numbers<[1], [0], [0], [1], [0, 0, 1, 1], [], []>} : vector<64x32xbf16>, vector<32x256xbf16>, vector<64x256xf32> -> vector<64x256xf32>
    %c1 = arith.constant 1 : index
    %c0_8 = arith.constant 0 : index
    %c0_9 = arith.constant 0 : index
    %27 = vector.load %arg2[%c1, %c0_8, %c0_9] : memref<3x32x256xbf16, #tpu.memory_space<vmem>>, vector<1x32x256xbf16>
    %28 = vector.shape_cast %27 : vector<1x32x256xbf16> to vector<32x256xbf16>
    %c0_10 = arith.constant 0 : index
    %c16 = arith.constant 16 : index
    %c0_11 = arith.constant 0 : index
    %29 = vector.load %arg1[%c0_10, %c16, %c0_11] : memref<1x96x32xbf16, #tpu.memory_space<vmem>>, vector<1x64x32xbf16>
    %30 = vector.shape_cast %29 : vector<1x64x32xbf16> to vector<64x32xbf16>
    %cst_12 = arith.constant dense<0.000000e+00> : vector<64x256xf32>
    %31 = tpu.matmul %30, %28, %cst_12 {dimension_numbers = #tpu.dot_dimension_numbers<[1], [0], [0], [1], [0, 0, 1, 1], [], []>} : vector<64x32xbf16>, vector<32x256xbf16>, vector<64x256xf32> -> vector<64x256xf32>
    %32 = arith.addf %26, %31 : vector<64x256xf32>
    %c2 = arith.constant 2 : index
    %c0_13 = arith.constant 0 : index
    %c0_14 = arith.constant 0 : index
    %33 = vector.load %arg2[%c2, %c0_13, %c0_14] : memref<3x32x256xbf16, #tpu.memory_space<vmem>>, vector<1x32x256xbf16>
    %34 = vector.shape_cast %33 : vector<1x32x256xbf16> to vector<32x256xbf16>
    %c0_15 = arith.constant 0 : index
    %c17 = arith.constant 17 : index
    %c0_16 = arith.constant 0 : index
    %35 = vector.load %arg1[%c0_15, %c17, %c0_16] : memref<1x96x32xbf16, #tpu.memory_space<vmem>>, vector<1x64x32xbf16>
    %36 = vector.shape_cast %35 : vector<1x64x32xbf16> to vector<64x32xbf16>
    %cst_17 = arith.constant dense<0.000000e+00> : vector<64x256xf32>
    %37 = tpu.matmul %36, %34, %cst_17 {dimension_numbers = #tpu.dot_dimension_numbers<[1], [0], [0], [1], [0, 0, 1, 1], [], []>} : vector<64x32xbf16>, vector<32x256xbf16>, vector<64x256xf32> -> vector<64x256xf32>
    %38 = arith.addf %32, %37 : vector<64x256xf32>
    %c0_18 = arith.constant 0 : index
    %c0_19 = arith.constant 0 : index
    %c0_20 = arith.constant 0 : index
    %39 = vector.load %arg4[%c0_18, %c0_19, %c0_20] : memref<5x1x256xf32, #tpu.memory_space<vmem>>, vector<1x1x256xf32>
    %40 = vector.shape_cast %39 : vector<1x1x256xf32> to vector<1x256xf32>
    %41 = vector.broadcast %40 : vector<1x256xf32> to vector<64x256xf32>
    %42 = arith.addf %38, %41 : vector<64x256xf32>
    %cst_21 = arith.constant 0.000000e+00 : f32
    %43 = vector.broadcast %cst_21 : f32 to vector<64x256xf32>
    %44 = arith.maximumf %42, %43 : vector<64x256xf32>
    %cst_22 = arith.constant 0.000000e+00 : f32
    %45 = vector.shape_cast %21 : vector<64x1xi1> to vector<64x1xi1>
    %46 = vector.broadcast %45 : vector<64x1xi1> to vector<64x256xi1>
    %47 = vector.broadcast %cst_22 : f32 to vector<64x256xf32>
    %48 = arith.select %46, %44, %47 : vector<64x256xi1>, vector<64x256xf32>
    %49 = arith.truncf %48 : vector<64x256xf32> to vector<64x256xbf16>
    %c16_23 = arith.constant 16 : index
    %c0_24 = arith.constant 0 : index
    %50 = vector.load %arg10[%c16_23, %c0_24] : memref<96x256xbf16, #tpu.memory_space<vmem>>, vector<64x256xbf16>
    tpu.vector_store %arg10[%c16_23, %c0_24], %49 {strides = array<i32>} : memref<96x256xbf16, #tpu.memory_space<vmem>>, vector<64x256xbf16>,
    %c0_25 = arith.constant 0 : index
    %c0_26 = arith.constant 0 : index
    %c0_27 = arith.constant 0 : index
    %c0_28 = arith.constant 0 : index
    %51 = vector.load %arg3[%c0_25, %c0_26, %c0_27, %c0_28] : memref<4x3x256x256xbf16, #tpu.memory_space<vmem>>, vector<1x1x256x256xbf16>
    %52 = vector.shape_cast %51 : vector<1x1x256x256xbf16> to vector<256x256xbf16>
    %c15_29 = arith.constant 15 : index
    %c0_30 = arith.constant 0 : index
    %53 = vector.load %arg10[%c15_29, %c0_30] : memref<96x256xbf16, #tpu.memory_space<vmem>>, vector<64x256xbf16>
    %cst_31 = arith.constant dense<0.000000e+00> : vector<64x256xf32>
    %54 = tpu.matmul %53, %52, %cst_31 {dimension_numbers = #tpu.dot_dimension_numbers<[1], [0], [0], [1], [0, 0, 1, 1], [], []>} : vector<64x256xbf16>, vector<256x256xbf16>, vector<64x256xf32> -> vector<64x256xf32>
    %c0_32 = arith.constant 0 : index
    %c1_33 = arith.constant 1 : index
    %c0_34 = arith.constant 0 : index
    %c0_35 = arith.constant 0 : index
    %55 = vector.load %arg3[%c0_32, %c1_33, %c0_34, %c0_35] : memref<4x3x256x256xbf16, #tpu.memory_space<vmem>>, vector<1x1x256x256xbf16>
    %56 = vector.shape_cast %55 : vector<1x1x256x256xbf16> to vector<256x256xbf16>
    %c16_36 = arith.constant 16 : index
    %c0_37 = arith.constant 0 : index
    %57 = vector.load %arg10[%c16_36, %c0_37] : memref<96x256xbf16, #tpu.memory_space<vmem>>, vector<64x256xbf16>
    %cst_38 = arith.constant dense<0.000000e+00> : vector<64x256xf32>
    %58 = tpu.matmul %57, %56, %cst_38 {dimension_numbers = #tpu.dot_dimension_numbers<[1], [0], [0], [1], [0, 0, 1, 1], [], []>} : vector<64x256xbf16>, vector<256x256xbf16>, vector<64x256xf32> -> vector<64x256xf32>
    %59 = arith.addf %54, %58 : vector<64x256xf32>
    %c0_39 = arith.constant 0 : index
    %c2_40 = arith.constant 2 : index
    %c0_41 = arith.constant 0 : index
    %c0_42 = arith.constant 0 : index
    %60 = vector.load %arg3[%c0_39, %c2_40, %c0_41, %c0_42] : memref<4x3x256x256xbf16, #tpu.memory_space<vmem>>, vector<1x1x256x256xbf16>
    %61 = vector.shape_cast %60 : vector<1x1x256x256xbf16> to vector<256x256xbf16>
    %c17_43 = arith.constant 17 : index
    %c0_44 = arith.constant 0 : index
    %62 = vector.load %arg10[%c17_43, %c0_44] : memref<96x256xbf16, #tpu.memory_space<vmem>>, vector<64x256xbf16>
    %cst_45 = arith.constant dense<0.000000e+00> : vector<64x256xf32>
    %63 = tpu.matmul %62, %61, %cst_45 {dimension_numbers = #tpu.dot_dimension_numbers<[1], [0], [0], [1], [0, 0, 1, 1], [], []>} : vector<64x256xbf16>, vector<256x256xbf16>, vector<64x256xf32> -> vector<64x256xf32>
    %64 = arith.addf %59, %63 : vector<64x256xf32>
    %c1_46 = arith.constant 1 : index
    %c0_47 = arith.constant 0 : index
    %c0_48 = arith.constant 0 : index
    %65 = vector.load %arg4[%c1_46, %c0_47, %c0_48] : memref<5x1x256xf32, #tpu.memory_space<vmem>>, vector<1x1x256xf32>
    %66 = vector.shape_cast %65 : vector<1x1x256xf32> to vector<1x256xf32>
    %67 = vector.broadcast %66 : vector<1x256xf32> to vector<64x256xf32>
    %68 = arith.addf %64, %67 : vector<64x256xf32>
    %cst_49 = arith.constant 0.000000e+00 : f32
    %69 = vector.broadcast %cst_49 : f32 to vector<64x256xf32>
    %70 = arith.maximumf %68, %69 : vector<64x256xf32>
    %cst_50 = arith.constant 0.000000e+00 : f32
    %71 = vector.shape_cast %21 : vector<64x1xi1> to vector<64x1xi1>
    %72 = vector.broadcast %71 : vector<64x1xi1> to vector<64x256xi1>
    %73 = vector.broadcast %cst_50 : f32 to vector<64x256xf32>
    %74 = arith.select %72, %70, %73 : vector<64x256xi1>, vector<64x256xf32>
    %75 = arith.truncf %74 : vector<64x256xf32> to vector<64x256xbf16>
    %c16_51 = arith.constant 16 : index
    %c0_52 = arith.constant 0 : index
    %76 = vector.load %arg11[%c16_51, %c0_52] : memref<96x256xbf16, #tpu.memory_space<vmem>>, vector<64x256xbf16>
    tpu.vector_store %arg11[%c16_51, %c0_52], %75 {strides = array<i32>} : memref<96x256xbf16, #tpu.memory_space<vmem>>, vector<64x256xbf16>,
    %c1_53 = arith.constant 1 : index
    %c0_54 = arith.constant 0 : index
    %c0_55 = arith.constant 0 : index
    %c0_56 = arith.constant 0 : index
    %77 = vector.load %arg3[%c1_53, %c0_54, %c0_55, %c0_56] : memref<4x3x256x256xbf16, #tpu.memory_space<vmem>>, vector<1x1x256x256xbf16>
    %78 = vector.shape_cast %77 : vector<1x1x256x256xbf16> to vector<256x256xbf16>
    %c15_57 = arith.constant 15 : index
    %c0_58 = arith.constant 0 : index
    %79 = vector.load %arg11[%c15_57, %c0_58] : memref<96x256xbf16, #tpu.memory_space<vmem>>, vector<64x256xbf16>
    %cst_59 = arith.constant dense<0.000000e+00> : vector<64x256xf32>
    %80 = tpu.matmul %79, %78, %cst_59 {dimension_numbers = #tpu.dot_dimension_numbers<[1], [0], [0], [1], [0, 0, 1, 1], [], []>} : vector<64x256xbf16>, vector<256x256xbf16>, vector<64x256xf32> -> vector<64x256xf32>
    %c1_60 = arith.constant 1 : index
    %c1_61 = arith.constant 1 : index
    %c0_62 = arith.constant 0 : index
    %c0_63 = arith.constant 0 : index
    %81 = vector.load %arg3[%c1_60, %c1_61, %c0_62, %c0_63] : memref<4x3x256x256xbf16, #tpu.memory_space<vmem>>, vector<1x1x256x256xbf16>
    %82 = vector.shape_cast %81 : vector<1x1x256x256xbf16> to vector<256x256xbf16>
    %c16_64 = arith.constant 16 : index
    %c0_65 = arith.constant 0 : index
    %83 = vector.load %arg11[%c16_64, %c0_65] : memref<96x256xbf16, #tpu.memory_space<vmem>>, vector<64x256xbf16>
    %cst_66 = arith.constant dense<0.000000e+00> : vector<64x256xf32>
    %84 = tpu.matmul %83, %82, %cst_66 {dimension_numbers = #tpu.dot_dimension_numbers<[1], [0], [0], [1], [0, 0, 1, 1], [], []>} : vector<64x256xbf16>, vector<256x256xbf16>, vector<64x256xf32> -> vector<64x256xf32>
    %85 = arith.addf %80, %84 : vector<64x256xf32>
    %c1_67 = arith.constant 1 : index
    %c2_68 = arith.constant 2 : index
    %c0_69 = arith.constant 0 : index
    %c0_70 = arith.constant 0 : index
    %86 = vector.load %arg3[%c1_67, %c2_68, %c0_69, %c0_70] : memref<4x3x256x256xbf16, #tpu.memory_space<vmem>>, vector<1x1x256x256xbf16>
    %87 = vector.shape_cast %86 : vector<1x1x256x256xbf16> to vector<256x256xbf16>
    %c17_71 = arith.constant 17 : index
    %c0_72 = arith.constant 0 : index
    %88 = vector.load %arg11[%c17_71, %c0_72] : memref<96x256xbf16, #tpu.memory_space<vmem>>, vector<64x256xbf16>
    %cst_73 = arith.constant dense<0.000000e+00> : vector<64x256xf32>
    %89 = tpu.matmul %88, %87, %cst_73 {dimension_numbers = #tpu.dot_dimension_numbers<[1], [0], [0], [1], [0, 0, 1, 1], [], []>} : vector<64x256xbf16>, vector<256x256xbf16>, vector<64x256xf32> -> vector<64x256xf32>
    %90 = arith.addf %85, %89 : vector<64x256xf32>
    %c2_74 = arith.constant 2 : index
    %c0_75 = arith.constant 0 : index
    %c0_76 = arith.constant 0 : index
    %91 = vector.load %arg4[%c2_74, %c0_75, %c0_76] : memref<5x1x256xf32, #tpu.memory_space<vmem>>, vector<1x1x256xf32>
    %92 = vector.shape_cast %91 : vector<1x1x256xf32> to vector<1x256xf32>
    %93 = vector.broadcast %92 : vector<1x256xf32> to vector<64x256xf32>
    %94 = arith.addf %90, %93 : vector<64x256xf32>
    %95 = arith.addf %94, %48 : vector<64x256xf32>
    %cst_77 = arith.constant 0.000000e+00 : f32
    %96 = vector.broadcast %cst_77 : f32 to vector<64x256xf32>
    %97 = arith.maximumf %95, %96 : vector<64x256xf32>
    %cst_78 = arith.constant 0.000000e+00 : f32
    %98 = vector.shape_cast %21 : vector<64x1xi1> to vector<64x1xi1>
    %99 = vector.broadcast %98 : vector<64x1xi1> to vector<64x256xi1>
    %100 = vector.broadcast %cst_78 : f32 to vector<64x256xf32>
    %101 = arith.select %99, %97, %100 : vector<64x256xi1>, vector<64x256xf32>
    %102 = arith.truncf %101 : vector<64x256xf32> to vector<64x256xbf16>
    %c16_79 = arith.constant 16 : index
    %c0_80 = arith.constant 0 : index
    %103 = vector.load %arg10[%c16_79, %c0_80] : memref<96x256xbf16, #tpu.memory_space<vmem>>, vector<64x256xbf16>
    tpu.vector_store %arg10[%c16_79, %c0_80], %102 {strides = array<i32>} : memref<96x256xbf16, #tpu.memory_space<vmem>>, vector<64x256xbf16>,
    %c2_81 = arith.constant 2 : index
    %c0_82 = arith.constant 0 : index
    %c0_83 = arith.constant 0 : index
    %c0_84 = arith.constant 0 : index
    %104 = vector.load %arg3[%c2_81, %c0_82, %c0_83, %c0_84] : memref<4x3x256x256xbf16, #tpu.memory_space<vmem>>, vector<1x1x256x256xbf16>
    %105 = vector.shape_cast %104 : vector<1x1x256x256xbf16> to vector<256x256xbf16>
    %c15_85 = arith.constant 15 : index
    %c0_86 = arith.constant 0 : index
    %106 = vector.load %arg10[%c15_85, %c0_86] : memref<96x256xbf16, #tpu.memory_space<vmem>>, vector<64x256xbf16>
    %cst_87 = arith.constant dense<0.000000e+00> : vector<64x256xf32>
    %107 = tpu.matmul %106, %105, %cst_87 {dimension_numbers = #tpu.dot_dimension_numbers<[1], [0], [0], [1], [0, 0, 1, 1], [], []>} : vector<64x256xbf16>, vector<256x256xbf16>, vector<64x256xf32> -> vector<64x256xf32>
    %c2_88 = arith.constant 2 : index
    %c1_89 = arith.constant 1 : index
    %c0_90 = arith.constant 0 : index
    %c0_91 = arith.constant 0 : index
    %108 = vector.load %arg3[%c2_88, %c1_89, %c0_90, %c0_91] : memref<4x3x256x256xbf16, #tpu.memory_space<vmem>>, vector<1x1x256x256xbf16>
    %109 = vector.shape_cast %108 : vector<1x1x256x256xbf16> to vector<256x256xbf16>
    %c16_92 = arith.constant 16 : index
    %c0_93 = arith.constant 0 : index
    %110 = vector.load %arg10[%c16_92, %c0_93] : memref<96x256xbf16, #tpu.memory_space<vmem>>, vector<64x256xbf16>
    %cst_94 = arith.constant dense<0.000000e+00> : vector<64x256xf32>
    %111 = tpu.matmul %110, %109, %cst_94 {dimension_numbers = #tpu.dot_dimension_numbers<[1], [0], [0], [1], [0, 0, 1, 1], [], []>} : vector<64x256xbf16>, vector<256x256xbf16>, vector<64x256xf32> -> vector<64x256xf32>
    %112 = arith.addf %107, %111 : vector<64x256xf32>
    %c2_95 = arith.constant 2 : index
    %c2_96 = arith.constant 2 : index
    %c0_97 = arith.constant 0 : index
    %c0_98 = arith.constant 0 : index
    %113 = vector.load %arg3[%c2_95, %c2_96, %c0_97, %c0_98] : memref<4x3x256x256xbf16, #tpu.memory_space<vmem>>, vector<1x1x256x256xbf16>
    %114 = vector.shape_cast %113 : vector<1x1x256x256xbf16> to vector<256x256xbf16>
    %c17_99 = arith.constant 17 : index
    %c0_100 = arith.constant 0 : index
    %115 = vector.load %arg10[%c17_99, %c0_100] : memref<96x256xbf16, #tpu.memory_space<vmem>>, vector<64x256xbf16>
    %cst_101 = arith.constant dense<0.000000e+00> : vector<64x256xf32>
    %116 = tpu.matmul %115, %114, %cst_101 {dimension_numbers = #tpu.dot_dimension_numbers<[1], [0], [0], [1], [0, 0, 1, 1], [], []>} : vector<64x256xbf16>, vector<256x256xbf16>, vector<64x256xf32> -> vector<64x256xf32>
    %117 = arith.addf %112, %116 : vector<64x256xf32>
    %c3 = arith.constant 3 : index
    %c0_102 = arith.constant 0 : index
    %c0_103 = arith.constant 0 : index
    %118 = vector.load %arg4[%c3, %c0_102, %c0_103] : memref<5x1x256xf32, #tpu.memory_space<vmem>>, vector<1x1x256xf32>
    %119 = vector.shape_cast %118 : vector<1x1x256xf32> to vector<1x256xf32>
    %120 = vector.broadcast %119 : vector<1x256xf32> to vector<64x256xf32>
    %121 = arith.addf %117, %120 : vector<64x256xf32>
    %cst_104 = arith.constant 0.000000e+00 : f32
    %122 = vector.broadcast %cst_104 : f32 to vector<64x256xf32>
    %123 = arith.maximumf %121, %122 : vector<64x256xf32>
    %cst_105 = arith.constant 0.000000e+00 : f32
    %124 = vector.shape_cast %21 : vector<64x1xi1> to vector<64x1xi1>
    %125 = vector.broadcast %124 : vector<64x1xi1> to vector<64x256xi1>
    %126 = vector.broadcast %cst_105 : f32 to vector<64x256xf32>
    %127 = arith.select %125, %123, %126 : vector<64x256xi1>, vector<64x256xf32>
    %128 = arith.truncf %127 : vector<64x256xf32> to vector<64x256xbf16>
    %c16_106 = arith.constant 16 : index
    %c0_107 = arith.constant 0 : index
    %129 = vector.load %arg11[%c16_106, %c0_107] : memref<96x256xbf16, #tpu.memory_space<vmem>>, vector<64x256xbf16>
    tpu.vector_store %arg11[%c16_106, %c0_107], %128 {strides = array<i32>} : memref<96x256xbf16, #tpu.memory_space<vmem>>, vector<64x256xbf16>,
    %c3_108 = arith.constant 3 : index
    %c0_109 = arith.constant 0 : index
    %c0_110 = arith.constant 0 : index
    %c0_111 = arith.constant 0 : index
    %130 = vector.load %arg3[%c3_108, %c0_109, %c0_110, %c0_111] : memref<4x3x256x256xbf16, #tpu.memory_space<vmem>>, vector<1x1x256x256xbf16>
    %131 = vector.shape_cast %130 : vector<1x1x256x256xbf16> to vector<256x256xbf16>
    %c15_112 = arith.constant 15 : index
    %c0_113 = arith.constant 0 : index
    %132 = vector.load %arg11[%c15_112, %c0_113] : memref<96x256xbf16, #tpu.memory_space<vmem>>, vector<64x256xbf16>
    %cst_114 = arith.constant dense<0.000000e+00> : vector<64x256xf32>
    %133 = tpu.matmul %132, %131, %cst_114 {dimension_numbers = #tpu.dot_dimension_numbers<[1], [0], [0], [1], [0, 0, 1, 1], [], []>} : vector<64x256xbf16>, vector<256x256xbf16>, vector<64x256xf32> -> vector<64x256xf32>
    %c3_115 = arith.constant 3 : index
    %c1_116 = arith.constant 1 : index
    %c0_117 = arith.constant 0 : index
    %c0_118 = arith.constant 0 : index
    %134 = vector.load %arg3[%c3_115, %c1_116, %c0_117, %c0_118] : memref<4x3x256x256xbf16, #tpu.memory_space<vmem>>, vector<1x1x256x256xbf16>
    %135 = vector.shape_cast %134 : vector<1x1x256x256xbf16> to vector<256x256xbf16>
    %c16_119 = arith.constant 16 : index
    %c0_120 = arith.constant 0 : index
    %136 = vector.load %arg11[%c16_119, %c0_120] : memref<96x256xbf16, #tpu.memory_space<vmem>>, vector<64x256xbf16>
    %cst_121 = arith.constant dense<0.000000e+00> : vector<64x256xf32>
    %137 = tpu.matmul %136, %135, %cst_121 {dimension_numbers = #tpu.dot_dimension_numbers<[1], [0], [0], [1], [0, 0, 1, 1], [], []>} : vector<64x256xbf16>, vector<256x256xbf16>, vector<64x256xf32> -> vector<64x256xf32>
    %138 = arith.addf %133, %137 : vector<64x256xf32>
    %c3_122 = arith.constant 3 : index
    %c2_123 = arith.constant 2 : index
    %c0_124 = arith.constant 0 : index
    %c0_125 = arith.constant 0 : index
    %139 = vector.load %arg3[%c3_122, %c2_123, %c0_124, %c0_125] : memref<4x3x256x256xbf16, #tpu.memory_space<vmem>>, vector<1x1x256x256xbf16>
    %140 = vector.shape_cast %139 : vector<1x1x256x256xbf16> to vector<256x256xbf16>
    %c17_126 = arith.constant 17 : index
    %c0_127 = arith.constant 0 : index
    %141 = vector.load %arg11[%c17_126, %c0_127] : memref<96x256xbf16, #tpu.memory_space<vmem>>, vector<64x256xbf16>
    %cst_128 = arith.constant dense<0.000000e+00> : vector<64x256xf32>
    %142 = tpu.matmul %141, %140, %cst_128 {dimension_numbers = #tpu.dot_dimension_numbers<[1], [0], [0], [1], [0, 0, 1, 1], [], []>} : vector<64x256xbf16>, vector<256x256xbf16>, vector<64x256xf32> -> vector<64x256xf32>
    %143 = arith.addf %138, %142 : vector<64x256xf32>
    %c4 = arith.constant 4 : index
    %c0_129 = arith.constant 0 : index
    %c0_130 = arith.constant 0 : index
    %144 = vector.load %arg4[%c4, %c0_129, %c0_130] : memref<5x1x256xf32, #tpu.memory_space<vmem>>, vector<1x1x256xf32>
    %145 = vector.shape_cast %144 : vector<1x1x256xf32> to vector<1x256xf32>
    %146 = vector.broadcast %145 : vector<1x256xf32> to vector<64x256xf32>
    %147 = arith.addf %143, %146 : vector<64x256xf32>
    %148 = arith.addf %147, %101 : vector<64x256xf32>
    %cst_131 = arith.constant 0.000000e+00 : f32
    %149 = vector.broadcast %cst_131 : f32 to vector<64x256xf32>
    %150 = arith.maximumf %148, %149 : vector<64x256xf32>
    %cst_132 = arith.constant 0.000000e+00 : f32
    %151 = vector.shape_cast %21 : vector<64x1xi1> to vector<64x1xi1>
    %152 = vector.broadcast %151 : vector<64x1xi1> to vector<64x256xi1>
    %153 = vector.broadcast %cst_132 : f32 to vector<64x256xf32>
    %154 = arith.select %152, %150, %153 : vector<64x256xi1>, vector<64x256xf32>
    %155 = arith.truncf %154 : vector<64x256xf32> to vector<64x256xbf16>
    %c16_133 = arith.constant 16 : index
    %c0_134 = arith.constant 0 : index
    %156 = vector.load %arg10[%c16_133, %c0_134] : memref<96x256xbf16, #tpu.memory_space<vmem>>, vector<64x256xbf16>
    tpu.vector_store %arg10[%c16_133, %c0_134], %155 {strides = array<i32>} : memref<96x256xbf16, #tpu.memory_space<vmem>>, vector<64x256xbf16>,
    %c0_135 = arith.constant 0 : index
    %c0_136 = arith.constant 0 : index
    %c0_137 = arith.constant 0 : index
    %157 = vector.load %arg5[%c0_135, %c0_136, %c0_137] : memref<3x256x512xbf16, #tpu.memory_space<vmem>>, vector<1x256x512xbf16>
    %158 = vector.shape_cast %157 : vector<1x256x512xbf16> to vector<256x512xbf16>
    %c15_138 = arith.constant 15 : index
    %c0_139 = arith.constant 0 : index
    %159 = vector.load %arg10[%c15_138, %c0_139] : memref<96x256xbf16, #tpu.memory_space<vmem>>, vector<64x256xbf16>
    %cst_140 = arith.constant dense<0.000000e+00> : vector<64x512xf32>
    %160 = tpu.matmul %159, %158, %cst_140 {dimension_numbers = #tpu.dot_dimension_numbers<[1], [0], [0], [1], [0, 0, 1, 1], [], []>} : vector<64x256xbf16>, vector<256x512xbf16>, vector<64x512xf32> -> vector<64x512xf32>
    %c1_141 = arith.constant 1 : index
    %c0_142 = arith.constant 0 : index
    %c0_143 = arith.constant 0 : index
    %161 = vector.load %arg5[%c1_141, %c0_142, %c0_143] : memref<3x256x512xbf16, #tpu.memory_space<vmem>>, vector<1x256x512xbf16>
    %162 = vector.shape_cast %161 : vector<1x256x512xbf16> to vector<256x512xbf16>
    %c16_144 = arith.constant 16 : index
    %c0_145 = arith.constant 0 : index
    %163 = vector.load %arg10[%c16_144, %c0_145] : memref<96x256xbf16, #tpu.memory_space<vmem>>, vector<64x256xbf16>
    %cst_146 = arith.constant dense<0.000000e+00> : vector<64x512xf32>
    %164 = tpu.matmul %163, %162, %cst_146 {dimension_numbers = #tpu.dot_dimension_numbers<[1], [0], [0], [1], [0, 0, 1, 1], [], []>} : vector<64x256xbf16>, vector<256x512xbf16>, vector<64x512xf32> -> vector<64x512xf32>
    %165 = arith.addf %160, %164 : vector<64x512xf32>
    %c2_147 = arith.constant 2 : index
    %c0_148 = arith.constant 0 : index
    %c0_149 = arith.constant 0 : index
    %166 = vector.load %arg5[%c2_147, %c0_148, %c0_149] : memref<3x256x512xbf16, #tpu.memory_space<vmem>>, vector<1x256x512xbf16>
    %167 = vector.shape_cast %166 : vector<1x256x512xbf16> to vector<256x512xbf16>
    %c17_150 = arith.constant 17 : index
    %c0_151 = arith.constant 0 : index
    %168 = vector.load %arg10[%c17_150, %c0_151] : memref<96x256xbf16, #tpu.memory_space<vmem>>, vector<64x256xbf16>
    %cst_152 = arith.constant dense<0.000000e+00> : vector<64x512xf32>
    %169 = tpu.matmul %168, %167, %cst_152 {dimension_numbers = #tpu.dot_dimension_numbers<[1], [0], [0], [1], [0, 0, 1, 1], [], []>} : vector<64x256xbf16>, vector<256x512xbf16>, vector<64x512xf32> -> vector<64x512xf32>
    %170 = arith.addf %165, %169 : vector<64x512xf32>
    %c0_153 = arith.constant 0 : index
    %c0_154 = arith.constant 0 : index
    %171 = vector.load %arg6[%c0_153, %c0_154] : memref<1x512xf32, #tpu.memory_space<vmem>>, vector<1x512xf32>
    %172 = vector.broadcast %171 : vector<1x512xf32> to vector<64x512xf32>
    %173 = arith.addf %170, %172 : vector<64x512xf32>
    %cst_155 = arith.constant 0.000000e+00 : f32
    %174 = vector.broadcast %cst_155 : f32 to vector<64x512xf32>
    %175 = arith.maximumf %173, %174 : vector<64x512xf32>
    %176 = vector.shape_cast %175 : vector<64x512xf32> to vector<8x8x512xf32>
    %c0_156 = arith.constant 0 : index
    %c0_157 = arith.constant 0 : index
    %c0_158 = arith.constant 0 : index
    %177 = vector.load %arg12[%c0_156, %c0_157, %c0_158] : memref<8x8x512xf32, #tpu.memory_space<vmem>>, vector<8x8x512xf32>
    tpu.vector_store %arg12[%c0_156, %c0_157, %c0_158], %176 {strides = array<i32>} : memref<8x8x512xf32, #tpu.memory_space<vmem>>, vector<8x8x512xf32>,
    %c0_159 = arith.constant 0 : index
    %c1_160 = arith.constant 1 : index
    %c0_161 = arith.constant 0 : index
    %178 = vector.load %arg12[%c0_159, %c1_160, %c0_161] : memref<8x8x512xf32, #tpu.memory_space<vmem>>, vector<8x1x512xf32>
    %179 = vector.shape_cast %178 : vector<8x1x512xf32> to vector<8x512xf32>
    %c0_162 = arith.constant 0 : index
    %c0_163 = arith.constant 0 : index
    %c0_164 = arith.constant 0 : index
    %180 = vector.load %arg7[%c0_162, %c0_163, %c0_164] : memref<6x512x8xf32, #tpu.memory_space<vmem>>, vector<1x512x8xf32>
    %181 = vector.shape_cast %180 : vector<1x512x8xf32> to vector<512x8xf32>
    %cst_165 = arith.constant dense<0.000000e+00> : vector<8x8xf32>
    %182 = tpu.matmul %179, %181, %cst_165 {dimension_numbers = #tpu.dot_dimension_numbers<[1], [0], [0], [1], [0, 0, 1, 1], [], []>} : vector<8x512xf32>, vector<512x8xf32>, vector<8x8xf32> -> vector<8x8xf32>
    %c0_166 = arith.constant 0 : index
    %c2_167 = arith.constant 2 : index
    %c0_168 = arith.constant 0 : index
    %183 = vector.load %arg12[%c0_166, %c2_167, %c0_168] : memref<8x8x512xf32, #tpu.memory_space<vmem>>, vector<8x1x512xf32>
    %184 = vector.shape_cast %183 : vector<8x1x512xf32> to vector<8x512xf32>
    %c1_169 = arith.constant 1 : index
    %c0_170 = arith.constant 0 : index
    %c0_171 = arith.constant 0 : index
    %185 = vector.load %arg7[%c1_169, %c0_170, %c0_171] : memref<6x512x8xf32, #tpu.memory_space<vmem>>, vector<1x512x8xf32>
    %186 = vector.shape_cast %185 : vector<1x512x8xf32> to vector<512x8xf32>
    %cst_172 = arith.constant dense<0.000000e+00> : vector<8x8xf32>
    %187 = tpu.matmul %184, %186, %cst_172 {dimension_numbers = #tpu.dot_dimension_numbers<[1], [0], [0], [1], [0, 0, 1, 1], [], []>} : vector<8x512xf32>, vector<512x8xf32>, vector<8x8xf32> -> vector<8x8xf32>
    %188 = arith.addf %182, %187 : vector<8x8xf32>
    %c0_173 = arith.constant 0 : index
    %c3_174 = arith.constant 3 : index
    %c0_175 = arith.constant 0 : index
    %189 = vector.load %arg12[%c0_173, %c3_174, %c0_175] : memref<8x8x512xf32, #tpu.memory_space<vmem>>, vector<8x1x512xf32>
    %190 = vector.shape_cast %189 : vector<8x1x512xf32> to vector<8x512xf32>
    %c2_176 = arith.constant 2 : index
    %c0_177 = arith.constant 0 : index
    %c0_178 = arith.constant 0 : index
    %191 = vector.load %arg7[%c2_176, %c0_177, %c0_178] : memref<6x512x8xf32, #tpu.memory_space<vmem>>, vector<1x512x8xf32>
    %192 = vector.shape_cast %191 : vector<1x512x8xf32> to vector<512x8xf32>
    %cst_179 = arith.constant dense<0.000000e+00> : vector<8x8xf32>
    %193 = tpu.matmul %190, %192, %cst_179 {dimension_numbers = #tpu.dot_dimension_numbers<[1], [0], [0], [1], [0, 0, 1, 1], [], []>} : vector<8x512xf32>, vector<512x8xf32>, vector<8x8xf32> -> vector<8x8xf32>
    %194 = arith.addf %188, %193 : vector<8x8xf32>
    %c0_180 = arith.constant 0 : index
    %c4_181 = arith.constant 4 : index
    %c0_182 = arith.constant 0 : index
    %195 = vector.load %arg12[%c0_180, %c4_181, %c0_182] : memref<8x8x512xf32, #tpu.memory_space<vmem>>, vector<8x1x512xf32>
    %196 = vector.shape_cast %195 : vector<8x1x512xf32> to vector<8x512xf32>
    %c3_183 = arith.constant 3 : index
    %c0_184 = arith.constant 0 : index
    %c0_185 = arith.constant 0 : index
    %197 = vector.load %arg7[%c3_183, %c0_184, %c0_185] : memref<6x512x8xf32, #tpu.memory_space<vmem>>, vector<1x512x8xf32>
    %198 = vector.shape_cast %197 : vector<1x512x8xf32> to vector<512x8xf32>
    %cst_186 = arith.constant dense<0.000000e+00> : vector<8x8xf32>
    %199 = tpu.matmul %196, %198, %cst_186 {dimension_numbers = #tpu.dot_dimension_numbers<[1], [0], [0], [1], [0, 0, 1, 1], [], []>} : vector<8x512xf32>, vector<512x8xf32>, vector<8x8xf32> -> vector<8x8xf32>
    %200 = arith.addf %194, %199 : vector<8x8xf32>
    %c0_187 = arith.constant 0 : index
    %c5 = arith.constant 5 : index
    %c0_188 = arith.constant 0 : index
    %201 = vector.load %arg12[%c0_187, %c5, %c0_188] : memref<8x8x512xf32, #tpu.memory_space<vmem>>, vector<8x1x512xf32>
    %202 = vector.shape_cast %201 : vector<8x1x512xf32> to vector<8x512xf32>
    %c4_189 = arith.constant 4 : index
    %c0_190 = arith.constant 0 : index
    %c0_191 = arith.constant 0 : index
    %203 = vector.load %arg7[%c4_189, %c0_190, %c0_191] : memref<6x512x8xf32, #tpu.memory_space<vmem>>, vector<1x512x8xf32>
    %204 = vector.shape_cast %203 : vector<1x512x8xf32> to vector<512x8xf32>
    %cst_192 = arith.constant dense<0.000000e+00> : vector<8x8xf32>
    %205 = tpu.matmul %202, %204, %cst_192 {dimension_numbers = #tpu.dot_dimension_numbers<[1], [0], [0], [1], [0, 0, 1, 1], [], []>} : vector<8x512xf32>, vector<512x8xf32>, vector<8x8xf32> -> vector<8x8xf32>
    %206 = arith.addf %200, %205 : vector<8x8xf32>
    %c0_193 = arith.constant 0 : index
    %c6 = arith.constant 6 : index
    %c0_194 = arith.constant 0 : index
    %207 = vector.load %arg12[%c0_193, %c6, %c0_194] : memref<8x8x512xf32, #tpu.memory_space<vmem>>, vector<8x1x512xf32>
    %208 = vector.shape_cast %207 : vector<8x1x512xf32> to vector<8x512xf32>
    %c5_195 = arith.constant 5 : index
    %c0_196 = arith.constant 0 : index
    %c0_197 = arith.constant 0 : index
    %209 = vector.load %arg7[%c5_195, %c0_196, %c0_197] : memref<6x512x8xf32, #tpu.memory_space<vmem>>, vector<1x512x8xf32>
    %210 = vector.shape_cast %209 : vector<1x512x8xf32> to vector<512x8xf32>
    %cst_198 = arith.constant dense<0.000000e+00> : vector<8x8xf32>
    %211 = tpu.matmul %208, %210, %cst_198 {dimension_numbers = #tpu.dot_dimension_numbers<[1], [0], [0], [1], [0, 0, 1, 1], [], []>} : vector<8x512xf32>, vector<512x8xf32>, vector<8x8xf32> -> vector<8x8xf32>
    %212 = arith.addf %206, %211 : vector<8x8xf32>
    %c0_199 = arith.constant 0 : index
    %c0_200 = arith.constant 0 : index
    %213 = vector.load %arg8[%c0_199, %c0_200] : memref<1x8xf32, #tpu.memory_space<vmem>>, vector<1x8xf32>
    %214 = vector.broadcast %213 : vector<1x8xf32> to vector<8x8xf32>
    %215 = arith.addf %212, %214 : vector<8x8xf32>
    %216 = tpu.iota {dimensions = array<i32: 1>} : vector<8x8xi32>
    %c7_i32_201 = arith.constant 7 : i32
    %217 = vector.broadcast %c7_i32_201 : i32 to vector<8x8xi32>
    %218 = arith.cmpi eq, %216, %217 : vector<8x8xi32>
    %219 = math.tanh %215 : vector<8x8xf32>
    %220 = arith.select %218, %219, %215 : vector<8x8xi1>, vector<8x8xf32>
    %c0_202 = arith.constant 0 : index
    %c0_203 = arith.constant 0 : index
    %221 = vector.load %arg9[%c0_202, %c0_203] : memref<8x8xf32, #tpu.memory_space<vmem>>, vector<8x8xf32>
    tpu.vector_store %arg9[%c0_202, %c0_203], %220 {strides = array<i32>} : memref<8x8xf32, #tpu.memory_space<vmem>>, vector<8x8xf32>,
    return
  }
  func.func @transform_0(%arg0: i32) -> (i32, i32, i32) {
    %c0_i32 = arith.constant 0 : i32
    %c0_i32_0 = arith.constant 0 : i32
    %c0_i32_1 = arith.constant 0 : i32
    return %arg0, %c0_i32, %c0_i32_0 : i32, i32, i32
  }
  func.func @transform_1(%arg0: i32) -> (i32, i32, i32) {
    %c0_i32 = arith.constant 0 : i32
    %c0_i32_0 = arith.constant 0 : i32
    %c0_i32_1 = arith.constant 0 : i32
    %c0_i32_2 = arith.constant 0 : i32
    return %c0_i32, %c0_i32_0, %c0_i32_1 : i32, i32, i32
  }
  func.func @transform_2(%arg0: i32) -> (i32, i32, i32, i32) {
    %c0_i32 = arith.constant 0 : i32
    %c0_i32_0 = arith.constant 0 : i32
    %c0_i32_1 = arith.constant 0 : i32
    %c0_i32_2 = arith.constant 0 : i32
    %c0_i32_3 = arith.constant 0 : i32
    return %c0_i32, %c0_i32_0, %c0_i32_1, %c0_i32_2 : i32, i32, i32, i32
  }
  func.func @transform_3(%arg0: i32) -> (i32, i32, i32) {
    %c0_i32 = arith.constant 0 : i32
    %c0_i32_0 = arith.constant 0 : i32
    %c0_i32_1 = arith.constant 0 : i32
    %c0_i32_2 = arith.constant 0 : i32
    return %c0_i32, %c0_i32_0, %c0_i32_1 : i32, i32, i32
  }
  func.func @transform_4(%arg0: i32) -> (i32, i32, i32) {
    %c0_i32 = arith.constant 0 : i32
    %c0_i32_0 = arith.constant 0 : i32
    %c0_i32_1 = arith.constant 0 : i32
    %c0_i32_2 = arith.constant 0 : i32
    return %c0_i32, %c0_i32_0, %c0_i32_1 : i32, i32, i32
  }
  func.func @transform_5(%arg0: i32) -> (i32, i32) {
    %c0_i32 = arith.constant 0 : i32
    %c0_i32_0 = arith.constant 0 : i32
    %c0_i32_1 = arith.constant 0 : i32
    return %c0_i32, %c0_i32_0 : i32, i32
  }
  func.func @transform_6(%arg0: i32) -> (i32, i32, i32) {
    %c0_i32 = arith.constant 0 : i32
    %c0_i32_0 = arith.constant 0 : i32
    %c0_i32_1 = arith.constant 0 : i32
    %c0_i32_2 = arith.constant 0 : i32
    return %c0_i32, %c0_i32_0, %c0_i32_1 : i32, i32, i32
  }
  func.func @transform_7(%arg0: i32) -> (i32, i32) {
    %c0_i32 = arith.constant 0 : i32
    %c0_i32_0 = arith.constant 0 : i32
    %c0_i32_1 = arith.constant 0 : i32
    return %c0_i32, %c0_i32_0 : i32, i32
  }
  func.func @transform_8(%arg0: i32) -> (i32, i32) {
    %c0_i32 = arith.constant 0 : i32
    %c0_i32_0 = arith.constant 0 : i32
    return %arg0, %c0_i32 : i32, i32
  }
}

</mosaic_0001>

<llo_original>
// kernel: network_forward.1
$region0: #{network_forward.1}
  #allocation0 [shape = 'u32[]', space=smem, size = 0x4, offset = 0x4, fixed_abs, tag = 'smem constant byte address 0x4 - core index']
  #allocation1 [shape = 'u32[144,128]{1,0:T(1,128)}', space=vmem, size = 0x12000, scoped, tag = 'internal scratch']
  #allocation2 [shape = 'bf16[96,256]{1,0:T(16,128)(2,1)}', space=vmem, size = 0xc000, scoped, tag = 'scratch operand']
  #allocation3 [shape = 'bf16[96,256]{1,0:T(16,128)(2,1)}', space=vmem, size = 0xc000, scoped, tag = 'scratch operand']
  #allocation4 [shape = 'f32[8,8,512]{2,1,0:T(8,128)}', space=vmem, size = 0x20000, scoped, tag = 'scratch operand']
  %s0 = inlined_call_operand.hbm [shape: bf16[1,96,32], index: 0, kind: input, shape index: {}]
  %s1 = inlined_call_operand.hbm [shape: bf16[3,32,256], index: 1, kind: input, shape index: {}]
  %s2 = inlined_call_operand.hbm [shape: bf16[4,3,256,256], index: 2, kind: input, shape index: {}]
  %s3 = inlined_call_operand.hbm [shape: f32[5,1,256], index: 3, kind: input, shape index: {}]
  %s4 = inlined_call_operand.hbm [shape: bf16[3,256,512], index: 4, kind: input, shape index: {}]
  %s5 = inlined_call_operand.hbm [shape: f32[1,512], index: 5, kind: input, shape index: {}]
  %s6 = inlined_call_operand.hbm [shape: f32[6,512,8], index: 6, kind: input, shape index: {}]
  %s7 = inlined_call_operand.hbm [shape: f32[1,8], index: 7, kind: input, shape index: {}]
  %s8 = inlined_call_operand.hbm [shape: f32[8,8], index: 8, kind: output, shape index: {}]
  %s9 = sld [smem:[#allocation0]]
  $region74: #{network_forward.1} parent=0
    _
  %s11 = ssub.s32 1, %s9
  %s12 = scalar_select 0, %s11, %s9
  $region1: #{network_forward.1} parent=0
    #allocation5 [shape = 'u8[24576]{0}', space=vmem, size = 0x6000, scoped, tag = 'input window, operand 0, single buffered']
    #allocation6 [shape = 's32[1]{0}', space=sflag, size = 0x4, scoped, tag = 'scoped memory for network_forward.1']
    #allocation7 [shape = 's32[1]{0}', space=sflag, size = 0x4, scoped, tag = 'scoped memory for network_forward.1']
    #allocation8 [shape = 'u8[49152]{0}', space=vmem, size = 0xc000, scoped, tag = 'input window, operand 1, single buffered']
    #allocation9 [shape = 's32[1]{0}', space=sflag, size = 0x4, scoped, tag = 'scoped memory for network_forward.1']
    #allocation10 [shape = 'u8[1572864]{0}', space=vmem, size = 0x180000, scoped, tag = 'input window, operand 2, single buffered']
    #allocation11 [shape = 'u8[5120]{0}', space=vmem, size = 0x1400, scoped, tag = 'input window, operand 3, single buffered']
    #allocation12 [shape = 's32[1]{0}', space=sflag, size = 0x4, scoped, tag = 'scoped memory for network_forward.1']
    #allocation13 [shape = 'u8[786432]{0}', space=vmem, size = 0xc0000, scoped, tag = 'input window, operand 4, single buffered']
    #allocation14 [shape = 'u8[2048]{0}', space=vmem, size = 0x800, scoped, tag = 'input window, operand 5, single buffered']
    #allocation15 [shape = 's32[1]{0}', space=sflag, size = 0x4, scoped, tag = 'scoped memory for network_forward.1']
    #allocation16 [shape = 'u8[1572864]{0}', space=vmem, size = 0x180000, scoped, tag = 'input window, operand 6, single buffered']
    #allocation17 [shape = 'u8[512]{0}', space=vmem, size = 0x400, scoped, tag = 'input window, operand 7, single buffered']
    #allocation18 [shape = 's32[1]{0}', space=sflag, size = 0x4, scoped, tag = 'scoped memory for network_forward.1']
    #allocation19 [shape = 'u8[4096]{0}', space=vmem, size = 0x1000, scoped, tag = 'output window, operand 0, single buffered']
    %13 = vsyncpa [#allocation6], 0
    %14 = vsyncpa [#allocation9], 0
    %15 = vsyncpa [#allocation12], 0
    %16 = vsyncpa [#allocation15], 0
    %17 = vsyncpa [#allocation18], 0
    %18 = vsyncpa [#allocation7], 0
    // Predicated region
    $region2: #{network_forward.1} parent=1 // pred_check
      _
    $region3: #{network_forward.1} parent=1 // pred_check_branch
      %20 = sbr.rel (0) target = $region5
    $region4: #{network_forward.1} parent=1 // pred_region
      %s22 = ssub.s32 768, 768
      %23 = vsyncadd [#allocation6], %s22
      %s24 = sshll.u32 [#allocation5], 4
      %s25 = int_to_ptr.vmem [resolvable:$true] %s24
      %30 = dma.hbm_to_vmem [thread:$0]  %s0, 768, %s25, [#allocation6], 64, 64, 4
    $region5: #{network_forward.1} parent=1 // pred_fallthru
      _
    // Predicated region
    $region6: #{network_forward.1} parent=1 // pred_check
      _
    $region7: #{network_forward.1} parent=1 // pred_check_branch
      %32 = sbr.rel (0) target = $region9
    $region8: #{network_forward.1} parent=1 // pred_region
      %s34 = ssub.s32 1536, 1536
      %35 = vsyncadd [#allocation9], %s34
      %s36 = sshll.u32 [#allocation8], 4
      %s37 = int_to_ptr.vmem [resolvable:$true] %s36
      %42 = dma.hbm_to_vmem [thread:$0]  %s1, 1536, %s37, [#allocation9], 128, 128, 8
    $region9: #{network_forward.1} parent=1 // pred_fallthru
      _
    // Predicated region
    $region10: #{network_forward.1} parent=1 // pred_check
      _
    $region11: #{network_forward.1} parent=1 // pred_check_branch
      %44 = sbr.rel (0) target = $region13
    $region12: #{network_forward.1} parent=1 // pred_region
      %s46 = ssub.s32 49152, 49152
      %47 = vsyncadd [#allocation9], %s46
      %s48 = sshll.u32 [#allocation10], 4
      %s49 = int_to_ptr.vmem [resolvable:$true] %s48
      %54 = dma.hbm_to_vmem [thread:$0]  %s2, 49152, %s49, [#allocation9], 128, 128, 8
    $region13: #{network_forward.1} parent=1 // pred_fallthru
      _
    // Predicated region
    $region14: #{network_forward.1} parent=1 // pred_check
      _
    $region15: #{network_forward.1} parent=1 // pred_check_branch
      %56 = sbr.rel (0) target = $region17
    $region16: #{network_forward.1} parent=1 // pred_region
      %s58 = ssub.s32 160, 160
      %59 = vsyncadd [#allocation12], %s58
      %s60 = sshll.u32 [#allocation11], 4
      %s61 = int_to_ptr.vmem [resolvable:$true] %s60
      %66 = dma.hbm_to_vmem [thread:$0]  %s3, 160, %s61, [#allocation12], 32, 32, 2
    $region17: #{network_forward.1} parent=1 // pred_fallthru
      _
    // Predicated region
    $region18: #{network_forward.1} parent=1 // pred_check
      _
    $region19: #{network_forward.1} parent=1 // pred_check_branch
      %68 = sbr.rel (0) target = $region21
    $region20: #{network_forward.1} parent=1 // pred_region
      %s70 = ssub.s32 24576, 24576
      %71 = vsyncadd [#allocation12], %s70
      %s72 = sshll.u32 [#allocation13], 4
      %s73 = int_to_ptr.vmem [resolvable:$true] %s72
      %78 = dma.hbm_to_vmem [thread:$0]  %s4, 24576, %s73, [#allocation12], 256, 256, 16
    $region21: #{network_forward.1} parent=1 // pred_fallthru
      _
    // Predicated region
    $region22: #{network_forward.1} parent=1 // pred_check
      _
    $region23: #{network_forward.1} parent=1 // pred_check_branch
      %80 = sbr.rel (0) target = $region25
    $region24: #{network_forward.1} parent=1 // pred_region
      %s82 = ssub.s32 64, 64
      %83 = vsyncadd [#allocation15], %s82
      %s85 = sshll.u32 [#allocation14], 4
      %s86 = int_to_ptr.vmem [resolvable:$true] %s85
      %88 = dma.hbm_to_vmem [thread:$0]  %s5, 64, %s86, [#allocation15]
    $region25: #{network_forward.1} parent=1 // pred_fallthru
      _
    // Predicated region
    $region26: #{network_forward.1} parent=1 // pred_check
      _
    $region27: #{network_forward.1} parent=1 // pred_check_branch
      %90 = sbr.rel (0) target = $region29
    $region28: #{network_forward.1} parent=1 // pred_region
      %s92 = ssub.s32 49152, 49152
      %93 = vsyncadd [#allocation15], %s92
      %s94 = sshll.u32 [#allocation16], 4
      %s95 = int_to_ptr.vmem [resolvable:$true] %s94
      %100 = dma.hbm_to_vmem [thread:$0]  %s6, 49152, %s95, [#allocation15], 128, 128, 8
    $region29: #{network_forward.1} parent=1 // pred_fallthru
      _
    // Predicated region
    $region30: #{network_forward.1} parent=1 // pred_check
      _
    $region31: #{network_forward.1} parent=1 // pred_check_branch
      %102 = sbr.rel (0) target = $region33
    $region32: #{network_forward.1} parent=1 // pred_region
      %s104 = ssub.s32 16, 16
      %105 = vsyncadd [#allocation18], %s104
      %s107 = sshll.u32 [#allocation17], 4
      %s108 = int_to_ptr.vmem [resolvable:$true] %s107
      %110 = dma.hbm_to_vmem [thread:$0]  %s7, 16, %s108, [#allocation18]
    $region33: #{network_forward.1} parent=1 // pred_fallthru
      _
    // Predicated region
    $region34: #{network_forward.1} parent=1 // pred_check
      _
    $region35: #{network_forward.1} parent=1 // pred_check_branch
      %112 = sbr.rel (0) target = $region37
    $region36: #{network_forward.1} parent=1 // pred_region
      %113 = dma.done [#allocation6], 768
    $region37: #{network_forward.1} parent=1 // pred_fallthru
      _
    // Predicated region
    $region38: #{network_forward.1} parent=1 // pred_check
      _
    $region39: #{network_forward.1} parent=1 // pred_check_branch
      %115 = sbr.rel (0) target = $region41
    $region40: #{network_forward.1} parent=1 // pred_region
      %116 = dma.done [#allocation9], 1536
    $region41: #{network_forward.1} parent=1 // pred_fallthru
      _
    // Predicated region
    $region42: #{network_forward.1} parent=1 // pred_check
      _
    $region43: #{network_forward.1} parent=1 // pred_check_branch
      %118 = sbr.rel (0) target = $region45
    $region44: #{network_forward.1} parent=1 // pred_region
      %119 = dma.done [#allocation9], 49152
    $region45: #{network_forward.1} parent=1 // pred_fallthru
      _
    // Predicated region
    $region46: #{network_forward.1} parent=1 // pred_check
      _
    $region47: #{network_forward.1} parent=1 // pred_check_branch
      %121 = sbr.rel (0) target = $region49
    $region48: #{network_forward.1} parent=1 // pred_region
      %122 = dma.done [#allocation12], 160
    $region49: #{network_forward.1} parent=1 // pred_fallthru
      _
    // Predicated region
    $region50: #{network_forward.1} parent=1 // pred_check
      _
    $region51: #{network_forward.1} parent=1 // pred_check_branch
      %124 = sbr.rel (0) target = $region53
    $region52: #{network_forward.1} parent=1 // pred_region
      %125 = dma.done [#allocation12], 24576
    $region53: #{network_forward.1} parent=1 // pred_fallthru
      _
    // Predicated region
    $region54: #{network_forward.1} parent=1 // pred_check
      _
    $region55: #{network_forward.1} parent=1 // pred_check_branch
      %127 = sbr.rel (0) target = $region57
    $region56: #{network_forward.1} parent=1 // pred_region
      %128 = dma.done [#allocation15], 64
    $region57: #{network_forward.1} parent=1 // pred_fallthru
      _
    // Predicated region
    $region58: #{network_forward.1} parent=1 // pred_check
      _
    $region59: #{network_forward.1} parent=1 // pred_check_branch
      %130 = sbr.rel (0) target = $region61
    $region60: #{network_forward.1} parent=1 // pred_region
      %131 = dma.done [#allocation15], 49152
    $region61: #{network_forward.1} parent=1 // pred_fallthru
      _
    // Predicated region
    $region62: #{network_forward.1} parent=1 // pred_check
      _
    $region63: #{network_forward.1} parent=1 // pred_check_branch
      %133 = sbr.rel (0) target = $region65
    $region64: #{network_forward.1} parent=1 // pred_region
      %134 = dma.done [#allocation18], 16
    $region65: #{network_forward.1} parent=1 // pred_fallthru
      _
    %v136 = vlaneseq
    %v137 = vshrl.u32 %v136, 7
    %v138 = vadd.s32 %v137, 8
    %v139 = vadd.s32 %v137, 16
    %v140 = vadd.s32 %v137, 24
    %v141 = vadd.s32 %v137, 32
    %v142 = vadd.s32 %v137, 40
    %v143 = vadd.s32 %v137, 48
    %v144 = vadd.s32 %v137, 56
    %vm145 = vcmp.lt.s32.totalorder %v137, 0
    %v146 = vsub.s32 0, %v137
    %v147 = vsel %vm145, %v146, %v137
    %v148 = vshrl.u32 %v147, 3
    %v149 = vand.u32 %v147, 7
    %v150 = vsub.s32 0, %v149
    %v151 = vsel %vm145, %v150, %v149
    %vm152 = vcmp.lt.s32.totalorder %v138, 0
    %v153 = vsub.s32 0, %v138
    %v154 = vsel %vm152, %v153, %v138
    %v155 = vshrl.u32 %v154, 3
    %v156 = vand.u32 %v154, 7
    %v157 = vsub.s32 0, %v156
    %v158 = vsel %vm152, %v157, %v156
    %vm159 = vcmp.lt.s32.totalorder %v139, 0
    %v160 = vsub.s32 0, %v139
    %v161 = vsel %vm159, %v160, %v139
    %v162 = vshrl.u32 %v161, 3
    %v163 = vand.u32 %v161, 7
    %v164 = vsub.s32 0, %v163
    %v165 = vsel %vm159, %v164, %v163
    %vm166 = vcmp.lt.s32.totalorder %v140, 0
    %v167 = vsub.s32 0, %v140
    %v168 = vsel %vm166, %v167, %v140
    %v169 = vshrl.u32 %v168, 3
    %v170 = vand.u32 %v168, 7
    %v171 = vsub.s32 0, %v170
    %v172 = vsel %vm166, %v171, %v170
    %vm173 = vcmp.lt.s32.totalorder %v141, 0
    %v174 = vsub.s32 0, %v141
    %v175 = vsel %vm173, %v174, %v141
    %v176 = vshrl.u32 %v175, 3
    %v177 = vand.u32 %v175, 7
    %v178 = vsub.s32 0, %v177
    %v179 = vsel %vm173, %v178, %v177
    %vm180 = vcmp.lt.s32.totalorder %v142, 0
    %v181 = vsub.s32 0, %v142
    %v182 = vsel %vm180, %v181, %v142
    %v183 = vshrl.u32 %v182, 3
    %v184 = vand.u32 %v182, 7
    %v185 = vsub.s32 0, %v184
    %v186 = vsel %vm180, %v185, %v184
    %vm187 = vcmp.lt.s32.totalorder %v143, 0
    %v188 = vsub.s32 0, %v143
    %v189 = vsel %vm187, %v188, %v143
    %v190 = vshrl.u32 %v189, 3
    %v191 = vand.u32 %v189, 7
    %v192 = vsub.s32 0, %v191
    %v193 = vsel %vm187, %v192, %v191
    %vm194 = vcmp.lt.s32.totalorder %v144, 0
    %v195 = vsub.s32 0, %v144
    %v196 = vsel %vm194, %v195, %v144
    %v197 = vshrl.u32 %v196, 3
    %v198 = vand.u32 %v196, 7
    %v199 = vsub.s32 0, %v198
    %v200 = vsel %vm194, %v199, %v198
    %vm201 = vcmp.ne.s32.totalorder %v151, 0
    %vm202 = vcmp.ne.s32.totalorder %v158, 0
    %vm203 = vcmp.ne.s32.totalorder %v165, 0
    %vm204 = vcmp.ne.s32.totalorder %v172, 0
    %vm205 = vcmp.ne.s32.totalorder %v179, 0
    %vm206 = vcmp.ne.s32.totalorder %v186, 0
    %vm207 = vcmp.ne.s32.totalorder %v193, 0
    %vm208 = vcmp.ne.s32.totalorder %v200, 0
    %vm209 = vcmp.lt.s32.totalorder %v151, 0
    %vm210 = vcmp.lt.s32.totalorder %v158, 0
    %vm211 = vcmp.lt.s32.totalorder %v165, 0
    %vm212 = vcmp.lt.s32.totalorder %v172, 0
    %vm213 = vcmp.lt.s32.totalorder %v179, 0
    %vm214 = vcmp.lt.s32.totalorder %v186, 0
    %vm215 = vcmp.lt.s32.totalorder %v193, 0
    %vm216 = vcmp.lt.s32.totalorder %v200, 0
    %vm217 = vmand %vm209, %vm201
    %vm218 = vmand %vm210, %vm202
    %vm219 = vmand %vm211, %vm203
    %vm220 = vmand %vm212, %vm204
    %vm221 = vmand %vm213, %vm205
    %vm222 = vmand %vm214, %vm206
    %vm223 = vmand %vm215, %vm207
    %vm224 = vmand %vm216, %vm208
    %v225 = vadd.s32 %v151, 8
    %v226 = vadd.s32 %v158, 8
    %v227 = vadd.s32 %v165, 8
    %v228 = vadd.s32 %v172, 8
    %v229 = vadd.s32 %v179, 8
    %v230 = vadd.s32 %v186, 8
    %v231 = vadd.s32 %v193, 8
    %v232 = vadd.s32 %v200, 8
    %v233 = vsel %vm217, %v225, %v151
    %v234 = vsel %vm218, %v226, %v158
    %v235 = vsel %vm219, %v227, %v165
    %v236 = vsel %vm220, %v228, %v172
    %v237 = vsel %vm221, %v229, %v179
    %v238 = vsel %vm222, %v230, %v186
    %v239 = vsel %vm223, %v231, %v193
    %v240 = vsel %vm224, %v232, %v200
    %vm241 = vcmp.ne.s32.totalorder %v233, 0
    %vm242 = vcmp.ne.s32.totalorder %v234, 0
    %vm243 = vcmp.ne.s32.totalorder %v235, 0
    %vm244 = vcmp.ne.s32.totalorder %v236, 0
    %vm245 = vcmp.ne.s32.totalorder %v237, 0
    %vm246 = vcmp.ne.s32.totalorder %v238, 0
    %vm247 = vcmp.ne.s32.totalorder %v239, 0
    %vm248 = vcmp.ne.s32.totalorder %v240, 0
    %vm249 = vcmp.ne.s32.totalorder %v233, 7
    %vm250 = vcmp.ne.s32.totalorder %v234, 7
    %vm251 = vcmp.ne.s32.totalorder %v235, 7
    %vm252 = vcmp.ne.s32.totalorder %v236, 7
    %vm253 = vcmp.ne.s32.totalorder %v237, 7
    %vm254 = vcmp.ne.s32.totalorder %v238, 7
    %vm255 = vcmp.ne.s32.totalorder %v239, 7
    %vm256 = vcmp.ne.s32.totalorder %v240, 7
    %vm257 = vmand %vm241, %vm249
    %vm258 = vmand %vm242, %vm250
    %vm259 = vmand %vm243, %vm251
    %vm260 = vmand %vm244, %vm252
    %vm261 = vmand %vm245, %vm253
    %vm262 = vmand %vm246, %vm254
    %vm263 = vmand %vm247, %vm255
    %vm264 = vmand %vm248, %vm256
    %v265 = vld [vmem:[#allocation8] sm:$0xff]
    %v266 = vld [vmem:[#allocation8 + $0x8] sm:$0xff]
    %v267 = vld [vmem:[#allocation8 + $0x10] sm:$0xff]
    %v268 = vld [vmem:[#allocation8 + $0x18] sm:$0xff]
    %v269 = vld [vmem:[#allocation5 + $0x4] sm:$0x8]
    %v270 = vld [vmem:[#allocation5 + $0x8] sm:$0xf]
    %v271 = vld [vmem:[#allocation5 + $0xc] sm:$0xf]
    %v272 = vld [vmem:[#allocation5 + $0x10] sm:$0xf]
    %v273 = vld [vmem:[#allocation5 + $0x14] sm:$0xf]
    %v274 = vld [vmem:[#allocation5 + $0x18] sm:$0xf]
    %v275 = vld [vmem:[#allocation5 + $0x1c] sm:$0xf]
    %v276 = vld [vmem:[#allocation5 + $0x20] sm:$0xf]
    %v277 = vld [vmem:[#allocation5 + $0x24] sm:$0xf]
    %s278 = scalar_lea.vmem [#allocation8], 32
    %v279 = vld [vmem:[%s278] sm:$0xff]
    %v280 = vld [vmem:[%s278 + $0x8] sm:$0xff]
    %v281 = vld [vmem:[%s278 + $0x10] sm:$0xff]
    %v282 = vld [vmem:[%s278 + $0x18] sm:$0xff]
    %v291 = vunpack.c.l.b16 %v270
    %v292 = vunpack.c.l.b16 %v271
    %v293 = vunpack.c.l.b16 %v272
    %v294 = vunpack.c.l.b16 %v273
    %v295 = vunpack.c.l.b16 %v274
    %v296 = vunpack.c.l.b16 %v275
    %v297 = vunpack.c.l.b16 %v276
    %v298 = vunpack.c.l.b16 %v277
    %v299 = vpack.c.b16 %v292, %v291
    %v300 = vpack.c.b16 %v294, %v293
    %v301 = vpack.c.b16 %v296, %v295
    %v302 = vpack.c.b16 %v298, %v297
    %v307 = vunpack.c.l.b16 %v279
    %v308 = vunpack.c.h.b16 %v279
    %v309 = vunpack.c.l.b16 %v280
    %v310 = vunpack.c.h.b16 %v280
    %v311 = vunpack.c.l.b16 %v281
    %v312 = vunpack.c.h.b16 %v281
    %v313 = vunpack.c.l.b16 %v282
    %v314 = vunpack.c.h.b16 %v282
    %v315 = vpack.c.b16 %v309, %v307
    %v316 = vpack.c.b16 %v310, %v308
    %v317 = vpack.c.b16 %v313, %v311
    %v318 = vpack.c.b16 %v314, %v312
    %vm323 = vcmask 261120
    %v325 = vsel %vm323, %v299, 0
    %v328 = vsel %vm323, %v300, 0
    %v331 = vsel %vm323, %v301, 0
    %v334 = vsel %vm323, %v302, 0
    %336 = vmatprep.subr.bf16.mxu0 %v316
    %337 = vmatpush1.bf16.msra.mxu0 %v315
    %338 = vmatprep.subr.bf16.mxu0 %v318
    %339 = vmatpush1.bf16.msra.mxu0 %v317
    %340 = vmatprep.subr.bf16.mxu0 0
    %341 = vmatpush1.bf16.msra.mxu0 0
    %342 = vmatprep.subr.bf16.mxu0 0
    %343 = vmatpush1.bf16.msra.mxu0 0
    %344 = vmatprep.subr.bf16.mxu0 0
    %345 = vmatpush1.bf16.msra.mxu0 0
    %346 = vmatprep.subr.bf16.mxu0 0
    %347 = vmatpush1.bf16.msra.mxu0 0
    %348 = vmatprep.subr.bf16.mxu0 0
    %349 = vmatpush1.bf16.msra.mxu0 0
    %350 = vmatprep.subr.bf16.mxu0 0
    %351 = vmatpush1.bf16.msra.mxu0 0
    %352 = vmatprep.subr.bf16.mxu0 0
    %353 = vmatpush1.bf16.msra.mxu0 0
    %354 = vmatprep.subr.bf16.mxu0 0
    %355 = vmatpush1.bf16.msra.mxu0 0
    %356 = vmatprep.subr.bf16.mxu0 0
    %357 = vmatpush1.bf16.msra.mxu0 0
    %358 = vmatprep.subr.bf16.mxu0 0
    %359 = vmatpush1.bf16.msra.mxu0 0
    %360 = vmatprep.subr.bf16.mxu0 0
    %361 = vmatpush1.bf16.msra.mxu0 0
    %362 = vmatprep.subr.bf16.mxu0 0
    %363 = vmatpush1.bf16.msra.mxu0 0
    %364 = vmatprep.subr.bf16.mxu0 0
    %365 = vmatpush1.bf16.msra.mxu0 0
    %366 = vmatprep.subr.bf16.mxu0 0
    %367 = vmatpush1.bf16.msra.mxu0 0
    %368 = vmatprep.mubr.bf16.mxu0 0
    %369 = vmatmul.mubr.bf16.gmra.mrb[0].mxu0 %v325
    %v370 = vpop.f32.mrb[0].mxu0
    %v371 = vadd.f32 0.0, %v370
    %v372 = vpop.f32.mrb[0].mxu0
    %v373 = vadd.f32 0.0, %v372
    %v374 = vpop.f32.mrb[0].mxu0
    %v375 = vadd.f32 0.0, %v374
    %v376 = vpop.f32.mrb[0].mxu0
    %v377 = vadd.f32 0.0, %v376
    %378 = vmatprep.mubr.bf16.mxu0 0
    %379 = vmatmul.mubr.bf16.gmra.mrb[0].mxu0 %v328
    %v380 = vpop.f32.mrb[0].mxu0
    %v381 = vadd.f32 0.0, %v380
    %v382 = vpop.f32.mrb[0].mxu0
    %v383 = vadd.f32 0.0, %v382
    %v384 = vpop.f32.mrb[0].mxu0
    %v385 = vadd.f32 0.0, %v384
    %v386 = vpop.f32.mrb[0].mxu0
    %v387 = vadd.f32 0.0, %v386
    %388 = vmatprep.mubr.bf16.mxu0 0
    %389 = vmatmul.mubr.bf16.gmra.mrb[0].mxu0 %v331
    %v390 = vpop.f32.mrb[0].mxu0
    %v391 = vadd.f32 0.0, %v390
    %v392 = vpop.f32.mrb[0].mxu0
    %v393 = vadd.f32 0.0, %v392
    %v394 = vpop.f32.mrb[0].mxu0
    %v395 = vadd.f32 0.0, %v394
    %v396 = vpop.f32.mrb[0].mxu0
    %v397 = vadd.f32 0.0, %v396
    %398 = vmatprep.mubr.bf16.mxu0 0
    %399 = vmatmul.mubr.bf16.gmra.mrb[0].mxu0 %v334
    %v400 = vpop.f32.mrb[0].mxu0
    %v401 = vadd.f32 0.0, %v400
    %v402 = vpop.f32.mrb[0].mxu0
    %v403 = vadd.f32 0.0, %v402
    %v404 = vpop.f32.mrb[0].mxu0
    %v405 = vadd.f32 0.0, %v404
    %v406 = vpop.f32.mrb[0].mxu0
    %v407 = vadd.f32 0.0, %v406
    %408 = vdwg.mxu0
    %v410 = vunpack.c.l.b16 %v269
    %v411 = vpack.c.b16 %v291, %v410
    %v412 = vpack.c.b16 %v293, %v292
    %v413 = vpack.c.b16 %v295, %v294
    %v414 = vpack.c.b16 %v297, %v296
    %v415 = vpack.c.b16 %v298, %v298
    %vm416 = vsmask.f32 4352
    %v418 = vshrl.u32 %v411, 16
    %v420 = vrot.slane %v418, 3
    %v421 = vshll.u32 %v411, 16
    %v423 = vrot.slane %v421, 4
    %v424 = vor.u32 %v420, %v423
    %v426 = vshrl.u32 %v412, 16
    %v428 = vrot.slane %v426, 3
    %v429 = vshll.u32 %v412, 16
    %v431 = vrot.slane %v429, 4
    %v432 = vor.u32 %v428, %v431
    %v433 = vsel %vm416, %v424, %v432
    %v435 = vshrl.u32 %v413, 16
    %v437 = vrot.slane %v435, 3
    %v438 = vshll.u32 %v413, 16
    %v440 = vrot.slane %v438, 4
    %v441 = vor.u32 %v437, %v440
    %v442 = vsel %vm416, %v432, %v441
    %v444 = vshrl.u32 %v414, 16
    %v446 = vrot.slane %v444, 3
    %v447 = vshll.u32 %v414, 16
    %v449 = vrot.slane %v447, 4
    %v450 = vor.u32 %v446, %v449
    %v451 = vsel %vm416, %v441, %v450
    %v453 = vshrl.u32 %v415, 16
    %v455 = vrot.slane %v453, 3
    %v456 = vshll.u32 %v415, 16
    %v458 = vrot.slane %v456, 4
    %v459 = vor.u32 %v455, %v458
    %v460 = vsel %vm416, %v450, %v459
    %v465 = vunpack.c.l.b16 %v265
    %v466 = vunpack.c.h.b16 %v265
    %v467 = vunpack.c.l.b16 %v266
    %v468 = vunpack.c.h.b16 %v266
    %v469 = vunpack.c.l.b16 %v267
    %v470 = vunpack.c.h.b16 %v267
    %v471 = vunpack.c.l.b16 %v268
    %v472 = vunpack.c.h.b16 %v268
    %v473 = vpack.c.b16 %v467, %v465
    %v474 = vpack.c.b16 %v468, %v466
    %v475 = vpack.c.b16 %v471, %v469
    %v476 = vpack.c.b16 %v472, %v470
    %v482 = vsel %vm323, %v433, 0
    %v485 = vsel %vm323, %v442, 0
    %v488 = vsel %vm323, %v451, 0
    %v491 = vsel %vm323, %v460, 0
    %493 = vmatprep.subr.bf16.mxu0 %v474
    %494 = vmatpush1.bf16.msra.mxu0 %v473
    %495 = vmatprep.subr.bf16.mxu0 %v476
    %496 = vmatpush1.bf16.msra.mxu0 %v475
    %497 = vmatprep.subr.bf16.mxu0 0
    %498 = vmatpush1.bf16.msra.mxu0 0
    %499 = vmatprep.subr.bf16.mxu0 0
    %500 = vmatpush1.bf16.msra.mxu0 0
    %501 = vmatprep.subr.bf16.mxu0 0
    %502 = vmatpush1.bf16.msra.mxu0 0
    %503 = vmatprep.subr.bf16.mxu0 0
    %504 = vmatpush1.bf16.msra.mxu0 0
    %505 = vmatprep.subr.bf16.mxu0 0
    %506 = vmatpush1.bf16.msra.mxu0 0
    %507 = vmatprep.subr.bf16.mxu0 0
    %508 = vmatpush1.bf16.msra.mxu0 0
    %509 = vmatprep.subr.bf16.mxu0 0
    %510 = vmatpush1.bf16.msra.mxu0 0
    %511 = vmatprep.subr.bf16.mxu0 0
    %512 = vmatpush1.bf16.msra.mxu0 0
    %513 = vmatprep.subr.bf16.mxu0 0
    %514 = vmatpush1.bf16.msra.mxu0 0
    %515 = vmatprep.subr.bf16.mxu0 0
    %516 = vmatpush1.bf16.msra.mxu0 0
    %517 = vmatprep.subr.bf16.mxu0 0
    %518 = vmatpush1.bf16.msra.mxu0 0
    %519 = vmatprep.subr.bf16.mxu0 0
    %520 = vmatpush1.bf16.msra.mxu0 0
    %521 = vmatprep.subr.bf16.mxu0 0
    %522 = vmatpush1.bf16.msra.mxu0 0
    %523 = vmatprep.subr.bf16.mxu0 0
    %524 = vmatpush1.bf16.msra.mxu0 0
    %525 = vmatprep.mubr.bf16.mxu0 0
    %526 = vmatmul.mubr.bf16.gmra.mrb[0].mxu0 %v482
    %v527 = vpop.f32.mrb[0].mxu0
    %v528 = vadd.f32 %v371, %v527
    %v529 = vpop.f32.mrb[0].mxu0
    %v530 = vadd.f32 %v373, %v529
    %v531 = vpop.f32.mrb[0].mxu0
    %v532 = vadd.f32 %v375, %v531
    %v533 = vpop.f32.mrb[0].mxu0
    %v534 = vadd.f32 %v377, %v533
    %535 = vmatprep.mubr.bf16.mxu0 0
    %536 = vmatmul.mubr.bf16.gmra.mrb[0].mxu0 %v485
    %v537 = vpop.f32.mrb[0].mxu0
    %v538 = vadd.f32 %v381, %v537
    %v539 = vpop.f32.mrb[0].mxu0
    %v540 = vadd.f32 %v383, %v539
    %v541 = vpop.f32.mrb[0].mxu0
    %v542 = vadd.f32 %v385, %v541
    %v543 = vpop.f32.mrb[0].mxu0
    %v544 = vadd.f32 %v387, %v543
    %545 = vmatprep.mubr.bf16.mxu0 0
    %546 = vmatmul.mubr.bf16.gmra.mrb[0].mxu0 %v488
    %v547 = vpop.f32.mrb[0].mxu0
    %v548 = vadd.f32 %v391, %v547
    %v549 = vpop.f32.mrb[0].mxu0
    %v550 = vadd.f32 %v393, %v549
    %v551 = vpop.f32.mrb[0].mxu0
    %v552 = vadd.f32 %v395, %v551
    %v553 = vpop.f32.mrb[0].mxu0
    %v554 = vadd.f32 %v397, %v553
    %555 = vmatprep.mubr.bf16.mxu0 0
    %556 = vmatmul.mubr.bf16.gmra.mrb[0].mxu0 %v491
    %v557 = vpop.f32.mrb[0].mxu0
    %v558 = vadd.f32 %v401, %v557
    %v559 = vpop.f32.mrb[0].mxu0
    %v560 = vadd.f32 %v403, %v559
    %v561 = vpop.f32.mrb[0].mxu0
    %v562 = vadd.f32 %v405, %v561
    %v563 = vpop.f32.mrb[0].mxu0
    %v564 = vadd.f32 %v407, %v563
    %565 = vdwg.mxu0
    %s566 = scalar_lea.vmem [#allocation8], 64
    %v567 = vld [vmem:[%s566] sm:$0xff]
    %v568 = vld [vmem:[%s566 + $0x8] sm:$0xff]
    %v569 = vld [vmem:[%s566 + $0x10] sm:$0xff]
    %v570 = vld [vmem:[%s566 + $0x18] sm:$0xff]
    %v571 = vld [vmem:[#allocation5 + $0x8] sm:$0xf]
    %v572 = vld [vmem:[#allocation5 + $0xc] sm:$0xf]
    %v573 = vld [vmem:[#allocation5 + $0x10] sm:$0xf]
    %v574 = vld [vmem:[#allocation5 + $0x14] sm:$0xf]
    %v575 = vld [vmem:[#allocation5 + $0x18] sm:$0xf]
    %v576 = vld [vmem:[#allocation5 + $0x1c] sm:$0xf]
    %v577 = vld [vmem:[#allocation5 + $0x20] sm:$0xf]
    %v578 = vld [vmem:[#allocation5 + $0x24] sm:$0xf]
    %v579 = vld [vmem:[#allocation5 + $0x28] sm:$0x1]
    %v589 = vunpack.c.l.b16 %v571
    %v590 = vunpack.c.l.b16 %v572
    %v591 = vunpack.c.l.b16 %v573
    %v592 = vunpack.c.l.b16 %v574
    %v593 = vunpack.c.l.b16 %v575
    %v594 = vunpack.c.l.b16 %v576
    %v595 = vunpack.c.l.b16 %v577
    %v596 = vunpack.c.l.b16 %v578
    %v597 = vunpack.c.l.b16 %v579
    %v598 = vpack.c.b16 %v590, %v589
    %v599 = vpack.c.b16 %v592, %v591
    %v600 = vpack.c.b16 %v594, %v593
    %v601 = vpack.c.b16 %v596, %v595
    %v602 = vpack.c.b16 %v597, %v597
    %vm603 = vsmask.f32 7424
    %v605 = vshrl.u32 %v598, 16
    %v607 = vshll.u32 %v598, 16
    %v609 = vrot.slane %v607, 1
    %v610 = vor.u32 %v605, %v609
    %v612 = vshll.u32 %v599, 16
    %v614 = vrot.slane %v612, 1
    %v615 = vsel %vm603, %v610, %v614
    %v616 = vshrl.u32 %v599, 16
    %v618 = vor.u32 %v616, %v614
    %v620 = vshll.u32 %v600, 16
    %v622 = vrot.slane %v620, 1
    %v623 = vsel %vm603, %v618, %v622
    %v624 = vshrl.u32 %v600, 16
    %v626 = vor.u32 %v624, %v622
    %v628 = vshll.u32 %v601, 16
    %v630 = vrot.slane %v628, 1
    %v631 = vsel %vm603, %v626, %v630
    %v632 = vshrl.u32 %v601, 16
    %v634 = vor.u32 %v632, %v630
    %v636 = vshll.u32 %v602, 16
    %v638 = vrot.slane %v636, 1
    %v639 = vsel %vm603, %v634, %v638
    %v644 = vunpack.c.l.b16 %v567
    %v645 = vunpack.c.h.b16 %v567
    %v646 = vunpack.c.l.b16 %v568
    %v647 = vunpack.c.h.b16 %v568
    %v648 = vunpack.c.l.b16 %v569
    %v649 = vunpack.c.h.b16 %v569
    %v650 = vunpack.c.l.b16 %v570
    %v651 = vunpack.c.h.b16 %v570
    %v652 = vpack.c.b16 %v646, %v644
    %v653 = vpack.c.b16 %v647, %v645
    %v654 = vpack.c.b16 %v650, %v648
    %v655 = vpack.c.b16 %v651, %v649
    %v661 = vsel %vm323, %v615, 0
    %v664 = vsel %vm323, %v623, 0
    %v667 = vsel %vm323, %v631, 0
    %v670 = vsel %vm323, %v639, 0
    %672 = vmatprep.subr.bf16.mxu0 %v653
    %673 = vmatpush1.bf16.msra.mxu0 %v652
    %674 = vmatprep.subr.bf16.mxu0 %v655
    %675 = vmatpush1.bf16.msra.mxu0 %v654
    %676 = vmatprep.subr.bf16.mxu0 0
    %677 = vmatpush1.bf16.msra.mxu0 0
    %678 = vmatprep.subr.bf16.mxu0 0
    %679 = vmatpush1.bf16.msra.mxu0 0
    %680 = vmatprep.subr.bf16.mxu0 0
    %681 = vmatpush1.bf16.msra.mxu0 0
    %682 = vmatprep.subr.bf16.mxu0 0
    %683 = vmatpush1.bf16.msra.mxu0 0
    %684 = vmatprep.subr.bf16.mxu0 0
    %685 = vmatpush1.bf16.msra.mxu0 0
    %686 = vmatprep.subr.bf16.mxu0 0
    %687 = vmatpush1.bf16.msra.mxu0 0
    %688 = vmatprep.subr.bf16.mxu0 0
    %689 = vmatpush1.bf16.msra.mxu0 0
    %690 = vmatprep.subr.bf16.mxu0 0
    %691 = vmatpush1.bf16.msra.mxu0 0
    %692 = vmatprep.subr.bf16.mxu0 0
    %693 = vmatpush1.bf16.msra.mxu0 0
    %694 = vmatprep.subr.bf16.mxu0 0
    %695 = vmatpush1.bf16.msra.mxu0 0
    %696 = vmatprep.subr.bf16.mxu0 0
    %697 = vmatpush1.bf16.msra.mxu0 0
    %698 = vmatprep.subr.bf16.mxu0 0
    %699 = vmatpush1.bf16.msra.mxu0 0
    %700 = vmatprep.subr.bf16.mxu0 0
    %701 = vmatpush1.bf16.msra.mxu0 0
    %702 = vmatprep.subr.bf16.mxu0 0
    %703 = vmatpush1.bf16.msra.mxu0 0
    %704 = vmatprep.mubr.bf16.mxu0 0
    %705 = vmatmul.mubr.bf16.gmra.mrb[0].mxu0 %v661
    %v706 = vpop.f32.mrb[0].mxu0
    %v707 = vadd.f32 0.0, %v706
    %v708 = vpop.f32.mrb[0].mxu0
    %v709 = vadd.f32 0.0, %v708
    %v710 = vpop.f32.mrb[0].mxu0
    %v711 = vadd.f32 0.0, %v710
    %v712 = vpop.f32.mrb[0].mxu0
    %v713 = vadd.f32 0.0, %v712
    %714 = vmatprep.mubr.bf16.mxu0 0
    %715 = vmatmul.mubr.bf16.gmra.mrb[0].mxu0 %v664
    %v716 = vpop.f32.mrb[0].mxu0
    %v717 = vadd.f32 0.0, %v716
    %v718 = vpop.f32.mrb[0].mxu0
    %v719 = vadd.f32 0.0, %v718
    %v720 = vpop.f32.mrb[0].mxu0
    %v721 = vadd.f32 0.0, %v720
    %v722 = vpop.f32.mrb[0].mxu0
    %v723 = vadd.f32 0.0, %v722
    %724 = vmatprep.mubr.bf16.mxu0 0
    %725 = vmatmul.mubr.bf16.gmra.mrb[0].mxu0 %v667
    %v726 = vpop.f32.mrb[0].mxu0
    %v727 = vadd.f32 0.0, %v726
    %v728 = vpop.f32.mrb[0].mxu0
    %v729 = vadd.f32 0.0, %v728
    %v730 = vpop.f32.mrb[0].mxu0
    %v731 = vadd.f32 0.0, %v730
    %v732 = vpop.f32.mrb[0].mxu0
    %v733 = vadd.f32 0.0, %v732
    %734 = vmatprep.mubr.bf16.mxu0 0
    %735 = vmatmul.mubr.bf16.gmra.mrb[0].mxu0 %v670
    %v736 = vpop.f32.mrb[0].mxu0
    %v737 = vadd.f32 0.0, %v736
    %v738 = vpop.f32.mrb[0].mxu0
    %v739 = vadd.f32 0.0, %v738
    %v740 = vpop.f32.mrb[0].mxu0
    %v741 = vadd.f32 0.0, %v740
    %v742 = vpop.f32.mrb[0].mxu0
    %v743 = vadd.f32 0.0, %v742
    %744 = vdwg.mxu0
    %v745 = vadd.f32 %v528, %v707
    %v746 = vadd.f32 %v530, %v709
    %v747 = vadd.f32 %v532, %v711
    %v748 = vadd.f32 %v534, %v713
    %v749 = vadd.f32 %v538, %v717
    %v750 = vadd.f32 %v540, %v719
    %v751 = vadd.f32 %v542, %v721
    %v752 = vadd.f32 %v544, %v723
    %v753 = vadd.f32 %v548, %v727
    %v754 = vadd.f32 %v550, %v729
    %v755 = vadd.f32 %v552, %v731
    %v756 = vadd.f32 %v554, %v733
    %v757 = vadd.f32 %v558, %v737
    %v758 = vadd.f32 %v560, %v739
    %v759 = vadd.f32 %v562, %v741
    %v760 = vadd.f32 %v564, %v743
    %v761 = vld [vmem:[#allocation11] sm:$0x3]
    %v763 = vlaneseq
    %v764 = vshrl.u32 %v763, 7
    %v765 = vsub.s32 0, %v764
    %v766 = vrot.slane %v761, %v765
    %v767 = vlaneseq
    %v768 = vshrl.u32 %v767, 7
    %v769 = vsub.s32 1, %v768
    %v770 = vrot.slane %v761, %v769
    %v773 = vadd.f32 %v745, %v766
    %v774 = vadd.f32 %v746, %v770
    %v775 = vadd.f32 %v747, %v766
    %v776 = vadd.f32 %v748, %v770
    %v777 = vadd.f32 %v749, %v766
    %v778 = vadd.f32 %v750, %v770
    %v779 = vadd.f32 %v751, %v766
    %v780 = vadd.f32 %v752, %v770
    %v781 = vadd.f32 %v753, %v766
    %v782 = vadd.f32 %v754, %v770
    %v783 = vadd.f32 %v755, %v766
    %v784 = vadd.f32 %v756, %v770
    %v785 = vadd.f32 %v757, %v766
    %v786 = vadd.f32 %v758, %v770
    %v787 = vadd.f32 %v759, %v766
    %v788 = vadd.f32 %v760, %v770
    %v789 = vmax.f32 %v773, 0.0
    %v790 = vmax.f32 %v774, 0.0
    %v791 = vmax.f32 %v775, 0.0
    %v792 = vmax.f32 %v776, 0.0
    %v793 = vmax.f32 %v777, 0.0
    %v794 = vmax.f32 %v778, 0.0
    %v795 = vmax.f32 %v779, 0.0
    %v796 = vmax.f32 %v780, 0.0
    %v797 = vmax.f32 %v781, 0.0
    %v798 = vmax.f32 %v782, 0.0
    %v799 = vmax.f32 %v783, 0.0
    %v800 = vmax.f32 %v784, 0.0
    %v801 = vmax.f32 %v785, 0.0
    %v802 = vmax.f32 %v786, 0.0
    %v803 = vmax.f32 %v787, 0.0
    %v804 = vmax.f32 %v788, 0.0
    %v805 = vsel %vm257, 1, 0
    %v806 = vsel %vm258, 1, 0
    %v807 = vsel %vm259, 1, 0
    %v808 = vsel %vm260, 1, 0
    %v809 = vsel %vm261, 1, 0
    %v810 = vsel %vm262, 1, 0
    %v811 = vsel %vm263, 1, 0
    %v812 = vsel %vm264, 1, 0
    %vm813 = vcmp.eq.s32.totalorder %v805, 1
    %vm814 = vcmp.eq.s32.totalorder %v806, 1
    %vm815 = vcmp.eq.s32.totalorder %v807, 1
    %vm816 = vcmp.eq.s32.totalorder %v808, 1
    %vm817 = vcmp.eq.s32.totalorder %v809, 1
    %vm818 = vcmp.eq.s32.totalorder %v810, 1
    %vm819 = vcmp.eq.s32.totalorder %v811, 1
    %vm820 = vcmp.eq.s32.totalorder %v812, 1
    %v821 = vsel %vm813, %v789, 0.0
    %v822 = vsel %vm813, %v790, 0.0
    %v823 = vsel %vm814, %v791, 0.0
    %v824 = vsel %vm814, %v792, 0.0
    %v825 = vsel %vm815, %v793, 0.0
    %v826 = vsel %vm815, %v794, 0.0
    %v827 = vsel %vm816, %v795, 0.0
    %v828 = vsel %vm816, %v796, 0.0
    %v829 = vsel %vm817, %v797, 0.0
    %v830 = vsel %vm817, %v798, 0.0
    %v831 = vsel %vm818, %v799, 0.0
    %v832 = vsel %vm818, %v800, 0.0
    %v833 = vsel %vm819, %v801, 0.0
    %v834 = vsel %vm819, %v802, 0.0
    %v835 = vsel %vm820, %v803, 0.0
    %v836 = vsel %vm820, %v804, 0.0
    %v837 = vpack.c.bf16 %v823, %v821
    %v838 = vpack.c.bf16 %v824, %v822
    %v839 = vpack.c.bf16 %v827, %v825
    %v840 = vpack.c.bf16 %v828, %v826
    %v841 = vpack.c.bf16 %v831, %v829
    %v842 = vpack.c.bf16 %v832, %v830
    %v843 = vpack.c.bf16 %v835, %v833
    %v844 = vpack.c.bf16 %v836, %v834
    %845 = vst [vmem:[#allocation2 + $0x10] sm:$0xff] %v837
    %846 = vst [vmem:[#allocation2 + $0x18] sm:$0xff] %v838
    %847 = vst [vmem:[#allocation2 + $0x20] sm:$0xff] %v839
    %848 = vst [vmem:[#allocation2 + $0x28] sm:$0xff] %v840
    %849 = vst [vmem:[#allocation2 + $0x30] sm:$0xff] %v841
    %850 = vst [vmem:[#allocation2 + $0x38] sm:$0xff] %v842
    %851 = vst [vmem:[#allocation2 + $0x40] sm:$0xff] %v843
    %852 = vst [vmem:[#allocation2 + $0x48] sm:$0xff] %v844
    %v853 = vld [vmem:[#allocation10] sm:$0xff]
    %v854 = vld [vmem:[#allocation10 + $0x8] sm:$0xff]
    %v855 = vld [vmem:[#allocation10 + $0x10] sm:$0xff]
    %v856 = vld [vmem:[#allocation10 + $0x18] sm:$0xff]
    %v857 = vld [vmem:[#allocation10 + $0x20] sm:$0xff]
    %v858 = vld [vmem:[#allocation10 + $0x28] sm:$0xff]
    %v859 = vld [vmem:[#allocation10 + $0x30] sm:$0xff]
    %v860 = vld [vmem:[#allocation10 + $0x38] sm:$0xff]
    %v861 = vld [vmem:[#allocation10 + $0x40] sm:$0xff]
    %v862 = vld [vmem:[#allocation10 + $0x48] sm:$0xff]
    %v863 = vld [vmem:[#allocation10 + $0x50] sm:$0xff]
    %v864 = vld [vmem:[#allocation10 + $0x58] sm:$0xff]
    %v865 = vld [vmem:[#allocation10 + $0x60] sm:$0xff]
    %v866 = vld [vmem:[#allocation10 + $0x68] sm:$0xff]
    %v867 = vld [vmem:[#allocation10 + $0x70] sm:$0xff]
    %v868 = vld [vmem:[#allocation10 + $0x78] sm:$0xff]
    %v869 = vld [vmem:[#allocation10 + $0x80] sm:$0xff]
    %v870 = vld [vmem:[#allocation10 + $0x88] sm:$0xff]
    %v871 = vld [vmem:[#allocation10 + $0x90] sm:$0xff]
    %v872 = vld [vmem:[#allocation10 + $0x98] sm:$0xff]
    %v873 = vld [vmem:[#allocation10 + $0xa0] sm:$0xff]
    %v874 = vld [vmem:[#allocation10 + $0xa8] sm:$0xff]
    %v875 = vld [vmem:[#allocation10 + $0xb0] sm:$0xff]
    %v876 = vld [vmem:[#allocation10 + $0xb8] sm:$0xff]
    %v877 = vld [vmem:[#allocation10 + $0xc0] sm:$0xff]
    %v878 = vld [vmem:[#allocation10 + $0xc8] sm:$0xff]
    %v879 = vld [vmem:[#allocation10 + $0xd0] sm:$0xff]
    %v880 = vld [vmem:[#allocation10 + $0xd8] sm:$0xff]
    %v881 = vld [vmem:[#allocation10 + $0xe0] sm:$0xff]
    %v882 = vld [vmem:[#allocation10 + $0xe8] sm:$0xff]
    %v883 = vld [vmem:[#allocation10 + $0xf0] sm:$0xff]
    %v884 = vld [vmem:[#allocation10 + $0xf8] sm:$0xff]
    %v885 = vld [vmem:[#allocation2] sm:$0x80]
    %v886 = vld [vmem:[#allocation2 + $0x8] sm:$0x80]
    %v887 = vld [vmem:[#allocation2 + $0x10] sm:$0xff]
    %v888 = vld [vmem:[#allocation2 + $0x18] sm:$0xff]
    %v889 = vld [vmem:[#allocation2 + $0x20] sm:$0xff]
    %v890 = vld [vmem:[#allocation2 + $0x28] sm:$0xff]
    %v891 = vld [vmem:[#allocation2 + $0x30] sm:$0xff]
    %v892 = vld [vmem:[#allocation2 + $0x38] sm:$0xff]
    %v893 = vld [vmem:[#allocation2 + $0x40] sm:$0xff]
    %v894 = vld [vmem:[#allocation2 + $0x48] sm:$0xff]
    %s895 = scalar_lea.vmem [#allocation10], 256
    %v896 = vld [vmem:[%s895] sm:$0xff]
    %v897 = vld [vmem:[%s895 + $0x8] sm:$0xff]
    %v898 = vld [vmem:[%s895 + $0x10] sm:$0xff]
    %v899 = vld [vmem:[%s895 + $0x18] sm:$0xff]
    %v900 = vld [vmem:[%s895 + $0x20] sm:$0xff]
    %v901 = vld [vmem:[%s895 + $0x28] sm:$0xff]
    %v902 = vld [vmem:[%s895 + $0x30] sm:$0xff]
    %v903 = vld [vmem:[%s895 + $0x38] sm:$0xff]
    %v904 = vld [vmem:[%s895 + $0x40] sm:$0xff]
    %v905 = vld [vmem:[%s895 + $0x48] sm:$0xff]
    %v906 = vld [vmem:[%s895 + $0x50] sm:$0xff]
    %v907 = vld [vmem:[%s895 + $0x58] sm:$0xff]
    %v908 = vld [vmem:[%s895 + $0x60] sm:$0xff]
    %v909 = vld [vmem:[%s895 + $0x68] sm:$0xff]
    %v910 = vld [vmem:[%s895 + $0x70] sm:$0xff]
    %v911 = vld [vmem:[%s895 + $0x78] sm:$0xff]
    %v912 = vld [vmem:[%s895 + $0x80] sm:$0xff]
    %v913 = vld [vmem:[%s895 + $0x88] sm:$0xff]
    %v914 = vld [vmem:[%s895 + $0x90] sm:$0xff]
    %v915 = vld [vmem:[%s895 + $0x98] sm:$0xff]
    %v916 = vld [vmem:[%s895 + $0xa0] sm:$0xff]
    %v917 = vld [vmem:[%s895 + $0xa8] sm:$0xff]
    %v918 = vld [vmem:[%s895 + $0xb0] sm:$0xff]
    %v919 = vld [vmem:[%s895 + $0xb8] sm:$0xff]
    %v920 = vld [vmem:[%s895 + $0xc0] sm:$0xff]
    %v921 = vld [vmem:[%s895 + $0xc8] sm:$0xff]
    %v922 = vld [vmem:[%s895 + $0xd0] sm:$0xff]
    %v923 = vld [vmem:[%s895 + $0xd8] sm:$0xff]
    %v924 = vld [vmem:[%s895 + $0xe0] sm:$0xff]
    %v925 = vld [vmem:[%s895 + $0xe8] sm:$0xff]
    %v926 = vld [vmem:[%s895 + $0xf0] sm:$0xff]
    %v927 = vld [vmem:[%s895 + $0xf8] sm:$0xff]
    %v960 = vunpack.c.l.b16 %v896
    %v961 = vunpack.c.h.b16 %v896
    %v962 = vunpack.c.l.b16 %v897
    %v963 = vunpack.c.h.b16 %v897
    %v964 = vunpack.c.l.b16 %v898
    %v965 = vunpack.c.h.b16 %v898
    %v966 = vunpack.c.l.b16 %v899
    %v967 = vunpack.c.h.b16 %v899
    %v968 = vunpack.c.l.b16 %v900
    %v969 = vunpack.c.h.b16 %v900
    %v970 = vunpack.c.l.b16 %v901
    %v971 = vunpack.c.h.b16 %v901
    %v972 = vunpack.c.l.b16 %v902
    %v973 = vunpack.c.h.b16 %v902
    %v974 = vunpack.c.l.b16 %v903
    %v975 = vunpack.c.h.b16 %v903
    %v976 = vunpack.c.l.b16 %v904
    %v977 = vunpack.c.h.b16 %v904
    %v978 = vunpack.c.l.b16 %v905
    %v979 = vunpack.c.h.b16 %v905
    %v980 = vunpack.c.l.b16 %v906
    %v981 = vunpack.c.h.b16 %v906
    %v982 = vunpack.c.l.b16 %v907
    %v983 = vunpack.c.h.b16 %v907
    %v984 = vunpack.c.l.b16 %v908
    %v985 = vunpack.c.h.b16 %v908
    %v986 = vunpack.c.l.b16 %v909
    %v987 = vunpack.c.h.b16 %v909
    %v988 = vunpack.c.l.b16 %v910
    %v989 = vunpack.c.h.b16 %v910
    %v990 = vunpack.c.l.b16 %v911
    %v991 = vunpack.c.h.b16 %v911
    %v992 = vunpack.c.l.b16 %v912
    %v993 = vunpack.c.h.b16 %v912
    %v994 = vunpack.c.l.b16 %v913
    %v995 = vunpack.c.h.b16 %v913
    %v996 = vunpack.c.l.b16 %v914
    %v997 = vunpack.c.h.b16 %v914
    %v998 = vunpack.c.l.b16 %v915
    %v999 = vunpack.c.h.b16 %v915
    %v1000 = vunpack.c.l.b16 %v916
    %v1001 = vunpack.c.h.b16 %v916
    %v1002 = vunpack.c.l.b16 %v917
    %v1003 = vunpack.c.h.b16 %v917
    %v1004 = vunpack.c.l.b16 %v918
    %v1005 = vunpack.c.h.b16 %v918
    %v1006 = vunpack.c.l.b16 %v919
    %v1007 = vunpack.c.h.b16 %v919
    %v1008 = vunpack.c.l.b16 %v920
    %v1009 = vunpack.c.h.b16 %v920
    %v1010 = vunpack.c.l.b16 %v921
    %v1011 = vunpack.c.h.b16 %v921
    %v1012 = vunpack.c.l.b16 %v922
    %v1013 = vunpack.c.h.b16 %v922
    %v1014 = vunpack.c.l.b16 %v923
    %v1015 = vunpack.c.h.b16 %v923
    %v1016 = vunpack.c.l.b16 %v924
    %v1017 = vunpack.c.h.b16 %v924
    %v1018 = vunpack.c.l.b16 %v925
    %v1019 = vunpack.c.h.b16 %v925
    %v1020 = vunpack.c.l.b16 %v926
    %v1021 = vunpack.c.h.b16 %v926
    %v1022 = vunpack.c.l.b16 %v927
    %v1023 = vunpack.c.h.b16 %v927
    %v1024 = vpack.c.b16 %v962, %v960
    %v1025 = vpack.c.b16 %v963, %v961
    %v1026 = vpack.c.b16 %v966, %v964
    %v1027 = vpack.c.b16 %v967, %v965
    %v1028 = vpack.c.b16 %v970, %v968
    %v1029 = vpack.c.b16 %v971, %v969
    %v1030 = vpack.c.b16 %v974, %v972
    %v1031 = vpack.c.b16 %v975, %v973
    %v1032 = vpack.c.b16 %v978, %v976
    %v1033 = vpack.c.b16 %v979, %v977
    %v1034 = vpack.c.b16 %v982, %v980
    %v1035 = vpack.c.b16 %v983, %v981
    %v1036 = vpack.c.b16 %v986, %v984
    %v1037 = vpack.c.b16 %v987, %v985
    %v1038 = vpack.c.b16 %v990, %v988
    %v1039 = vpack.c.b16 %v991, %v989
    %v1040 = vpack.c.b16 %v994, %v992
    %v1041 = vpack.c.b16 %v995, %v993
    %v1042 = vpack.c.b16 %v998, %v996
    %v1043 = vpack.c.b16 %v999, %v997
    %v1044 = vpack.c.b16 %v1002, %v1000
    %v1045 = vpack.c.b16 %v1003, %v1001
    %v1046 = vpack.c.b16 %v1006, %v1004
    %v1047 = vpack.c.b16 %v1007, %v1005
    %v1048 = vpack.c.b16 %v1010, %v1008
    %v1049 = vpack.c.b16 %v1011, %v1009
    %v1050 = vpack.c.b16 %v1014, %v1012
    %v1051 = vpack.c.b16 %v1015, %v1013
    %v1052 = vpack.c.b16 %v1018, %v1016
    %v1053 = vpack.c.b16 %v1019, %v1017
    %v1054 = vpack.c.b16 %v1022, %v1020
    %v1055 = vpack.c.b16 %v1023, %v1021
    %1088 = vmatprep.subr.bf16.mxu0 %v1025
    %1089 = vmatpush1.bf16.msra.mxu0 %v1024
    %1090 = vmatprep.subr.bf16.mxu0 %v1027
    %1091 = vmatpush1.bf16.msra.mxu0 %v1026
    %1092 = vmatprep.subr.bf16.mxu0 %v1029
    %1093 = vmatpush1.bf16.msra.mxu0 %v1028
    %1094 = vmatprep.subr.bf16.mxu0 %v1031
    %1095 = vmatpush1.bf16.msra.mxu0 %v1030
    %1096 = vmatprep.subr.bf16.mxu0 %v1033
    %1097 = vmatpush1.bf16.msra.mxu0 %v1032
    %1098 = vmatprep.subr.bf16.mxu0 %v1035
    %1099 = vmatpush1.bf16.msra.mxu0 %v1034
    %1100 = vmatprep.subr.bf16.mxu0 %v1037
    %1101 = vmatpush1.bf16.msra.mxu0 %v1036
    %1102 = vmatprep.subr.bf16.mxu0 %v1039
    %1103 = vmatpush1.bf16.msra.mxu0 %v1038
    %1104 = vmatprep.subr.bf16.mxu0 %v1041
    %1105 = vmatpush1.bf16.msra.mxu0 %v1040
    %1106 = vmatprep.subr.bf16.mxu0 %v1043
    %1107 = vmatpush1.bf16.msra.mxu0 %v1042
    %1108 = vmatprep.subr.bf16.mxu0 %v1045
    %1109 = vmatpush1.bf16.msra.mxu0 %v1044
    %1110 = vmatprep.subr.bf16.mxu0 %v1047
    %1111 = vmatpush1.bf16.msra.mxu0 %v1046
    %1112 = vmatprep.subr.bf16.mxu0 %v1049
    %1113 = vmatpush1.bf16.msra.mxu0 %v1048
    %1114 = vmatprep.subr.bf16.mxu0 %v1051
    %1115 = vmatpush1.bf16.msra.mxu0 %v1050
    %1116 = vmatprep.subr.bf16.mxu0 %v1053
    %1117 = vmatpush1.bf16.msra.mxu0 %v1052
    %1118 = vmatprep.subr.bf16.mxu0 %v1055
    %1119 = vmatpush1.bf16.msra.mxu0 %v1054
    %1120 = vmatprep.mubr.bf16.mxu0 %v888
    %1121 = vmatmul.mubr.bf16.gmra.mrb[0].mxu0 %v887
    %v1122 = vpop.f32.mrb[0].mxu0
    %v1123 = vadd.f32 0.0, %v1122
    %v1124 = vpop.f32.mrb[0].mxu0
    %v1125 = vadd.f32 0.0, %v1124
    %v1126 = vpop.f32.mrb[0].mxu0
    %v1127 = vadd.f32 0.0, %v1126
    %v1128 = vpop.f32.mrb[0].mxu0
    %v1129 = vadd.f32 0.0, %v1128
    %1130 = vmatprep.mubr.bf16.mxu0 %v890
    %1131 = vmatmul.mubr.bf16.gmra.mrb[0].mxu0 %v889
    %v1132 = vpop.f32.mrb[0].mxu0
    %v1133 = vadd.f32 0.0, %v1132
    %v1134 = vpop.f32.mrb[0].mxu0
    %v1135 = vadd.f32 0.0, %v1134
    %v1136 = vpop.f32.mrb[0].mxu0
    %v1137 = vadd.f32 0.0, %v1136
    %v1138 = vpop.f32.mrb[0].mxu0
    %v1139 = vadd.f32 0.0, %v1138
    %1140 = vmatprep.mubr.bf16.mxu0 %v892
    %1141 = vmatmul.mubr.bf16.gmra.mrb[0].mxu0 %v891
    %v1142 = vpop.f32.mrb[0].mxu0
    %v1143 = vadd.f32 0.0, %v1142
    %v1144 = vpop.f32.mrb[0].mxu0
    %v1145 = vadd.f32 0.0, %v1144
    %v1146 = vpop.f32.mrb[0].mxu0
    %v1147 = vadd.f32 0.0, %v1146
    %v1148 = vpop.f32.mrb[0].mxu0
    %v1149 = vadd.f32 0.0, %v1148
    %1150 = vmatprep.mubr.bf16.mxu0 %v894
    %1151 = vmatmul.mubr.bf16.gmra.mrb[0].mxu0 %v893
    %v1152 = vpop.f32.mrb[0].mxu0
    %v1153 = vadd.f32 0.0, %v1152
    %v1154 = vpop.f32.mrb[0].mxu0
    %v1155 = vadd.f32 0.0, %v1154
    %v1156 = vpop.f32.mrb[0].mxu0
    %v1157 = vadd.f32 0.0, %v1156
    %v1158 = vpop.f32.mrb[0].mxu0
    %v1159 = vadd.f32 0.0, %v1158
    %1160 = vdwg.mxu0
    %vm1161 = vsmask.f32 256
    %v1163 = vshrl.u32 %v885, 16
    %v1165 = vrot.slane %v1163, 7
    %v1167 = vshrl.u32 %v887, 16
    %v1169 = vrot.slane %v1167, 7
    %v1170 = vshll.u32 %v887, 16
    %v1172 = vor.u32 %v1169, %v1170
    %v1173 = vsel %vm1161, %v1165, %v1172
    %v1175 = vshrl.u32 %v886, 16
    %v1177 = vrot.slane %v1175, 7
    %v1179 = vshrl.u32 %v888, 16
    %v1181 = vrot.slane %v1179, 7
    %v1182 = vshll.u32 %v888, 16
    %v1184 = vor.u32 %v1181, %v1182
    %v1185 = vsel %vm1161, %v1177, %v1184
    %v1187 = vshrl.u32 %v889, 16
    %v1189 = vrot.slane %v1187, 7
    %v1190 = vshll.u32 %v889, 16
    %v1192 = vor.u32 %v1189, %v1190
    %v1193 = vsel %vm1161, %v1169, %v1192
    %v1195 = vshrl.u32 %v890, 16
    %v1197 = vrot.slane %v1195, 7
    %v1198 = vshll.u32 %v890, 16
    %v1200 = vor.u32 %v1197, %v1198
    %v1201 = vsel %vm1161, %v1181, %v1200
    %v1203 = vshrl.u32 %v891, 16
    %v1205 = vrot.slane %v1203, 7
    %v1206 = vshll.u32 %v891, 16
    %v1208 = vor.u32 %v1205, %v1206
    %v1209 = vsel %vm1161, %v1189, %v1208
    %v1211 = vshrl.u32 %v892, 16
    %v1213 = vrot.slane %v1211, 7
    %v1214 = vshll.u32 %v892, 16
    %v1216 = vor.u32 %v1213, %v1214
    %v1217 = vsel %vm1161, %v1197, %v1216
    %v1219 = vshrl.u32 %v893, 16
    %v1221 = vrot.slane %v1219, 7
    %v1222 = vshll.u32 %v893, 16
    %v1224 = vor.u32 %v1221, %v1222
    %v1225 = vsel %vm1161, %v1205, %v1224
    %v1227 = vshrl.u32 %v894, 16
    %v1229 = vrot.slane %v1227, 7
    %v1230 = vshll.u32 %v894, 16
    %v1232 = vor.u32 %v1229, %v1230
    %v1233 = vsel %vm1161, %v1213, %v1232
    %v1274 = vunpack.c.l.b16 %v853
    %v1275 = vunpack.c.h.b16 %v853
    %v1276 = vunpack.c.l.b16 %v854
    %v1277 = vunpack.c.h.b16 %v854
    %v1278 = vunpack.c.l.b16 %v855
    %v1279 = vunpack.c.h.b16 %v855
    %v1280 = vunpack.c.l.b16 %v856
    %v1281 = vunpack.c.h.b16 %v856
    %v1282 = vunpack.c.l.b16 %v857
    %v1283 = vunpack.c.h.b16 %v857
    %v1284 = vunpack.c.l.b16 %v858
    %v1285 = vunpack.c.h.b16 %v858
    %v1286 = vunpack.c.l.b16 %v859
    %v1287 = vunpack.c.h.b16 %v859
    %v1288 = vunpack.c.l.b16 %v860
    %v1289 = vunpack.c.h.b16 %v860
    %v1290 = vunpack.c.l.b16 %v861
    %v1291 = vunpack.c.h.b16 %v861
    %v1292 = vunpack.c.l.b16 %v862
    %v1293 = vunpack.c.h.b16 %v862
    %v1294 = vunpack.c.l.b16 %v863
    %v1295 = vunpack.c.h.b16 %v863
    %v1296 = vunpack.c.l.b16 %v864
    %v1297 = vunpack.c.h.b16 %v864
    %v1298 = vunpack.c.l.b16 %v865
    %v1299 = vunpack.c.h.b16 %v865
    %v1300 = vunpack.c.l.b16 %v866
    %v1301 = vunpack.c.h.b16 %v866
    %v1302 = vunpack.c.l.b16 %v867
    %v1303 = vunpack.c.h.b16 %v867
    %v1304 = vunpack.c.l.b16 %v868
    %v1305 = vunpack.c.h.b16 %v868
    %v1306 = vunpack.c.l.b16 %v869
    %v1307 = vunpack.c.h.b16 %v869
    %v1308 = vunpack.c.l.b16 %v870
    %v1309 = vunpack.c.h.b16 %v870
    %v1310 = vunpack.c.l.b16 %v871
    %v1311 = vunpack.c.h.b16 %v871
    %v1312 = vunpack.c.l.b16 %v872
    %v1313 = vunpack.c.h.b16 %v872
    %v1314 = vunpack.c.l.b16 %v873
    %v1315 = vunpack.c.h.b16 %v873
    %v1316 = vunpack.c.l.b16 %v874
    %v1317 = vunpack.c.h.b16 %v874
    %v1318 = vunpack.c.l.b16 %v875
    %v1319 = vunpack.c.h.b16 %v875
    %v1320 = vunpack.c.l.b16 %v876
    %v1321 = vunpack.c.h.b16 %v876
    %v1322 = vunpack.c.l.b16 %v877
    %v1323 = vunpack.c.h.b16 %v877
    %v1324 = vunpack.c.l.b16 %v878
    %v1325 = vunpack.c.h.b16 %v878
    %v1326 = vunpack.c.l.b16 %v879
    %v1327 = vunpack.c.h.b16 %v879
    %v1328 = vunpack.c.l.b16 %v880
    %v1329 = vunpack.c.h.b16 %v880
    %v1330 = vunpack.c.l.b16 %v881
    %v1331 = vunpack.c.h.b16 %v881
    %v1332 = vunpack.c.l.b16 %v882
    %v1333 = vunpack.c.h.b16 %v882
    %v1334 = vunpack.c.l.b16 %v883
    %v1335 = vunpack.c.h.b16 %v883
    %v1336 = vunpack.c.l.b16 %v884
    %v1337 = vunpack.c.h.b16 %v884
    %v1338 = vpack.c.b16 %v1276, %v1274
    %v1339 = vpack.c.b16 %v1277, %v1275
    %v1340 = vpack.c.b16 %v1280, %v1278
    %v1341 = vpack.c.b16 %v1281, %v1279
    %v1342 = vpack.c.b16 %v1284, %v1282
    %v1343 = vpack.c.b16 %v1285, %v1283
    %v1344 = vpack.c.b16 %v1288, %v1286
    %v1345 = vpack.c.b16 %v1289, %v1287
    %v1346 = vpack.c.b16 %v1292, %v1290
    %v1347 = vpack.c.b16 %v1293, %v1291
    %v1348 = vpack.c.b16 %v1296, %v1294
    %v1349 = vpack.c.b16 %v1297, %v1295
    %v1350 = vpack.c.b16 %v1300, %v1298
    %v1351 = vpack.c.b16 %v1301, %v1299
    %v1352 = vpack.c.b16 %v1304, %v1302
    %v1353 = vpack.c.b16 %v1305, %v1303
    %v1354 = vpack.c.b16 %v1308, %v1306
    %v1355 = vpack.c.b16 %v1309, %v1307
    %v1356 = vpack.c.b16 %v1312, %v1310
    %v1357 = vpack.c.b16 %v1313, %v1311
    %v1358 = vpack.c.b16 %v1316, %v1314
    %v1359 = vpack.c.b16 %v1317, %v1315
    %v1360 = vpack.c.b16 %v1320, %v1318
    %v1361 = vpack.c.b16 %v1321, %v1319
    %v1362 = vpack.c.b16 %v1324, %v1322
    %v1363 = vpack.c.b16 %v1325, %v1323
    %v1364 = vpack.c.b16 %v1328, %v1326
    %v1365 = vpack.c.b16 %v1329, %v1327
    %v1366 = vpack.c.b16 %v1332, %v1330
    %v1367 = vpack.c.b16 %v1333, %v1331
    %v1368 = vpack.c.b16 %v1336, %v1334
    %v1369 = vpack.c.b16 %v1337, %v1335
    %1402 = vmatprep.subr.bf16.mxu0 %v1339
    %1403 = vmatpush1.bf16.msra.mxu0 %v1338
    %1404 = vmatprep.subr.bf16.mxu0 %v1341
    %1405 = vmatpush1.bf16.msra.mxu0 %v1340
    %1406 = vmatprep.subr.bf16.mxu0 %v1343
    %1407 = vmatpush1.bf16.msra.mxu0 %v1342
    %1408 = vmatprep.subr.bf16.mxu0 %v1345
    %1409 = vmatpush1.bf16.msra.mxu0 %v1344
    %1410 = vmatprep.subr.bf16.mxu0 %v1347
    %1411 = vmatpush1.bf16.msra.mxu0 %v1346
    %1412 = vmatprep.subr.bf16.mxu0 %v1349
    %1413 = vmatpush1.bf16.msra.mxu0 %v1348
    %1414 = vmatprep.subr.bf16.mxu0 %v1351
    %1415 = vmatpush1.bf16.msra.mxu0 %v1350
    %1416 = vmatprep.subr.bf16.mxu0 %v1353
    %1417 = vmatpush1.bf16.msra.mxu0 %v1352
    %1418 = vmatprep.subr.bf16.mxu0 %v1355
    %1419 = vmatpush1.bf16.msra.mxu0 %v1354
    %1420 = vmatprep.subr.bf16.mxu0 %v1357
    %1421 = vmatpush1.bf16.msra.mxu0 %v1356
    %1422 = vmatprep.subr.bf16.mxu0 %v1359
    %1423 = vmatpush1.bf16.msra.mxu0 %v1358
    %1424 = vmatprep.subr.bf16.mxu0 %v1361
    %1425 = vmatpush1.bf16.msra.mxu0 %v1360
    %1426 = vmatprep.subr.bf16.mxu0 %v1363
    %1427 = vmatpush1.bf16.msra.mxu0 %v1362
    %1428 = vmatprep.subr.bf16.mxu0 %v1365
    %1429 = vmatpush1.bf16.msra.mxu0 %v1364
    %1430 = vmatprep.subr.bf16.mxu0 %v1367
    %1431 = vmatpush1.bf16.msra.mxu0 %v1366
    %1432 = vmatprep.subr.bf16.mxu0 %v1369
    %1433 = vmatpush1.bf16.msra.mxu0 %v1368
    %1434 = vmatprep.mubr.bf16.mxu0 %v1185
    %1435 = vmatmul.mubr.bf16.gmra.mrb[0].mxu0 %v1173
    %v1436 = vpop.f32.mrb[0].mxu0
    %v1437 = vadd.f32 %v1123, %v1436
    %v1438 = vpop.f32.mrb[0].mxu0
    %v1439 = vadd.f32 %v1125, %v1438
    %v1440 = vpop.f32.mrb[0].mxu0
    %v1441 = vadd.f32 %v1127, %v1440
    %v1442 = vpop.f32.mrb[0].mxu0
    %v1443 = vadd.f32 %v1129, %v1442
    %1444 = vmatprep.mubr.bf16.mxu0 %v1201
    %1445 = vmatmul.mubr.bf16.gmra.mrb[0].mxu0 %v1193
    %v1446 = vpop.f32.mrb[0].mxu0
    %v1447 = vadd.f32 %v1133, %v1446
    %v1448 = vpop.f32.mrb[0].mxu0
    %v1449 = vadd.f32 %v1135, %v1448
    %v1450 = vpop.f32.mrb[0].mxu0
    %v1451 = vadd.f32 %v1137, %v1450
    %v1452 = vpop.f32.mrb[0].mxu0
    %v1453 = vadd.f32 %v1139, %v1452
    %1454 = vmatprep.mubr.bf16.mxu0 %v1217
    %1455 = vmatmul.mubr.bf16.gmra.mrb[0].mxu0 %v1209
    %v1456 = vpop.f32.mrb[0].mxu0
    %v1457 = vadd.f32 %v1143, %v1456
    %v1458 = vpop.f32.mrb[0].mxu0
    %v1459 = vadd.f32 %v1145, %v1458
    %v1460 = vpop.f32.mrb[0].mxu0
    %v1461 = vadd.f32 %v1147, %v1460
    %v1462 = vpop.f32.mrb[0].mxu0
    %v1463 = vadd.f32 %v1149, %v1462
    %1464 = vmatprep.mubr.bf16.mxu0 %v1233
    %1465 = vmatmul.mubr.bf16.gmra.mrb[0].mxu0 %v1225
    %v1466 = vpop.f32.mrb[0].mxu0
    %v1467 = vadd.f32 %v1153, %v1466
    %v1468 = vpop.f32.mrb[0].mxu0
    %v1469 = vadd.f32 %v1155, %v1468
    %v1470 = vpop.f32.mrb[0].mxu0
    %v1471 = vadd.f32 %v1157, %v1470
    %v1472 = vpop.f32.mrb[0].mxu0
    %v1473 = vadd.f32 %v1159, %v1472
    %1474 = vdwg.mxu0
    %s1475 = scalar_lea.vmem [#allocation10], 512
    %v1476 = vld [vmem:[%s1475] sm:$0xff]
    %v1477 = vld [vmem:[%s1475 + $0x8] sm:$0xff]
    %v1478 = vld [vmem:[%s1475 + $0x10] sm:$0xff]
    %v1479 = vld [vmem:[%s1475 + $0x18] sm:$0xff]
    %v1480 = vld [vmem:[%s1475 + $0x20] sm:$0xff]
    %v1481 = vld [vmem:[%s1475 + $0x28] sm:$0xff]
    %v1482 = vld [vmem:[%s1475 + $0x30] sm:$0xff]
    %v1483 = vld [vmem:[%s1475 + $0x38] sm:$0xff]
    %v1484 = vld [vmem:[%s1475 + $0x40] sm:$0xff]
    %v1485 = vld [vmem:[%s1475 + $0x48] sm:$0xff]
    %v1486 = vld [vmem:[%s1475 + $0x50] sm:$0xff]
    %v1487 = vld [vmem:[%s1475 + $0x58] sm:$0xff]
    %v1488 = vld [vmem:[%s1475 + $0x60] sm:$0xff]
    %v1489 = vld [vmem:[%s1475 + $0x68] sm:$0xff]
    %v1490 = vld [vmem:[%s1475 + $0x70] sm:$0xff]
    %v1491 = vld [vmem:[%s1475 + $0x78] sm:$0xff]
    %v1492 = vld [vmem:[%s1475 + $0x80] sm:$0xff]
    %v1493 = vld [vmem:[%s1475 + $0x88] sm:$0xff]
    %v1494 = vld [vmem:[%s1475 + $0x90] sm:$0xff]
    %v1495 = vld [vmem:[%s1475 + $0x98] sm:$0xff]
    %v1496 = vld [vmem:[%s1475 + $0xa0] sm:$0xff]
    %v1497 = vld [vmem:[%s1475 + $0xa8] sm:$0xff]
    %v1498 = vld [vmem:[%s1475 + $0xb0] sm:$0xff]
    %v1499 = vld [vmem:[%s1475 + $0xb8] sm:$0xff]
    %v1500 = vld [vmem:[%s1475 + $0xc0] sm:$0xff]
    %v1501 = vld [vmem:[%s1475 + $0xc8] sm:$0xff]
    %v1502 = vld [vmem:[%s1475 + $0xd0] sm:$0xff]
    %v1503 = vld [vmem:[%s1475 + $0xd8] sm:$0xff]
    %v1504 = vld [vmem:[%s1475 + $0xe0] sm:$0xff]
    %v1505 = vld [vmem:[%s1475 + $0xe8] sm:$0xff]
    %v1506 = vld [vmem:[%s1475 + $0xf0] sm:$0xff]
    %v1507 = vld [vmem:[%s1475 + $0xf8] sm:$0xff]
    %v1508 = vld [vmem:[#allocation2 + $0x10] sm:$0xff]
    %v1509 = vld [vmem:[#allocation2 + $0x18] sm:$0xff]
    %v1510 = vld [vmem:[#allocation2 + $0x20] sm:$0xff]
    %v1511 = vld [vmem:[#allocation2 + $0x28] sm:$0xff]
    %v1512 = vld [vmem:[#allocation2 + $0x30] sm:$0xff]
    %v1513 = vld [vmem:[#allocation2 + $0x38] sm:$0xff]
    %v1514 = vld [vmem:[#allocation2 + $0x40] sm:$0xff]
    %v1515 = vld [vmem:[#allocation2 + $0x48] sm:$0xff]
    %v1516 = vld [vmem:[#allocation2 + $0x50] sm:$0x1]
    %v1517 = vld [vmem:[#allocation2 + $0x58] sm:$0x1]
    %v1519 = vshrl.u32 %v1508, 16
    %v1521 = vshll.u32 %v1508, 16
    %v1523 = vrot.slane %v1521, 1
    %v1524 = vor.u32 %v1519, %v1523
    %v1526 = vshll.u32 %v1510, 16
    %v1528 = vrot.slane %v1526, 1
    %v1529 = vsel %vm603, %v1524, %v1528
    %v1531 = vshrl.u32 %v1509, 16
    %v1533 = vshll.u32 %v1509, 16
    %v1535 = vrot.slane %v1533, 1
    %v1536 = vor.u32 %v1531, %v1535
    %v1538 = vshll.u32 %v1511, 16
    %v1540 = vrot.slane %v1538, 1
    %v1541 = vsel %vm603, %v1536, %v1540
    %v1542 = vshrl.u32 %v1510, 16
    %v1544 = vor.u32 %v1542, %v1528
    %v1546 = vshll.u32 %v1512, 16
    %v1548 = vrot.slane %v1546, 1
    %v1549 = vsel %vm603, %v1544, %v1548
    %v1550 = vshrl.u32 %v1511, 16
    %v1552 = vor.u32 %v1550, %v1540
    %v1554 = vshll.u32 %v1513, 16
    %v1556 = vrot.slane %v1554, 1
    %v1557 = vsel %vm603, %v1552, %v1556
    %v1558 = vshrl.u32 %v1512, 16
    %v1560 = vor.u32 %v1558, %v1548
    %v1562 = vshll.u32 %v1514, 16
    %v1564 = vrot.slane %v1562, 1
    %v1565 = vsel %vm603, %v1560, %v1564
    %v1566 = vshrl.u32 %v1513, 16
    %v1568 = vor.u32 %v1566, %v1556
    %v1570 = vshll.u32 %v1515, 16
    %v1572 = vrot.slane %v1570, 1
    %v1573 = vsel %vm603, %v1568, %v1572
    %v1574 = vshrl.u32 %v1514, 16
    %v1576 = vor.u32 %v1574, %v1564
    %v1578 = vshll.u32 %v1516, 16
    %v1580 = vrot.slane %v1578, 1
    %v1581 = vsel %vm603, %v1576, %v1580
    %v1582 = vshrl.u32 %v1515, 16
    %v1584 = vor.u32 %v1582, %v1572
    %v1586 = vshll.u32 %v1517, 16
    %v1588 = vrot.slane %v1586, 1
    %v1589 = vsel %vm603, %v1584, %v1588
    %v1630 = vunpack.c.l.b16 %v1476
    %v1631 = vunpack.c.h.b16 %v1476
    %v1632 = vunpack.c.l.b16 %v1477
    %v1633 = vunpack.c.h.b16 %v1477
    %v1634 = vunpack.c.l.b16 %v1478
    %v1635 = vunpack.c.h.b16 %v1478
    %v1636 = vunpack.c.l.b16 %v1479
    %v1637 = vunpack.c.h.b16 %v1479
    %v1638 = vunpack.c.l.b16 %v1480
    %v1639 = vunpack.c.h.b16 %v1480
    %v1640 = vunpack.c.l.b16 %v1481
    %v1641 = vunpack.c.h.b16 %v1481
    %v1642 = vunpack.c.l.b16 %v1482
    %v1643 = vunpack.c.h.b16 %v1482
    %v1644 = vunpack.c.l.b16 %v1483
    %v1645 = vunpack.c.h.b16 %v1483
    %v1646 = vunpack.c.l.b16 %v1484
    %v1647 = vunpack.c.h.b16 %v1484
    %v1648 = vunpack.c.l.b16 %v1485
    %v1649 = vunpack.c.h.b16 %v1485
    %v1650 = vunpack.c.l.b16 %v1486
    %v1651 = vunpack.c.h.b16 %v1486
    %v1652 = vunpack.c.l.b16 %v1487
    %v1653 = vunpack.c.h.b16 %v1487
    %v1654 = vunpack.c.l.b16 %v1488
    %v1655 = vunpack.c.h.b16 %v1488
    %v1656 = vunpack.c.l.b16 %v1489
    %v1657 = vunpack.c.h.b16 %v1489
    %v1658 = vunpack.c.l.b16 %v1490
    %v1659 = vunpack.c.h.b16 %v1490
    %v1660 = vunpack.c.l.b16 %v1491
    %v1661 = vunpack.c.h.b16 %v1491
    %v1662 = vunpack.c.l.b16 %v1492
    %v1663 = vunpack.c.h.b16 %v1492
    %v1664 = vunpack.c.l.b16 %v1493
    %v1665 = vunpack.c.h.b16 %v1493
    %v1666 = vunpack.c.l.b16 %v1494
    %v1667 = vunpack.c.h.b16 %v1494
    %v1668 = vunpack.c.l.b16 %v1495
    %v1669 = vunpack.c.h.b16 %v1495
    %v1670 = vunpack.c.l.b16 %v1496
    %v1671 = vunpack.c.h.b16 %v1496
    %v1672 = vunpack.c.l.b16 %v1497
    %v1673 = vunpack.c.h.b16 %v1497
    %v1674 = vunpack.c.l.b16 %v1498
    %v1675 = vunpack.c.h.b16 %v1498
    %v1676 = vunpack.c.l.b16 %v1499
    %v1677 = vunpack.c.h.b16 %v1499
    %v1678 = vunpack.c.l.b16 %v1500
    %v1679 = vunpack.c.h.b16 %v1500
    %v1680 = vunpack.c.l.b16 %v1501
    %v1681 = vunpack.c.h.b16 %v1501
    %v1682 = vunpack.c.l.b16 %v1502
    %v1683 = vunpack.c.h.b16 %v1502
    %v1684 = vunpack.c.l.b16 %v1503
    %v1685 = vunpack.c.h.b16 %v1503
    %v1686 = vunpack.c.l.b16 %v1504
    %v1687 = vunpack.c.h.b16 %v1504
    %v1688 = vunpack.c.l.b16 %v1505
    %v1689 = vunpack.c.h.b16 %v1505
    %v1690 = vunpack.c.l.b16 %v1506
    %v1691 = vunpack.c.h.b16 %v1506
    %v1692 = vunpack.c.l.b16 %v1507
    %v1693 = vunpack.c.h.b16 %v1507
    %v1694 = vpack.c.b16 %v1632, %v1630
    %v1695 = vpack.c.b16 %v1633, %v1631
    %v1696 = vpack.c.b16 %v1636, %v1634
    %v1697 = vpack.c.b16 %v1637, %v1635
    %v1698 = vpack.c.b16 %v1640, %v1638
    %v1699 = vpack.c.b16 %v1641, %v1639
    %v1700 = vpack.c.b16 %v1644, %v1642
    %v1701 = vpack.c.b16 %v1645, %v1643
    %v1702 = vpack.c.b16 %v1648, %v1646
    %v1703 = vpack.c.b16 %v1649, %v1647
    %v1704 = vpack.c.b16 %v1652, %v1650
    %v1705 = vpack.c.b16 %v1653, %v1651
    %v1706 = vpack.c.b16 %v1656, %v1654
    %v1707 = vpack.c.b16 %v1657, %v1655
    %v1708 = vpack.c.b16 %v1660, %v1658
    %v1709 = vpack.c.b16 %v1661, %v1659
    %v1710 = vpack.c.b16 %v1664, %v1662
    %v1711 = vpack.c.b16 %v1665, %v1663
    %v1712 = vpack.c.b16 %v1668, %v1666
    %v1713 = vpack.c.b16 %v1669, %v1667
    %v1714 = vpack.c.b16 %v1672, %v1670
    %v1715 = vpack.c.b16 %v1673, %v1671
    %v1716 = vpack.c.b16 %v1676, %v1674
    %v1717 = vpack.c.b16 %v1677, %v1675
    %v1718 = vpack.c.b16 %v1680, %v1678
    %v1719 = vpack.c.b16 %v1681, %v1679
    %v1720 = vpack.c.b16 %v1684, %v1682
    %v1721 = vpack.c.b16 %v1685, %v1683
    %v1722 = vpack.c.b16 %v1688, %v1686
    %v1723 = vpack.c.b16 %v1689, %v1687
    %v1724 = vpack.c.b16 %v1692, %v1690
    %v1725 = vpack.c.b16 %v1693, %v1691
    %1758 = vmatprep.subr.bf16.mxu0 %v1695
    %1759 = vmatpush1.bf16.msra.mxu0 %v1694
    %1760 = vmatprep.subr.bf16.mxu0 %v1697
    %1761 = vmatpush1.bf16.msra.mxu0 %v1696
    %1762 = vmatprep.subr.bf16.mxu0 %v1699
    %1763 = vmatpush1.bf16.msra.mxu0 %v1698
    %1764 = vmatprep.subr.bf16.mxu0 %v1701
    %1765 = vmatpush1.bf16.msra.mxu0 %v1700
    %1766 = vmatprep.subr.bf16.mxu0 %v1703
    %1767 = vmatpush1.bf16.msra.mxu0 %v1702
    %1768 = vmatprep.subr.bf16.mxu0 %v1705
    %1769 = vmatpush1.bf16.msra.mxu0 %v1704
    %1770 = vmatprep.subr.bf16.mxu0 %v1707
    %1771 = vmatpush1.bf16.msra.mxu0 %v1706
    %1772 = vmatprep.subr.bf16.mxu0 %v1709
    %1773 = vmatpush1.bf16.msra.mxu0 %v1708
    %1774 = vmatprep.subr.bf16.mxu0 %v1711
    %1775 = vmatpush1.bf16.msra.mxu0 %v1710
    %1776 = vmatprep.subr.bf16.mxu0 %v1713
    %1777 = vmatpush1.bf16.msra.mxu0 %v1712
    %1778 = vmatprep.subr.bf16.mxu0 %v1715
    %1779 = vmatpush1.bf16.msra.mxu0 %v1714
    %1780 = vmatprep.subr.bf16.mxu0 %v1717
    %1781 = vmatpush1.bf16.msra.mxu0 %v1716
    %1782 = vmatprep.subr.bf16.mxu0 %v1719
    %1783 = vmatpush1.bf16.msra.mxu0 %v1718
    %1784 = vmatprep.subr.bf16.mxu0 %v1721
    %1785 = vmatpush1.bf16.msra.mxu0 %v1720
    %1786 = vmatprep.subr.bf16.mxu0 %v1723
    %1787 = vmatpush1.bf16.msra.mxu0 %v1722
    %1788 = vmatprep.subr.bf16.mxu0 %v1725
    %1789 = vmatpush1.bf16.msra.mxu0 %v1724
    %1790 = vmatprep.mubr.bf16.mxu0 %v1541
    %1791 = vmatmul.mubr.bf16.gmra.mrb[0].mxu0 %v1529
    %v1792 = vpop.f32.mrb[0].mxu0
    %v1793 = vadd.f32 0.0, %v1792
    %v1794 = vpop.f32.mrb[0].mxu0
    %v1795 = vadd.f32 0.0, %v1794
    %v1796 = vpop.f32.mrb[0].mxu0
    %v1797 = vadd.f32 0.0, %v1796
    %v1798 = vpop.f32.mrb[0].mxu0
    %v1799 = vadd.f32 0.0, %v1798
    %1800 = vmatprep.mubr.bf16.mxu0 %v1557
    %1801 = vmatmul.mubr.bf16.gmra.mrb[0].mxu0 %v1549
    %v1802 = vpop.f32.mrb[0].mxu0
    %v1803 = vadd.f32 0.0, %v1802
    %v1804 = vpop.f32.mrb[0].mxu0
    %v1805 = vadd.f32 0.0, %v1804
    %v1806 = vpop.f32.mrb[0].mxu0
    %v1807 = vadd.f32 0.0, %v1806
    %v1808 = vpop.f32.mrb[0].mxu0
    %v1809 = vadd.f32 0.0, %v1808
    %1810 = vmatprep.mubr.bf16.mxu0 %v1573
    %1811 = vmatmul.mubr.bf16.gmra.mrb[0].mxu0 %v1565
    %v1812 = vpop.f32.mrb[0].mxu0
    %v1813 = vadd.f32 0.0, %v1812
    %v1814 = vpop.f32.mrb[0].mxu0
    %v1815 = vadd.f32 0.0, %v1814
    %v1816 = vpop.f32.mrb[0].mxu0
    %v1817 = vadd.f32 0.0, %v1816
    %v1818 = vpop.f32.mrb[0].mxu0
    %v1819 = vadd.f32 0.0, %v1818
    %1820 = vmatprep.mubr.bf16.mxu0 %v1589
    %1821 = vmatmul.mubr.bf16.gmra.mrb[0].mxu0 %v1581
    %v1822 = vpop.f32.mrb[0].mxu0
    %v1823 = vadd.f32 0.0, %v1822
    %v1824 = vpop.f32.mrb[0].mxu0
    %v1825 = vadd.f32 0.0, %v1824
    %v1826 = vpop.f32.mrb[0].mxu0
    %v1827 = vadd.f32 0.0, %v1826
    %v1828 = vpop.f32.mrb[0].mxu0
    %v1829 = vadd.f32 0.0, %v1828
    %1830 = vdwg.mxu0
    %v1831 = vadd.f32 %v1437, %v1793
    %v1832 = vadd.f32 %v1439, %v1795
    %v1833 = vadd.f32 %v1441, %v1797
    %v1834 = vadd.f32 %v1443, %v1799
    %v1835 = vadd.f32 %v1447, %v1803
    %v1836 = vadd.f32 %v1449, %v1805
    %v1837 = vadd.f32 %v1451, %v1807
    %v1838 = vadd.f32 %v1453, %v1809
    %v1839 = vadd.f32 %v1457, %v1813
    %v1840 = vadd.f32 %v1459, %v1815
    %v1841 = vadd.f32 %v1461, %v1817
    %v1842 = vadd.f32 %v1463, %v1819
    %v1843 = vadd.f32 %v1467, %v1823
    %v1844 = vadd.f32 %v1469, %v1825
    %v1845 = vadd.f32 %v1471, %v1827
    %v1846 = vadd.f32 %v1473, %v1829
    %s1847 = scalar_lea.vmem [#allocation11], 2
    %v1848 = vld [vmem:[%s1847] sm:$0x3]
    %v1850 = vlaneseq
    %v1851 = vshrl.u32 %v1850, 7
    %v1852 = vsub.s32 0, %v1851
    %v1853 = vrot.slane %v1848, %v1852
    %v1854 = vlaneseq
    %v1855 = vshrl.u32 %v1854, 7
    %v1856 = vsub.s32 1, %v1855
    %v1857 = vrot.slane %v1848, %v1856
    %v1860 = vadd.f32 %v1831, %v1853
    %v1861 = vadd.f32 %v1832, %v1857
    %v1862 = vadd.f32 %v1833, %v1853
    %v1863 = vadd.f32 %v1834, %v1857
    %v1864 = vadd.f32 %v1835, %v1853
    %v1865 = vadd.f32 %v1836, %v1857
    %v1866 = vadd.f32 %v1837, %v1853
    %v1867 = vadd.f32 %v1838, %v1857
    %v1868 = vadd.f32 %v1839, %v1853
    %v1869 = vadd.f32 %v1840, %v1857
    %v1870 = vadd.f32 %v1841, %v1853
    %v1871 = vadd.f32 %v1842, %v1857
    %v1872 = vadd.f32 %v1843, %v1853
    %v1873 = vadd.f32 %v1844, %v1857
    %v1874 = vadd.f32 %v1845, %v1853
    %v1875 = vadd.f32 %v1846, %v1857
    %v1876 = vmax.f32 %v1860, 0.0
    %v1877 = vmax.f32 %v1861, 0.0
    %v1878 = vmax.f32 %v1862, 0.0
    %v1879 = vmax.f32 %v1863, 0.0
    %v1880 = vmax.f32 %v1864, 0.0
    %v1881 = vmax.f32 %v1865, 0.0
    %v1882 = vmax.f32 %v1866, 0.0
    %v1883 = vmax.f32 %v1867, 0.0
    %v1884 = vmax.f32 %v1868, 0.0
    %v1885 = vmax.f32 %v1869, 0.0
    %v1886 = vmax.f32 %v1870, 0.0
    %v1887 = vmax.f32 %v1871, 0.0
    %v1888 = vmax.f32 %v1872, 0.0
    %v1889 = vmax.f32 %v1873, 0.0
    %v1890 = vmax.f32 %v1874, 0.0
    %v1891 = vmax.f32 %v1875, 0.0
    %v1892 = vsel %vm813, %v1876, 0.0
    %v1893 = vsel %vm813, %v1877, 0.0
    %v1894 = vsel %vm814, %v1878, 0.0
    %v1895 = vsel %vm814, %v1879, 0.0
    %v1896 = vsel %vm815, %v1880, 0.0
    %v1897 = vsel %vm815, %v1881, 0.0
    %v1898 = vsel %vm816, %v1882, 0.0
    %v1899 = vsel %vm816, %v1883, 0.0
    %v1900 = vsel %vm817, %v1884, 0.0
    %v1901 = vsel %vm817, %v1885, 0.0
    %v1902 = vsel %vm818, %v1886, 0.0
    %v1903 = vsel %vm818, %v1887, 0.0
    %v1904 = vsel %vm819, %v1888, 0.0
    %v1905 = vsel %vm819, %v1889, 0.0
    %v1906 = vsel %vm820, %v1890, 0.0
    %v1907 = vsel %vm820, %v1891, 0.0
    %v1908 = vpack.c.bf16 %v1894, %v1892
    %v1909 = vpack.c.bf16 %v1895, %v1893
    %v1910 = vpack.c.bf16 %v1898, %v1896
    %v1911 = vpack.c.bf16 %v1899, %v1897
    %v1912 = vpack.c.bf16 %v1902, %v1900
    %v1913 = vpack.c.bf16 %v1903, %v1901
    %v1914 = vpack.c.bf16 %v1906, %v1904
    %v1915 = vpack.c.bf16 %v1907, %v1905
    %1916 = vst [vmem:[#allocation3 + $0x10] sm:$0xff] %v1908
    %1917 = vst [vmem:[#allocation3 + $0x18] sm:$0xff] %v1909
    %1918 = vst [vmem:[#allocation3 + $0x20] sm:$0xff] %v1910
    %1919 = vst [vmem:[#allocation3 + $0x28] sm:$0xff] %v1911
    %1920 = vst [vmem:[#allocation3 + $0x30] sm:$0xff] %v1912
    %1921 = vst [vmem:[#allocation3 + $0x38] sm:$0xff] %v1913
    %1922 = vst [vmem:[#allocation3 + $0x40] sm:$0xff] %v1914
    %1923 = vst [vmem:[#allocation3 + $0x48] sm:$0xff] %v1915
    %s1924 = scalar_lea.vmem [#allocation10], 768
    %v1925 = vld [vmem:[%s1924] sm:$0xff]
    %v1926 = vld [vmem:[%s1924 + $0x8] sm:$0xff]
    %v1927 = vld [vmem:[%s1924 + $0x10] sm:$0xff]
    %v1928 = vld [vmem:[%s1924 + $0x18] sm:$0xff]
    %v1929 = vld [vmem:[%s1924 + $0x20] sm:$0xff]
    %v1930 = vld [vmem:[%s1924 + $0x28] sm:$0xff]
    %v1931 = vld [vmem:[%s1924 + $0x30] sm:$0xff]
    %v1932 = vld [vmem:[%s1924 + $0x38] sm:$0xff]
    %v1933 = vld [vmem:[%s1924 + $0x40] sm:$0xff]
    %v1934 = vld [vmem:[%s1924 + $0x48] sm:$0xff]
    %v1935 = vld [vmem:[%s1924 + $0x50] sm:$0xff]
    %v1936 = vld [vmem:[%s1924 + $0x58] sm:$0xff]
    %v1937 = vld [vmem:[%s1924 + $0x60] sm:$0xff]
    %v1938 = vld [vmem:[%s1924 + $0x68] sm:$0xff]
    %v1939 = vld [vmem:[%s1924 + $0x70] sm:$0xff]
    %v1940 = vld [vmem:[%s1924 + $0x78] sm:$0xff]
    %v1941 = vld [vmem:[%s1924 + $0x80] sm:$0xff]
    %v1942 = vld [vmem:[%s1924 + $0x88] sm:$0xff]
    %v1943 = vld [vmem:[%s1924 + $0x90] sm:$0xff]
    %v1944 = vld [vmem:[%s1924 + $0x98] sm:$0xff]
    %v1945 = vld [vmem:[%s1924 + $0xa0] sm:$0xff]
    %v1946 = vld [vmem:[%s1924 + $0xa8] sm:$0xff]
    %v1947 = vld [vmem:[%s1924 + $0xb0] sm:$0xff]
    %v1948 = vld [vmem:[%s1924 + $0xb8] sm:$0xff]
    %v1949 = vld [vmem:[%s1924 + $0xc0] sm:$0xff]
    %v1950 = vld [vmem:[%s1924 + $0xc8] sm:$0xff]
    %v1951 = vld [vmem:[%s1924 + $0xd0] sm:$0xff]
    %v1952 = vld [vmem:[%s1924 + $0xd8] sm:$0xff]
    %v1953 = vld [vmem:[%s1924 + $0xe0] sm:$0xff]
    %v1954 = vld [vmem:[%s1924 + $0xe8] sm:$0xff]
    %v1955 = vld [vmem:[%s1924 + $0xf0] sm:$0xff]
    %v1956 = vld [vmem:[%s1924 + $0xf8] sm:$0xff]
    %v1957 = vld [vmem:[#allocation3] sm:$0x80]
    %v1958 = vld [vmem:[#allocation3 + $0x8] sm:$0x80]
    %v1959 = vld [vmem:[#allocation3 + $0x10] sm:$0xff]
    %v1960 = vld [vmem:[#allocation3 + $0x18] sm:$0xff]
    %v1961 = vld [vmem:[#allocation3 + $0x20] sm:$0xff]
    %v1962 = vld [vmem:[#allocation3 + $0x28] sm:$0xff]
    %v1963 = vld [vmem:[#allocation3 + $0x30] sm:$0xff]
    %v1964 = vld [vmem:[#allocation3 + $0x38] sm:$0xff]
    %v1965 = vld [vmem:[#allocation3 + $0x40] sm:$0xff]
    %v1966 = vld [vmem:[#allocation3 + $0x48] sm:$0xff]
    %s1967 = scalar_lea.vmem [#allocation10], 1024
    %v1968 = vld [vmem:[%s1967] sm:$0xff]
    %v1969 = vld [vmem:[%s1967 + $0x8] sm:$0xff]
    %v1970 = vld [vmem:[%s1967 + $0x10] sm:$0xff]
    %v1971 = vld [vmem:[%s1967 + $0x18] sm:$0xff]
    %v1972 = vld [vmem:[%s1967 + $0x20] sm:$0xff]
    %v1973 = vld [vmem:[%s1967 + $0x28] sm:$0xff]
    %v1974 = vld [vmem:[%s1967 + $0x30] sm:$0xff]
    %v1975 = vld [vmem:[%s1967 + $0x38] sm:$0xff]
    %v1976 = vld [vmem:[%s1967 + $0x40] sm:$0xff]
    %v1977 = vld [vmem:[%s1967 + $0x48] sm:$0xff]
    %v1978 = vld [vmem:[%s1967 + $0x50] sm:$0xff]
    %v1979 = vld [vmem:[%s1967 + $0x58] sm:$0xff]
    %v1980 = vld [vmem:[%s1967 + $0x60] sm:$0xff]
    %v1981 = vld [vmem:[%s1967 + $0x68] sm:$0xff]
    %v1982 = vld [vmem:[%s1967 + $0x70] sm:$0xff]
    %v1983 = vld [vmem:[%s1967 + $0x78] sm:$0xff]
    %v1984 = vld [vmem:[%s1967 + $0x80] sm:$0xff]
    %v1985 = vld [vmem:[%s1967 + $0x88] sm:$0xff]
    %v1986 = vld [vmem:[%s1967 + $0x90] sm:$0xff]
    %v1987 = vld [vmem:[%s1967 + $0x98] sm:$0xff]
    %v1988 = vld [vmem:[%s1967 + $0xa0] sm:$0xff]
    %v1989 = vld [vmem:[%s1967 + $0xa8] sm:$0xff]
    %v1990 = vld [vmem:[%s1967 + $0xb0] sm:$0xff]
    %v1991 = vld [vmem:[%s1967 + $0xb8] sm:$0xff]
    %v1992 = vld [vmem:[%s1967 + $0xc0] sm:$0xff]
    %v1993 = vld [vmem:[%s1967 + $0xc8] sm:$0xff]
    %v1994 = vld [vmem:[%s1967 + $0xd0] sm:$0xff]
    %v1995 = vld [vmem:[%s1967 + $0xd8] sm:$0xff]
    %v1996 = vld [vmem:[%s1967 + $0xe0] sm:$0xff]
    %v1997 = vld [vmem:[%s1967 + $0xe8] sm:$0xff]
    %v1998 = vld [vmem:[%s1967 + $0xf0] sm:$0xff]
    %v1999 = vld [vmem:[%s1967 + $0xf8] sm:$0xff]
    %v2032 = vunpack.c.l.b16 %v1968
    %v2033 = vunpack.c.h.b16 %v1968
    %v2034 = vunpack.c.l.b16 %v1969
    %v2035 = vunpack.c.h.b16 %v1969
    %v2036 = vunpack.c.l.b16 %v1970
    %v2037 = vunpack.c.h.b16 %v1970
    %v2038 = vunpack.c.l.b16 %v1971
    %v2039 = vunpack.c.h.b16 %v1971
    %v2040 = vunpack.c.l.b16 %v1972
    %v2041 = vunpack.c.h.b16 %v1972
    %v2042 = vunpack.c.l.b16 %v1973
    %v2043 = vunpack.c.h.b16 %v1973
    %v2044 = vunpack.c.l.b16 %v1974
    %v2045 = vunpack.c.h.b16 %v1974
    %v2046 = vunpack.c.l.b16 %v1975
    %v2047 = vunpack.c.h.b16 %v1975
    %v2048 = vunpack.c.l.b16 %v1976
    %v2049 = vunpack.c.h.b16 %v1976
    %v2050 = vunpack.c.l.b16 %v1977
    %v2051 = vunpack.c.h.b16 %v1977
    %v2052 = vunpack.c.l.b16 %v1978
    %v2053 = vunpack.c.h.b16 %v1978
    %v2054 = vunpack.c.l.b16 %v1979
    %v2055 = vunpack.c.h.b16 %v1979
    %v2056 = vunpack.c.l.b16 %v1980
    %v2057 = vunpack.c.h.b16 %v1980
    %v2058 = vunpack.c.l.b16 %v1981
    %v2059 = vunpack.c.h.b16 %v1981
    %v2060 = vunpack.c.l.b16 %v1982
    %v2061 = vunpack.c.h.b16 %v1982
    %v2062 = vunpack.c.l.b16 %v1983
    %v2063 = vunpack.c.h.b16 %v1983
    %v2064 = vunpack.c.l.b16 %v1984
    %v2065 = vunpack.c.h.b16 %v1984
    %v2066 = vunpack.c.l.b16 %v1985
    %v2067 = vunpack.c.h.b16 %v1985
    %v2068 = vunpack.c.l.b16 %v1986
    %v2069 = vunpack.c.h.b16 %v1986
    %v2070 = vunpack.c.l.b16 %v1987
    %v2071 = vunpack.c.h.b16 %v1987
    %v2072 = vunpack.c.l.b16 %v1988
    %v2073 = vunpack.c.h.b16 %v1988
    %v2074 = vunpack.c.l.b16 %v1989
    %v2075 = vunpack.c.h.b16 %v1989
    %v2076 = vunpack.c.l.b16 %v1990
    %v2077 = vunpack.c.h.b16 %v1990
    %v2078 = vunpack.c.l.b16 %v1991
    %v2079 = vunpack.c.h.b16 %v1991
    %v2080 = vunpack.c.l.b16 %v1992
    %v2081 = vunpack.c.h.b16 %v1992
    %v2082 = vunpack.c.l.b16 %v1993
    %v2083 = vunpack.c.h.b16 %v1993
    %v2084 = vunpack.c.l.b16 %v1994
    %v2085 = vunpack.c.h.b16 %v1994
    %v2086 = vunpack.c.l.b16 %v1995
    %v2087 = vunpack.c.h.b16 %v1995
    %v2088 = vunpack.c.l.b16 %v1996
    %v2089 = vunpack.c.h.b16 %v1996
    %v2090 = vunpack.c.l.b16 %v1997
    %v2091 = vunpack.c.h.b16 %v1997
    %v2092 = vunpack.c.l.b16 %v1998
    %v2093 = vunpack.c.h.b16 %v1998
    %v2094 = vunpack.c.l.b16 %v1999
    %v2095 = vunpack.c.h.b16 %v1999
    %v2096 = vpack.c.b16 %v2034, %v2032
    %v2097 = vpack.c.b16 %v2035, %v2033
    %v2098 = vpack.c.b16 %v2038, %v2036
    %v2099 = vpack.c.b16 %v2039, %v2037
    %v2100 = vpack.c.b16 %v2042, %v2040
    %v2101 = vpack.c.b16 %v2043, %v2041
    %v2102 = vpack.c.b16 %v2046, %v2044
    %v2103 = vpack.c.b16 %v2047, %v2045
    %v2104 = vpack.c.b16 %v2050, %v2048
    %v2105 = vpack.c.b16 %v2051, %v2049
    %v2106 = vpack.c.b16 %v2054, %v2052
    %v2107 = vpack.c.b16 %v2055, %v2053
    %v2108 = vpack.c.b16 %v2058, %v2056
    %v2109 = vpack.c.b16 %v2059, %v2057
    %v2110 = vpack.c.b16 %v2062, %v2060
    %v2111 = vpack.c.b16 %v2063, %v2061
    %v2112 = vpack.c.b16 %v2066, %v2064
    %v2113 = vpack.c.b16 %v2067, %v2065
    %v2114 = vpack.c.b16 %v2070, %v2068
    %v2115 = vpack.c.b16 %v2071, %v2069
    %v2116 = vpack.c.b16 %v2074, %v2072
    %v2117 = vpack.c.b16 %v2075, %v2073
    %v2118 = vpack.c.b16 %v2078, %v2076
    %v2119 = vpack.c.b16 %v2079, %v2077
    %v2120 = vpack.c.b16 %v2082, %v2080
    %v2121 = vpack.c.b16 %v2083, %v2081
    %v2122 = vpack.c.b16 %v2086, %v2084
    %v2123 = vpack.c.b16 %v2087, %v2085
    %v2124 = vpack.c.b16 %v2090, %v2088
    %v2125 = vpack.c.b16 %v2091, %v2089
    %v2126 = vpack.c.b16 %v2094, %v2092
    %v2127 = vpack.c.b16 %v2095, %v2093
    %2160 = vmatprep.subr.bf16.mxu0 %v2097
    %2161 = vmatpush1.bf16.msra.mxu0 %v2096
    %2162 = vmatprep.subr.bf16.mxu0 %v2099
    %2163 = vmatpush1.bf16.msra.mxu0 %v2098
    %2164 = vmatprep.subr.bf16.mxu0 %v2101
    %2165 = vmatpush1.bf16.msra.mxu0 %v2100
    %2166 = vmatprep.subr.bf16.mxu0 %v2103
    %2167 = vmatpush1.bf16.msra.mxu0 %v2102
    %2168 = vmatprep.subr.bf16.mxu0 %v2105
    %2169 = vmatpush1.bf16.msra.mxu0 %v2104
    %2170 = vmatprep.subr.bf16.mxu0 %v2107
    %2171 = vmatpush1.bf16.msra.mxu0 %v2106
    %2172 = vmatprep.subr.bf16.mxu0 %v2109
    %2173 = vmatpush1.bf16.msra.mxu0 %v2108
    %2174 = vmatprep.subr.bf16.mxu0 %v2111
    %2175 = vmatpush1.bf16.msra.mxu0 %v2110
    %2176 = vmatprep.subr.bf16.mxu0 %v2113
    %2177 = vmatpush1.bf16.msra.mxu0 %v2112
    %2178 = vmatprep.subr.bf16.mxu0 %v2115
    %2179 = vmatpush1.bf16.msra.mxu0 %v2114
    %2180 = vmatprep.subr.bf16.mxu0 %v2117
    %2181 = vmatpush1.bf16.msra.mxu0 %v2116
    %2182 = vmatprep.subr.bf16.mxu0 %v2119
    %2183 = vmatpush1.bf16.msra.mxu0 %v2118
    %2184 = vmatprep.subr.bf16.mxu0 %v2121
    %2185 = vmatpush1.bf16.msra.mxu0 %v2120
    %2186 = vmatprep.subr.bf16.mxu0 %v2123
    %2187 = vmatpush1.bf16.msra.mxu0 %v2122
    %2188 = vmatprep.subr.bf16.mxu0 %v2125
    %2189 = vmatpush1.bf16.msra.mxu0 %v2124
    %2190 = vmatprep.subr.bf16.mxu0 %v2127
    %2191 = vmatpush1.bf16.msra.mxu0 %v2126
    %2192 = vmatprep.mubr.bf16.mxu0 %v1960
    %2193 = vmatmul.mubr.bf16.gmra.mrb[0].mxu0 %v1959
    %v2194 = vpop.f32.mrb[0].mxu0
    %v2195 = vadd.f32 0.0, %v2194
    %v2196 = vpop.f32.mrb[0].mxu0
    %v2197 = vadd.f32 0.0, %v2196
    %v2198 = vpop.f32.mrb[0].mxu0
    %v2199 = vadd.f32 0.0, %v2198
    %v2200 = vpop.f32.mrb[0].mxu0
    %v2201 = vadd.f32 0.0, %v2200
    %2202 = vmatprep.mubr.bf16.mxu0 %v1962
    %2203 = vmatmul.mubr.bf16.gmra.mrb[0].mxu0 %v1961
    %v2204 = vpop.f32.mrb[0].mxu0
    %v2205 = vadd.f32 0.0, %v2204
    %v2206 = vpop.f32.mrb[0].mxu0
    %v2207 = vadd.f32 0.0, %v2206
    %v2208 = vpop.f32.mrb[0].mxu0
    %v2209 = vadd.f32 0.0, %v2208
    %v2210 = vpop.f32.mrb[0].mxu0
    %v2211 = vadd.f32 0.0, %v2210
    %2212 = vmatprep.mubr.bf16.mxu0 %v1964
    %2213 = vmatmul.mubr.bf16.gmra.mrb[0].mxu0 %v1963
    %v2214 = vpop.f32.mrb[0].mxu0
    %v2215 = vadd.f32 0.0, %v2214
    %v2216 = vpop.f32.mrb[0].mxu0
    %v2217 = vadd.f32 0.0, %v2216
    %v2218 = vpop.f32.mrb[0].mxu0
    %v2219 = vadd.f32 0.0, %v2218
    %v2220 = vpop.f32.mrb[0].mxu0
    %v2221 = vadd.f32 0.0, %v2220
    %2222 = vmatprep.mubr.bf16.mxu0 %v1966
    %2223 = vmatmul.mubr.bf16.gmra.mrb[0].mxu0 %v1965
    %v2224 = vpop.f32.mrb[0].mxu0
    %v2225 = vadd.f32 0.0, %v2224
    %v2226 = vpop.f32.mrb[0].mxu0
    %v2227 = vadd.f32 0.0, %v2226
    %v2228 = vpop.f32.mrb[0].mxu0
    %v2229 = vadd.f32 0.0, %v2228
    %v2230 = vpop.f32.mrb[0].mxu0
    %v2231 = vadd.f32 0.0, %v2230
    %2232 = vdwg.mxu0
    %v2234 = vshrl.u32 %v1957, 16
    %v2236 = vrot.slane %v2234, 7
    %v2238 = vshrl.u32 %v1959, 16
    %v2240 = vrot.slane %v2238, 7
    %v2241 = vshll.u32 %v1959, 16
    %v2243 = vor.u32 %v2240, %v2241
    %v2244 = vsel %vm1161, %v2236, %v2243
    %v2246 = vshrl.u32 %v1958, 16
    %v2248 = vrot.slane %v2246, 7
    %v2250 = vshrl.u32 %v1960, 16
    %v2252 = vrot.slane %v2250, 7
    %v2253 = vshll.u32 %v1960, 16
    %v2255 = vor.u32 %v2252, %v2253
    %v2256 = vsel %vm1161, %v2248, %v2255
    %v2258 = vshrl.u32 %v1961, 16
    %v2260 = vrot.slane %v2258, 7
    %v2261 = vshll.u32 %v1961, 16
    %v2263 = vor.u32 %v2260, %v2261
    %v2264 = vsel %vm1161, %v2240, %v2263
    %v2266 = vshrl.u32 %v1962, 16
    %v2268 = vrot.slane %v2266, 7
    %v2269 = vshll.u32 %v1962, 16
    %v2271 = vor.u32 %v2268, %v2269
    %v2272 = vsel %vm1161, %v2252, %v2271
    %v2274 = vshrl.u32 %v1963, 16
    %v2276 = vrot.slane %v2274, 7
    %v2277 = vshll.u32 %v1963, 16
    %v2279 = vor.u32 %v2276, %v2277
    %v2280 = vsel %vm1161, %v2260, %v2279
    %v2282 = vshrl.u32 %v1964, 16
    %v2284 = vrot.slane %v2282, 7
    %v2285 = vshll.u32 %v1964, 16
    %v2287 = vor.u32 %v2284, %v2285
    %v2288 = vsel %vm1161, %v2268, %v2287
    %v2290 = vshrl.u32 %v1965, 16
    %v2292 = vrot.slane %v2290, 7
    %v2293 = vshll.u32 %v1965, 16
    %v2295 = vor.u32 %v2292, %v2293
    %v2296 = vsel %vm1161, %v2276, %v2295
    %v2298 = vshrl.u32 %v1966, 16
    %v2300 = vrot.slane %v2298, 7
    %v2301 = vshll.u32 %v1966, 16
    %v2303 = vor.u32 %v2300, %v2301
    %v2304 = vsel %vm1161, %v2284, %v2303
    %v2345 = vunpack.c.l.b16 %v1925
    %v2346 = vunpack.c.h.b16 %v1925
    %v2347 = vunpack.c.l.b16 %v1926
    %v2348 = vunpack.c.h.b16 %v1926
    %v2349 = vunpack.c.l.b16 %v1927
    %v2350 = vunpack.c.h.b16 %v1927
    %v2351 = vunpack.c.l.b16 %v1928
    %v2352 = vunpack.c.h.b16 %v1928
    %v2353 = vunpack.c.l.b16 %v1929
    %v2354 = vunpack.c.h.b16 %v1929
    %v2355 = vunpack.c.l.b16 %v1930
    %v2356 = vunpack.c.h.b16 %v1930
    %v2357 = vunpack.c.l.b16 %v1931
    %v2358 = vunpack.c.h.b16 %v1931
    %v2359 = vunpack.c.l.b16 %v1932
    %v2360 = vunpack.c.h.b16 %v1932
    %v2361 = vunpack.c.l.b16 %v1933
    %v2362 = vunpack.c.h.b16 %v1933
    %v2363 = vunpack.c.l.b16 %v1934
    %v2364 = vunpack.c.h.b16 %v1934
    %v2365 = vunpack.c.l.b16 %v1935
    %v2366 = vunpack.c.h.b16 %v1935
    %v2367 = vunpack.c.l.b16 %v1936
    %v2368 = vunpack.c.h.b16 %v1936
    %v2369 = vunpack.c.l.b16 %v1937
    %v2370 = vunpack.c.h.b16 %v1937
    %v2371 = vunpack.c.l.b16 %v1938
    %v2372 = vunpack.c.h.b16 %v1938
    %v2373 = vunpack.c.l.b16 %v1939
    %v2374 = vunpack.c.h.b16 %v1939
    %v2375 = vunpack.c.l.b16 %v1940
    %v2376 = vunpack.c.h.b16 %v1940
    %v2377 = vunpack.c.l.b16 %v1941
    %v2378 = vunpack.c.h.b16 %v1941
    %v2379 = vunpack.c.l.b16 %v1942
    %v2380 = vunpack.c.h.b16 %v1942
    %v2381 = vunpack.c.l.b16 %v1943
    %v2382 = vunpack.c.h.b16 %v1943
    %v2383 = vunpack.c.l.b16 %v1944
    %v2384 = vunpack.c.h.b16 %v1944
    %v2385 = vunpack.c.l.b16 %v1945
    %v2386 = vunpack.c.h.b16 %v1945
    %v2387 = vunpack.c.l.b16 %v1946
    %v2388 = vunpack.c.h.b16 %v1946
    %v2389 = vunpack.c.l.b16 %v1947
    %v2390 = vunpack.c.h.b16 %v1947
    %v2391 = vunpack.c.l.b16 %v1948
    %v2392 = vunpack.c.h.b16 %v1948
    %v2393 = vunpack.c.l.b16 %v1949
    %v2394 = vunpack.c.h.b16 %v1949
    %v2395 = vunpack.c.l.b16 %v1950
    %v2396 = vunpack.c.h.b16 %v1950
    %v2397 = vunpack.c.l.b16 %v1951
    %v2398 = vunpack.c.h.b16 %v1951
    %v2399 = vunpack.c.l.b16 %v1952
    %v2400 = vunpack.c.h.b16 %v1952
    %v2401 = vunpack.c.l.b16 %v1953
    %v2402 = vunpack.c.h.b16 %v1953
    %v2403 = vunpack.c.l.b16 %v1954
    %v2404 = vunpack.c.h.b16 %v1954
    %v2405 = vunpack.c.l.b16 %v1955
    %v2406 = vunpack.c.h.b16 %v1955
    %v2407 = vunpack.c.l.b16 %v1956
    %v2408 = vunpack.c.h.b16 %v1956
    %v2409 = vpack.c.b16 %v2347, %v2345
    %v2410 = vpack.c.b16 %v2348, %v2346
    %v2411 = vpack.c.b16 %v2351, %v2349
    %v2412 = vpack.c.b16 %v2352, %v2350
    %v2413 = vpack.c.b16 %v2355, %v2353
    %v2414 = vpack.c.b16 %v2356, %v2354
    %v2415 = vpack.c.b16 %v2359, %v2357
    %v2416 = vpack.c.b16 %v2360, %v2358
    %v2417 = vpack.c.b16 %v2363, %v2361
    %v2418 = vpack.c.b16 %v2364, %v2362
    %v2419 = vpack.c.b16 %v2367, %v2365
    %v2420 = vpack.c.b16 %v2368, %v2366
    %v2421 = vpack.c.b16 %v2371, %v2369
    %v2422 = vpack.c.b16 %v2372, %v2370
    %v2423 = vpack.c.b16 %v2375, %v2373
    %v2424 = vpack.c.b16 %v2376, %v2374
    %v2425 = vpack.c.b16 %v2379, %v2377
    %v2426 = vpack.c.b16 %v2380, %v2378
    %v2427 = vpack.c.b16 %v2383, %v2381
    %v2428 = vpack.c.b16 %v2384, %v2382
    %v2429 = vpack.c.b16 %v2387, %v2385
    %v2430 = vpack.c.b16 %v2388, %v2386
    %v2431 = vpack.c.b16 %v2391, %v2389
    %v2432 = vpack.c.b16 %v2392, %v2390
    %v2433 = vpack.c.b16 %v2395, %v2393
    %v2434 = vpack.c.b16 %v2396, %v2394
    %v2435 = vpack.c.b16 %v2399, %v2397
    %v2436 = vpack.c.b16 %v2400, %v2398
    %v2437 = vpack.c.b16 %v2403, %v2401
    %v2438 = vpack.c.b16 %v2404, %v2402
    %v2439 = vpack.c.b16 %v2407, %v2405
    %v2440 = vpack.c.b16 %v2408, %v2406
    %2473 = vmatprep.subr.bf16.mxu0 %v2410
    %2474 = vmatpush1.bf16.msra.mxu0 %v2409
    %2475 = vmatprep.subr.bf16.mxu0 %v2412
    %2476 = vmatpush1.bf16.msra.mxu0 %v2411
    %2477 = vmatprep.subr.bf16.mxu0 %v2414
    %2478 = vmatpush1.bf16.msra.mxu0 %v2413
    %2479 = vmatprep.subr.bf16.mxu0 %v2416
    %2480 = vmatpush1.bf16.msra.mxu0 %v2415
    %2481 = vmatprep.subr.bf16.mxu0 %v2418
    %2482 = vmatpush1.bf16.msra.mxu0 %v2417
    %2483 = vmatprep.subr.bf16.mxu0 %v2420
    %2484 = vmatpush1.bf16.msra.mxu0 %v2419
    %2485 = vmatprep.subr.bf16.mxu0 %v2422
    %2486 = vmatpush1.bf16.msra.mxu0 %v2421
    %2487 = vmatprep.subr.bf16.mxu0 %v2424
    %2488 = vmatpush1.bf16.msra.mxu0 %v2423
    %2489 = vmatprep.subr.bf16.mxu0 %v2426
    %2490 = vmatpush1.bf16.msra.mxu0 %v2425
    %2491 = vmatprep.subr.bf16.mxu0 %v2428
    %2492 = vmatpush1.bf16.msra.mxu0 %v2427
    %2493 = vmatprep.subr.bf16.mxu0 %v2430
    %2494 = vmatpush1.bf16.msra.mxu0 %v2429
    %2495 = vmatprep.subr.bf16.mxu0 %v2432
    %2496 = vmatpush1.bf16.msra.mxu0 %v2431
    %2497 = vmatprep.subr.bf16.mxu0 %v2434
    %2498 = vmatpush1.bf16.msra.mxu0 %v2433
    %2499 = vmatprep.subr.bf16.mxu0 %v2436
    %2500 = vmatpush1.bf16.msra.mxu0 %v2435
    %2501 = vmatprep.subr.bf16.mxu0 %v2438
    %2502 = vmatpush1.bf16.msra.mxu0 %v2437
    %2503 = vmatprep.subr.bf16.mxu0 %v2440
    %2504 = vmatpush1.bf16.msra.mxu0 %v2439
    %2505 = vmatprep.mubr.bf16.mxu0 %v2256
    %2506 = vmatmul.mubr.bf16.gmra.mrb[0].mxu0 %v2244
    %v2507 = vpop.f32.mrb[0].mxu0
    %v2508 = vadd.f32 %v2195, %v2507
    %v2509 = vpop.f32.mrb[0].mxu0
    %v2510 = vadd.f32 %v2197, %v2509
    %v2511 = vpop.f32.mrb[0].mxu0
    %v2512 = vadd.f32 %v2199, %v2511
    %v2513 = vpop.f32.mrb[0].mxu0
    %v2514 = vadd.f32 %v2201, %v2513
    %2515 = vmatprep.mubr.bf16.mxu0 %v2272
    %2516 = vmatmul.mubr.bf16.gmra.mrb[0].mxu0 %v2264
    %v2517 = vpop.f32.mrb[0].mxu0
    %v2518 = vadd.f32 %v2205, %v2517
    %v2519 = vpop.f32.mrb[0].mxu0
    %v2520 = vadd.f32 %v2207, %v2519
    %v2521 = vpop.f32.mrb[0].mxu0
    %v2522 = vadd.f32 %v2209, %v2521
    %v2523 = vpop.f32.mrb[0].mxu0
    %v2524 = vadd.f32 %v2211, %v2523
    %2525 = vmatprep.mubr.bf16.mxu0 %v2288
    %2526 = vmatmul.mubr.bf16.gmra.mrb[0].mxu0 %v2280
    %v2527 = vpop.f32.mrb[0].mxu0
    %v2528 = vadd.f32 %v2215, %v2527
    %v2529 = vpop.f32.mrb[0].mxu0
    %v2530 = vadd.f32 %v2217, %v2529
    %v2531 = vpop.f32.mrb[0].mxu0
    %v2532 = vadd.f32 %v2219, %v2531
    %v2533 = vpop.f32.mrb[0].mxu0
    %v2534 = vadd.f32 %v2221, %v2533
    %2535 = vmatprep.mubr.bf16.mxu0 %v2304
    %2536 = vmatmul.mubr.bf16.gmra.mrb[0].mxu0 %v2296
    %v2537 = vpop.f32.mrb[0].mxu0
    %v2538 = vadd.f32 %v2225, %v2537
    %v2539 = vpop.f32.mrb[0].mxu0
    %v2540 = vadd.f32 %v2227, %v2539
    %v2541 = vpop.f32.mrb[0].mxu0
    %v2542 = vadd.f32 %v2229, %v2541
    %v2543 = vpop.f32.mrb[0].mxu0
    %v2544 = vadd.f32 %v2231, %v2543
    %2545 = vdwg.mxu0
    %s2546 = scalar_lea.vmem [#allocation10], 1280
    %v2547 = vld [vmem:[%s2546] sm:$0xff]
    %v2548 = vld [vmem:[%s2546 + $0x8] sm:$0xff]
    %v2549 = vld [vmem:[%s2546 + $0x10] sm:$0xff]
    %v2550 = vld [vmem:[%s2546 + $0x18] sm:$0xff]
    %v2551 = vld [vmem:[%s2546 + $0x20] sm:$0xff]
    %v2552 = vld [vmem:[%s2546 + $0x28] sm:$0xff]
    %v2553 = vld [vmem:[%s2546 + $0x30] sm:$0xff]
    %v2554 = vld [vmem:[%s2546 + $0x38] sm:$0xff]
    %v2555 = vld [vmem:[%s2546 + $0x40] sm:$0xff]
    %v2556 = vld [vmem:[%s2546 + $0x48] sm:$0xff]
    %v2557 = vld [vmem:[%s2546 + $0x50] sm:$0xff]
    %v2558 = vld [vmem:[%s2546 + $0x58] sm:$0xff]
    %v2559 = vld [vmem:[%s2546 + $0x60] sm:$0xff]
    %v2560 = vld [vmem:[%s2546 + $0x68] sm:$0xff]
    %v2561 = vld [vmem:[%s2546 + $0x70] sm:$0xff]
    %v2562 = vld [vmem:[%s2546 + $0x78] sm:$0xff]
    %v2563 = vld [vmem:[%s2546 + $0x80] sm:$0xff]
    %v2564 = vld [vmem:[%s2546 + $0x88] sm:$0xff]
    %v2565 = vld [vmem:[%s2546 + $0x90] sm:$0xff]
    %v2566 = vld [vmem:[%s2546 + $0x98] sm:$0xff]
    %v2567 = vld [vmem:[%s2546 + $0xa0] sm:$0xff]
    %v2568 = vld [vmem:[%s2546 + $0xa8] sm:$0xff]
    %v2569 = vld [vmem:[%s2546 + $0xb0] sm:$0xff]
    %v2570 = vld [vmem:[%s2546 + $0xb8] sm:$0xff]
    %v2571 = vld [vmem:[%s2546 + $0xc0] sm:$0xff]
    %v2572 = vld [vmem:[%s2546 + $0xc8] sm:$0xff]
    %v2573 = vld [vmem:[%s2546 + $0xd0] sm:$0xff]
    %v2574 = vld [vmem:[%s2546 + $0xd8] sm:$0xff]
    %v2575 = vld [vmem:[%s2546 + $0xe0] sm:$0xff]
    %v2576 = vld [vmem:[%s2546 + $0xe8] sm:$0xff]
    %v2577 = vld [vmem:[%s2546 + $0xf0] sm:$0xff]
    %v2578 = vld [vmem:[%s2546 + $0xf8] sm:$0xff]
    %v2579 = vld [vmem:[#allocation3 + $0x10] sm:$0xff]
    %v2580 = vld [vmem:[#allocation3 + $0x18] sm:$0xff]
    %v2581 = vld [vmem:[#allocation3 + $0x20] sm:$0xff]
    %v2582 = vld [vmem:[#allocation3 + $0x28] sm:$0xff]
    %v2583 = vld [vmem:[#allocation3 + $0x30] sm:$0xff]
    %v2584 = vld [vmem:[#allocation3 + $0x38] sm:$0xff]
    %v2585 = vld [vmem:[#allocation3 + $0x40] sm:$0xff]
    %v2586 = vld [vmem:[#allocation3 + $0x48] sm:$0xff]
    %v2587 = vld [vmem:[#allocation3 + $0x50] sm:$0x1]
    %v2588 = vld [vmem:[#allocation3 + $0x58] sm:$0x1]
    %v2590 = vshrl.u32 %v2579, 16
    %v2592 = vshll.u32 %v2579, 16
    %v2594 = vrot.slane %v2592, 1
    %v2595 = vor.u32 %v2590, %v2594
    %v2597 = vshll.u32 %v2581, 16
    %v2599 = vrot.slane %v2597, 1
    %v2600 = vsel %vm603, %v2595, %v2599
    %v2602 = vshrl.u32 %v2580, 16
    %v2604 = vshll.u32 %v2580, 16
    %v2606 = vrot.slane %v2604, 1
    %v2607 = vor.u32 %v2602, %v2606
    %v2609 = vshll.u32 %v2582, 16
    %v2611 = vrot.slane %v2609, 1
    %v2612 = vsel %vm603, %v2607, %v2611
    %v2613 = vshrl.u32 %v2581, 16
    %v2615 = vor.u32 %v2613, %v2599
    %v2617 = vshll.u32 %v2583, 16
    %v2619 = vrot.slane %v2617, 1
    %v2620 = vsel %vm603, %v2615, %v2619
    %v2621 = vshrl.u32 %v2582, 16
    %v2623 = vor.u32 %v2621, %v2611
    %v2625 = vshll.u32 %v2584, 16
    %v2627 = vrot.slane %v2625, 1
    %v2628 = vsel %vm603, %v2623, %v2627
    %v2629 = vshrl.u32 %v2583, 16
    %v2631 = vor.u32 %v2629, %v2619
    %v2633 = vshll.u32 %v2585, 16
    %v2635 = vrot.slane %v2633, 1
    %v2636 = vsel %vm603, %v2631, %v2635
    %v2637 = vshrl.u32 %v2584, 16
    %v2639 = vor.u32 %v2637, %v2627
    %v2641 = vshll.u32 %v2586, 16
    %v2643 = vrot.slane %v2641, 1
    %v2644 = vsel %vm603, %v2639, %v2643
    %v2645 = vshrl.u32 %v2585, 16
    %v2647 = vor.u32 %v2645, %v2635
    %v2649 = vshll.u32 %v2587, 16
    %v2651 = vrot.slane %v2649, 1
    %v2652 = vsel %vm603, %v2647, %v2651
    %v2653 = vshrl.u32 %v2586, 16
    %v2655 = vor.u32 %v2653, %v2643
    %v2657 = vshll.u32 %v2588, 16
    %v2659 = vrot.slane %v2657, 1
    %v2660 = vsel %vm603, %v2655, %v2659
    %v2701 = vunpack.c.l.b16 %v2547
    %v2702 = vunpack.c.h.b16 %v2547
    %v2703 = vunpack.c.l.b16 %v2548
    %v2704 = vunpack.c.h.b16 %v2548
    %v2705 = vunpack.c.l.b16 %v2549
    %v2706 = vunpack.c.h.b16 %v2549
    %v2707 = vunpack.c.l.b16 %v2550
    %v2708 = vunpack.c.h.b16 %v2550
    %v2709 = vunpack.c.l.b16 %v2551
    %v2710 = vunpack.c.h.b16 %v2551
    %v2711 = vunpack.c.l.b16 %v2552
    %v2712 = vunpack.c.h.b16 %v2552
    %v2713 = vunpack.c.l.b16 %v2553
    %v2714 = vunpack.c.h.b16 %v2553
    %v2715 = vunpack.c.l.b16 %v2554
    %v2716 = vunpack.c.h.b16 %v2554
    %v2717 = vunpack.c.l.b16 %v2555
    %v2718 = vunpack.c.h.b16 %v2555
    %v2719 = vunpack.c.l.b16 %v2556
    %v2720 = vunpack.c.h.b16 %v2556
    %v2721 = vunpack.c.l.b16 %v2557
    %v2722 = vunpack.c.h.b16 %v2557
    %v2723 = vunpack.c.l.b16 %v2558
    %v2724 = vunpack.c.h.b16 %v2558
    %v2725 = vunpack.c.l.b16 %v2559
    %v2726 = vunpack.c.h.b16 %v2559
    %v2727 = vunpack.c.l.b16 %v2560
    %v2728 = vunpack.c.h.b16 %v2560
    %v2729 = vunpack.c.l.b16 %v2561
    %v2730 = vunpack.c.h.b16 %v2561
    %v2731 = vunpack.c.l.b16 %v2562
    %v2732 = vunpack.c.h.b16 %v2562
    %v2733 = vunpack.c.l.b16 %v2563
    %v2734 = vunpack.c.h.b16 %v2563
    %v2735 = vunpack.c.l.b16 %v2564
    %v2736 = vunpack.c.h.b16 %v2564
    %v2737 = vunpack.c.l.b16 %v2565
    %v2738 = vunpack.c.h.b16 %v2565
    %v2739 = vunpack.c.l.b16 %v2566
    %v2740 = vunpack.c.h.b16 %v2566
    %v2741 = vunpack.c.l.b16 %v2567
    %v2742 = vunpack.c.h.b16 %v2567
    %v2743 = vunpack.c.l.b16 %v2568
    %v2744 = vunpack.c.h.b16 %v2568
    %v2745 = vunpack.c.l.b16 %v2569
    %v2746 = vunpack.c.h.b16 %v2569
    %v2747 = vunpack.c.l.b16 %v2570
    %v2748 = vunpack.c.h.b16 %v2570
    %v2749 = vunpack.c.l.b16 %v2571
    %v2750 = vunpack.c.h.b16 %v2571
    %v2751 = vunpack.c.l.b16 %v2572
    %v2752 = vunpack.c.h.b16 %v2572
    %v2753 = vunpack.c.l.b16 %v2573
    %v2754 = vunpack.c.h.b16 %v2573
    %v2755 = vunpack.c.l.b16 %v2574
    %v2756 = vunpack.c.h.b16 %v2574
    %v2757 = vunpack.c.l.b16 %v2575
    %v2758 = vunpack.c.h.b16 %v2575
    %v2759 = vunpack.c.l.b16 %v2576
    %v2760 = vunpack.c.h.b16 %v2576
    %v2761 = vunpack.c.l.b16 %v2577
    %v2762 = vunpack.c.h.b16 %v2577
    %v2763 = vunpack.c.l.b16 %v2578
    %v2764 = vunpack.c.h.b16 %v2578
    %v2765 = vpack.c.b16 %v2703, %v2701
    %v2766 = vpack.c.b16 %v2704, %v2702
    %v2767 = vpack.c.b16 %v2707, %v2705
    %v2768 = vpack.c.b16 %v2708, %v2706
    %v2769 = vpack.c.b16 %v2711, %v2709
    %v2770 = vpack.c.b16 %v2712, %v2710
    %v2771 = vpack.c.b16 %v2715, %v2713
    %v2772 = vpack.c.b16 %v2716, %v2714
    %v2773 = vpack.c.b16 %v2719, %v2717
    %v2774 = vpack.c.b16 %v2720, %v2718
    %v2775 = vpack.c.b16 %v2723, %v2721
    %v2776 = vpack.c.b16 %v2724, %v2722
    %v2777 = vpack.c.b16 %v2727, %v2725
    %v2778 = vpack.c.b16 %v2728, %v2726
    %v2779 = vpack.c.b16 %v2731, %v2729
    %v2780 = vpack.c.b16 %v2732, %v2730
    %v2781 = vpack.c.b16 %v2735, %v2733
    %v2782 = vpack.c.b16 %v2736, %v2734
    %v2783 = vpack.c.b16 %v2739, %v2737
    %v2784 = vpack.c.b16 %v2740, %v2738
    %v2785 = vpack.c.b16 %v2743, %v2741
    %v2786 = vpack.c.b16 %v2744, %v2742
    %v2787 = vpack.c.b16 %v2747, %v2745
    %v2788 = vpack.c.b16 %v2748, %v2746
    %v2789 = vpack.c.b16 %v2751, %v2749
    %v2790 = vpack.c.b16 %v2752, %v2750
    %v2791 = vpack.c.b16 %v2755, %v2753
    %v2792 = vpack.c.b16 %v2756, %v2754
    %v2793 = vpack.c.b16 %v2759, %v2757
    %v2794 = vpack.c.b16 %v2760, %v2758
    %v2795 = vpack.c.b16 %v2763, %v2761
    %v2796 = vpack.c.b16 %v2764, %v2762
    %2829 = vmatprep.subr.bf16.mxu0 %v2766
    %2830 = vmatpush1.bf16.msra.mxu0 %v2765
    %2831 = vmatprep.subr.bf16.mxu0 %v2768
    %2832 = vmatpush1.bf16.msra.mxu0 %v2767
    %2833 = vmatprep.subr.bf16.mxu0 %v2770
    %2834 = vmatpush1.bf16.msra.mxu0 %v2769
    %2835 = vmatprep.subr.bf16.mxu0 %v2772
    %2836 = vmatpush1.bf16.msra.mxu0 %v2771
    %2837 = vmatprep.subr.bf16.mxu0 %v2774
    %2838 = vmatpush1.bf16.msra.mxu0 %v2773
    %2839 = vmatprep.subr.bf16.mxu0 %v2776
    %2840 = vmatpush1.bf16.msra.mxu0 %v2775
    %2841 = vmatprep.subr.bf16.mxu0 %v2778
    %2842 = vmatpush1.bf16.msra.mxu0 %v2777
    %2843 = vmatprep.subr.bf16.mxu0 %v2780
    %2844 = vmatpush1.bf16.msra.mxu0 %v2779
    %2845 = vmatprep.subr.bf16.mxu0 %v2782
    %2846 = vmatpush1.bf16.msra.mxu0 %v2781
    %2847 = vmatprep.subr.bf16.mxu0 %v2784
    %2848 = vmatpush1.bf16.msra.mxu0 %v2783
    %2849 = vmatprep.subr.bf16.mxu0 %v2786
    %2850 = vmatpush1.bf16.msra.mxu0 %v2785
    %2851 = vmatprep.subr.bf16.mxu0 %v2788
    %2852 = vmatpush1.bf16.msra.mxu0 %v2787
    %2853 = vmatprep.subr.bf16.mxu0 %v2790
    %2854 = vmatpush1.bf16.msra.mxu0 %v2789
    %2855 = vmatprep.subr.bf16.mxu0 %v2792
    %2856 = vmatpush1.bf16.msra.mxu0 %v2791
    %2857 = vmatprep.subr.bf16.mxu0 %v2794
    %2858 = vmatpush1.bf16.msra.mxu0 %v2793
    %2859 = vmatprep.subr.bf16.mxu0 %v2796
    %2860 = vmatpush1.bf16.msra.mxu0 %v2795
    %2861 = vmatprep.mubr.bf16.mxu0 %v2612
    %2862 = vmatmul.mubr.bf16.gmra.mrb[0].mxu0 %v2600
    %v2863 = vpop.f32.mrb[0].mxu0
    %v2864 = vadd.f32 0.0, %v2863
    %v2865 = vpop.f32.mrb[0].mxu0
    %v2866 = vadd.f32 0.0, %v2865
    %v2867 = vpop.f32.mrb[0].mxu0
    %v2868 = vadd.f32 0.0, %v2867
    %v2869 = vpop.f32.mrb[0].mxu0
    %v2870 = vadd.f32 0.0, %v2869
    %2871 = vmatprep.mubr.bf16.mxu0 %v2628
    %2872 = vmatmul.mubr.bf16.gmra.mrb[0].mxu0 %v2620
    %v2873 = vpop.f32.mrb[0].mxu0
    %v2874 = vadd.f32 0.0, %v2873
    %v2875 = vpop.f32.mrb[0].mxu0
    %v2876 = vadd.f32 0.0, %v2875
    %v2877 = vpop.f32.mrb[0].mxu0
    %v2878 = vadd.f32 0.0, %v2877
    %v2879 = vpop.f32.mrb[0].mxu0
    %v2880 = vadd.f32 0.0, %v2879
    %2881 = vmatprep.mubr.bf16.mxu0 %v2644
    %2882 = vmatmul.mubr.bf16.gmra.mrb[0].mxu0 %v2636
    %v2883 = vpop.f32.mrb[0].mxu0
    %v2884 = vadd.f32 0.0, %v2883
    %v2885 = vpop.f32.mrb[0].mxu0
    %v2886 = vadd.f32 0.0, %v2885
    %v2887 = vpop.f32.mrb[0].mxu0
    %v2888 = vadd.f32 0.0, %v2887
    %v2889 = vpop.f32.mrb[0].mxu0
    %v2890 = vadd.f32 0.0, %v2889
    %2891 = vmatprep.mubr.bf16.mxu0 %v2660
    %2892 = vmatmul.mubr.bf16.gmra.mrb[0].mxu0 %v2652
    %v2893 = vpop.f32.mrb[0].mxu0
    %v2894 = vadd.f32 0.0, %v2893
    %v2895 = vpop.f32.mrb[0].mxu0
    %v2896 = vadd.f32 0.0, %v2895
    %v2897 = vpop.f32.mrb[0].mxu0
    %v2898 = vadd.f32 0.0, %v2897
    %v2899 = vpop.f32.mrb[0].mxu0
    %v2900 = vadd.f32 0.0, %v2899
    %2901 = vdwg.mxu0
    %v2902 = vadd.f32 %v2508, %v2864
    %v2903 = vadd.f32 %v2510, %v2866
    %v2904 = vadd.f32 %v2512, %v2868
    %v2905 = vadd.f32 %v2514, %v2870
    %v2906 = vadd.f32 %v2518, %v2874
    %v2907 = vadd.f32 %v2520, %v2876
    %v2908 = vadd.f32 %v2522, %v2878
    %v2909 = vadd.f32 %v2524, %v2880
    %v2910 = vadd.f32 %v2528, %v2884
    %v2911 = vadd.f32 %v2530, %v2886
    %v2912 = vadd.f32 %v2532, %v2888
    %v2913 = vadd.f32 %v2534, %v2890
    %v2914 = vadd.f32 %v2538, %v2894
    %v2915 = vadd.f32 %v2540, %v2896
    %v2916 = vadd.f32 %v2542, %v2898
    %v2917 = vadd.f32 %v2544, %v2900
    %s2918 = scalar_lea.vmem [#allocation11], 4
    %v2919 = vld [vmem:[%s2918] sm:$0x3]
    %v2921 = vlaneseq
    %v2922 = vshrl.u32 %v2921, 7
    %v2923 = vsub.s32 0, %v2922
    %v2924 = vrot.slane %v2919, %v2923
    %v2925 = vlaneseq
    %v2926 = vshrl.u32 %v2925, 7
    %v2927 = vsub.s32 1, %v2926
    %v2928 = vrot.slane %v2919, %v2927
    %v2931 = vadd.f32 %v2902, %v2924
    %v2932 = vadd.f32 %v2903, %v2928
    %v2933 = vadd.f32 %v2904, %v2924
    %v2934 = vadd.f32 %v2905, %v2928
    %v2935 = vadd.f32 %v2906, %v2924
    %v2936 = vadd.f32 %v2907, %v2928
    %v2937 = vadd.f32 %v2908, %v2924
    %v2938 = vadd.f32 %v2909, %v2928
    %v2939 = vadd.f32 %v2910, %v2924
    %v2940 = vadd.f32 %v2911, %v2928
    %v2941 = vadd.f32 %v2912, %v2924
    %v2942 = vadd.f32 %v2913, %v2928
    %v2943 = vadd.f32 %v2914, %v2924
    %v2944 = vadd.f32 %v2915, %v2928
    %v2945 = vadd.f32 %v2916, %v2924
    %v2946 = vadd.f32 %v2917, %v2928
    %v2947 = vadd.f32 %v2931, %v821
    %v2948 = vadd.f32 %v2932, %v822
    %v2949 = vadd.f32 %v2933, %v823
    %v2950 = vadd.f32 %v2934, %v824
    %v2951 = vadd.f32 %v2935, %v825
    %v2952 = vadd.f32 %v2936, %v826
    %v2953 = vadd.f32 %v2937, %v827
    %v2954 = vadd.f32 %v2938, %v828
    %v2955 = vadd.f32 %v2939, %v829
    %v2956 = vadd.f32 %v2940, %v830
    %v2957 = vadd.f32 %v2941, %v831
    %v2958 = vadd.f32 %v2942, %v832
    %v2959 = vadd.f32 %v2943, %v833
    %v2960 = vadd.f32 %v2944, %v834
    %v2961 = vadd.f32 %v2945, %v835
    %v2962 = vadd.f32 %v2946, %v836
    %v2963 = vmax.f32 %v2947, 0.0
    %v2964 = vmax.f32 %v2948, 0.0
    %v2965 = vmax.f32 %v2949, 0.0
    %v2966 = vmax.f32 %v2950, 0.0
    %v2967 = vmax.f32 %v2951, 0.0
    %v2968 = vmax.f32 %v2952, 0.0
    %v2969 = vmax.f32 %v2953, 0.0
    %v2970 = vmax.f32 %v2954, 0.0
    %v2971 = vmax.f32 %v2955, 0.0
    %v2972 = vmax.f32 %v2956, 0.0
    %v2973 = vmax.f32 %v2957, 0.0
    %v2974 = vmax.f32 %v2958, 0.0
    %v2975 = vmax.f32 %v2959, 0.0
    %v2976 = vmax.f32 %v2960, 0.0
    %v2977 = vmax.f32 %v2961, 0.0
    %v2978 = vmax.f32 %v2962, 0.0
    %v2979 = vsel %vm813, %v2963, 0.0
    %v2980 = vsel %vm813, %v2964, 0.0
    %v2981 = vsel %vm814, %v2965, 0.0
    %v2982 = vsel %vm814, %v2966, 0.0
    %v2983 = vsel %vm815, %v2967, 0.0
    %v2984 = vsel %vm815, %v2968, 0.0
    %v2985 = vsel %vm816, %v2969, 0.0
    %v2986 = vsel %vm816, %v2970, 0.0
    %v2987 = vsel %vm817, %v2971, 0.0
    %v2988 = vsel %vm817, %v2972, 0.0
    %v2989 = vsel %vm818, %v2973, 0.0
    %v2990 = vsel %vm818, %v2974, 0.0
    %v2991 = vsel %vm819, %v2975, 0.0
    %v2992 = vsel %vm819, %v2976, 0.0
    %v2993 = vsel %vm820, %v2977, 0.0
    %v2994 = vsel %vm820, %v2978, 0.0
    %v2995 = vpack.c.bf16 %v2981, %v2979
    %v2996 = vpack.c.bf16 %v2982, %v2980
    %v2997 = vpack.c.bf16 %v2985, %v2983
    %v2998 = vpack.c.bf16 %v2986, %v2984
    %v2999 = vpack.c.bf16 %v2989, %v2987
    %v3000 = vpack.c.bf16 %v2990, %v2988
    %v3001 = vpack.c.bf16 %v2993, %v2991
    %v3002 = vpack.c.bf16 %v2994, %v2992
    %3003 = vst [vmem:[#allocation2 + $0x10] sm:$0xff] %v2995
    %3004 = vst [vmem:[#allocation2 + $0x18] sm:$0xff] %v2996
    %3005 = vst [vmem:[#allocation2 + $0x20] sm:$0xff] %v2997
    %3006 = vst [vmem:[#allocation2 + $0x28] sm:$0xff] %v2998
    %3007 = vst [vmem:[#allocation2 + $0x30] sm:$0xff] %v2999
    %3008 = vst [vmem:[#allocation2 + $0x38] sm:$0xff] %v3000
    %3009 = vst [vmem:[#allocation2 + $0x40] sm:$0xff] %v3001
    %3010 = vst [vmem:[#allocation2 + $0x48] sm:$0xff] %v3002
    %s3011 = scalar_lea.vmem [#allocation10], 1536
    %v3012 = vld [vmem:[%s3011] sm:$0xff]
    %v3013 = vld [vmem:[%s3011 + $0x8] sm:$0xff]
    %v3014 = vld [vmem:[%s3011 + $0x10] sm:$0xff]
    %v3015 = vld [vmem:[%s3011 + $0x18] sm:$0xff]
    %v3016 = vld [vmem:[%s3011 + $0x20] sm:$0xff]
    %v3017 = vld [vmem:[%s3011 + $0x28] sm:$0xff]
    %v3018 = vld [vmem:[%s3011 + $0x30] sm:$0xff]
    %v3019 = vld [vmem:[%s3011 + $0x38] sm:$0xff]
    %v3020 = vld [vmem:[%s3011 + $0x40] sm:$0xff]
    %v3021 = vld [vmem:[%s3011 + $0x48] sm:$0xff]
    %v3022 = vld [vmem:[%s3011 + $0x50] sm:$0xff]
    %v3023 = vld [vmem:[%s3011 + $0x58] sm:$0xff]
    %v3024 = vld [vmem:[%s3011 + $0x60] sm:$0xff]
    %v3025 = vld [vmem:[%s3011 + $0x68] sm:$0xff]
    %v3026 = vld [vmem:[%s3011 + $0x70] sm:$0xff]
    %v3027 = vld [vmem:[%s3011 + $0x78] sm:$0xff]
    %v3028 = vld [vmem:[%s3011 + $0x80] sm:$0xff]
    %v3029 = vld [vmem:[%s3011 + $0x88] sm:$0xff]
    %v3030 = vld [vmem:[%s3011 + $0x90] sm:$0xff]
    %v3031 = vld [vmem:[%s3011 + $0x98] sm:$0xff]
    %v3032 = vld [vmem:[%s3011 + $0xa0] sm:$0xff]
    %v3033 = vld [vmem:[%s3011 + $0xa8] sm:$0xff]
    %v3034 = vld [vmem:[%s3011 + $0xb0] sm:$0xff]
    %v3035 = vld [vmem:[%s3011 + $0xb8] sm:$0xff]
    %v3036 = vld [vmem:[%s3011 + $0xc0] sm:$0xff]
    %v3037 = vld [vmem:[%s3011 + $0xc8] sm:$0xff]
    %v3038 = vld [vmem:[%s3011 + $0xd0] sm:$0xff]
    %v3039 = vld [vmem:[%s3011 + $0xd8] sm:$0xff]
    %v3040 = vld [vmem:[%s3011 + $0xe0] sm:$0xff]
    %v3041 = vld [vmem:[%s3011 + $0xe8] sm:$0xff]
    %v3042 = vld [vmem:[%s3011 + $0xf0] sm:$0xff]
    %v3043 = vld [vmem:[%s3011 + $0xf8] sm:$0xff]
    %v3044 = vld [vmem:[#allocation2] sm:$0x80]
    %v3045 = vld [vmem:[#allocation2 + $0x8] sm:$0x80]
    %v3046 = vld [vmem:[#allocation2 + $0x10] sm:$0xff]
    %v3047 = vld [vmem:[#allocation2 + $0x18] sm:$0xff]
    %v3048 = vld [vmem:[#allocation2 + $0x20] sm:$0xff]
    %v3049 = vld [vmem:[#allocation2 + $0x28] sm:$0xff]
    %v3050 = vld [vmem:[#allocation2 + $0x30] sm:$0xff]
    %v3051 = vld [vmem:[#allocation2 + $0x38] sm:$0xff]
    %v3052 = vld [vmem:[#allocation2 + $0x40] sm:$0xff]
    %v3053 = vld [vmem:[#allocation2 + $0x48] sm:$0xff]
    %s3054 = scalar_lea.vmem [#allocation10], 1792
    %v3055 = vld [vmem:[%s3054] sm:$0xff]
    %v3056 = vld [vmem:[%s3054 + $0x8] sm:$0xff]
    %v3057 = vld [vmem:[%s3054 + $0x10] sm:$0xff]
    %v3058 = vld [vmem:[%s3054 + $0x18] sm:$0xff]
    %v3059 = vld [vmem:[%s3054 + $0x20] sm:$0xff]
    %v3060 = vld [vmem:[%s3054 + $0x28] sm:$0xff]
    %v3061 = vld [vmem:[%s3054 + $0x30] sm:$0xff]
    %v3062 = vld [vmem:[%s3054 + $0x38] sm:$0xff]
    %v3063 = vld [vmem:[%s3054 + $0x40] sm:$0xff]
    %v3064 = vld [vmem:[%s3054 + $0x48] sm:$0xff]
    %v3065 = vld [vmem:[%s3054 + $0x50] sm:$0xff]
    %v3066 = vld [vmem:[%s3054 + $0x58] sm:$0xff]
    %v3067 = vld [vmem:[%s3054 + $0x60] sm:$0xff]
    %v3068 = vld [vmem:[%s3054 + $0x68] sm:$0xff]
    %v3069 = vld [vmem:[%s3054 + $0x70] sm:$0xff]
    %v3070 = vld [vmem:[%s3054 + $0x78] sm:$0xff]
    %v3071 = vld [vmem:[%s3054 + $0x80] sm:$0xff]
    %v3072 = vld [vmem:[%s3054 + $0x88] sm:$0xff]
    %v3073 = vld [vmem:[%s3054 + $0x90] sm:$0xff]
    %v3074 = vld [vmem:[%s3054 + $0x98] sm:$0xff]
    %v3075 = vld [vmem:[%s3054 + $0xa0] sm:$0xff]
    %v3076 = vld [vmem:[%s3054 + $0xa8] sm:$0xff]
    %v3077 = vld [vmem:[%s3054 + $0xb0] sm:$0xff]
    %v3078 = vld [vmem:[%s3054 + $0xb8] sm:$0xff]
    %v3079 = vld [vmem:[%s3054 + $0xc0] sm:$0xff]
    %v3080 = vld [vmem:[%s3054 + $0xc8] sm:$0xff]
    %v3081 = vld [vmem:[%s3054 + $0xd0] sm:$0xff]
    %v3082 = vld [vmem:[%s3054 + $0xd8] sm:$0xff]
    %v3083 = vld [vmem:[%s3054 + $0xe0] sm:$0xff]
    %v3084 = vld [vmem:[%s3054 + $0xe8] sm:$0xff]
    %v3085 = vld [vmem:[%s3054 + $0xf0] sm:$0xff]
    %v3086 = vld [vmem:[%s3054 + $0xf8] sm:$0xff]
    %v3119 = vunpack.c.l.b16 %v3055
    %v3120 = vunpack.c.h.b16 %v3055
    %v3121 = vunpack.c.l.b16 %v3056
    %v3122 = vunpack.c.h.b16 %v3056
    %v3123 = vunpack.c.l.b16 %v3057
    %v3124 = vunpack.c.h.b16 %v3057
    %v3125 = vunpack.c.l.b16 %v3058
    %v3126 = vunpack.c.h.b16 %v3058
    %v3127 = vunpack.c.l.b16 %v3059
    %v3128 = vunpack.c.h.b16 %v3059
    %v3129 = vunpack.c.l.b16 %v3060
    %v3130 = vunpack.c.h.b16 %v3060
    %v3131 = vunpack.c.l.b16 %v3061
    %v3132 = vunpack.c.h.b16 %v3061
    %v3133 = vunpack.c.l.b16 %v3062
    %v3134 = vunpack.c.h.b16 %v3062
    %v3135 = vunpack.c.l.b16 %v3063
    %v3136 = vunpack.c.h.b16 %v3063
    %v3137 = vunpack.c.l.b16 %v3064
    %v3138 = vunpack.c.h.b16 %v3064
    %v3139 = vunpack.c.l.b16 %v3065
    %v3140 = vunpack.c.h.b16 %v3065
    %v3141 = vunpack.c.l.b16 %v3066
    %v3142 = vunpack.c.h.b16 %v3066
    %v3143 = vunpack.c.l.b16 %v3067
    %v3144 = vunpack.c.h.b16 %v3067
    %v3145 = vunpack.c.l.b16 %v3068
    %v3146 = vunpack.c.h.b16 %v3068
    %v3147 = vunpack.c.l.b16 %v3069
    %v3148 = vunpack.c.h.b16 %v3069
    %v3149 = vunpack.c.l.b16 %v3070
    %v3150 = vunpack.c.h.b16 %v3070
    %v3151 = vunpack.c.l.b16 %v3071
    %v3152 = vunpack.c.h.b16 %v3071
    %v3153 = vunpack.c.l.b16 %v3072
    %v3154 = vunpack.c.h.b16 %v3072
    %v3155 = vunpack.c.l.b16 %v3073
    %v3156 = vunpack.c.h.b16 %v3073
    %v3157 = vunpack.c.l.b16 %v3074
    %v3158 = vunpack.c.h.b16 %v3074
    %v3159 = vunpack.c.l.b16 %v3075
    %v3160 = vunpack.c.h.b16 %v3075
    %v3161 = vunpack.c.l.b16 %v3076
    %v3162 = vunpack.c.h.b16 %v3076
    %v3163 = vunpack.c.l.b16 %v3077
    %v3164 = vunpack.c.h.b16 %v3077
    %v3165 = vunpack.c.l.b16 %v3078
    %v3166 = vunpack.c.h.b16 %v3078
    %v3167 = vunpack.c.l.b16 %v3079
    %v3168 = vunpack.c.h.b16 %v3079
    %v3169 = vunpack.c.l.b16 %v3080
    %v3170 = vunpack.c.h.b16 %v3080
    %v3171 = vunpack.c.l.b16 %v3081
    %v3172 = vunpack.c.h.b16 %v3081
    %v3173 = vunpack.c.l.b16 %v3082
    %v3174 = vunpack.c.h.b16 %v3082
    %v3175 = vunpack.c.l.b16 %v3083
    %v3176 = vunpack.c.h.b16 %v3083
    %v3177 = vunpack.c.l.b16 %v3084
    %v3178 = vunpack.c.h.b16 %v3084
    %v3179 = vunpack.c.l.b16 %v3085
    %v3180 = vunpack.c.h.b16 %v3085
    %v3181 = vunpack.c.l.b16 %v3086
    %v3182 = vunpack.c.h.b16 %v3086
    %v3183 = vpack.c.b16 %v3121, %v3119
    %v3184 = vpack.c.b16 %v3122, %v3120
    %v3185 = vpack.c.b16 %v3125, %v3123
    %v3186 = vpack.c.b16 %v3126, %v3124
    %v3187 = vpack.c.b16 %v3129, %v3127
    %v3188 = vpack.c.b16 %v3130, %v3128
    %v3189 = vpack.c.b16 %v3133, %v3131
    %v3190 = vpack.c.b16 %v3134, %v3132
    %v3191 = vpack.c.b16 %v3137, %v3135
    %v3192 = vpack.c.b16 %v3138, %v3136
    %v3193 = vpack.c.b16 %v3141, %v3139
    %v3194 = vpack.c.b16 %v3142, %v3140
    %v3195 = vpack.c.b16 %v3145, %v3143
    %v3196 = vpack.c.b16 %v3146, %v3144
    %v3197 = vpack.c.b16 %v3149, %v3147
    %v3198 = vpack.c.b16 %v3150, %v3148
    %v3199 = vpack.c.b16 %v3153, %v3151
    %v3200 = vpack.c.b16 %v3154, %v3152
    %v3201 = vpack.c.b16 %v3157, %v3155
    %v3202 = vpack.c.b16 %v3158, %v3156
    %v3203 = vpack.c.b16 %v3161, %v3159
    %v3204 = vpack.c.b16 %v3162, %v3160
    %v3205 = vpack.c.b16 %v3165, %v3163
    %v3206 = vpack.c.b16 %v3166, %v3164
    %v3207 = vpack.c.b16 %v3169, %v3167
    %v3208 = vpack.c.b16 %v3170, %v3168
    %v3209 = vpack.c.b16 %v3173, %v3171
    %v3210 = vpack.c.b16 %v3174, %v3172
    %v3211 = vpack.c.b16 %v3177, %v3175
    %v3212 = vpack.c.b16 %v3178, %v3176
    %v3213 = vpack.c.b16 %v3181, %v3179
    %v3214 = vpack.c.b16 %v3182, %v3180
    %3247 = vmatprep.subr.bf16.mxu0 %v3184
    %3248 = vmatpush1.bf16.msra.mxu0 %v3183
    %3249 = vmatprep.subr.bf16.mxu0 %v3186
    %3250 = vmatpush1.bf16.msra.mxu0 %v3185
    %3251 = vmatprep.subr.bf16.mxu0 %v3188
    %3252 = vmatpush1.bf16.msra.mxu0 %v3187
    %3253 = vmatprep.subr.bf16.mxu0 %v3190
    %3254 = vmatpush1.bf16.msra.mxu0 %v3189
    %3255 = vmatprep.subr.bf16.mxu0 %v3192
    %3256 = vmatpush1.bf16.msra.mxu0 %v3191
    %3257 = vmatprep.subr.bf16.mxu0 %v3194
    %3258 = vmatpush1.bf16.msra.mxu0 %v3193
    %3259 = vmatprep.subr.bf16.mxu0 %v3196
    %3260 = vmatpush1.bf16.msra.mxu0 %v3195
    %3261 = vmatprep.subr.bf16.mxu0 %v3198
    %3262 = vmatpush1.bf16.msra.mxu0 %v3197
    %3263 = vmatprep.subr.bf16.mxu0 %v3200
    %3264 = vmatpush1.bf16.msra.mxu0 %v3199
    %3265 = vmatprep.subr.bf16.mxu0 %v3202
    %3266 = vmatpush1.bf16.msra.mxu0 %v3201
    %3267 = vmatprep.subr.bf16.mxu0 %v3204
    %3268 = vmatpush1.bf16.msra.mxu0 %v3203
    %3269 = vmatprep.subr.bf16.mxu0 %v3206
    %3270 = vmatpush1.bf16.msra.mxu0 %v3205
    %3271 = vmatprep.subr.bf16.mxu0 %v3208
    %3272 = vmatpush1.bf16.msra.mxu0 %v3207
    %3273 = vmatprep.subr.bf16.mxu0 %v3210
    %3274 = vmatpush1.bf16.msra.mxu0 %v3209
    %3275 = vmatprep.subr.bf16.mxu0 %v3212
    %3276 = vmatpush1.bf16.msra.mxu0 %v3211
    %3277 = vmatprep.subr.bf16.mxu0 %v3214
    %3278 = vmatpush1.bf16.msra.mxu0 %v3213
    %3279 = vmatprep.mubr.bf16.mxu0 %v3047
    %3280 = vmatmul.mubr.bf16.gmra.mrb[0].mxu0 %v3046
    %v3281 = vpop.f32.mrb[0].mxu0
    %v3282 = vadd.f32 0.0, %v3281
    %v3283 = vpop.f32.mrb[0].mxu0
    %v3284 = vadd.f32 0.0, %v3283
    %v3285 = vpop.f32.mrb[0].mxu0
    %v3286 = vadd.f32 0.0, %v3285
    %v3287 = vpop.f32.mrb[0].mxu0
    %v3288 = vadd.f32 0.0, %v3287
    %3289 = vmatprep.mubr.bf16.mxu0 %v3049
    %3290 = vmatmul.mubr.bf16.gmra.mrb[0].mxu0 %v3048
    %v3291 = vpop.f32.mrb[0].mxu0
    %v3292 = vadd.f32 0.0, %v3291
    %v3293 = vpop.f32.mrb[0].mxu0
    %v3294 = vadd.f32 0.0, %v3293
    %v3295 = vpop.f32.mrb[0].mxu0
    %v3296 = vadd.f32 0.0, %v3295
    %v3297 = vpop.f32.mrb[0].mxu0
    %v3298 = vadd.f32 0.0, %v3297
    %3299 = vmatprep.mubr.bf16.mxu0 %v3051
    %3300 = vmatmul.mubr.bf16.gmra.mrb[0].mxu0 %v3050
    %v3301 = vpop.f32.mrb[0].mxu0
    %v3302 = vadd.f32 0.0, %v3301
    %v3303 = vpop.f32.mrb[0].mxu0
    %v3304 = vadd.f32 0.0, %v3303
    %v3305 = vpop.f32.mrb[0].mxu0
    %v3306 = vadd.f32 0.0, %v3305
    %v3307 = vpop.f32.mrb[0].mxu0
    %v3308 = vadd.f32 0.0, %v3307
    %3309 = vmatprep.mubr.bf16.mxu0 %v3053
    %3310 = vmatmul.mubr.bf16.gmra.mrb[0].mxu0 %v3052
    %v3311 = vpop.f32.mrb[0].mxu0
    %v3312 = vadd.f32 0.0, %v3311
    %v3313 = vpop.f32.mrb[0].mxu0
    %v3314 = vadd.f32 0.0, %v3313
    %v3315 = vpop.f32.mrb[0].mxu0
    %v3316 = vadd.f32 0.0, %v3315
    %v3317 = vpop.f32.mrb[0].mxu0
    %v3318 = vadd.f32 0.0, %v3317
    %3319 = vdwg.mxu0
    %v3321 = vshrl.u32 %v3044, 16
    %v3323 = vrot.slane %v3321, 7
    %v3325 = vshrl.u32 %v3046, 16
    %v3327 = vrot.slane %v3325, 7
    %v3328 = vshll.u32 %v3046, 16
    %v3330 = vor.u32 %v3327, %v3328
    %v3331 = vsel %vm1161, %v3323, %v3330
    %v3333 = vshrl.u32 %v3045, 16
    %v3335 = vrot.slane %v3333, 7
    %v3337 = vshrl.u32 %v3047, 16
    %v3339 = vrot.slane %v3337, 7
    %v3340 = vshll.u32 %v3047, 16
    %v3342 = vor.u32 %v3339, %v3340
    %v3343 = vsel %vm1161, %v3335, %v3342
    %v3345 = vshrl.u32 %v3048, 16
    %v3347 = vrot.slane %v3345, 7
    %v3348 = vshll.u32 %v3048, 16
    %v3350 = vor.u32 %v3347, %v3348
    %v3351 = vsel %vm1161, %v3327, %v3350
    %v3353 = vshrl.u32 %v3049, 16
    %v3355 = vrot.slane %v3353, 7
    %v3356 = vshll.u32 %v3049, 16
    %v3358 = vor.u32 %v3355, %v3356
    %v3359 = vsel %vm1161, %v3339, %v3358
    %v3361 = vshrl.u32 %v3050, 16
    %v3363 = vrot.slane %v3361, 7
    %v3364 = vshll.u32 %v3050, 16
    %v3366 = vor.u32 %v3363, %v3364
    %v3367 = vsel %vm1161, %v3347, %v3366
    %v3369 = vshrl.u32 %v3051, 16
    %v3371 = vrot.slane %v3369, 7
    %v3372 = vshll.u32 %v3051, 16
    %v3374 = vor.u32 %v3371, %v3372
    %v3375 = vsel %vm1161, %v3355, %v3374
    %v3377 = vshrl.u32 %v3052, 16
    %v3379 = vrot.slane %v3377, 7
    %v3380 = vshll.u32 %v3052, 16
    %v3382 = vor.u32 %v3379, %v3380
    %v3383 = vsel %vm1161, %v3363, %v3382
    %v3385 = vshrl.u32 %v3053, 16
    %v3387 = vrot.slane %v3385, 7
    %v3388 = vshll.u32 %v3053, 16
    %v3390 = vor.u32 %v3387, %v3388
    %v3391 = vsel %vm1161, %v3371, %v3390
    %v3432 = vunpack.c.l.b16 %v3012
    %v3433 = vunpack.c.h.b16 %v3012
    %v3434 = vunpack.c.l.b16 %v3013
    %v3435 = vunpack.c.h.b16 %v3013
    %v3436 = vunpack.c.l.b16 %v3014
    %v3437 = vunpack.c.h.b16 %v3014
    %v3438 = vunpack.c.l.b16 %v3015
    %v3439 = vunpack.c.h.b16 %v3015
    %v3440 = vunpack.c.l.b16 %v3016
    %v3441 = vunpack.c.h.b16 %v3016
    %v3442 = vunpack.c.l.b16 %v3017
    %v3443 = vunpack.c.h.b16 %v3017
    %v3444 = vunpack.c.l.b16 %v3018
    %v3445 = vunpack.c.h.b16 %v3018
    %v3446 = vunpack.c.l.b16 %v3019
    %v3447 = vunpack.c.h.b16 %v3019
    %v3448 = vunpack.c.l.b16 %v3020
    %v3449 = vunpack.c.h.b16 %v3020
    %v3450 = vunpack.c.l.b16 %v3021
    %v3451 = vunpack.c.h.b16 %v3021
    %v3452 = vunpack.c.l.b16 %v3022
    %v3453 = vunpack.c.h.b16 %v3022
    %v3454 = vunpack.c.l.b16 %v3023
    %v3455 = vunpack.c.h.b16 %v3023
    %v3456 = vunpack.c.l.b16 %v3024
    %v3457 = vunpack.c.h.b16 %v3024
    %v3458 = vunpack.c.l.b16 %v3025
    %v3459 = vunpack.c.h.b16 %v3025
    %v3460 = vunpack.c.l.b16 %v3026
    %v3461 = vunpack.c.h.b16 %v3026
    %v3462 = vunpack.c.l.b16 %v3027
    %v3463 = vunpack.c.h.b16 %v3027
    %v3464 = vunpack.c.l.b16 %v3028
    %v3465 = vunpack.c.h.b16 %v3028
    %v3466 = vunpack.c.l.b16 %v3029
    %v3467 = vunpack.c.h.b16 %v3029
    %v3468 = vunpack.c.l.b16 %v3030
    %v3469 = vunpack.c.h.b16 %v3030
    %v3470 = vunpack.c.l.b16 %v3031
    %v3471 = vunpack.c.h.b16 %v3031
    %v3472 = vunpack.c.l.b16 %v3032
    %v3473 = vunpack.c.h.b16 %v3032
    %v3474 = vunpack.c.l.b16 %v3033
    %v3475 = vunpack.c.h.b16 %v3033
    %v3476 = vunpack.c.l.b16 %v3034
    %v3477 = vunpack.c.h.b16 %v3034
    %v3478 = vunpack.c.l.b16 %v3035
    %v3479 = vunpack.c.h.b16 %v3035
    %v3480 = vunpack.c.l.b16 %v3036
    %v3481 = vunpack.c.h.b16 %v3036
    %v3482 = vunpack.c.l.b16 %v3037
    %v3483 = vunpack.c.h.b16 %v3037
    %v3484 = vunpack.c.l.b16 %v3038
    %v3485 = vunpack.c.h.b16 %v3038
    %v3486 = vunpack.c.l.b16 %v3039
    %v3487 = vunpack.c.h.b16 %v3039
    %v3488 = vunpack.c.l.b16 %v3040
    %v3489 = vunpack.c.h.b16 %v3040
    %v3490 = vunpack.c.l.b16 %v3041
    %v3491 = vunpack.c.h.b16 %v3041
    %v3492 = vunpack.c.l.b16 %v3042
    %v3493 = vunpack.c.h.b16 %v3042
    %v3494 = vunpack.c.l.b16 %v3043
    %v3495 = vunpack.c.h.b16 %v3043
    %v3496 = vpack.c.b16 %v3434, %v3432
    %v3497 = vpack.c.b16 %v3435, %v3433
    %v3498 = vpack.c.b16 %v3438, %v3436
    %v3499 = vpack.c.b16 %v3439, %v3437
    %v3500 = vpack.c.b16 %v3442, %v3440
    %v3501 = vpack.c.b16 %v3443, %v3441
    %v3502 = vpack.c.b16 %v3446, %v3444
    %v3503 = vpack.c.b16 %v3447, %v3445
    %v3504 = vpack.c.b16 %v3450, %v3448
    %v3505 = vpack.c.b16 %v3451, %v3449
    %v3506 = vpack.c.b16 %v3454, %v3452
    %v3507 = vpack.c.b16 %v3455, %v3453
    %v3508 = vpack.c.b16 %v3458, %v3456
    %v3509 = vpack.c.b16 %v3459, %v3457
    %v3510 = vpack.c.b16 %v3462, %v3460
    %v3511 = vpack.c.b16 %v3463, %v3461
    %v3512 = vpack.c.b16 %v3466, %v3464
    %v3513 = vpack.c.b16 %v3467, %v3465
    %v3514 = vpack.c.b16 %v3470, %v3468
    %v3515 = vpack.c.b16 %v3471, %v3469
    %v3516 = vpack.c.b16 %v3474, %v3472
    %v3517 = vpack.c.b16 %v3475, %v3473
    %v3518 = vpack.c.b16 %v3478, %v3476
    %v3519 = vpack.c.b16 %v3479, %v3477
    %v3520 = vpack.c.b16 %v3482, %v3480
    %v3521 = vpack.c.b16 %v3483, %v3481
    %v3522 = vpack.c.b16 %v3486, %v3484
    %v3523 = vpack.c.b16 %v3487, %v3485
    %v3524 = vpack.c.b16 %v3490, %v3488
    %v3525 = vpack.c.b16 %v3491, %v3489
    %v3526 = vpack.c.b16 %v3494, %v3492
    %v3527 = vpack.c.b16 %v3495, %v3493
    %3560 = vmatprep.subr.bf16.mxu0 %v3497
    %3561 = vmatpush1.bf16.msra.mxu0 %v3496
    %3562 = vmatprep.subr.bf16.mxu0 %v3499
    %3563 = vmatpush1.bf16.msra.mxu0 %v3498
    %3564 = vmatprep.subr.bf16.mxu0 %v3501
    %3565 = vmatpush1.bf16.msra.mxu0 %v3500
    %3566 = vmatprep.subr.bf16.mxu0 %v3503
    %3567 = vmatpush1.bf16.msra.mxu0 %v3502
    %3568 = vmatprep.subr.bf16.mxu0 %v3505
    %3569 = vmatpush1.bf16.msra.mxu0 %v3504
    %3570 = vmatprep.subr.bf16.mxu0 %v3507
    %3571 = vmatpush1.bf16.msra.mxu0 %v3506
    %3572 = vmatprep.subr.bf16.mxu0 %v3509
    %3573 = vmatpush1.bf16.msra.mxu0 %v3508
    %3574 = vmatprep.subr.bf16.mxu0 %v3511
    %3575 = vmatpush1.bf16.msra.mxu0 %v3510
    %3576 = vmatprep.subr.bf16.mxu0 %v3513
    %3577 = vmatpush1.bf16.msra.mxu0 %v3512
    %3578 = vmatprep.subr.bf16.mxu0 %v3515
    %3579 = vmatpush1.bf16.msra.mxu0 %v3514
    %3580 = vmatprep.subr.bf16.mxu0 %v3517
    %3581 = vmatpush1.bf16.msra.mxu0 %v3516
    %3582 = vmatprep.subr.bf16.mxu0 %v3519
    %3583 = vmatpush1.bf16.msra.mxu0 %v3518
    %3584 = vmatprep.subr.bf16.mxu0 %v3521
    %3585 = vmatpush1.bf16.msra.mxu0 %v3520
    %3586 = vmatprep.subr.bf16.mxu0 %v3523
    %3587 = vmatpush1.bf16.msra.mxu0 %v3522
    %3588 = vmatprep.subr.bf16.mxu0 %v3525
    %3589 = vmatpush1.bf16.msra.mxu0 %v3524
    %3590 = vmatprep.subr.bf16.mxu0 %v3527
    %3591 = vmatpush1.bf16.msra.mxu0 %v3526
    %3592 = vmatprep.mubr.bf16.mxu0 %v3343
    %3593 = vmatmul.mubr.bf16.gmra.mrb[0].mxu0 %v3331
    %v3594 = vpop.f32.mrb[0].mxu0
    %v3595 = vadd.f32 %v3282, %v3594
    %v3596 = vpop.f32.mrb[0].mxu0
    %v3597 = vadd.f32 %v3284, %v3596
    %v3598 = vpop.f32.mrb[0].mxu0
    %v3599 = vadd.f32 %v3286, %v3598
    %v3600 = vpop.f32.mrb[0].mxu0
    %v3601 = vadd.f32 %v3288, %v3600
    %3602 = vmatprep.mubr.bf16.mxu0 %v3359
    %3603 = vmatmul.mubr.bf16.gmra.mrb[0].mxu0 %v3351
    %v3604 = vpop.f32.mrb[0].mxu0
    %v3605 = vadd.f32 %v3292, %v3604
    %v3606 = vpop.f32.mrb[0].mxu0
    %v3607 = vadd.f32 %v3294, %v3606
    %v3608 = vpop.f32.mrb[0].mxu0
    %v3609 = vadd.f32 %v3296, %v3608
    %v3610 = vpop.f32.mrb[0].mxu0
    %v3611 = vadd.f32 %v3298, %v3610
    %3612 = vmatprep.mubr.bf16.mxu0 %v3375
    %3613 = vmatmul.mubr.bf16.gmra.mrb[0].mxu0 %v3367
    %v3614 = vpop.f32.mrb[0].mxu0
    %v3615 = vadd.f32 %v3302, %v3614
    %v3616 = vpop.f32.mrb[0].mxu0
    %v3617 = vadd.f32 %v3304, %v3616
    %v3618 = vpop.f32.mrb[0].mxu0
    %v3619 = vadd.f32 %v3306, %v3618
    %v3620 = vpop.f32.mrb[0].mxu0
    %v3621 = vadd.f32 %v3308, %v3620
    %3622 = vmatprep.mubr.bf16.mxu0 %v3391
    %3623 = vmatmul.mubr.bf16.gmra.mrb[0].mxu0 %v3383
    %v3624 = vpop.f32.mrb[0].mxu0
    %v3625 = vadd.f32 %v3312, %v3624
    %v3626 = vpop.f32.mrb[0].mxu0
    %v3627 = vadd.f32 %v3314, %v3626
    %v3628 = vpop.f32.mrb[0].mxu0
    %v3629 = vadd.f32 %v3316, %v3628
    %v3630 = vpop.f32.mrb[0].mxu0
    %v3631 = vadd.f32 %v3318, %v3630
    %3632 = vdwg.mxu0
    %s3633 = scalar_lea.vmem [#allocation10], 2048
    %v3634 = vld [vmem:[%s3633] sm:$0xff]
    %v3635 = vld [vmem:[%s3633 + $0x8] sm:$0xff]
    %v3636 = vld [vmem:[%s3633 + $0x10] sm:$0xff]
    %v3637 = vld [vmem:[%s3633 + $0x18] sm:$0xff]
    %v3638 = vld [vmem:[%s3633 + $0x20] sm:$0xff]
    %v3639 = vld [vmem:[%s3633 + $0x28] sm:$0xff]
    %v3640 = vld [vmem:[%s3633 + $0x30] sm:$0xff]
    %v3641 = vld [vmem:[%s3633 + $0x38] sm:$0xff]
    %v3642 = vld [vmem:[%s3633 + $0x40] sm:$0xff]
    %v3643 = vld [vmem:[%s3633 + $0x48] sm:$0xff]
    %v3644 = vld [vmem:[%s3633 + $0x50] sm:$0xff]
    %v3645 = vld [vmem:[%s3633 + $0x58] sm:$0xff]
    %v3646 = vld [vmem:[%s3633 + $0x60] sm:$0xff]
    %v3647 = vld [vmem:[%s3633 + $0x68] sm:$0xff]
    %v3648 = vld [vmem:[%s3633 + $0x70] sm:$0xff]
    %v3649 = vld [vmem:[%s3633 + $0x78] sm:$0xff]
    %v3650 = vld [vmem:[%s3633 + $0x80] sm:$0xff]
    %v3651 = vld [vmem:[%s3633 + $0x88] sm:$0xff]
    %v3652 = vld [vmem:[%s3633 + $0x90] sm:$0xff]
    %v3653 = vld [vmem:[%s3633 + $0x98] sm:$0xff]
    %v3654 = vld [vmem:[%s3633 + $0xa0] sm:$0xff]
    %v3655 = vld [vmem:[%s3633 + $0xa8] sm:$0xff]
    %v3656 = vld [vmem:[%s3633 + $0xb0] sm:$0xff]
    %v3657 = vld [vmem:[%s3633 + $0xb8] sm:$0xff]
    %v3658 = vld [vmem:[%s3633 + $0xc0] sm:$0xff]
    %v3659 = vld [vmem:[%s3633 + $0xc8] sm:$0xff]
    %v3660 = vld [vmem:[%s3633 + $0xd0] sm:$0xff]
    %v3661 = vld [vmem:[%s3633 + $0xd8] sm:$0xff]
    %v3662 = vld [vmem:[%s3633 + $0xe0] sm:$0xff]
    %v3663 = vld [vmem:[%s3633 + $0xe8] sm:$0xff]
    %v3664 = vld [vmem:[%s3633 + $0xf0] sm:$0xff]
    %v3665 = vld [vmem:[%s3633 + $0xf8] sm:$0xff]
    %v3666 = vld [vmem:[#allocation2 + $0x10] sm:$0xff]
    %v3667 = vld [vmem:[#allocation2 + $0x18] sm:$0xff]
    %v3668 = vld [vmem:[#allocation2 + $0x20] sm:$0xff]
    %v3669 = vld [vmem:[#allocation2 + $0x28] sm:$0xff]
    %v3670 = vld [vmem:[#allocation2 + $0x30] sm:$0xff]
    %v3671 = vld [vmem:[#allocation2 + $0x38] sm:$0xff]
    %v3672 = vld [vmem:[#allocation2 + $0x40] sm:$0xff]
    %v3673 = vld [vmem:[#allocation2 + $0x48] sm:$0xff]
    %v3674 = vld [vmem:[#allocation2 + $0x50] sm:$0x1]
    %v3675 = vld [vmem:[#allocation2 + $0x58] sm:$0x1]
    %v3677 = vshrl.u32 %v3666, 16
    %v3679 = vshll.u32 %v3666, 16
    %v3681 = vrot.slane %v3679, 1
    %v3682 = vor.u32 %v3677, %v3681
    %v3684 = vshll.u32 %v3668, 16
    %v3686 = vrot.slane %v3684, 1
    %v3687 = vsel %vm603, %v3682, %v3686
    %v3689 = vshrl.u32 %v3667, 16
    %v3691 = vshll.u32 %v3667, 16
    %v3693 = vrot.slane %v3691, 1
    %v3694 = vor.u32 %v3689, %v3693
    %v3696 = vshll.u32 %v3669, 16
    %v3698 = vrot.slane %v3696, 1
    %v3699 = vsel %vm603, %v3694, %v3698
    %v3700 = vshrl.u32 %v3668, 16
    %v3702 = vor.u32 %v3700, %v3686
    %v3704 = vshll.u32 %v3670, 16
    %v3706 = vrot.slane %v3704, 1
    %v3707 = vsel %vm603, %v3702, %v3706
    %v3708 = vshrl.u32 %v3669, 16
    %v3710 = vor.u32 %v3708, %v3698
    %v3712 = vshll.u32 %v3671, 16
    %v3714 = vrot.slane %v3712, 1
    %v3715 = vsel %vm603, %v3710, %v3714
    %v3716 = vshrl.u32 %v3670, 16
    %v3718 = vor.u32 %v3716, %v3706
    %v3720 = vshll.u32 %v3672, 16
    %v3722 = vrot.slane %v3720, 1
    %v3723 = vsel %vm603, %v3718, %v3722
    %v3724 = vshrl.u32 %v3671, 16
    %v3726 = vor.u32 %v3724, %v3714
    %v3728 = vshll.u32 %v3673, 16
    %v3730 = vrot.slane %v3728, 1
    %v3731 = vsel %vm603, %v3726, %v3730
    %v3732 = vshrl.u32 %v3672, 16
    %v3734 = vor.u32 %v3732, %v3722
    %v3736 = vshll.u32 %v3674, 16
    %v3738 = vrot.slane %v3736, 1
    %v3739 = vsel %vm603, %v3734, %v3738
    %v3740 = vshrl.u32 %v3673, 16
    %v3742 = vor.u32 %v3740, %v3730
    %v3744 = vshll.u32 %v3675, 16
    %v3746 = vrot.slane %v3744, 1
    %v3747 = vsel %vm603, %v3742, %v3746
    %v3788 = vunpack.c.l.b16 %v3634
    %v3789 = vunpack.c.h.b16 %v3634
    %v3790 = vunpack.c.l.b16 %v3635
    %v3791 = vunpack.c.h.b16 %v3635
    %v3792 = vunpack.c.l.b16 %v3636
    %v3793 = vunpack.c.h.b16 %v3636
    %v3794 = vunpack.c.l.b16 %v3637
    %v3795 = vunpack.c.h.b16 %v3637
    %v3796 = vunpack.c.l.b16 %v3638
    %v3797 = vunpack.c.h.b16 %v3638
    %v3798 = vunpack.c.l.b16 %v3639
    %v3799 = vunpack.c.h.b16 %v3639
    %v3800 = vunpack.c.l.b16 %v3640
    %v3801 = vunpack.c.h.b16 %v3640
    %v3802 = vunpack.c.l.b16 %v3641
    %v3803 = vunpack.c.h.b16 %v3641
    %v3804 = vunpack.c.l.b16 %v3642
    %v3805 = vunpack.c.h.b16 %v3642
    %v3806 = vunpack.c.l.b16 %v3643
    %v3807 = vunpack.c.h.b16 %v3643
    %v3808 = vunpack.c.l.b16 %v3644
    %v3809 = vunpack.c.h.b16 %v3644
    %v3810 = vunpack.c.l.b16 %v3645
    %v3811 = vunpack.c.h.b16 %v3645
    %v3812 = vunpack.c.l.b16 %v3646
    %v3813 = vunpack.c.h.b16 %v3646
    %v3814 = vunpack.c.l.b16 %v3647
    %v3815 = vunpack.c.h.b16 %v3647
    %v3816 = vunpack.c.l.b16 %v3648
    %v3817 = vunpack.c.h.b16 %v3648
    %v3818 = vunpack.c.l.b16 %v3649
    %v3819 = vunpack.c.h.b16 %v3649
    %v3820 = vunpack.c.l.b16 %v3650
    %v3821 = vunpack.c.h.b16 %v3650
    %v3822 = vunpack.c.l.b16 %v3651
    %v3823 = vunpack.c.h.b16 %v3651
    %v3824 = vunpack.c.l.b16 %v3652
    %v3825 = vunpack.c.h.b16 %v3652
    %v3826 = vunpack.c.l.b16 %v3653
    %v3827 = vunpack.c.h.b16 %v3653
    %v3828 = vunpack.c.l.b16 %v3654
    %v3829 = vunpack.c.h.b16 %v3654
    %v3830 = vunpack.c.l.b16 %v3655
    %v3831 = vunpack.c.h.b16 %v3655
    %v3832 = vunpack.c.l.b16 %v3656
    %v3833 = vunpack.c.h.b16 %v3656
    %v3834 = vunpack.c.l.b16 %v3657
    %v3835 = vunpack.c.h.b16 %v3657
    %v3836 = vunpack.c.l.b16 %v3658
    %v3837 = vunpack.c.h.b16 %v3658
    %v3838 = vunpack.c.l.b16 %v3659
    %v3839 = vunpack.c.h.b16 %v3659
    %v3840 = vunpack.c.l.b16 %v3660
    %v3841 = vunpack.c.h.b16 %v3660
    %v3842 = vunpack.c.l.b16 %v3661
    %v3843 = vunpack.c.h.b16 %v3661
    %v3844 = vunpack.c.l.b16 %v3662
    %v3845 = vunpack.c.h.b16 %v3662
    %v3846 = vunpack.c.l.b16 %v3663
    %v3847 = vunpack.c.h.b16 %v3663
    %v3848 = vunpack.c.l.b16 %v3664
    %v3849 = vunpack.c.h.b16 %v3664
    %v3850 = vunpack.c.l.b16 %v3665
    %v3851 = vunpack.c.h.b16 %v3665
    %v3852 = vpack.c.b16 %v3790, %v3788
    %v3853 = vpack.c.b16 %v3791, %v3789
    %v3854 = vpack.c.b16 %v3794, %v3792
    %v3855 = vpack.c.b16 %v3795, %v3793
    %v3856 = vpack.c.b16 %v3798, %v3796
    %v3857 = vpack.c.b16 %v3799, %v3797
    %v3858 = vpack.c.b16 %v3802, %v3800
    %v3859 = vpack.c.b16 %v3803, %v3801
    %v3860 = vpack.c.b16 %v3806, %v3804
    %v3861 = vpack.c.b16 %v3807, %v3805
    %v3862 = vpack.c.b16 %v3810, %v3808
    %v3863 = vpack.c.b16 %v3811, %v3809
    %v3864 = vpack.c.b16 %v3814, %v3812
    %v3865 = vpack.c.b16 %v3815, %v3813
    %v3866 = vpack.c.b16 %v3818, %v3816
    %v3867 = vpack.c.b16 %v3819, %v3817
    %v3868 = vpack.c.b16 %v3822, %v3820
    %v3869 = vpack.c.b16 %v3823, %v3821
    %v3870 = vpack.c.b16 %v3826, %v3824
    %v3871 = vpack.c.b16 %v3827, %v3825
    %v3872 = vpack.c.b16 %v3830, %v3828
    %v3873 = vpack.c.b16 %v3831, %v3829
    %v3874 = vpack.c.b16 %v3834, %v3832
    %v3875 = vpack.c.b16 %v3835, %v3833
    %v3876 = vpack.c.b16 %v3838, %v3836
    %v3877 = vpack.c.b16 %v3839, %v3837
    %v3878 = vpack.c.b16 %v3842, %v3840
    %v3879 = vpack.c.b16 %v3843, %v3841
    %v3880 = vpack.c.b16 %v3846, %v3844
    %v3881 = vpack.c.b16 %v3847, %v3845
    %v3882 = vpack.c.b16 %v3850, %v3848
    %v3883 = vpack.c.b16 %v3851, %v3849
    %3916 = vmatprep.subr.bf16.mxu0 %v3853
    %3917 = vmatpush1.bf16.msra.mxu0 %v3852
    %3918 = vmatprep.subr.bf16.mxu0 %v3855
    %3919 = vmatpush1.bf16.msra.mxu0 %v3854
    %3920 = vmatprep.subr.bf16.mxu0 %v3857
    %3921 = vmatpush1.bf16.msra.mxu0 %v3856
    %3922 = vmatprep.subr.bf16.mxu0 %v3859
    %3923 = vmatpush1.bf16.msra.mxu0 %v3858
    %3924 = vmatprep.subr.bf16.mxu0 %v3861
    %3925 = vmatpush1.bf16.msra.mxu0 %v3860
    %3926 = vmatprep.subr.bf16.mxu0 %v3863
    %3927 = vmatpush1.bf16.msra.mxu0 %v3862
    %3928 = vmatprep.subr.bf16.mxu0 %v3865
    %3929 = vmatpush1.bf16.msra.mxu0 %v3864
    %3930 = vmatprep.subr.bf16.mxu0 %v3867
    %3931 = vmatpush1.bf16.msra.mxu0 %v3866
    %3932 = vmatprep.subr.bf16.mxu0 %v3869
    %3933 = vmatpush1.bf16.msra.mxu0 %v3868
    %3934 = vmatprep.subr.bf16.mxu0 %v3871
    %3935 = vmatpush1.bf16.msra.mxu0 %v3870
    %3936 = vmatprep.subr.bf16.mxu0 %v3873
    %3937 = vmatpush1.bf16.msra.mxu0 %v3872
    %3938 = vmatprep.subr.bf16.mxu0 %v3875
    %3939 = vmatpush1.bf16.msra.mxu0 %v3874
    %3940 = vmatprep.subr.bf16.mxu0 %v3877
    %3941 = vmatpush1.bf16.msra.mxu0 %v3876
    %3942 = vmatprep.subr.bf16.mxu0 %v3879
    %3943 = vmatpush1.bf16.msra.mxu0 %v3878
    %3944 = vmatprep.subr.bf16.mxu0 %v3881
    %3945 = vmatpush1.bf16.msra.mxu0 %v3880
    %3946 = vmatprep.subr.bf16.mxu0 %v3883
    %3947 = vmatpush1.bf16.msra.mxu0 %v3882
    %3948 = vmatprep.mubr.bf16.mxu0 %v3699
    %3949 = vmatmul.mubr.bf16.gmra.mrb[0].mxu0 %v3687
    %v3950 = vpop.f32.mrb[0].mxu0
    %v3951 = vadd.f32 0.0, %v3950
    %v3952 = vpop.f32.mrb[0].mxu0
    %v3953 = vadd.f32 0.0, %v3952
    %v3954 = vpop.f32.mrb[0].mxu0
    %v3955 = vadd.f32 0.0, %v3954
    %v3956 = vpop.f32.mrb[0].mxu0
    %v3957 = vadd.f32 0.0, %v3956
    %3958 = vmatprep.mubr.bf16.mxu0 %v3715
    %3959 = vmatmul.mubr.bf16.gmra.mrb[0].mxu0 %v3707
    %v3960 = vpop.f32.mrb[0].mxu0
    %v3961 = vadd.f32 0.0, %v3960
    %v3962 = vpop.f32.mrb[0].mxu0
    %v3963 = vadd.f32 0.0, %v3962
    %v3964 = vpop.f32.mrb[0].mxu0
    %v3965 = vadd.f32 0.0, %v3964
    %v3966 = vpop.f32.mrb[0].mxu0
    %v3967 = vadd.f32 0.0, %v3966
    %3968 = vmatprep.mubr.bf16.mxu0 %v3731
    %3969 = vmatmul.mubr.bf16.gmra.mrb[0].mxu0 %v3723
    %v3970 = vpop.f32.mrb[0].mxu0
    %v3971 = vadd.f32 0.0, %v3970
    %v3972 = vpop.f32.mrb[0].mxu0
    %v3973 = vadd.f32 0.0, %v3972
    %v3974 = vpop.f32.mrb[0].mxu0
    %v3975 = vadd.f32 0.0, %v3974
    %v3976 = vpop.f32.mrb[0].mxu0
    %v3977 = vadd.f32 0.0, %v3976
    %3978 = vmatprep.mubr.bf16.mxu0 %v3747
    %3979 = vmatmul.mubr.bf16.gmra.mrb[0].mxu0 %v3739
    %v3980 = vpop.f32.mrb[0].mxu0
    %v3981 = vadd.f32 0.0, %v3980
    %v3982 = vpop.f32.mrb[0].mxu0
    %v3983 = vadd.f32 0.0, %v3982
    %v3984 = vpop.f32.mrb[0].mxu0
    %v3985 = vadd.f32 0.0, %v3984
    %v3986 = vpop.f32.mrb[0].mxu0
    %v3987 = vadd.f32 0.0, %v3986
    %3988 = vdwg.mxu0
    %v3989 = vadd.f32 %v3595, %v3951
    %v3990 = vadd.f32 %v3597, %v3953
    %v3991 = vadd.f32 %v3599, %v3955
    %v3992 = vadd.f32 %v3601, %v3957
    %v3993 = vadd.f32 %v3605, %v3961
    %v3994 = vadd.f32 %v3607, %v3963
    %v3995 = vadd.f32 %v3609, %v3965
    %v3996 = vadd.f32 %v3611, %v3967
    %v3997 = vadd.f32 %v3615, %v3971
    %v3998 = vadd.f32 %v3617, %v3973
    %v3999 = vadd.f32 %v3619, %v3975
    %v4000 = vadd.f32 %v3621, %v3977
    %v4001 = vadd.f32 %v3625, %v3981
    %v4002 = vadd.f32 %v3627, %v3983
    %v4003 = vadd.f32 %v3629, %v3985
    %v4004 = vadd.f32 %v3631, %v3987
    %s4005 = scalar_lea.vmem [#allocation11], 6
    %v4006 = vld [vmem:[%s4005] sm:$0x3]
    %v4008 = vlaneseq
    %v4009 = vshrl.u32 %v4008, 7
    %v4010 = vsub.s32 0, %v4009
    %v4011 = vrot.slane %v4006, %v4010
    %v4012 = vlaneseq
    %v4013 = vshrl.u32 %v4012, 7
    %v4014 = vsub.s32 1, %v4013
    %v4015 = vrot.slane %v4006, %v4014
    %v4018 = vadd.f32 %v3989, %v4011
    %v4019 = vadd.f32 %v3990, %v4015
    %v4020 = vadd.f32 %v3991, %v4011
    %v4021 = vadd.f32 %v3992, %v4015
    %v4022 = vadd.f32 %v3993, %v4011
    %v4023 = vadd.f32 %v3994, %v4015
    %v4024 = vadd.f32 %v3995, %v4011
    %v4025 = vadd.f32 %v3996, %v4015
    %v4026 = vadd.f32 %v3997, %v4011
    %v4027 = vadd.f32 %v3998, %v4015
    %v4028 = vadd.f32 %v3999, %v4011
    %v4029 = vadd.f32 %v4000, %v4015
    %v4030 = vadd.f32 %v4001, %v4011
    %v4031 = vadd.f32 %v4002, %v4015
    %v4032 = vadd.f32 %v4003, %v4011
    %v4033 = vadd.f32 %v4004, %v4015
    %v4034 = vmax.f32 %v4018, 0.0
    %v4035 = vmax.f32 %v4019, 0.0
    %v4036 = vmax.f32 %v4020, 0.0
    %v4037 = vmax.f32 %v4021, 0.0
    %v4038 = vmax.f32 %v4022, 0.0
    %v4039 = vmax.f32 %v4023, 0.0
    %v4040 = vmax.f32 %v4024, 0.0
    %v4041 = vmax.f32 %v4025, 0.0
    %v4042 = vmax.f32 %v4026, 0.0
    %v4043 = vmax.f32 %v4027, 0.0
    %v4044 = vmax.f32 %v4028, 0.0
    %v4045 = vmax.f32 %v4029, 0.0
    %v4046 = vmax.f32 %v4030, 0.0
    %v4047 = vmax.f32 %v4031, 0.0
    %v4048 = vmax.f32 %v4032, 0.0
    %v4049 = vmax.f32 %v4033, 0.0
    %v4050 = vsel %vm813, %v4034, 0.0
    %v4051 = vsel %vm813, %v4035, 0.0
    %v4052 = vsel %vm814, %v4036, 0.0
    %v4053 = vsel %vm814, %v4037, 0.0
    %v4054 = vsel %vm815, %v4038, 0.0
    %v4055 = vsel %vm815, %v4039, 0.0
    %v4056 = vsel %vm816, %v4040, 0.0
    %v4057 = vsel %vm816, %v4041, 0.0
    %v4058 = vsel %vm817, %v4042, 0.0
    %v4059 = vsel %vm817, %v4043, 0.0
    %v4060 = vsel %vm818, %v4044, 0.0
    %v4061 = vsel %vm818, %v4045, 0.0
    %v4062 = vsel %vm819, %v4046, 0.0
    %v4063 = vsel %vm819, %v4047, 0.0
    %v4064 = vsel %vm820, %v4048, 0.0
    %v4065 = vsel %vm820, %v4049, 0.0
    %v4066 = vpack.c.bf16 %v4052, %v4050
    %v4067 = vpack.c.bf16 %v4053, %v4051
    %v4068 = vpack.c.bf16 %v4056, %v4054
    %v4069 = vpack.c.bf16 %v4057, %v4055
    %v4070 = vpack.c.bf16 %v4060, %v4058
    %v4071 = vpack.c.bf16 %v4061, %v4059
    %v4072 = vpack.c.bf16 %v4064, %v4062
    %v4073 = vpack.c.bf16 %v4065, %v4063
    %4074 = vst [vmem:[#allocation3 + $0x10] sm:$0xff] %v4066
    %4075 = vst [vmem:[#allocation3 + $0x18] sm:$0xff] %v4067
    %4076 = vst [vmem:[#allocation3 + $0x20] sm:$0xff] %v4068
    %4077 = vst [vmem:[#allocation3 + $0x28] sm:$0xff] %v4069
    %4078 = vst [vmem:[#allocation3 + $0x30] sm:$0xff] %v4070
    %4079 = vst [vmem:[#allocation3 + $0x38] sm:$0xff] %v4071
    %4080 = vst [vmem:[#allocation3 + $0x40] sm:$0xff] %v4072
    %4081 = vst [vmem:[#allocation3 + $0x48] sm:$0xff] %v4073
    %s4082 = scalar_lea.vmem [#allocation10], 2304
    %v4083 = vld [vmem:[%s4082] sm:$0xff]
    %v4084 = vld [vmem:[%s4082 + $0x8] sm:$0xff]
    %v4085 = vld [vmem:[%s4082 + $0x10] sm:$0xff]
    %v4086 = vld [vmem:[%s4082 + $0x18] sm:$0xff]
    %v4087 = vld [vmem:[%s4082 + $0x20] sm:$0xff]
    %v4088 = vld [vmem:[%s4082 + $0x28] sm:$0xff]
    %v4089 = vld [vmem:[%s4082 + $0x30] sm:$0xff]
    %v4090 = vld [vmem:[%s4082 + $0x38] sm:$0xff]
    %v4091 = vld [vmem:[%s4082 + $0x40] sm:$0xff]
    %v4092 = vld [vmem:[%s4082 + $0x48] sm:$0xff]
    %v4093 = vld [vmem:[%s4082 + $0x50] sm:$0xff]
    %v4094 = vld [vmem:[%s4082 + $0x58] sm:$0xff]
    %v4095 = vld [vmem:[%s4082 + $0x60] sm:$0xff]
    %v4096 = vld [vmem:[%s4082 + $0x68] sm:$0xff]
    %v4097 = vld [vmem:[%s4082 + $0x70] sm:$0xff]
    %v4098 = vld [vmem:[%s4082 + $0x78] sm:$0xff]
    %v4099 = vld [vmem:[%s4082 + $0x80] sm:$0xff]
    %v4100 = vld [vmem:[%s4082 + $0x88] sm:$0xff]
    %v4101 = vld [vmem:[%s4082 + $0x90] sm:$0xff]
    %v4102 = vld [vmem:[%s4082 + $0x98] sm:$0xff]
    %v4103 = vld [vmem:[%s4082 + $0xa0] sm:$0xff]
    %v4104 = vld [vmem:[%s4082 + $0xa8] sm:$0xff]
    %v4105 = vld [vmem:[%s4082 + $0xb0] sm:$0xff]
    %v4106 = vld [vmem:[%s4082 + $0xb8] sm:$0xff]
    %v4107 = vld [vmem:[%s4082 + $0xc0] sm:$0xff]
    %v4108 = vld [vmem:[%s4082 + $0xc8] sm:$0xff]
    %v4109 = vld [vmem:[%s4082 + $0xd0] sm:$0xff]
    %v4110 = vld [vmem:[%s4082 + $0xd8] sm:$0xff]
    %v4111 = vld [vmem:[%s4082 + $0xe0] sm:$0xff]
    %v4112 = vld [vmem:[%s4082 + $0xe8] sm:$0xff]
    %v4113 = vld [vmem:[%s4082 + $0xf0] sm:$0xff]
    %v4114 = vld [vmem:[%s4082 + $0xf8] sm:$0xff]
    %v4115 = vld [vmem:[#allocation3] sm:$0x80]
    %v4116 = vld [vmem:[#allocation3 + $0x8] sm:$0x80]
    %v4117 = vld [vmem:[#allocation3 + $0x10] sm:$0xff]
    %v4118 = vld [vmem:[#allocation3 + $0x18] sm:$0xff]
    %v4119 = vld [vmem:[#allocation3 + $0x20] sm:$0xff]
    %v4120 = vld [vmem:[#allocation3 + $0x28] sm:$0xff]
    %v4121 = vld [vmem:[#allocation3 + $0x30] sm:$0xff]
    %v4122 = vld [vmem:[#allocation3 + $0x38] sm:$0xff]
    %v4123 = vld [vmem:[#allocation3 + $0x40] sm:$0xff]
    %v4124 = vld [vmem:[#allocation3 + $0x48] sm:$0xff]
    %s4125 = scalar_lea.vmem [#allocation10], 2560
    %v4126 = vld [vmem:[%s4125] sm:$0xff]
    %v4127 = vld [vmem:[%s4125 + $0x8] sm:$0xff]
    %v4128 = vld [vmem:[%s4125 + $0x10] sm:$0xff]
    %v4129 = vld [vmem:[%s4125 + $0x18] sm:$0xff]
    %v4130 = vld [vmem:[%s4125 + $0x20] sm:$0xff]
    %v4131 = vld [vmem:[%s4125 + $0x28] sm:$0xff]
    %v4132 = vld [vmem:[%s4125 + $0x30] sm:$0xff]
    %v4133 = vld [vmem:[%s4125 + $0x38] sm:$0xff]
    %v4134 = vld [vmem:[%s4125 + $0x40] sm:$0xff]
    %v4135 = vld [vmem:[%s4125 + $0x48] sm:$0xff]
    %v4136 = vld [vmem:[%s4125 + $0x50] sm:$0xff]
    %v4137 = vld [vmem:[%s4125 + $0x58] sm:$0xff]
    %v4138 = vld [vmem:[%s4125 + $0x60] sm:$0xff]
    %v4139 = vld [vmem:[%s4125 + $0x68] sm:$0xff]
    %v4140 = vld [vmem:[%s4125 + $0x70] sm:$0xff]
    %v4141 = vld [vmem:[%s4125 + $0x78] sm:$0xff]
    %v4142 = vld [vmem:[%s4125 + $0x80] sm:$0xff]
    %v4143 = vld [vmem:[%s4125 + $0x88] sm:$0xff]
    %v4144 = vld [vmem:[%s4125 + $0x90] sm:$0xff]
    %v4145 = vld [vmem:[%s4125 + $0x98] sm:$0xff]
    %v4146 = vld [vmem:[%s4125 + $0xa0] sm:$0xff]
    %v4147 = vld [vmem:[%s4125 + $0xa8] sm:$0xff]
    %v4148 = vld [vmem:[%s4125 + $0xb0] sm:$0xff]
    %v4149 = vld [vmem:[%s4125 + $0xb8] sm:$0xff]
    %v4150 = vld [vmem:[%s4125 + $0xc0] sm:$0xff]
    %v4151 = vld [vmem:[%s4125 + $0xc8] sm:$0xff]
    %v4152 = vld [vmem:[%s4125 + $0xd0] sm:$0xff]
    %v4153 = vld [vmem:[%s4125 + $0xd8] sm:$0xff]
    %v4154 = vld [vmem:[%s4125 + $0xe0] sm:$0xff]
    %v4155 = vld [vmem:[%s4125 + $0xe8] sm:$0xff]
    %v4156 = vld [vmem:[%s4125 + $0xf0] sm:$0xff]
    %v4157 = vld [vmem:[%s4125 + $0xf8] sm:$0xff]
    %v4190 = vunpack.c.l.b16 %v4126
    %v4191 = vunpack.c.h.b16 %v4126
    %v4192 = vunpack.c.l.b16 %v4127
    %v4193 = vunpack.c.h.b16 %v4127
    %v4194 = vunpack.c.l.b16 %v4128
    %v4195 = vunpack.c.h.b16 %v4128
    %v4196 = vunpack.c.l.b16 %v4129
    %v4197 = vunpack.c.h.b16 %v4129
    %v4198 = vunpack.c.l.b16 %v4130
    %v4199 = vunpack.c.h.b16 %v4130
    %v4200 = vunpack.c.l.b16 %v4131
    %v4201 = vunpack.c.h.b16 %v4131
    %v4202 = vunpack.c.l.b16 %v4132
    %v4203 = vunpack.c.h.b16 %v4132
    %v4204 = vunpack.c.l.b16 %v4133
    %v4205 = vunpack.c.h.b16 %v4133
    %v4206 = vunpack.c.l.b16 %v4134
    %v4207 = vunpack.c.h.b16 %v4134
    %v4208 = vunpack.c.l.b16 %v4135
    %v4209 = vunpack.c.h.b16 %v4135
    %v4210 = vunpack.c.l.b16 %v4136
    %v4211 = vunpack.c.h.b16 %v4136
    %v4212 = vunpack.c.l.b16 %v4137
    %v4213 = vunpack.c.h.b16 %v4137
    %v4214 = vunpack.c.l.b16 %v4138
    %v4215 = vunpack.c.h.b16 %v4138
    %v4216 = vunpack.c.l.b16 %v4139
    %v4217 = vunpack.c.h.b16 %v4139
    %v4218 = vunpack.c.l.b16 %v4140
    %v4219 = vunpack.c.h.b16 %v4140
    %v4220 = vunpack.c.l.b16 %v4141
    %v4221 = vunpack.c.h.b16 %v4141
    %v4222 = vunpack.c.l.b16 %v4142
    %v4223 = vunpack.c.h.b16 %v4142
    %v4224 = vunpack.c.l.b16 %v4143
    %v4225 = vunpack.c.h.b16 %v4143
    %v4226 = vunpack.c.l.b16 %v4144
    %v4227 = vunpack.c.h.b16 %v4144
    %v4228 = vunpack.c.l.b16 %v4145
    %v4229 = vunpack.c.h.b16 %v4145
    %v4230 = vunpack.c.l.b16 %v4146
    %v4231 = vunpack.c.h.b16 %v4146
    %v4232 = vunpack.c.l.b16 %v4147
    %v4233 = vunpack.c.h.b16 %v4147
    %v4234 = vunpack.c.l.b16 %v4148
    %v4235 = vunpack.c.h.b16 %v4148
    %v4236 = vunpack.c.l.b16 %v4149
    %v4237 = vunpack.c.h.b16 %v4149
    %v4238 = vunpack.c.l.b16 %v4150
    %v4239 = vunpack.c.h.b16 %v4150
    %v4240 = vunpack.c.l.b16 %v4151
    %v4241 = vunpack.c.h.b16 %v4151
    %v4242 = vunpack.c.l.b16 %v4152
    %v4243 = vunpack.c.h.b16 %v4152
    %v4244 = vunpack.c.l.b16 %v4153
    %v4245 = vunpack.c.h.b16 %v4153
    %v4246 = vunpack.c.l.b16 %v4154
    %v4247 = vunpack.c.h.b16 %v4154
    %v4248 = vunpack.c.l.b16 %v4155
    %v4249 = vunpack.c.h.b16 %v4155
    %v4250 = vunpack.c.l.b16 %v4156
    %v4251 = vunpack.c.h.b16 %v4156
    %v4252 = vunpack.c.l.b16 %v4157
    %v4253 = vunpack.c.h.b16 %v4157
    %v4254 = vpack.c.b16 %v4192, %v4190
    %v4255 = vpack.c.b16 %v4193, %v4191
    %v4256 = vpack.c.b16 %v4196, %v4194
    %v4257 = vpack.c.b16 %v4197, %v4195
    %v4258 = vpack.c.b16 %v4200, %v4198
    %v4259 = vpack.c.b16 %v4201, %v4199
    %v4260 = vpack.c.b16 %v4204, %v4202
    %v4261 = vpack.c.b16 %v4205, %v4203
    %v4262 = vpack.c.b16 %v4208, %v4206
    %v4263 = vpack.c.b16 %v4209, %v4207
    %v4264 = vpack.c.b16 %v4212, %v4210
    %v4265 = vpack.c.b16 %v4213, %v4211
    %v4266 = vpack.c.b16 %v4216, %v4214
    %v4267 = vpack.c.b16 %v4217, %v4215
    %v4268 = vpack.c.b16 %v4220, %v4218
    %v4269 = vpack.c.b16 %v4221, %v4219
    %v4270 = vpack.c.b16 %v4224, %v4222
    %v4271 = vpack.c.b16 %v4225, %v4223
    %v4272 = vpack.c.b16 %v4228, %v4226
    %v4273 = vpack.c.b16 %v4229, %v4227
    %v4274 = vpack.c.b16 %v4232, %v4230
    %v4275 = vpack.c.b16 %v4233, %v4231
    %v4276 = vpack.c.b16 %v4236, %v4234
    %v4277 = vpack.c.b16 %v4237, %v4235
    %v4278 = vpack.c.b16 %v4240, %v4238
    %v4279 = vpack.c.b16 %v4241, %v4239
    %v4280 = vpack.c.b16 %v4244, %v4242
    %v4281 = vpack.c.b16 %v4245, %v4243
    %v4282 = vpack.c.b16 %v4248, %v4246
    %v4283 = vpack.c.b16 %v4249, %v4247
    %v4284 = vpack.c.b16 %v4252, %v4250
    %v4285 = vpack.c.b16 %v4253, %v4251
    %4318 = vmatprep.subr.bf16.mxu0 %v4255
    %4319 = vmatpush1.bf16.msra.mxu0 %v4254
    %4320 = vmatprep.subr.bf16.mxu0 %v4257
    %4321 = vmatpush1.bf16.msra.mxu0 %v4256
    %4322 = vmatprep.subr.bf16.mxu0 %v4259
    %4323 = vmatpush1.bf16.msra.mxu0 %v4258
    %4324 = vmatprep.subr.bf16.mxu0 %v4261
    %4325 = vmatpush1.bf16.msra.mxu0 %v4260
    %4326 = vmatprep.subr.bf16.mxu0 %v4263
    %4327 = vmatpush1.bf16.msra.mxu0 %v4262
    %4328 = vmatprep.subr.bf16.mxu0 %v4265
    %4329 = vmatpush1.bf16.msra.mxu0 %v4264
    %4330 = vmatprep.subr.bf16.mxu0 %v4267
    %4331 = vmatpush1.bf16.msra.mxu0 %v4266
    %4332 = vmatprep.subr.bf16.mxu0 %v4269
    %4333 = vmatpush1.bf16.msra.mxu0 %v4268
    %4334 = vmatprep.subr.bf16.mxu0 %v4271
    %4335 = vmatpush1.bf16.msra.mxu0 %v4270
    %4336 = vmatprep.subr.bf16.mxu0 %v4273
    %4337 = vmatpush1.bf16.msra.mxu0 %v4272
    %4338 = vmatprep.subr.bf16.mxu0 %v4275
    %4339 = vmatpush1.bf16.msra.mxu0 %v4274
    %4340 = vmatprep.subr.bf16.mxu0 %v4277
    %4341 = vmatpush1.bf16.msra.mxu0 %v4276
    %4342 = vmatprep.subr.bf16.mxu0 %v4279
    %4343 = vmatpush1.bf16.msra.mxu0 %v4278
    %4344 = vmatprep.subr.bf16.mxu0 %v4281
    %4345 = vmatpush1.bf16.msra.mxu0 %v4280
    %4346 = vmatprep.subr.bf16.mxu0 %v4283
    %4347 = vmatpush1.bf16.msra.mxu0 %v4282
    %4348 = vmatprep.subr.bf16.mxu0 %v4285
    %4349 = vmatpush1.bf16.msra.mxu0 %v4284
    %4350 = vmatprep.mubr.bf16.mxu0 %v4118
    %4351 = vmatmul.mubr.bf16.gmra.mrb[0].mxu0 %v4117
    %v4352 = vpop.f32.mrb[0].mxu0
    %v4353 = vadd.f32 0.0, %v4352
    %v4354 = vpop.f32.mrb[0].mxu0
    %v4355 = vadd.f32 0.0, %v4354
    %v4356 = vpop.f32.mrb[0].mxu0
    %v4357 = vadd.f32 0.0, %v4356
    %v4358 = vpop.f32.mrb[0].mxu0
    %v4359 = vadd.f32 0.0, %v4358
    %4360 = vmatprep.mubr.bf16.mxu0 %v4120
    %4361 = vmatmul.mubr.bf16.gmra.mrb[0].mxu0 %v4119
    %v4362 = vpop.f32.mrb[0].mxu0
    %v4363 = vadd.f32 0.0, %v4362
    %v4364 = vpop.f32.mrb[0].mxu0
    %v4365 = vadd.f32 0.0, %v4364
    %v4366 = vpop.f32.mrb[0].mxu0
    %v4367 = vadd.f32 0.0, %v4366
    %v4368 = vpop.f32.mrb[0].mxu0
    %v4369 = vadd.f32 0.0, %v4368
    %4370 = vmatprep.mubr.bf16.mxu0 %v4122
    %4371 = vmatmul.mubr.bf16.gmra.mrb[0].mxu0 %v4121
    %v4372 = vpop.f32.mrb[0].mxu0
    %v4373 = vadd.f32 0.0, %v4372
    %v4374 = vpop.f32.mrb[0].mxu0
    %v4375 = vadd.f32 0.0, %v4374
    %v4376 = vpop.f32.mrb[0].mxu0
    %v4377 = vadd.f32 0.0, %v4376
    %v4378 = vpop.f32.mrb[0].mxu0
    %v4379 = vadd.f32 0.0, %v4378
    %4380 = vmatprep.mubr.bf16.mxu0 %v4124
    %4381 = vmatmul.mubr.bf16.gmra.mrb[0].mxu0 %v4123
    %v4382 = vpop.f32.mrb[0].mxu0
    %v4383 = vadd.f32 0.0, %v4382
    %v4384 = vpop.f32.mrb[0].mxu0
    %v4385 = vadd.f32 0.0, %v4384
    %v4386 = vpop.f32.mrb[0].mxu0
    %v4387 = vadd.f32 0.0, %v4386
    %v4388 = vpop.f32.mrb[0].mxu0
    %v4389 = vadd.f32 0.0, %v4388
    %4390 = vdwg.mxu0
    %v4392 = vshrl.u32 %v4115, 16
    %v4394 = vrot.slane %v4392, 7
    %v4396 = vshrl.u32 %v4117, 16
    %v4398 = vrot.slane %v4396, 7
    %v4399 = vshll.u32 %v4117, 16
    %v4401 = vor.u32 %v4398, %v4399
    %v4402 = vsel %vm1161, %v4394, %v4401
    %v4404 = vshrl.u32 %v4116, 16
    %v4406 = vrot.slane %v4404, 7
    %v4408 = vshrl.u32 %v4118, 16
    %v4410 = vrot.slane %v4408, 7
    %v4411 = vshll.u32 %v4118, 16
    %v4413 = vor.u32 %v4410, %v4411
    %v4414 = vsel %vm1161, %v4406, %v4413
    %v4416 = vshrl.u32 %v4119, 16
    %v4418 = vrot.slane %v4416, 7
    %v4419 = vshll.u32 %v4119, 16
    %v4421 = vor.u32 %v4418, %v4419
    %v4422 = vsel %vm1161, %v4398, %v4421
    %v4424 = vshrl.u32 %v4120, 16
    %v4426 = vrot.slane %v4424, 7
    %v4427 = vshll.u32 %v4120, 16
    %v4429 = vor.u32 %v4426, %v4427
    %v4430 = vsel %vm1161, %v4410, %v4429
    %v4432 = vshrl.u32 %v4121, 16
    %v4434 = vrot.slane %v4432, 7
    %v4435 = vshll.u32 %v4121, 16
    %v4437 = vor.u32 %v4434, %v4435
    %v4438 = vsel %vm1161, %v4418, %v4437
    %v4440 = vshrl.u32 %v4122, 16
    %v4442 = vrot.slane %v4440, 7
    %v4443 = vshll.u32 %v4122, 16
    %v4445 = vor.u32 %v4442, %v4443
    %v4446 = vsel %vm1161, %v4426, %v4445
    %v4448 = vshrl.u32 %v4123, 16
    %v4450 = vrot.slane %v4448, 7
    %v4451 = vshll.u32 %v4123, 16
    %v4453 = vor.u32 %v4450, %v4451
    %v4454 = vsel %vm1161, %v4434, %v4453
    %v4456 = vshrl.u32 %v4124, 16
    %v4458 = vrot.slane %v4456, 7
    %v4459 = vshll.u32 %v4124, 16
    %v4461 = vor.u32 %v4458, %v4459
    %v4462 = vsel %vm1161, %v4442, %v4461
    %v4503 = vunpack.c.l.b16 %v4083
    %v4504 = vunpack.c.h.b16 %v4083
    %v4505 = vunpack.c.l.b16 %v4084
    %v4506 = vunpack.c.h.b16 %v4084
    %v4507 = vunpack.c.l.b16 %v4085
    %v4508 = vunpack.c.h.b16 %v4085
    %v4509 = vunpack.c.l.b16 %v4086
    %v4510 = vunpack.c.h.b16 %v4086
    %v4511 = vunpack.c.l.b16 %v4087
    %v4512 = vunpack.c.h.b16 %v4087
    %v4513 = vunpack.c.l.b16 %v4088
    %v4514 = vunpack.c.h.b16 %v4088
    %v4515 = vunpack.c.l.b16 %v4089
    %v4516 = vunpack.c.h.b16 %v4089
    %v4517 = vunpack.c.l.b16 %v4090
    %v4518 = vunpack.c.h.b16 %v4090
    %v4519 = vunpack.c.l.b16 %v4091
    %v4520 = vunpack.c.h.b16 %v4091
    %v4521 = vunpack.c.l.b16 %v4092
    %v4522 = vunpack.c.h.b16 %v4092
    %v4523 = vunpack.c.l.b16 %v4093
    %v4524 = vunpack.c.h.b16 %v4093
    %v4525 = vunpack.c.l.b16 %v4094
    %v4526 = vunpack.c.h.b16 %v4094
    %v4527 = vunpack.c.l.b16 %v4095
    %v4528 = vunpack.c.h.b16 %v4095
    %v4529 = vunpack.c.l.b16 %v4096
    %v4530 = vunpack.c.h.b16 %v4096
    %v4531 = vunpack.c.l.b16 %v4097
    %v4532 = vunpack.c.h.b16 %v4097
    %v4533 = vunpack.c.l.b16 %v4098
    %v4534 = vunpack.c.h.b16 %v4098
    %v4535 = vunpack.c.l.b16 %v4099
    %v4536 = vunpack.c.h.b16 %v4099
    %v4537 = vunpack.c.l.b16 %v4100
    %v4538 = vunpack.c.h.b16 %v4100
    %v4539 = vunpack.c.l.b16 %v4101
    %v4540 = vunpack.c.h.b16 %v4101
    %v4541 = vunpack.c.l.b16 %v4102
    %v4542 = vunpack.c.h.b16 %v4102
    %v4543 = vunpack.c.l.b16 %v4103
    %v4544 = vunpack.c.h.b16 %v4103
    %v4545 = vunpack.c.l.b16 %v4104
    %v4546 = vunpack.c.h.b16 %v4104
    %v4547 = vunpack.c.l.b16 %v4105
    %v4548 = vunpack.c.h.b16 %v4105
    %v4549 = vunpack.c.l.b16 %v4106
    %v4550 = vunpack.c.h.b16 %v4106
    %v4551 = vunpack.c.l.b16 %v4107
    %v4552 = vunpack.c.h.b16 %v4107
    %v4553 = vunpack.c.l.b16 %v4108
    %v4554 = vunpack.c.h.b16 %v4108
    %v4555 = vunpack.c.l.b16 %v4109
    %v4556 = vunpack.c.h.b16 %v4109
    %v4557 = vunpack.c.l.b16 %v4110
    %v4558 = vunpack.c.h.b16 %v4110
    %v4559 = vunpack.c.l.b16 %v4111
    %v4560 = vunpack.c.h.b16 %v4111
    %v4561 = vunpack.c.l.b16 %v4112
    %v4562 = vunpack.c.h.b16 %v4112
    %v4563 = vunpack.c.l.b16 %v4113
    %v4564 = vunpack.c.h.b16 %v4113
    %v4565 = vunpack.c.l.b16 %v4114
    %v4566 = vunpack.c.h.b16 %v4114
    %v4567 = vpack.c.b16 %v4505, %v4503
    %v4568 = vpack.c.b16 %v4506, %v4504
    %v4569 = vpack.c.b16 %v4509, %v4507
    %v4570 = vpack.c.b16 %v4510, %v4508
    %v4571 = vpack.c.b16 %v4513, %v4511
    %v4572 = vpack.c.b16 %v4514, %v4512
    %v4573 = vpack.c.b16 %v4517, %v4515
    %v4574 = vpack.c.b16 %v4518, %v4516
    %v4575 = vpack.c.b16 %v4521, %v4519
    %v4576 = vpack.c.b16 %v4522, %v4520
    %v4577 = vpack.c.b16 %v4525, %v4523
    %v4578 = vpack.c.b16 %v4526, %v4524
    %v4579 = vpack.c.b16 %v4529, %v4527
    %v4580 = vpack.c.b16 %v4530, %v4528
    %v4581 = vpack.c.b16 %v4533, %v4531
    %v4582 = vpack.c.b16 %v4534, %v4532
    %v4583 = vpack.c.b16 %v4537, %v4535
    %v4584 = vpack.c.b16 %v4538, %v4536
    %v4585 = vpack.c.b16 %v4541, %v4539
    %v4586 = vpack.c.b16 %v4542, %v4540
    %v4587 = vpack.c.b16 %v4545, %v4543
    %v4588 = vpack.c.b16 %v4546, %v4544
    %v4589 = vpack.c.b16 %v4549, %v4547
    %v4590 = vpack.c.b16 %v4550, %v4548
    %v4591 = vpack.c.b16 %v4553, %v4551
    %v4592 = vpack.c.b16 %v4554, %v4552
    %v4593 = vpack.c.b16 %v4557, %v4555
    %v4594 = vpack.c.b16 %v4558, %v4556
    %v4595 = vpack.c.b16 %v4561, %v4559
    %v4596 = vpack.c.b16 %v4562, %v4560
    %v4597 = vpack.c.b16 %v4565, %v4563
    %v4598 = vpack.c.b16 %v4566, %v4564
    %4631 = vmatprep.subr.bf16.mxu0 %v4568
    %4632 = vmatpush1.bf16.msra.mxu0 %v4567
    %4633 = vmatprep.subr.bf16.mxu0 %v4570
    %4634 = vmatpush1.bf16.msra.mxu0 %v4569
    %4635 = vmatprep.subr.bf16.mxu0 %v4572
    %4636 = vmatpush1.bf16.msra.mxu0 %v4571
    %4637 = vmatprep.subr.bf16.mxu0 %v4574
    %4638 = vmatpush1.bf16.msra.mxu0 %v4573
    %4639 = vmatprep.subr.bf16.mxu0 %v4576
    %4640 = vmatpush1.bf16.msra.mxu0 %v4575
    %4641 = vmatprep.subr.bf16.mxu0 %v4578
    %4642 = vmatpush1.bf16.msra.mxu0 %v4577
    %4643 = vmatprep.subr.bf16.mxu0 %v4580
    %4644 = vmatpush1.bf16.msra.mxu0 %v4579
    %4645 = vmatprep.subr.bf16.mxu0 %v4582
    %4646 = vmatpush1.bf16.msra.mxu0 %v4581
    %4647 = vmatprep.subr.bf16.mxu0 %v4584
    %4648 = vmatpush1.bf16.msra.mxu0 %v4583
    %4649 = vmatprep.subr.bf16.mxu0 %v4586
    %4650 = vmatpush1.bf16.msra.mxu0 %v4585
    %4651 = vmatprep.subr.bf16.mxu0 %v4588
    %4652 = vmatpush1.bf16.msra.mxu0 %v4587
    %4653 = vmatprep.subr.bf16.mxu0 %v4590
    %4654 = vmatpush1.bf16.msra.mxu0 %v4589
    %4655 = vmatprep.subr.bf16.mxu0 %v4592
    %4656 = vmatpush1.bf16.msra.mxu0 %v4591
    %4657 = vmatprep.subr.bf16.mxu0 %v4594
    %4658 = vmatpush1.bf16.msra.mxu0 %v4593
    %4659 = vmatprep.subr.bf16.mxu0 %v4596
    %4660 = vmatpush1.bf16.msra.mxu0 %v4595
    %4661 = vmatprep.subr.bf16.mxu0 %v4598
    %4662 = vmatpush1.bf16.msra.mxu0 %v4597
    %4663 = vmatprep.mubr.bf16.mxu0 %v4414
    %4664 = vmatmul.mubr.bf16.gmra.mrb[0].mxu0 %v4402
    %v4665 = vpop.f32.mrb[0].mxu0
    %v4666 = vadd.f32 %v4353, %v4665
    %v4667 = vpop.f32.mrb[0].mxu0
    %v4668 = vadd.f32 %v4355, %v4667
    %v4669 = vpop.f32.mrb[0].mxu0
    %v4670 = vadd.f32 %v4357, %v4669
    %v4671 = vpop.f32.mrb[0].mxu0
    %v4672 = vadd.f32 %v4359, %v4671
    %4673 = vmatprep.mubr.bf16.mxu0 %v4430
    %4674 = vmatmul.mubr.bf16.gmra.mrb[0].mxu0 %v4422
    %v4675 = vpop.f32.mrb[0].mxu0
    %v4676 = vadd.f32 %v4363, %v4675
    %v4677 = vpop.f32.mrb[0].mxu0
    %v4678 = vadd.f32 %v4365, %v4677
    %v4679 = vpop.f32.mrb[0].mxu0
    %v4680 = vadd.f32 %v4367, %v4679
    %v4681 = vpop.f32.mrb[0].mxu0
    %v4682 = vadd.f32 %v4369, %v4681
    %4683 = vmatprep.mubr.bf16.mxu0 %v4446
    %4684 = vmatmul.mubr.bf16.gmra.mrb[0].mxu0 %v4438
    %v4685 = vpop.f32.mrb[0].mxu0
    %v4686 = vadd.f32 %v4373, %v4685
    %v4687 = vpop.f32.mrb[0].mxu0
    %v4688 = vadd.f32 %v4375, %v4687
    %v4689 = vpop.f32.mrb[0].mxu0
    %v4690 = vadd.f32 %v4377, %v4689
    %v4691 = vpop.f32.mrb[0].mxu0
    %v4692 = vadd.f32 %v4379, %v4691
    %4693 = vmatprep.mubr.bf16.mxu0 %v4462
    %4694 = vmatmul.mubr.bf16.gmra.mrb[0].mxu0 %v4454
    %v4695 = vpop.f32.mrb[0].mxu0
    %v4696 = vadd.f32 %v4383, %v4695
    %v4697 = vpop.f32.mrb[0].mxu0
    %v4698 = vadd.f32 %v4385, %v4697
    %v4699 = vpop.f32.mrb[0].mxu0
    %v4700 = vadd.f32 %v4387, %v4699
    %v4701 = vpop.f32.mrb[0].mxu0
    %v4702 = vadd.f32 %v4389, %v4701
    %4703 = vdwg.mxu0
    %s4704 = scalar_lea.vmem [#allocation10], 2816
    %v4705 = vld [vmem:[%s4704] sm:$0xff]
    %v4706 = vld [vmem:[%s4704 + $0x8] sm:$0xff]
    %v4707 = vld [vmem:[%s4704 + $0x10] sm:$0xff]
    %v4708 = vld [vmem:[%s4704 + $0x18] sm:$0xff]
    %v4709 = vld [vmem:[%s4704 + $0x20] sm:$0xff]
    %v4710 = vld [vmem:[%s4704 + $0x28] sm:$0xff]
    %v4711 = vld [vmem:[%s4704 + $0x30] sm:$0xff]
    %v4712 = vld [vmem:[%s4704 + $0x38] sm:$0xff]
    %v4713 = vld [vmem:[%s4704 + $0x40] sm:$0xff]
    %v4714 = vld [vmem:[%s4704 + $0x48] sm:$0xff]
    %v4715 = vld [vmem:[%s4704 + $0x50] sm:$0xff]
    %v4716 = vld [vmem:[%s4704 + $0x58] sm:$0xff]
    %v4717 = vld [vmem:[%s4704 + $0x60] sm:$0xff]
    %v4718 = vld [vmem:[%s4704 + $0x68] sm:$0xff]
    %v4719 = vld [vmem:[%s4704 + $0x70] sm:$0xff]
    %v4720 = vld [vmem:[%s4704 + $0x78] sm:$0xff]
    %v4721 = vld [vmem:[%s4704 + $0x80] sm:$0xff]
    %v4722 = vld [vmem:[%s4704 + $0x88] sm:$0xff]
    %v4723 = vld [vmem:[%s4704 + $0x90] sm:$0xff]
    %v4724 = vld [vmem:[%s4704 + $0x98] sm:$0xff]
    %v4725 = vld [vmem:[%s4704 + $0xa0] sm:$0xff]
    %v4726 = vld [vmem:[%s4704 + $0xa8] sm:$0xff]
    %v4727 = vld [vmem:[%s4704 + $0xb0] sm:$0xff]
    %v4728 = vld [vmem:[%s4704 + $0xb8] sm:$0xff]
    %v4729 = vld [vmem:[%s4704 + $0xc0] sm:$0xff]
    %v4730 = vld [vmem:[%s4704 + $0xc8] sm:$0xff]
    %v4731 = vld [vmem:[%s4704 + $0xd0] sm:$0xff]
    %v4732 = vld [vmem:[%s4704 + $0xd8] sm:$0xff]
    %v4733 = vld [vmem:[%s4704 + $0xe0] sm:$0xff]
    %v4734 = vld [vmem:[%s4704 + $0xe8] sm:$0xff]
    %v4735 = vld [vmem:[%s4704 + $0xf0] sm:$0xff]
    %v4736 = vld [vmem:[%s4704 + $0xf8] sm:$0xff]
    %v4737 = vld [vmem:[#allocation3 + $0x10] sm:$0xff]
    %v4738 = vld [vmem:[#allocation3 + $0x18] sm:$0xff]
    %v4739 = vld [vmem:[#allocation3 + $0x20] sm:$0xff]
    %v4740 = vld [vmem:[#allocation3 + $0x28] sm:$0xff]
    %v4741 = vld [vmem:[#allocation3 + $0x30] sm:$0xff]
    %v4742 = vld [vmem:[#allocation3 + $0x38] sm:$0xff]
    %v4743 = vld [vmem:[#allocation3 + $0x40] sm:$0xff]
    %v4744 = vld [vmem:[#allocation3 + $0x48] sm:$0xff]
    %v4745 = vld [vmem:[#allocation3 + $0x50] sm:$0x1]
    %v4746 = vld [vmem:[#allocation3 + $0x58] sm:$0x1]
    %v4748 = vshrl.u32 %v4737, 16
    %v4750 = vshll.u32 %v4737, 16
    %v4752 = vrot.slane %v4750, 1
    %v4753 = vor.u32 %v4748, %v4752
    %v4755 = vshll.u32 %v4739, 16
    %v4757 = vrot.slane %v4755, 1
    %v4758 = vsel %vm603, %v4753, %v4757
    %v4760 = vshrl.u32 %v4738, 16
    %v4762 = vshll.u32 %v4738, 16
    %v4764 = vrot.slane %v4762, 1
    %v4765 = vor.u32 %v4760, %v4764
    %v4767 = vshll.u32 %v4740, 16
    %v4769 = vrot.slane %v4767, 1
    %v4770 = vsel %vm603, %v4765, %v4769
    %v4771 = vshrl.u32 %v4739, 16
    %v4773 = vor.u32 %v4771, %v4757
    %v4775 = vshll.u32 %v4741, 16
    %v4777 = vrot.slane %v4775, 1
    %v4778 = vsel %vm603, %v4773, %v4777
    %v4779 = vshrl.u32 %v4740, 16
    %v4781 = vor.u32 %v4779, %v4769
    %v4783 = vshll.u32 %v4742, 16
    %v4785 = vrot.slane %v4783, 1
    %v4786 = vsel %vm603, %v4781, %v4785
    %v4787 = vshrl.u32 %v4741, 16
    %v4789 = vor.u32 %v4787, %v4777
    %v4791 = vshll.u32 %v4743, 16
    %v4793 = vrot.slane %v4791, 1
    %v4794 = vsel %vm603, %v4789, %v4793
    %v4795 = vshrl.u32 %v4742, 16
    %v4797 = vor.u32 %v4795, %v4785
    %v4799 = vshll.u32 %v4744, 16
    %v4801 = vrot.slane %v4799, 1
    %v4802 = vsel %vm603, %v4797, %v4801
    %v4803 = vshrl.u32 %v4743, 16
    %v4805 = vor.u32 %v4803, %v4793
    %v4807 = vshll.u32 %v4745, 16
    %v4809 = vrot.slane %v4807, 1
    %v4810 = vsel %vm603, %v4805, %v4809
    %v4811 = vshrl.u32 %v4744, 16
    %v4813 = vor.u32 %v4811, %v4801
    %v4815 = vshll.u32 %v4746, 16
    %v4817 = vrot.slane %v4815, 1
    %v4818 = vsel %vm603, %v4813, %v4817
    %v4859 = vunpack.c.l.b16 %v4705
    %v4860 = vunpack.c.h.b16 %v4705
    %v4861 = vunpack.c.l.b16 %v4706
    %v4862 = vunpack.c.h.b16 %v4706
    %v4863 = vunpack.c.l.b16 %v4707
    %v4864 = vunpack.c.h.b16 %v4707
    %v4865 = vunpack.c.l.b16 %v4708
    %v4866 = vunpack.c.h.b16 %v4708
    %v4867 = vunpack.c.l.b16 %v4709
    %v4868 = vunpack.c.h.b16 %v4709
    %v4869 = vunpack.c.l.b16 %v4710
    %v4870 = vunpack.c.h.b16 %v4710
    %v4871 = vunpack.c.l.b16 %v4711
    %v4872 = vunpack.c.h.b16 %v4711
    %v4873 = vunpack.c.l.b16 %v4712
    %v4874 = vunpack.c.h.b16 %v4712
    %v4875 = vunpack.c.l.b16 %v4713
    %v4876 = vunpack.c.h.b16 %v4713
    %v4877 = vunpack.c.l.b16 %v4714
    %v4878 = vunpack.c.h.b16 %v4714
    %v4879 = vunpack.c.l.b16 %v4715
    %v4880 = vunpack.c.h.b16 %v4715
    %v4881 = vunpack.c.l.b16 %v4716
    %v4882 = vunpack.c.h.b16 %v4716
    %v4883 = vunpack.c.l.b16 %v4717
    %v4884 = vunpack.c.h.b16 %v4717
    %v4885 = vunpack.c.l.b16 %v4718
    %v4886 = vunpack.c.h.b16 %v4718
    %v4887 = vunpack.c.l.b16 %v4719
    %v4888 = vunpack.c.h.b16 %v4719
    %v4889 = vunpack.c.l.b16 %v4720
    %v4890 = vunpack.c.h.b16 %v4720
    %v4891 = vunpack.c.l.b16 %v4721
    %v4892 = vunpack.c.h.b16 %v4721
    %v4893 = vunpack.c.l.b16 %v4722
    %v4894 = vunpack.c.h.b16 %v4722
    %v4895 = vunpack.c.l.b16 %v4723
    %v4896 = vunpack.c.h.b16 %v4723
    %v4897 = vunpack.c.l.b16 %v4724
    %v4898 = vunpack.c.h.b16 %v4724
    %v4899 = vunpack.c.l.b16 %v4725
    %v4900 = vunpack.c.h.b16 %v4725
    %v4901 = vunpack.c.l.b16 %v4726
    %v4902 = vunpack.c.h.b16 %v4726
    %v4903 = vunpack.c.l.b16 %v4727
    %v4904 = vunpack.c.h.b16 %v4727
    %v4905 = vunpack.c.l.b16 %v4728
    %v4906 = vunpack.c.h.b16 %v4728
    %v4907 = vunpack.c.l.b16 %v4729
    %v4908 = vunpack.c.h.b16 %v4729
    %v4909 = vunpack.c.l.b16 %v4730
    %v4910 = vunpack.c.h.b16 %v4730
    %v4911 = vunpack.c.l.b16 %v4731
    %v4912 = vunpack.c.h.b16 %v4731
    %v4913 = vunpack.c.l.b16 %v4732
    %v4914 = vunpack.c.h.b16 %v4732
    %v4915 = vunpack.c.l.b16 %v4733
    %v4916 = vunpack.c.h.b16 %v4733
    %v4917 = vunpack.c.l.b16 %v4734
    %v4918 = vunpack.c.h.b16 %v4734
    %v4919 = vunpack.c.l.b16 %v4735
    %v4920 = vunpack.c.h.b16 %v4735
    %v4921 = vunpack.c.l.b16 %v4736
    %v4922 = vunpack.c.h.b16 %v4736
    %v4923 = vpack.c.b16 %v4861, %v4859
    %v4924 = vpack.c.b16 %v4862, %v4860
    %v4925 = vpack.c.b16 %v4865, %v4863
    %v4926 = vpack.c.b16 %v4866, %v4864
    %v4927 = vpack.c.b16 %v4869, %v4867
    %v4928 = vpack.c.b16 %v4870, %v4868
    %v4929 = vpack.c.b16 %v4873, %v4871
    %v4930 = vpack.c.b16 %v4874, %v4872
    %v4931 = vpack.c.b16 %v4877, %v4875
    %v4932 = vpack.c.b16 %v4878, %v4876
    %v4933 = vpack.c.b16 %v4881, %v4879
    %v4934 = vpack.c.b16 %v4882, %v4880
    %v4935 = vpack.c.b16 %v4885, %v4883
    %v4936 = vpack.c.b16 %v4886, %v4884
    %v4937 = vpack.c.b16 %v4889, %v4887
    %v4938 = vpack.c.b16 %v4890, %v4888
    %v4939 = vpack.c.b16 %v4893, %v4891
    %v4940 = vpack.c.b16 %v4894, %v4892
    %v4941 = vpack.c.b16 %v4897, %v4895
    %v4942 = vpack.c.b16 %v4898, %v4896
    %v4943 = vpack.c.b16 %v4901, %v4899
    %v4944 = vpack.c.b16 %v4902, %v4900
    %v4945 = vpack.c.b16 %v4905, %v4903
    %v4946 = vpack.c.b16 %v4906, %v4904
    %v4947 = vpack.c.b16 %v4909, %v4907
    %v4948 = vpack.c.b16 %v4910, %v4908
    %v4949 = vpack.c.b16 %v4913, %v4911
    %v4950 = vpack.c.b16 %v4914, %v4912
    %v4951 = vpack.c.b16 %v4917, %v4915
    %v4952 = vpack.c.b16 %v4918, %v4916
    %v4953 = vpack.c.b16 %v4921, %v4919
    %v4954 = vpack.c.b16 %v4922, %v4920
    %4987 = vmatprep.subr.bf16.mxu0 %v4924
    %4988 = vmatpush1.bf16.msra.mxu0 %v4923
    %4989 = vmatprep.subr.bf16.mxu0 %v4926
    %4990 = vmatpush1.bf16.msra.mxu0 %v4925
    %4991 = vmatprep.subr.bf16.mxu0 %v4928
    %4992 = vmatpush1.bf16.msra.mxu0 %v4927
    %4993 = vmatprep.subr.bf16.mxu0 %v4930
    %4994 = vmatpush1.bf16.msra.mxu0 %v4929
    %4995 = vmatprep.subr.bf16.mxu0 %v4932
    %4996 = vmatpush1.bf16.msra.mxu0 %v4931
    %4997 = vmatprep.subr.bf16.mxu0 %v4934
    %4998 = vmatpush1.bf16.msra.mxu0 %v4933
    %4999 = vmatprep.subr.bf16.mxu0 %v4936
    %5000 = vmatpush1.bf16.msra.mxu0 %v4935
    %5001 = vmatprep.subr.bf16.mxu0 %v4938
    %5002 = vmatpush1.bf16.msra.mxu0 %v4937
    %5003 = vmatprep.subr.bf16.mxu0 %v4940
    %5004 = vmatpush1.bf16.msra.mxu0 %v4939
    %5005 = vmatprep.subr.bf16.mxu0 %v4942
    %5006 = vmatpush1.bf16.msra.mxu0 %v4941
    %5007 = vmatprep.subr.bf16.mxu0 %v4944
    %5008 = vmatpush1.bf16.msra.mxu0 %v4943
    %5009 = vmatprep.subr.bf16.mxu0 %v4946
    %5010 = vmatpush1.bf16.msra.mxu0 %v4945
    %5011 = vmatprep.subr.bf16.mxu0 %v4948
    %5012 = vmatpush1.bf16.msra.mxu0 %v4947
    %5013 = vmatprep.subr.bf16.mxu0 %v4950
    %5014 = vmatpush1.bf16.msra.mxu0 %v4949
    %5015 = vmatprep.subr.bf16.mxu0 %v4952
    %5016 = vmatpush1.bf16.msra.mxu0 %v4951
    %5017 = vmatprep.subr.bf16.mxu0 %v4954
    %5018 = vmatpush1.bf16.msra.mxu0 %v4953
    %5019 = vmatprep.mubr.bf16.mxu0 %v4770
    %5020 = vmatmul.mubr.bf16.gmra.mrb[0].mxu0 %v4758
    %v5021 = vpop.f32.mrb[0].mxu0
    %v5022 = vadd.f32 0.0, %v5021
    %v5023 = vpop.f32.mrb[0].mxu0
    %v5024 = vadd.f32 0.0, %v5023
    %v5025 = vpop.f32.mrb[0].mxu0
    %v5026 = vadd.f32 0.0, %v5025
    %v5027 = vpop.f32.mrb[0].mxu0
    %v5028 = vadd.f32 0.0, %v5027
    %5029 = vmatprep.mubr.bf16.mxu0 %v4786
    %5030 = vmatmul.mubr.bf16.gmra.mrb[0].mxu0 %v4778
    %v5031 = vpop.f32.mrb[0].mxu0
    %v5032 = vadd.f32 0.0, %v5031
    %v5033 = vpop.f32.mrb[0].mxu0
    %v5034 = vadd.f32 0.0, %v5033
    %v5035 = vpop.f32.mrb[0].mxu0
    %v5036 = vadd.f32 0.0, %v5035
    %v5037 = vpop.f32.mrb[0].mxu0
    %v5038 = vadd.f32 0.0, %v5037
    %5039 = vmatprep.mubr.bf16.mxu0 %v4802
    %5040 = vmatmul.mubr.bf16.gmra.mrb[0].mxu0 %v4794
    %v5041 = vpop.f32.mrb[0].mxu0
    %v5042 = vadd.f32 0.0, %v5041
    %v5043 = vpop.f32.mrb[0].mxu0
    %v5044 = vadd.f32 0.0, %v5043
    %v5045 = vpop.f32.mrb[0].mxu0
    %v5046 = vadd.f32 0.0, %v5045
    %v5047 = vpop.f32.mrb[0].mxu0
    %v5048 = vadd.f32 0.0, %v5047
    %5049 = vmatprep.mubr.bf16.mxu0 %v4818
    %5050 = vmatmul.mubr.bf16.gmra.mrb[0].mxu0 %v4810
    %v5051 = vpop.f32.mrb[0].mxu0
    %v5052 = vadd.f32 0.0, %v5051
    %v5053 = vpop.f32.mrb[0].mxu0
    %v5054 = vadd.f32 0.0, %v5053
    %v5055 = vpop.f32.mrb[0].mxu0
    %v5056 = vadd.f32 0.0, %v5055
    %v5057 = vpop.f32.mrb[0].mxu0
    %v5058 = vadd.f32 0.0, %v5057
    %5059 = vdwg.mxu0
    %v5060 = vadd.f32 %v4666, %v5022
    %v5061 = vadd.f32 %v4668, %v5024
    %v5062 = vadd.f32 %v4670, %v5026
    %v5063 = vadd.f32 %v4672, %v5028
    %v5064 = vadd.f32 %v4676, %v5032
    %v5065 = vadd.f32 %v4678, %v5034
    %v5066 = vadd.f32 %v4680, %v5036
    %v5067 = vadd.f32 %v4682, %v5038
    %v5068 = vadd.f32 %v4686, %v5042
    %v5069 = vadd.f32 %v4688, %v5044
    %v5070 = vadd.f32 %v4690, %v5046
    %v5071 = vadd.f32 %v4692, %v5048
    %v5072 = vadd.f32 %v4696, %v5052
    %v5073 = vadd.f32 %v4698, %v5054
    %v5074 = vadd.f32 %v4700, %v5056
    %v5075 = vadd.f32 %v4702, %v5058
    %s5076 = scalar_lea.vmem [#allocation11], 8
    %v5077 = vld [vmem:[%s5076] sm:$0x3]
    %v5079 = vlaneseq
    %v5080 = vshrl.u32 %v5079, 7
    %v5081 = vsub.s32 0, %v5080
    %v5082 = vrot.slane %v5077, %v5081
    %v5083 = vlaneseq
    %v5084 = vshrl.u32 %v5083, 7
    %v5085 = vsub.s32 1, %v5084
    %v5086 = vrot.slane %v5077, %v5085
    %v5089 = vadd.f32 %v5060, %v5082
    %v5090 = vadd.f32 %v5061, %v5086
    %v5091 = vadd.f32 %v5062, %v5082
    %v5092 = vadd.f32 %v5063, %v5086
    %v5093 = vadd.f32 %v5064, %v5082
    %v5094 = vadd.f32 %v5065, %v5086
    %v5095 = vadd.f32 %v5066, %v5082
    %v5096 = vadd.f32 %v5067, %v5086
    %v5097 = vadd.f32 %v5068, %v5082
    %v5098 = vadd.f32 %v5069, %v5086
    %v5099 = vadd.f32 %v5070, %v5082
    %v5100 = vadd.f32 %v5071, %v5086
    %v5101 = vadd.f32 %v5072, %v5082
    %v5102 = vadd.f32 %v5073, %v5086
    %v5103 = vadd.f32 %v5074, %v5082
    %v5104 = vadd.f32 %v5075, %v5086
    %v5105 = vadd.f32 %v5089, %v2979
    %v5106 = vadd.f32 %v5090, %v2980
    %v5107 = vadd.f32 %v5091, %v2981
    %v5108 = vadd.f32 %v5092, %v2982
    %v5109 = vadd.f32 %v5093, %v2983
    %v5110 = vadd.f32 %v5094, %v2984
    %v5111 = vadd.f32 %v5095, %v2985
    %v5112 = vadd.f32 %v5096, %v2986
    %v5113 = vadd.f32 %v5097, %v2987
    %v5114 = vadd.f32 %v5098, %v2988
    %v5115 = vadd.f32 %v5099, %v2989
    %v5116 = vadd.f32 %v5100, %v2990
    %v5117 = vadd.f32 %v5101, %v2991
    %v5118 = vadd.f32 %v5102, %v2992
    %v5119 = vadd.f32 %v5103, %v2993
    %v5120 = vadd.f32 %v5104, %v2994
    %v5121 = vmax.f32 %v5105, 0.0
    %v5122 = vmax.f32 %v5106, 0.0
    %v5123 = vmax.f32 %v5107, 0.0
    %v5124 = vmax.f32 %v5108, 0.0
    %v5125 = vmax.f32 %v5109, 0.0
    %v5126 = vmax.f32 %v5110, 0.0
    %v5127 = vmax.f32 %v5111, 0.0
    %v5128 = vmax.f32 %v5112, 0.0
    %v5129 = vmax.f32 %v5113, 0.0
    %v5130 = vmax.f32 %v5114, 0.0
    %v5131 = vmax.f32 %v5115, 0.0
    %v5132 = vmax.f32 %v5116, 0.0
    %v5133 = vmax.f32 %v5117, 0.0
    %v5134 = vmax.f32 %v5118, 0.0
    %v5135 = vmax.f32 %v5119, 0.0
    %v5136 = vmax.f32 %v5120, 0.0
    %v5137 = vsel %vm813, %v5121, 0.0
    %v5138 = vsel %vm813, %v5122, 0.0
    %v5139 = vsel %vm814, %v5123, 0.0
    %v5140 = vsel %vm814, %v5124, 0.0
    %v5141 = vsel %vm815, %v5125, 0.0
    %v5142 = vsel %vm815, %v5126, 0.0
    %v5143 = vsel %vm816, %v5127, 0.0
    %v5144 = vsel %vm816, %v5128, 0.0
    %v5145 = vsel %vm817, %v5129, 0.0
    %v5146 = vsel %vm817, %v5130, 0.0
    %v5147 = vsel %vm818, %v5131, 0.0
    %v5148 = vsel %vm818, %v5132, 0.0
    %v5149 = vsel %vm819, %v5133, 0.0
    %v5150 = vsel %vm819, %v5134, 0.0
    %v5151 = vsel %vm820, %v5135, 0.0
    %v5152 = vsel %vm820, %v5136, 0.0
    %v5153 = vpack.c.bf16 %v5139, %v5137
    %v5154 = vpack.c.bf16 %v5140, %v5138
    %v5155 = vpack.c.bf16 %v5143, %v5141
    %v5156 = vpack.c.bf16 %v5144, %v5142
    %v5157 = vpack.c.bf16 %v5147, %v5145
    %v5158 = vpack.c.bf16 %v5148, %v5146
    %v5159 = vpack.c.bf16 %v5151, %v5149
    %v5160 = vpack.c.bf16 %v5152, %v5150
    %5161 = vst [vmem:[#allocation2 + $0x10] sm:$0xff] %v5153
    %5162 = vst [vmem:[#allocation2 + $0x18] sm:$0xff] %v5154
    %5163 = vst [vmem:[#allocation2 + $0x20] sm:$0xff] %v5155
    %5164 = vst [vmem:[#allocation2 + $0x28] sm:$0xff] %v5156
    %5165 = vst [vmem:[#allocation2 + $0x30] sm:$0xff] %v5157
    %5166 = vst [vmem:[#allocation2 + $0x38] sm:$0xff] %v5158
    %5167 = vst [vmem:[#allocation2 + $0x40] sm:$0xff] %v5159
    %5168 = vst [vmem:[#allocation2 + $0x48] sm:$0xff] %v5160
    %v5169 = vld [vmem:[#allocation13] sm:$0xff]
    %v5170 = vld [vmem:[#allocation13 + $0x8] sm:$0xff]
    %v5171 = vld [vmem:[#allocation13 + $0x10] sm:$0xff]
    %v5172 = vld [vmem:[#allocation13 + $0x18] sm:$0xff]
    %v5173 = vld [vmem:[#allocation13 + $0x20] sm:$0xff]
    %v5174 = vld [vmem:[#allocation13 + $0x28] sm:$0xff]
    %v5175 = vld [vmem:[#allocation13 + $0x30] sm:$0xff]
    %v5176 = vld [vmem:[#allocation13 + $0x38] sm:$0xff]
    %v5177 = vld [vmem:[#allocation13 + $0x40] sm:$0xff]
    %v5178 = vld [vmem:[#allocation13 + $0x48] sm:$0xff]
    %v5179 = vld [vmem:[#allocation13 + $0x50] sm:$0xff]
    %v5180 = vld [vmem:[#allocation13 + $0x58] sm:$0xff]
    %v5181 = vld [vmem:[#allocation13 + $0x60] sm:$0xff]
    %v5182 = vld [vmem:[#allocation13 + $0x68] sm:$0xff]
    %v5183 = vld [vmem:[#allocation13 + $0x70] sm:$0xff]
    %v5184 = vld [vmem:[#allocation13 + $0x78] sm:$0xff]
    %v5185 = vld [vmem:[#allocation13 + $0x80] sm:$0xff]
    %v5186 = vld [vmem:[#allocation13 + $0x88] sm:$0xff]
    %v5187 = vld [vmem:[#allocation13 + $0x90] sm:$0xff]
    %v5188 = vld [vmem:[#allocation13 + $0x98] sm:$0xff]
    %v5189 = vld [vmem:[#allocation13 + $0xa0] sm:$0xff]
    %v5190 = vld [vmem:[#allocation13 + $0xa8] sm:$0xff]
    %v5191 = vld [vmem:[#allocation13 + $0xb0] sm:$0xff]
    %v5192 = vld [vmem:[#allocation13 + $0xb8] sm:$0xff]
    %v5193 = vld [vmem:[#allocation13 + $0xc0] sm:$0xff]
    %v5194 = vld [vmem:[#allocation13 + $0xc8] sm:$0xff]
    %v5195 = vld [vmem:[#allocation13 + $0xd0] sm:$0xff]
    %v5196 = vld [vmem:[#allocation13 + $0xd8] sm:$0xff]
    %v5197 = vld [vmem:[#allocation13 + $0xe0] sm:$0xff]
    %v5198 = vld [vmem:[#allocation13 + $0xe8] sm:$0xff]
    %v5199 = vld [vmem:[#allocation13 + $0xf0] sm:$0xff]
    %v5200 = vld [vmem:[#allocation13 + $0xf8] sm:$0xff]
    %v5201 = vld [vmem:[#allocation13 + $0x100] sm:$0xff]
    %v5202 = vld [vmem:[#allocation13 + $0x108] sm:$0xff]
    %v5203 = vld [vmem:[#allocation13 + $0x110] sm:$0xff]
    %v5204 = vld [vmem:[#allocation13 + $0x118] sm:$0xff]
    %v5205 = vld [vmem:[#allocation13 + $0x120] sm:$0xff]
    %v5206 = vld [vmem:[#allocation13 + $0x128] sm:$0xff]
    %v5207 = vld [vmem:[#allocation13 + $0x130] sm:$0xff]
    %v5208 = vld [vmem:[#allocation13 + $0x138] sm:$0xff]
    %v5209 = vld [vmem:[#allocation13 + $0x140] sm:$0xff]
    %v5210 = vld [vmem:[#allocation13 + $0x148] sm:$0xff]
    %v5211 = vld [vmem:[#allocation13 + $0x150] sm:$0xff]
    %v5212 = vld [vmem:[#allocation13 + $0x158] sm:$0xff]
    %v5213 = vld [vmem:[#allocation13 + $0x160] sm:$0xff]
    %v5214 = vld [vmem:[#allocation13 + $0x168] sm:$0xff]
    %v5215 = vld [vmem:[#allocation13 + $0x170] sm:$0xff]
    %v5216 = vld [vmem:[#allocation13 + $0x178] sm:$0xff]
    %v5217 = vld [vmem:[#allocation13 + $0x180] sm:$0xff]
    %v5218 = vld [vmem:[#allocation13 + $0x188] sm:$0xff]
    %v5219 = vld [vmem:[#allocation13 + $0x190] sm:$0xff]
    %v5220 = vld [vmem:[#allocation13 + $0x198] sm:$0xff]
    %v5221 = vld [vmem:[#allocation13 + $0x1a0] sm:$0xff]
    %v5222 = vld [vmem:[#allocation13 + $0x1a8] sm:$0xff]
    %v5223 = vld [vmem:[#allocation13 + $0x1b0] sm:$0xff]
    %v5224 = vld [vmem:[#allocation13 + $0x1b8] sm:$0xff]
    %v5225 = vld [vmem:[#allocation13 + $0x1c0] sm:$0xff]
    %v5226 = vld [vmem:[#allocation13 + $0x1c8] sm:$0xff]
    %v5227 = vld [vmem:[#allocation13 + $0x1d0] sm:$0xff]
    %v5228 = vld [vmem:[#allocation13 + $0x1d8] sm:$0xff]
    %v5229 = vld [vmem:[#allocation13 + $0x1e0] sm:$0xff]
    %v5230 = vld [vmem:[#allocation13 + $0x1e8] sm:$0xff]
    %v5231 = vld [vmem:[#allocation13 + $0x1f0] sm:$0xff]
    %v5232 = vld [vmem:[#allocation13 + $0x1f8] sm:$0xff]
    %v5233 = vld [vmem:[#allocation2] sm:$0x80]
    %v5234 = vld [vmem:[#allocation2 + $0x8] sm:$0x80]
    %v5235 = vld [vmem:[#allocation2 + $0x10] sm:$0xff]
    %v5236 = vld [vmem:[#allocation2 + $0x18] sm:$0xff]
    %v5237 = vld [vmem:[#allocation2 + $0x20] sm:$0xff]
    %v5238 = vld [vmem:[#allocation2 + $0x28] sm:$0xff]
    %v5239 = vld [vmem:[#allocation2 + $0x30] sm:$0xff]
    %v5240 = vld [vmem:[#allocation2 + $0x38] sm:$0xff]
    %v5241 = vld [vmem:[#allocation2 + $0x40] sm:$0xff]
    %v5242 = vld [vmem:[#allocation2 + $0x48] sm:$0xff]
    %s5243 = scalar_lea.vmem [#allocation13], 512
    %v5244 = vld [vmem:[%s5243] sm:$0xff]
    %v5245 = vld [vmem:[%s5243 + $0x8] sm:$0xff]
    %v5246 = vld [vmem:[%s5243 + $0x10] sm:$0xff]
    %v5247 = vld [vmem:[%s5243 + $0x18] sm:$0xff]
    %v5248 = vld [vmem:[%s5243 + $0x20] sm:$0xff]
    %v5249 = vld [vmem:[%s5243 + $0x28] sm:$0xff]
    %v5250 = vld [vmem:[%s5243 + $0x30] sm:$0xff]
    %v5251 = vld [vmem:[%s5243 + $0x38] sm:$0xff]
    %v5252 = vld [vmem:[%s5243 + $0x40] sm:$0xff]
    %v5253 = vld [vmem:[%s5243 + $0x48] sm:$0xff]
    %v5254 = vld [vmem:[%s5243 + $0x50] sm:$0xff]
    %v5255 = vld [vmem:[%s5243 + $0x58] sm:$0xff]
    %v5256 = vld [vmem:[%s5243 + $0x60] sm:$0xff]
    %v5257 = vld [vmem:[%s5243 + $0x68] sm:$0xff]
    %v5258 = vld [vmem:[%s5243 + $0x70] sm:$0xff]
    %v5259 = vld [vmem:[%s5243 + $0x78] sm:$0xff]
    %v5260 = vld [vmem:[%s5243 + $0x80] sm:$0xff]
    %v5261 = vld [vmem:[%s5243 + $0x88] sm:$0xff]
    %v5262 = vld [vmem:[%s5243 + $0x90] sm:$0xff]
    %v5263 = vld [vmem:[%s5243 + $0x98] sm:$0xff]
    %v5264 = vld [vmem:[%s5243 + $0xa0] sm:$0xff]
    %v5265 = vld [vmem:[%s5243 + $0xa8] sm:$0xff]
    %v5266 = vld [vmem:[%s5243 + $0xb0] sm:$0xff]
    %v5267 = vld [vmem:[%s5243 + $0xb8] sm:$0xff]
    %v5268 = vld [vmem:[%s5243 + $0xc0] sm:$0xff]
    %v5269 = vld [vmem:[%s5243 + $0xc8] sm:$0xff]
    %v5270 = vld [vmem:[%s5243 + $0xd0] sm:$0xff]
    %v5271 = vld [vmem:[%s5243 + $0xd8] sm:$0xff]
    %v5272 = vld [vmem:[%s5243 + $0xe0] sm:$0xff]
    %v5273 = vld [vmem:[%s5243 + $0xe8] sm:$0xff]
    %v5274 = vld [vmem:[%s5243 + $0xf0] sm:$0xff]
    %v5275 = vld [vmem:[%s5243 + $0xf8] sm:$0xff]
    %v5276 = vld [vmem:[%s5243 + $0x100] sm:$0xff]
    %v5277 = vld [vmem:[%s5243 + $0x108] sm:$0xff]
    %v5278 = vld [vmem:[%s5243 + $0x110] sm:$0xff]
    %v5279 = vld [vmem:[%s5243 + $0x118] sm:$0xff]
    %v5280 = vld [vmem:[%s5243 + $0x120] sm:$0xff]
    %v5281 = vld [vmem:[%s5243 + $0x128] sm:$0xff]
    %v5282 = vld [vmem:[%s5243 + $0x130] sm:$0xff]
    %v5283 = vld [vmem:[%s5243 + $0x138] sm:$0xff]
    %v5284 = vld [vmem:[%s5243 + $0x140] sm:$0xff]
    %v5285 = vld [vmem:[%s5243 + $0x148] sm:$0xff]
    %v5286 = vld [vmem:[%s5243 + $0x150] sm:$0xff]
    %v5287 = vld [vmem:[%s5243 + $0x158] sm:$0xff]
    %v5288 = vld [vmem:[%s5243 + $0x160] sm:$0xff]
    %v5289 = vld [vmem:[%s5243 + $0x168] sm:$0xff]
    %v5290 = vld [vmem:[%s5243 + $0x170] sm:$0xff]
    %v5291 = vld [vmem:[%s5243 + $0x178] sm:$0xff]
    %v5292 = vld [vmem:[%s5243 + $0x180] sm:$0xff]
    %v5293 = vld [vmem:[%s5243 + $0x188] sm:$0xff]
    %v5294 = vld [vmem:[%s5243 + $0x190] sm:$0xff]
    %v5295 = vld [vmem:[%s5243 + $0x198] sm:$0xff]
    %v5296 = vld [vmem:[%s5243 + $0x1a0] sm:$0xff]
    %v5297 = vld [vmem:[%s5243 + $0x1a8] sm:$0xff]
    %v5298 = vld [vmem:[%s5243 + $0x1b0] sm:$0xff]
    %v5299 = vld [vmem:[%s5243 + $0x1b8] sm:$0xff]
    %v5300 = vld [vmem:[%s5243 + $0x1c0] sm:$0xff]
    %v5301 = vld [vmem:[%s5243 + $0x1c8] sm:$0xff]
    %v5302 = vld [vmem:[%s5243 + $0x1d0] sm:$0xff]
    %v5303 = vld [vmem:[%s5243 + $0x1d8] sm:$0xff]
    %v5304 = vld [vmem:[%s5243 + $0x1e0] sm:$0xff]
    %v5305 = vld [vmem:[%s5243 + $0x1e8] sm:$0xff]
    %v5306 = vld [vmem:[%s5243 + $0x1f0] sm:$0xff]
    %v5307 = vld [vmem:[%s5243 + $0x1f8] sm:$0xff]
    %v5372 = vunpack.c.l.b16 %v5244
    %v5373 = vunpack.c.h.b16 %v5244
    %v5374 = vunpack.c.l.b16 %v5245
    %v5375 = vunpack.c.h.b16 %v5245
    %v5376 = vunpack.c.l.b16 %v5246
    %v5377 = vunpack.c.h.b16 %v5246
    %v5378 = vunpack.c.l.b16 %v5247
    %v5379 = vunpack.c.h.b16 %v5247
    %v5380 = vunpack.c.l.b16 %v5248
    %v5381 = vunpack.c.h.b16 %v5248
    %v5382 = vunpack.c.l.b16 %v5249
    %v5383 = vunpack.c.h.b16 %v5249
    %v5384 = vunpack.c.l.b16 %v5250
    %v5385 = vunpack.c.h.b16 %v5250
    %v5386 = vunpack.c.l.b16 %v5251
    %v5387 = vunpack.c.h.b16 %v5251
    %v5388 = vunpack.c.l.b16 %v5252
    %v5389 = vunpack.c.h.b16 %v5252
    %v5390 = vunpack.c.l.b16 %v5253
    %v5391 = vunpack.c.h.b16 %v5253
    %v5392 = vunpack.c.l.b16 %v5254
    %v5393 = vunpack.c.h.b16 %v5254
    %v5394 = vunpack.c.l.b16 %v5255
    %v5395 = vunpack.c.h.b16 %v5255
    %v5396 = vunpack.c.l.b16 %v5256
    %v5397 = vunpack.c.h.b16 %v5256
    %v5398 = vunpack.c.l.b16 %v5257
    %v5399 = vunpack.c.h.b16 %v5257
    %v5400 = vunpack.c.l.b16 %v5258
    %v5401 = vunpack.c.h.b16 %v5258
    %v5402 = vunpack.c.l.b16 %v5259
    %v5403 = vunpack.c.h.b16 %v5259
    %v5404 = vunpack.c.l.b16 %v5260
    %v5405 = vunpack.c.h.b16 %v5260
    %v5406 = vunpack.c.l.b16 %v5261
    %v5407 = vunpack.c.h.b16 %v5261
    %v5408 = vunpack.c.l.b16 %v5262
    %v5409 = vunpack.c.h.b16 %v5262
    %v5410 = vunpack.c.l.b16 %v5263
    %v5411 = vunpack.c.h.b16 %v5263
    %v5412 = vunpack.c.l.b16 %v5264
    %v5413 = vunpack.c.h.b16 %v5264
    %v5414 = vunpack.c.l.b16 %v5265
    %v5415 = vunpack.c.h.b16 %v5265
    %v5416 = vunpack.c.l.b16 %v5266
    %v5417 = vunpack.c.h.b16 %v5266
    %v5418 = vunpack.c.l.b16 %v5267
    %v5419 = vunpack.c.h.b16 %v5267
    %v5420 = vunpack.c.l.b16 %v5268
    %v5421 = vunpack.c.h.b16 %v5268
    %v5422 = vunpack.c.l.b16 %v5269
    %v5423 = vunpack.c.h.b16 %v5269
    %v5424 = vunpack.c.l.b16 %v5270
    %v5425 = vunpack.c.h.b16 %v5270
    %v5426 = vunpack.c.l.b16 %v5271
    %v5427 = vunpack.c.h.b16 %v5271
    %v5428 = vunpack.c.l.b16 %v5272
    %v5429 = vunpack.c.h.b16 %v5272
    %v5430 = vunpack.c.l.b16 %v5273
    %v5431 = vunpack.c.h.b16 %v5273
    %v5432 = vunpack.c.l.b16 %v5274
    %v5433 = vunpack.c.h.b16 %v5274
    %v5434 = vunpack.c.l.b16 %v5275
    %v5435 = vunpack.c.h.b16 %v5275
    %v5436 = vunpack.c.l.b16 %v5276
    %v5437 = vunpack.c.h.b16 %v5276
    %v5438 = vunpack.c.l.b16 %v5277
    %v5439 = vunpack.c.h.b16 %v5277
    %v5440 = vunpack.c.l.b16 %v5278
    %v5441 = vunpack.c.h.b16 %v5278
    %v5442 = vunpack.c.l.b16 %v5279
    %v5443 = vunpack.c.h.b16 %v5279
    %v5444 = vunpack.c.l.b16 %v5280
    %v5445 = vunpack.c.h.b16 %v5280
    %v5446 = vunpack.c.l.b16 %v5281
    %v5447 = vunpack.c.h.b16 %v5281
    %v5448 = vunpack.c.l.b16 %v5282
    %v5449 = vunpack.c.h.b16 %v5282
    %v5450 = vunpack.c.l.b16 %v5283
    %v5451 = vunpack.c.h.b16 %v5283
    %v5452 = vunpack.c.l.b16 %v5284
    %v5453 = vunpack.c.h.b16 %v5284
    %v5454 = vunpack.c.l.b16 %v5285
    %v5455 = vunpack.c.h.b16 %v5285
    %v5456 = vunpack.c.l.b16 %v5286
    %v5457 = vunpack.c.h.b16 %v5286
    %v5458 = vunpack.c.l.b16 %v5287
    %v5459 = vunpack.c.h.b16 %v5287
    %v5460 = vunpack.c.l.b16 %v5288
    %v5461 = vunpack.c.h.b16 %v5288
    %v5462 = vunpack.c.l.b16 %v5289
    %v5463 = vunpack.c.h.b16 %v5289
    %v5464 = vunpack.c.l.b16 %v5290
    %v5465 = vunpack.c.h.b16 %v5290
    %v5466 = vunpack.c.l.b16 %v5291
    %v5467 = vunpack.c.h.b16 %v5291
    %v5468 = vunpack.c.l.b16 %v5292
    %v5469 = vunpack.c.h.b16 %v5292
    %v5470 = vunpack.c.l.b16 %v5293
    %v5471 = vunpack.c.h.b16 %v5293
    %v5472 = vunpack.c.l.b16 %v5294
    %v5473 = vunpack.c.h.b16 %v5294
    %v5474 = vunpack.c.l.b16 %v5295
    %v5475 = vunpack.c.h.b16 %v5295
    %v5476 = vunpack.c.l.b16 %v5296
    %v5477 = vunpack.c.h.b16 %v5296
    %v5478 = vunpack.c.l.b16 %v5297
    %v5479 = vunpack.c.h.b16 %v5297
    %v5480 = vunpack.c.l.b16 %v5298
    %v5481 = vunpack.c.h.b16 %v5298
    %v5482 = vunpack.c.l.b16 %v5299
    %v5483 = vunpack.c.h.b16 %v5299
    %v5484 = vunpack.c.l.b16 %v5300
    %v5485 = vunpack.c.h.b16 %v5300
    %v5486 = vunpack.c.l.b16 %v5301
    %v5487 = vunpack.c.h.b16 %v5301
    %v5488 = vunpack.c.l.b16 %v5302
    %v5489 = vunpack.c.h.b16 %v5302
    %v5490 = vunpack.c.l.b16 %v5303
    %v5491 = vunpack.c.h.b16 %v5303
    %v5492 = vunpack.c.l.b16 %v5304
    %v5493 = vunpack.c.h.b16 %v5304
    %v5494 = vunpack.c.l.b16 %v5305
    %v5495 = vunpack.c.h.b16 %v5305
    %v5496 = vunpack.c.l.b16 %v5306
    %v5497 = vunpack.c.h.b16 %v5306
    %v5498 = vunpack.c.l.b16 %v5307
    %v5499 = vunpack.c.h.b16 %v5307
    %v5500 = vpack.c.b16 %v5376, %v5372
    %v5501 = vpack.c.b16 %v5377, %v5373
    %v5502 = vpack.c.b16 %v5378, %v5374
    %v5503 = vpack.c.b16 %v5379, %v5375
    %v5504 = vpack.c.b16 %v5384, %v5380
    %v5505 = vpack.c.b16 %v5385, %v5381
    %v5506 = vpack.c.b16 %v5386, %v5382
    %v5507 = vpack.c.b16 %v5387, %v5383
    %v5508 = vpack.c.b16 %v5392, %v5388
    %v5509 = vpack.c.b16 %v5393, %v5389
    %v5510 = vpack.c.b16 %v5394, %v5390
    %v5511 = vpack.c.b16 %v5395, %v5391
    %v5512 = vpack.c.b16 %v5400, %v5396
    %v5513 = vpack.c.b16 %v5401, %v5397
    %v5514 = vpack.c.b16 %v5402, %v5398
    %v5515 = vpack.c.b16 %v5403, %v5399
    %v5516 = vpack.c.b16 %v5408, %v5404
    %v5517 = vpack.c.b16 %v5409, %v5405
    %v5518 = vpack.c.b16 %v5410, %v5406
    %v5519 = vpack.c.b16 %v5411, %v5407
    %v5520 = vpack.c.b16 %v5416, %v5412
    %v5521 = vpack.c.b16 %v5417, %v5413
    %v5522 = vpack.c.b16 %v5418, %v5414
    %v5523 = vpack.c.b16 %v5419, %v5415
    %v5524 = vpack.c.b16 %v5424, %v5420
    %v5525 = vpack.c.b16 %v5425, %v5421
    %v5526 = vpack.c.b16 %v5426, %v5422
    %v5527 = vpack.c.b16 %v5427, %v5423
    %v5528 = vpack.c.b16 %v5432, %v5428
    %v5529 = vpack.c.b16 %v5433, %v5429
    %v5530 = vpack.c.b16 %v5434, %v5430
    %v5531 = vpack.c.b16 %v5435, %v5431
    %v5532 = vpack.c.b16 %v5440, %v5436
    %v5533 = vpack.c.b16 %v5441, %v5437
    %v5534 = vpack.c.b16 %v5442, %v5438
    %v5535 = vpack.c.b16 %v5443, %v5439
    %v5536 = vpack.c.b16 %v5448, %v5444
    %v5537 = vpack.c.b16 %v5449, %v5445
    %v5538 = vpack.c.b16 %v5450, %v5446
    %v5539 = vpack.c.b16 %v5451, %v5447
    %v5540 = vpack.c.b16 %v5456, %v5452
    %v5541 = vpack.c.b16 %v5457, %v5453
    %v5542 = vpack.c.b16 %v5458, %v5454
    %v5543 = vpack.c.b16 %v5459, %v5455
    %v5544 = vpack.c.b16 %v5464, %v5460
    %v5545 = vpack.c.b16 %v5465, %v5461
    %v5546 = vpack.c.b16 %v5466, %v5462
    %v5547 = vpack.c.b16 %v5467, %v5463
    %v5548 = vpack.c.b16 %v5472, %v5468
    %v5549 = vpack.c.b16 %v5473, %v5469
    %v5550 = vpack.c.b16 %v5474, %v5470
    %v5551 = vpack.c.b16 %v5475, %v5471
    %v5552 = vpack.c.b16 %v5480, %v5476
    %v5553 = vpack.c.b16 %v5481, %v5477
    %v5554 = vpack.c.b16 %v5482, %v5478
    %v5555 = vpack.c.b16 %v5483, %v5479
    %v5556 = vpack.c.b16 %v5488, %v5484
    %v5557 = vpack.c.b16 %v5489, %v5485
    %v5558 = vpack.c.b16 %v5490, %v5486
    %v5559 = vpack.c.b16 %v5491, %v5487
    %v5560 = vpack.c.b16 %v5496, %v5492
    %v5561 = vpack.c.b16 %v5497, %v5493
    %v5562 = vpack.c.b16 %v5498, %v5494
    %v5563 = vpack.c.b16 %v5499, %v5495
    %5628 = vmatprep.subr.bf16.mxu0 %v5501
    %5629 = vmatpush1.bf16.msra.mxu0 %v5500
    %5630 = vmatprep.subr.bf16.mxu0 %v5505
    %5631 = vmatpush1.bf16.msra.mxu0 %v5504
    %5632 = vmatprep.subr.bf16.mxu0 %v5509
    %5633 = vmatpush1.bf16.msra.mxu0 %v5508
    %5634 = vmatprep.subr.bf16.mxu0 %v5513
    %5635 = vmatpush1.bf16.msra.mxu0 %v5512
    %5636 = vmatprep.subr.bf16.mxu0 %v5517
    %5637 = vmatpush1.bf16.msra.mxu0 %v5516
    %5638 = vmatprep.subr.bf16.mxu0 %v5521
    %5639 = vmatpush1.bf16.msra.mxu0 %v5520
    %5640 = vmatprep.subr.bf16.mxu0 %v5525
    %5641 = vmatpush1.bf16.msra.mxu0 %v5524
    %5642 = vmatprep.subr.bf16.mxu0 %v5529
    %5643 = vmatpush1.bf16.msra.mxu0 %v5528
    %5644 = vmatprep.subr.bf16.mxu0 %v5533
    %5645 = vmatpush1.bf16.msra.mxu0 %v5532
    %5646 = vmatprep.subr.bf16.mxu0 %v5537
    %5647 = vmatpush1.bf16.msra.mxu0 %v5536
    %5648 = vmatprep.subr.bf16.mxu0 %v5541
    %5649 = vmatpush1.bf16.msra.mxu0 %v5540
    %5650 = vmatprep.subr.bf16.mxu0 %v5545
    %5651 = vmatpush1.bf16.msra.mxu0 %v5544
    %5652 = vmatprep.subr.bf16.mxu0 %v5549
    %5653 = vmatpush1.bf16.msra.mxu0 %v5548
    %5654 = vmatprep.subr.bf16.mxu0 %v5553
    %5655 = vmatpush1.bf16.msra.mxu0 %v5552
    %5656 = vmatprep.subr.bf16.mxu0 %v5557
    %5657 = vmatpush1.bf16.msra.mxu0 %v5556
    %5658 = vmatprep.subr.bf16.mxu0 %v5561
    %5659 = vmatpush1.bf16.msra.mxu0 %v5560
    %5660 = vmatprep.mubr.bf16.mxu0 %v5236
    %5661 = vmatmul.mubr.bf16.gmra.mrb[0].mxu0 %v5235
    %v5662 = vpop.f32.mrb[0].mxu0
    %v5663 = vadd.f32 0.0, %v5662
    %v5664 = vpop.f32.mrb[0].mxu0
    %v5665 = vadd.f32 0.0, %v5664
    %v5666 = vpop.f32.mrb[0].mxu0
    %v5667 = vadd.f32 0.0, %v5666
    %v5668 = vpop.f32.mrb[0].mxu0
    %v5669 = vadd.f32 0.0, %v5668
    %5670 = vmatprep.mubr.bf16.mxu0 %v5238
    %5671 = vmatmul.mubr.bf16.gmra.mrb[0].mxu0 %v5237
    %v5672 = vpop.f32.mrb[0].mxu0
    %v5673 = vadd.f32 0.0, %v5672
    %v5674 = vpop.f32.mrb[0].mxu0
    %v5675 = vadd.f32 0.0, %v5674
    %v5676 = vpop.f32.mrb[0].mxu0
    %v5677 = vadd.f32 0.0, %v5676
    %v5678 = vpop.f32.mrb[0].mxu0
    %v5679 = vadd.f32 0.0, %v5678
    %5680 = vmatprep.mubr.bf16.mxu0 %v5240
    %5681 = vmatmul.mubr.bf16.gmra.mrb[0].mxu0 %v5239
    %v5682 = vpop.f32.mrb[0].mxu0
    %v5683 = vadd.f32 0.0, %v5682
    %v5684 = vpop.f32.mrb[0].mxu0
    %v5685 = vadd.f32 0.0, %v5684
    %v5686 = vpop.f32.mrb[0].mxu0
    %v5687 = vadd.f32 0.0, %v5686
    %v5688 = vpop.f32.mrb[0].mxu0
    %v5689 = vadd.f32 0.0, %v5688
    %5690 = vmatprep.mubr.bf16.mxu0 %v5242
    %5691 = vmatmul.mubr.bf16.gmra.mrb[0].mxu0 %v5241
    %v5692 = vpop.f32.mrb[0].mxu0
    %v5693 = vadd.f32 0.0, %v5692
    %v5694 = vpop.f32.mrb[0].mxu0
    %v5695 = vadd.f32 0.0, %v5694
    %v5696 = vpop.f32.mrb[0].mxu0
    %v5697 = vadd.f32 0.0, %v5696
    %v5698 = vpop.f32.mrb[0].mxu0
    %v5699 = vadd.f32 0.0, %v5698
    %5700 = vdwg.mxu0
    %5701 = vmatprep.subr.bf16.mxu0 %v5503
    %5702 = vmatpush1.bf16.msra.mxu0 %v5502
    %5703 = vmatprep.subr.bf16.mxu0 %v5507
    %5704 = vmatpush1.bf16.msra.mxu0 %v5506
    %5705 = vmatprep.subr.bf16.mxu0 %v5511
    %5706 = vmatpush1.bf16.msra.mxu0 %v5510
    %5707 = vmatprep.subr.bf16.mxu0 %v5515
    %5708 = vmatpush1.bf16.msra.mxu0 %v5514
    %5709 = vmatprep.subr.bf16.mxu0 %v5519
    %5710 = vmatpush1.bf16.msra.mxu0 %v5518
    %5711 = vmatprep.subr.bf16.mxu0 %v5523
    %5712 = vmatpush1.bf16.msra.mxu0 %v5522
    %5713 = vmatprep.subr.bf16.mxu0 %v5527
    %5714 = vmatpush1.bf16.msra.mxu0 %v5526
    %5715 = vmatprep.subr.bf16.mxu0 %v5531
    %5716 = vmatpush1.bf16.msra.mxu0 %v5530
    %5717 = vmatprep.subr.bf16.mxu0 %v5535
    %5718 = vmatpush1.bf16.msra.mxu0 %v5534
    %5719 = vmatprep.subr.bf16.mxu0 %v5539
    %5720 = vmatpush1.bf16.msra.mxu0 %v5538
    %5721 = vmatprep.subr.bf16.mxu0 %v5543
    %5722 = vmatpush1.bf16.msra.mxu0 %v5542
    %5723 = vmatprep.subr.bf16.mxu0 %v5547
    %5724 = vmatpush1.bf16.msra.mxu0 %v5546
    %5725 = vmatprep.subr.bf16.mxu0 %v5551
    %5726 = vmatpush1.bf16.msra.mxu0 %v5550
    %5727 = vmatprep.subr.bf16.mxu0 %v5555
    %5728 = vmatpush1.bf16.msra.mxu0 %v5554
    %5729 = vmatprep.subr.bf16.mxu0 %v5559
    %5730 = vmatpush1.bf16.msra.mxu0 %v5558
    %5731 = vmatprep.subr.bf16.mxu0 %v5563
    %5732 = vmatpush1.bf16.msra.mxu0 %v5562
    %5733 = vmatprep.mubr.bf16.mxu0 %v5236
    %5734 = vmatmul.mubr.bf16.gmra.mrb[0].mxu0 %v5235
    %v5735 = vpop.f32.mrb[0].mxu0
    %v5736 = vadd.f32 0.0, %v5735
    %v5737 = vpop.f32.mrb[0].mxu0
    %v5738 = vadd.f32 0.0, %v5737
    %v5739 = vpop.f32.mrb[0].mxu0
    %v5740 = vadd.f32 0.0, %v5739
    %v5741 = vpop.f32.mrb[0].mxu0
    %v5742 = vadd.f32 0.0, %v5741
    %5743 = vmatprep.mubr.bf16.mxu0 %v5238
    %5744 = vmatmul.mubr.bf16.gmra.mrb[0].mxu0 %v5237
    %v5745 = vpop.f32.mrb[0].mxu0
    %v5746 = vadd.f32 0.0, %v5745
    %v5747 = vpop.f32.mrb[0].mxu0
    %v5748 = vadd.f32 0.0, %v5747
    %v5749 = vpop.f32.mrb[0].mxu0
    %v5750 = vadd.f32 0.0, %v5749
    %v5751 = vpop.f32.mrb[0].mxu0
    %v5752 = vadd.f32 0.0, %v5751
    %5753 = vmatprep.mubr.bf16.mxu0 %v5240
    %5754 = vmatmul.mubr.bf16.gmra.mrb[0].mxu0 %v5239
    %v5755 = vpop.f32.mrb[0].mxu0
    %v5756 = vadd.f32 0.0, %v5755
    %v5757 = vpop.f32.mrb[0].mxu0
    %v5758 = vadd.f32 0.0, %v5757
    %v5759 = vpop.f32.mrb[0].mxu0
    %v5760 = vadd.f32 0.0, %v5759
    %v5761 = vpop.f32.mrb[0].mxu0
    %v5762 = vadd.f32 0.0, %v5761
    %5763 = vmatprep.mubr.bf16.mxu0 %v5242
    %5764 = vmatmul.mubr.bf16.gmra.mrb[0].mxu0 %v5241
    %v5765 = vpop.f32.mrb[0].mxu0
    %v5766 = vadd.f32 0.0, %v5765
    %v5767 = vpop.f32.mrb[0].mxu0
    %v5768 = vadd.f32 0.0, %v5767
    %v5769 = vpop.f32.mrb[0].mxu0
    %v5770 = vadd.f32 0.0, %v5769
    %v5771 = vpop.f32.mrb[0].mxu0
    %v5772 = vadd.f32 0.0, %v5771
    %5773 = vdwg.mxu0
    %v5775 = vshrl.u32 %v5233, 16
    %v5777 = vrot.slane %v5775, 7
    %v5779 = vshrl.u32 %v5235, 16
    %v5781 = vrot.slane %v5779, 7
    %v5782 = vshll.u32 %v5235, 16
    %v5784 = vor.u32 %v5781, %v5782
    %v5785 = vsel %vm1161, %v5777, %v5784
    %v5787 = vshrl.u32 %v5234, 16
    %v5789 = vrot.slane %v5787, 7
    %v5791 = vshrl.u32 %v5236, 16
    %v5793 = vrot.slane %v5791, 7
    %v5794 = vshll.u32 %v5236, 16
    %v5796 = vor.u32 %v5793, %v5794
    %v5797 = vsel %vm1161, %v5789, %v5796
    %v5799 = vshrl.u32 %v5237, 16
    %v5801 = vrot.slane %v5799, 7
    %v5802 = vshll.u32 %v5237, 16
    %v5804 = vor.u32 %v5801, %v5802
    %v5805 = vsel %vm1161, %v5781, %v5804
    %v5807 = vshrl.u32 %v5238, 16
    %v5809 = vrot.slane %v5807, 7
    %v5810 = vshll.u32 %v5238, 16
    %v5812 = vor.u32 %v5809, %v5810
    %v5813 = vsel %vm1161, %v5793, %v5812
    %v5815 = vshrl.u32 %v5239, 16
    %v5817 = vrot.slane %v5815, 7
    %v5818 = vshll.u32 %v5239, 16
    %v5820 = vor.u32 %v5817, %v5818
    %v5821 = vsel %vm1161, %v5801, %v5820
    %v5823 = vshrl.u32 %v5240, 16
    %v5825 = vrot.slane %v5823, 7
    %v5826 = vshll.u32 %v5240, 16
    %v5828 = vor.u32 %v5825, %v5826
    %v5829 = vsel %vm1161, %v5809, %v5828
    %v5831 = vshrl.u32 %v5241, 16
    %v5833 = vrot.slane %v5831, 7
    %v5834 = vshll.u32 %v5241, 16
    %v5836 = vor.u32 %v5833, %v5834
    %v5837 = vsel %vm1161, %v5817, %v5836
    %v5839 = vshrl.u32 %v5242, 16
    %v5841 = vrot.slane %v5839, 7
    %v5842 = vshll.u32 %v5242, 16
    %v5844 = vor.u32 %v5841, %v5842
    %v5845 = vsel %vm1161, %v5825, %v5844
    %v5918 = vunpack.c.l.b16 %v5169
    %v5919 = vunpack.c.h.b16 %v5169
    %v5920 = vunpack.c.l.b16 %v5170
    %v5921 = vunpack.c.h.b16 %v5170
    %v5922 = vunpack.c.l.b16 %v5171
    %v5923 = vunpack.c.h.b16 %v5171
    %v5924 = vunpack.c.l.b16 %v5172
    %v5925 = vunpack.c.h.b16 %v5172
    %v5926 = vunpack.c.l.b16 %v5173
    %v5927 = vunpack.c.h.b16 %v5173
    %v5928 = vunpack.c.l.b16 %v5174
    %v5929 = vunpack.c.h.b16 %v5174
    %v5930 = vunpack.c.l.b16 %v5175
    %v5931 = vunpack.c.h.b16 %v5175
    %v5932 = vunpack.c.l.b16 %v5176
    %v5933 = vunpack.c.h.b16 %v5176
    %v5934 = vunpack.c.l.b16 %v5177
    %v5935 = vunpack.c.h.b16 %v5177
    %v5936 = vunpack.c.l.b16 %v5178
    %v5937 = vunpack.c.h.b16 %v5178
    %v5938 = vunpack.c.l.b16 %v5179
    %v5939 = vunpack.c.h.b16 %v5179
    %v5940 = vunpack.c.l.b16 %v5180
    %v5941 = vunpack.c.h.b16 %v5180
    %v5942 = vunpack.c.l.b16 %v5181
    %v5943 = vunpack.c.h.b16 %v5181
    %v5944 = vunpack.c.l.b16 %v5182
    %v5945 = vunpack.c.h.b16 %v5182
    %v5946 = vunpack.c.l.b16 %v5183
    %v5947 = vunpack.c.h.b16 %v5183
    %v5948 = vunpack.c.l.b16 %v5184
    %v5949 = vunpack.c.h.b16 %v5184
    %v5950 = vunpack.c.l.b16 %v5185
    %v5951 = vunpack.c.h.b16 %v5185
    %v5952 = vunpack.c.l.b16 %v5186
    %v5953 = vunpack.c.h.b16 %v5186
    %v5954 = vunpack.c.l.b16 %v5187
    %v5955 = vunpack.c.h.b16 %v5187
    %v5956 = vunpack.c.l.b16 %v5188
    %v5957 = vunpack.c.h.b16 %v5188
    %v5958 = vunpack.c.l.b16 %v5189
    %v5959 = vunpack.c.h.b16 %v5189
    %v5960 = vunpack.c.l.b16 %v5190
    %v5961 = vunpack.c.h.b16 %v5190
    %v5962 = vunpack.c.l.b16 %v5191
    %v5963 = vunpack.c.h.b16 %v5191
    %v5964 = vunpack.c.l.b16 %v5192
    %v5965 = vunpack.c.h.b16 %v5192
    %v5966 = vunpack.c.l.b16 %v5193
    %v5967 = vunpack.c.h.b16 %v5193
    %v5968 = vunpack.c.l.b16 %v5194
    %v5969 = vunpack.c.h.b16 %v5194
    %v5970 = vunpack.c.l.b16 %v5195
    %v5971 = vunpack.c.h.b16 %v5195
    %v5972 = vunpack.c.l.b16 %v5196
    %v5973 = vunpack.c.h.b16 %v5196
    %v5974 = vunpack.c.l.b16 %v5197
    %v5975 = vunpack.c.h.b16 %v5197
    %v5976 = vunpack.c.l.b16 %v5198
    %v5977 = vunpack.c.h.b16 %v5198
    %v5978 = vunpack.c.l.b16 %v5199
    %v5979 = vunpack.c.h.b16 %v5199
    %v5980 = vunpack.c.l.b16 %v5200
    %v5981 = vunpack.c.h.b16 %v5200
    %v5982 = vunpack.c.l.b16 %v5201
    %v5983 = vunpack.c.h.b16 %v5201
    %v5984 = vunpack.c.l.b16 %v5202
    %v5985 = vunpack.c.h.b16 %v5202
    %v5986 = vunpack.c.l.b16 %v5203
    %v5987 = vunpack.c.h.b16 %v5203
    %v5988 = vunpack.c.l.b16 %v5204
    %v5989 = vunpack.c.h.b16 %v5204
    %v5990 = vunpack.c.l.b16 %v5205
    %v5991 = vunpack.c.h.b16 %v5205
    %v5992 = vunpack.c.l.b16 %v5206
    %v5993 = vunpack.c.h.b16 %v5206
    %v5994 = vunpack.c.l.b16 %v5207
    %v5995 = vunpack.c.h.b16 %v5207
    %v5996 = vunpack.c.l.b16 %v5208
    %v5997 = vunpack.c.h.b16 %v5208
    %v5998 = vunpack.c.l.b16 %v5209
    %v5999 = vunpack.c.h.b16 %v5209
    %v6000 = vunpack.c.l.b16 %v5210
    %v6001 = vunpack.c.h.b16 %v5210
    %v6002 = vunpack.c.l.b16 %v5211
    %v6003 = vunpack.c.h.b16 %v5211
    %v6004 = vunpack.c.l.b16 %v5212
    %v6005 = vunpack.c.h.b16 %v5212
    %v6006 = vunpack.c.l.b16 %v5213
    %v6007 = vunpack.c.h.b16 %v5213
    %v6008 = vunpack.c.l.b16 %v5214
    %v6009 = vunpack.c.h.b16 %v5214
    %v6010 = vunpack.c.l.b16 %v5215
    %v6011 = vunpack.c.h.b16 %v5215
    %v6012 = vunpack.c.l.b16 %v5216
    %v6013 = vunpack.c.h.b16 %v5216
    %v6014 = vunpack.c.l.b16 %v5217
    %v6015 = vunpack.c.h.b16 %v5217
    %v6016 = vunpack.c.l.b16 %v5218
    %v6017 = vunpack.c.h.b16 %v5218
    %v6018 = vunpack.c.l.b16 %v5219
    %v6019 = vunpack.c.h.b16 %v5219
    %v6020 = vunpack.c.l.b16 %v5220
    %v6021 = vunpack.c.h.b16 %v5220
    %v6022 = vunpack.c.l.b16 %v5221
    %v6023 = vunpack.c.h.b16 %v5221
    %v6024 = vunpack.c.l.b16 %v5222
    %v6025 = vunpack.c.h.b16 %v5222
    %v6026 = vunpack.c.l.b16 %v5223
    %v6027 = vunpack.c.h.b16 %v5223
    %v6028 = vunpack.c.l.b16 %v5224
    %v6029 = vunpack.c.h.b16 %v5224
    %v6030 = vunpack.c.l.b16 %v5225
    %v6031 = vunpack.c.h.b16 %v5225
    %v6032 = vunpack.c.l.b16 %v5226
    %v6033 = vunpack.c.h.b16 %v5226
    %v6034 = vunpack.c.l.b16 %v5227
    %v6035 = vunpack.c.h.b16 %v5227
    %v6036 = vunpack.c.l.b16 %v5228
    %v6037 = vunpack.c.h.b16 %v5228
    %v6038 = vunpack.c.l.b16 %v5229
    %v6039 = vunpack.c.h.b16 %v5229
    %v6040 = vunpack.c.l.b16 %v5230
    %v6041 = vunpack.c.h.b16 %v5230
    %v6042 = vunpack.c.l.b16 %v5231
    %v6043 = vunpack.c.h.b16 %v5231
    %v6044 = vunpack.c.l.b16 %v5232
    %v6045 = vunpack.c.h.b16 %v5232
    %v6046 = vpack.c.b16 %v5922, %v5918
    %v6047 = vpack.c.b16 %v5923, %v5919
    %v6048 = vpack.c.b16 %v5924, %v5920
    %v6049 = vpack.c.b16 %v5925, %v5921
    %v6050 = vpack.c.b16 %v5930, %v5926
    %v6051 = vpack.c.b16 %v5931, %v5927
    %v6052 = vpack.c.b16 %v5932, %v5928
    %v6053 = vpack.c.b16 %v5933, %v5929
    %v6054 = vpack.c.b16 %v5938, %v5934
    %v6055 = vpack.c.b16 %v5939, %v5935
    %v6056 = vpack.c.b16 %v5940, %v5936
    %v6057 = vpack.c.b16 %v5941, %v5937
    %v6058 = vpack.c.b16 %v5946, %v5942
    %v6059 = vpack.c.b16 %v5947, %v5943
    %v6060 = vpack.c.b16 %v5948, %v5944
    %v6061 = vpack.c.b16 %v5949, %v5945
    %v6062 = vpack.c.b16 %v5954, %v5950
    %v6063 = vpack.c.b16 %v5955, %v5951
    %v6064 = vpack.c.b16 %v5956, %v5952
    %v6065 = vpack.c.b16 %v5957, %v5953
    %v6066 = vpack.c.b16 %v5962, %v5958
    %v6067 = vpack.c.b16 %v5963, %v5959
    %v6068 = vpack.c.b16 %v5964, %v5960
    %v6069 = vpack.c.b16 %v5965, %v5961
    %v6070 = vpack.c.b16 %v5970, %v5966
    %v6071 = vpack.c.b16 %v5971, %v5967
    %v6072 = vpack.c.b16 %v5972, %v5968
    %v6073 = vpack.c.b16 %v5973, %v5969
    %v6074 = vpack.c.b16 %v5978, %v5974
    %v6075 = vpack.c.b16 %v5979, %v5975
    %v6076 = vpack.c.b16 %v5980, %v5976
    %v6077 = vpack.c.b16 %v5981, %v5977
    %v6078 = vpack.c.b16 %v5986, %v5982
    %v6079 = vpack.c.b16 %v5987, %v5983
    %v6080 = vpack.c.b16 %v5988, %v5984
    %v6081 = vpack.c.b16 %v5989, %v5985
    %v6082 = vpack.c.b16 %v5994, %v5990
    %v6083 = vpack.c.b16 %v5995, %v5991
    %v6084 = vpack.c.b16 %v5996, %v5992
    %v6085 = vpack.c.b16 %v5997, %v5993
    %v6086 = vpack.c.b16 %v6002, %v5998
    %v6087 = vpack.c.b16 %v6003, %v5999
    %v6088 = vpack.c.b16 %v6004, %v6000
    %v6089 = vpack.c.b16 %v6005, %v6001
    %v6090 = vpack.c.b16 %v6010, %v6006
    %v6091 = vpack.c.b16 %v6011, %v6007
    %v6092 = vpack.c.b16 %v6012, %v6008
    %v6093 = vpack.c.b16 %v6013, %v6009
    %v6094 = vpack.c.b16 %v6018, %v6014
    %v6095 = vpack.c.b16 %v6019, %v6015
    %v6096 = vpack.c.b16 %v6020, %v6016
    %v6097 = vpack.c.b16 %v6021, %v6017
    %v6098 = vpack.c.b16 %v6026, %v6022
    %v6099 = vpack.c.b16 %v6027, %v6023
    %v6100 = vpack.c.b16 %v6028, %v6024
    %v6101 = vpack.c.b16 %v6029, %v6025
    %v6102 = vpack.c.b16 %v6034, %v6030
    %v6103 = vpack.c.b16 %v6035, %v6031
    %v6104 = vpack.c.b16 %v6036, %v6032
    %v6105 = vpack.c.b16 %v6037, %v6033
    %v6106 = vpack.c.b16 %v6042, %v6038
    %v6107 = vpack.c.b16 %v6043, %v6039
    %v6108 = vpack.c.b16 %v6044, %v6040
    %v6109 = vpack.c.b16 %v6045, %v6041
    %6174 = vmatprep.subr.bf16.mxu0 %v6047
    %6175 = vmatpush1.bf16.msra.mxu0 %v6046
    %6176 = vmatprep.subr.bf16.mxu0 %v6051
    %6177 = vmatpush1.bf16.msra.mxu0 %v6050
    %6178 = vmatprep.subr.bf16.mxu0 %v6055
    %6179 = vmatpush1.bf16.msra.mxu0 %v6054
    %6180 = vmatprep.subr.bf16.mxu0 %v6059
    %6181 = vmatpush1.bf16.msra.mxu0 %v6058
    %6182 = vmatprep.subr.bf16.mxu0 %v6063
    %6183 = vmatpush1.bf16.msra.mxu0 %v6062
    %6184 = vmatprep.subr.bf16.mxu0 %v6067
    %6185 = vmatpush1.bf16.msra.mxu0 %v6066
    %6186 = vmatprep.subr.bf16.mxu0 %v6071
    %6187 = vmatpush1.bf16.msra.mxu0 %v6070
    %6188 = vmatprep.subr.bf16.mxu0 %v6075
    %6189 = vmatpush1.bf16.msra.mxu0 %v6074
    %6190 = vmatprep.subr.bf16.mxu0 %v6079
    %6191 = vmatpush1.bf16.msra.mxu0 %v6078
    %6192 = vmatprep.subr.bf16.mxu0 %v6083
    %6193 = vmatpush1.bf16.msra.mxu0 %v6082
    %6194 = vmatprep.subr.bf16.mxu0 %v6087
    %6195 = vmatpush1.bf16.msra.mxu0 %v6086
    %6196 = vmatprep.subr.bf16.mxu0 %v6091
    %6197 = vmatpush1.bf16.msra.mxu0 %v6090
    %6198 = vmatprep.subr.bf16.mxu0 %v6095
    %6199 = vmatpush1.bf16.msra.mxu0 %v6094
    %6200 = vmatprep.subr.bf16.mxu0 %v6099
    %6201 = vmatpush1.bf16.msra.mxu0 %v6098
    %6202 = vmatprep.subr.bf16.mxu0 %v6103
    %6203 = vmatpush1.bf16.msra.mxu0 %v6102
    %6204 = vmatprep.subr.bf16.mxu0 %v6107
    %6205 = vmatpush1.bf16.msra.mxu0 %v6106
    %6206 = vmatprep.mubr.bf16.mxu0 %v5797
    %6207 = vmatmul.mubr.bf16.gmra.mrb[0].mxu0 %v5785
    %v6208 = vpop.f32.mrb[0].mxu0
    %v6209 = vadd.f32 %v5663, %v6208
    %v6210 = vpop.f32.mrb[0].mxu0
    %v6211 = vadd.f32 %v5665, %v6210
    %v6212 = vpop.f32.mrb[0].mxu0
    %v6213 = vadd.f32 %v5667, %v6212
    %v6214 = vpop.f32.mrb[0].mxu0
    %v6215 = vadd.f32 %v5669, %v6214
    %6216 = vmatprep.mubr.bf16.mxu0 %v5813
    %6217 = vmatmul.mubr.bf16.gmra.mrb[0].mxu0 %v5805
    %v6218 = vpop.f32.mrb[0].mxu0
    %v6219 = vadd.f32 %v5673, %v6218
    %v6220 = vpop.f32.mrb[0].mxu0
    %v6221 = vadd.f32 %v5675, %v6220
    %v6222 = vpop.f32.mrb[0].mxu0
    %v6223 = vadd.f32 %v5677, %v6222
    %v6224 = vpop.f32.mrb[0].mxu0
    %v6225 = vadd.f32 %v5679, %v6224
    %6226 = vmatprep.mubr.bf16.mxu0 %v5829
    %6227 = vmatmul.mubr.bf16.gmra.mrb[0].mxu0 %v5821
    %v6228 = vpop.f32.mrb[0].mxu0
    %v6229 = vadd.f32 %v5683, %v6228
    %v6230 = vpop.f32.mrb[0].mxu0
    %v6231 = vadd.f32 %v5685, %v6230
    %v6232 = vpop.f32.mrb[0].mxu0
    %v6233 = vadd.f32 %v5687, %v6232
    %v6234 = vpop.f32.mrb[0].mxu0
    %v6235 = vadd.f32 %v5689, %v6234
    %6236 = vmatprep.mubr.bf16.mxu0 %v5845
    %6237 = vmatmul.mubr.bf16.gmra.mrb[0].mxu0 %v5837
    %v6238 = vpop.f32.mrb[0].mxu0
    %v6239 = vadd.f32 %v5693, %v6238
    %v6240 = vpop.f32.mrb[0].mxu0
    %v6241 = vadd.f32 %v5695, %v6240
    %v6242 = vpop.f32.mrb[0].mxu0
    %v6243 = vadd.f32 %v5697, %v6242
    %v6244 = vpop.f32.mrb[0].mxu0
    %v6245 = vadd.f32 %v5699, %v6244
    %6246 = vdwg.mxu0
    %6247 = vmatprep.subr.bf16.mxu0 %v6049
    %6248 = vmatpush1.bf16.msra.mxu0 %v6048
    %6249 = vmatprep.subr.bf16.mxu0 %v6053
    %6250 = vmatpush1.bf16.msra.mxu0 %v6052
    %6251 = vmatprep.subr.bf16.mxu0 %v6057
    %6252 = vmatpush1.bf16.msra.mxu0 %v6056
    %6253 = vmatprep.subr.bf16.mxu0 %v6061
    %6254 = vmatpush1.bf16.msra.mxu0 %v6060
    %6255 = vmatprep.subr.bf16.mxu0 %v6065
    %6256 = vmatpush1.bf16.msra.mxu0 %v6064
    %6257 = vmatprep.subr.bf16.mxu0 %v6069
    %6258 = vmatpush1.bf16.msra.mxu0 %v6068
    %6259 = vmatprep.subr.bf16.mxu0 %v6073
    %6260 = vmatpush1.bf16.msra.mxu0 %v6072
    %6261 = vmatprep.subr.bf16.mxu0 %v6077
    %6262 = vmatpush1.bf16.msra.mxu0 %v6076
    %6263 = vmatprep.subr.bf16.mxu0 %v6081
    %6264 = vmatpush1.bf16.msra.mxu0 %v6080
    %6265 = vmatprep.subr.bf16.mxu0 %v6085
    %6266 = vmatpush1.bf16.msra.mxu0 %v6084
    %6267 = vmatprep.subr.bf16.mxu0 %v6089
    %6268 = vmatpush1.bf16.msra.mxu0 %v6088
    %6269 = vmatprep.subr.bf16.mxu0 %v6093
    %6270 = vmatpush1.bf16.msra.mxu0 %v6092
    %6271 = vmatprep.subr.bf16.mxu0 %v6097
    %6272 = vmatpush1.bf16.msra.mxu0 %v6096
    %6273 = vmatprep.subr.bf16.mxu0 %v6101
    %6274 = vmatpush1.bf16.msra.mxu0 %v6100
    %6275 = vmatprep.subr.bf16.mxu0 %v6105
    %6276 = vmatpush1.bf16.msra.mxu0 %v6104
    %6277 = vmatprep.subr.bf16.mxu0 %v6109
    %6278 = vmatpush1.bf16.msra.mxu0 %v6108
    %6279 = vmatprep.mubr.bf16.mxu0 %v5797
    %6280 = vmatmul.mubr.bf16.gmra.mrb[0].mxu0 %v5785
    %v6281 = vpop.f32.mrb[0].mxu0
    %v6282 = vadd.f32 %v5736, %v6281
    %v6283 = vpop.f32.mrb[0].mxu0
    %v6284 = vadd.f32 %v5738, %v6283
    %v6285 = vpop.f32.mrb[0].mxu0
    %v6286 = vadd.f32 %v5740, %v6285
    %v6287 = vpop.f32.mrb[0].mxu0
    %v6288 = vadd.f32 %v5742, %v6287
    %6289 = vmatprep.mubr.bf16.mxu0 %v5813
    %6290 = vmatmul.mubr.bf16.gmra.mrb[0].mxu0 %v5805
    %v6291 = vpop.f32.mrb[0].mxu0
    %v6292 = vadd.f32 %v5746, %v6291
    %v6293 = vpop.f32.mrb[0].mxu0
    %v6294 = vadd.f32 %v5748, %v6293
    %v6295 = vpop.f32.mrb[0].mxu0
    %v6296 = vadd.f32 %v5750, %v6295
    %v6297 = vpop.f32.mrb[0].mxu0
    %v6298 = vadd.f32 %v5752, %v6297
    %6299 = vmatprep.mubr.bf16.mxu0 %v5829
    %6300 = vmatmul.mubr.bf16.gmra.mrb[0].mxu0 %v5821
    %v6301 = vpop.f32.mrb[0].mxu0
    %v6302 = vadd.f32 %v5756, %v6301
    %v6303 = vpop.f32.mrb[0].mxu0
    %v6304 = vadd.f32 %v5758, %v6303
    %v6305 = vpop.f32.mrb[0].mxu0
    %v6306 = vadd.f32 %v5760, %v6305
    %v6307 = vpop.f32.mrb[0].mxu0
    %v6308 = vadd.f32 %v5762, %v6307
    %6309 = vmatprep.mubr.bf16.mxu0 %v5845
    %6310 = vmatmul.mubr.bf16.gmra.mrb[0].mxu0 %v5837
    %v6311 = vpop.f32.mrb[0].mxu0
    %v6312 = vadd.f32 %v5766, %v6311
    %v6313 = vpop.f32.mrb[0].mxu0
    %v6314 = vadd.f32 %v5768, %v6313
    %v6315 = vpop.f32.mrb[0].mxu0
    %v6316 = vadd.f32 %v5770, %v6315
    %v6317 = vpop.f32.mrb[0].mxu0
    %v6318 = vadd.f32 %v5772, %v6317
    %6319 = vdwg.mxu0
    %s6320 = scalar_lea.vmem [#allocation13], 1024
    %v6321 = vld [vmem:[%s6320] sm:$0xff]
    %v6322 = vld [vmem:[%s6320 + $0x8] sm:$0xff]
    %v6323 = vld [vmem:[%s6320 + $0x10] sm:$0xff]
    %v6324 = vld [vmem:[%s6320 + $0x18] sm:$0xff]
    %v6325 = vld [vmem:[%s6320 + $0x20] sm:$0xff]
    %v6326 = vld [vmem:[%s6320 + $0x28] sm:$0xff]
    %v6327 = vld [vmem:[%s6320 + $0x30] sm:$0xff]
    %v6328 = vld [vmem:[%s6320 + $0x38] sm:$0xff]
    %v6329 = vld [vmem:[%s6320 + $0x40] sm:$0xff]
    %v6330 = vld [vmem:[%s6320 + $0x48] sm:$0xff]
    %v6331 = vld [vmem:[%s6320 + $0x50] sm:$0xff]
    %v6332 = vld [vmem:[%s6320 + $0x58] sm:$0xff]
    %v6333 = vld [vmem:[%s6320 + $0x60] sm:$0xff]
    %v6334 = vld [vmem:[%s6320 + $0x68] sm:$0xff]
    %v6335 = vld [vmem:[%s6320 + $0x70] sm:$0xff]
    %v6336 = vld [vmem:[%s6320 + $0x78] sm:$0xff]
    %v6337 = vld [vmem:[%s6320 + $0x80] sm:$0xff]
    %v6338 = vld [vmem:[%s6320 + $0x88] sm:$0xff]
    %v6339 = vld [vmem:[%s6320 + $0x90] sm:$0xff]
    %v6340 = vld [vmem:[%s6320 + $0x98] sm:$0xff]
    %v6341 = vld [vmem:[%s6320 + $0xa0] sm:$0xff]
    %v6342 = vld [vmem:[%s6320 + $0xa8] sm:$0xff]
    %v6343 = vld [vmem:[%s6320 + $0xb0] sm:$0xff]
    %v6344 = vld [vmem:[%s6320 + $0xb8] sm:$0xff]
    %v6345 = vld [vmem:[%s6320 + $0xc0] sm:$0xff]
    %v6346 = vld [vmem:[%s6320 + $0xc8] sm:$0xff]
    %v6347 = vld [vmem:[%s6320 + $0xd0] sm:$0xff]
    %v6348 = vld [vmem:[%s6320 + $0xd8] sm:$0xff]
    %v6349 = vld [vmem:[%s6320 + $0xe0] sm:$0xff]
    %v6350 = vld [vmem:[%s6320 + $0xe8] sm:$0xff]
    %v6351 = vld [vmem:[%s6320 + $0xf0] sm:$0xff]
    %v6352 = vld [vmem:[%s6320 + $0xf8] sm:$0xff]
    %v6353 = vld [vmem:[%s6320 + $0x100] sm:$0xff]
    %v6354 = vld [vmem:[%s6320 + $0x108] sm:$0xff]
    %v6355 = vld [vmem:[%s6320 + $0x110] sm:$0xff]
    %v6356 = vld [vmem:[%s6320 + $0x118] sm:$0xff]
    %v6357 = vld [vmem:[%s6320 + $0x120] sm:$0xff]
    %v6358 = vld [vmem:[%s6320 + $0x128] sm:$0xff]
    %v6359 = vld [vmem:[%s6320 + $0x130] sm:$0xff]
    %v6360 = vld [vmem:[%s6320 + $0x138] sm:$0xff]
    %v6361 = vld [vmem:[%s6320 + $0x140] sm:$0xff]
    %v6362 = vld [vmem:[%s6320 + $0x148] sm:$0xff]
    %v6363 = vld [vmem:[%s6320 + $0x150] sm:$0xff]
    %v6364 = vld [vmem:[%s6320 + $0x158] sm:$0xff]
    %v6365 = vld [vmem:[%s6320 + $0x160] sm:$0xff]
    %v6366 = vld [vmem:[%s6320 + $0x168] sm:$0xff]
    %v6367 = vld [vmem:[%s6320 + $0x170] sm:$0xff]
    %v6368 = vld [vmem:[%s6320 + $0x178] sm:$0xff]
    %v6369 = vld [vmem:[%s6320 + $0x180] sm:$0xff]
    %v6370 = vld [vmem:[%s6320 + $0x188] sm:$0xff]
    %v6371 = vld [vmem:[%s6320 + $0x190] sm:$0xff]
    %v6372 = vld [vmem:[%s6320 + $0x198] sm:$0xff]
    %v6373 = vld [vmem:[%s6320 + $0x1a0] sm:$0xff]
    %v6374 = vld [vmem:[%s6320 + $0x1a8] sm:$0xff]
    %v6375 = vld [vmem:[%s6320 + $0x1b0] sm:$0xff]
    %v6376 = vld [vmem:[%s6320 + $0x1b8] sm:$0xff]
    %v6377 = vld [vmem:[%s6320 + $0x1c0] sm:$0xff]
    %v6378 = vld [vmem:[%s6320 + $0x1c8] sm:$0xff]
    %v6379 = vld [vmem:[%s6320 + $0x1d0] sm:$0xff]
    %v6380 = vld [vmem:[%s6320 + $0x1d8] sm:$0xff]
    %v6381 = vld [vmem:[%s6320 + $0x1e0] sm:$0xff]
    %v6382 = vld [vmem:[%s6320 + $0x1e8] sm:$0xff]
    %v6383 = vld [vmem:[%s6320 + $0x1f0] sm:$0xff]
    %v6384 = vld [vmem:[%s6320 + $0x1f8] sm:$0xff]
    %v6385 = vld [vmem:[#allocation2 + $0x10] sm:$0xff]
    %v6386 = vld [vmem:[#allocation2 + $0x18] sm:$0xff]
    %v6387 = vld [vmem:[#allocation2 + $0x20] sm:$0xff]
    %v6388 = vld [vmem:[#allocation2 + $0x28] sm:$0xff]
    %v6389 = vld [vmem:[#allocation2 + $0x30] sm:$0xff]
    %v6390 = vld [vmem:[#allocation2 + $0x38] sm:$0xff]
    %v6391 = vld [vmem:[#allocation2 + $0x40] sm:$0xff]
    %v6392 = vld [vmem:[#allocation2 + $0x48] sm:$0xff]
    %v6393 = vld [vmem:[#allocation2 + $0x50] sm:$0x1]
    %v6394 = vld [vmem:[#allocation2 + $0x58] sm:$0x1]
    %v6396 = vshrl.u32 %v6385, 16
    %v6398 = vshll.u32 %v6385, 16
    %v6400 = vrot.slane %v6398, 1
    %v6401 = vor.u32 %v6396, %v6400
    %v6403 = vshll.u32 %v6387, 16
    %v6405 = vrot.slane %v6403, 1
    %v6406 = vsel %vm603, %v6401, %v6405
    %v6408 = vshrl.u32 %v6386, 16
    %v6410 = vshll.u32 %v6386, 16
    %v6412 = vrot.slane %v6410, 1
    %v6413 = vor.u32 %v6408, %v6412
    %v6415 = vshll.u32 %v6388, 16
    %v6417 = vrot.slane %v6415, 1
    %v6418 = vsel %vm603, %v6413, %v6417
    %v6419 = vshrl.u32 %v6387, 16
    %v6421 = vor.u32 %v6419, %v6405
    %v6423 = vshll.u32 %v6389, 16
    %v6425 = vrot.slane %v6423, 1
    %v6426 = vsel %vm603, %v6421, %v6425
    %v6427 = vshrl.u32 %v6388, 16
    %v6429 = vor.u32 %v6427, %v6417
    %v6431 = vshll.u32 %v6390, 16
    %v6433 = vrot.slane %v6431, 1
    %v6434 = vsel %vm603, %v6429, %v6433
    %v6435 = vshrl.u32 %v6389, 16
    %v6437 = vor.u32 %v6435, %v6425
    %v6439 = vshll.u32 %v6391, 16
    %v6441 = vrot.slane %v6439, 1
    %v6442 = vsel %vm603, %v6437, %v6441
    %v6443 = vshrl.u32 %v6390, 16
    %v6445 = vor.u32 %v6443, %v6433
    %v6447 = vshll.u32 %v6392, 16
    %v6449 = vrot.slane %v6447, 1
    %v6450 = vsel %vm603, %v6445, %v6449
    %v6451 = vshrl.u32 %v6391, 16
    %v6453 = vor.u32 %v6451, %v6441
    %v6455 = vshll.u32 %v6393, 16
    %v6457 = vrot.slane %v6455, 1
    %v6458 = vsel %vm603, %v6453, %v6457
    %v6459 = vshrl.u32 %v6392, 16
    %v6461 = vor.u32 %v6459, %v6449
    %v6463 = vshll.u32 %v6394, 16
    %v6465 = vrot.slane %v6463, 1
    %v6466 = vsel %vm603, %v6461, %v6465
    %v6539 = vunpack.c.l.b16 %v6321
    %v6540 = vunpack.c.h.b16 %v6321
    %v6541 = vunpack.c.l.b16 %v6322
    %v6542 = vunpack.c.h.b16 %v6322
    %v6543 = vunpack.c.l.b16 %v6323
    %v6544 = vunpack.c.h.b16 %v6323
    %v6545 = vunpack.c.l.b16 %v6324
    %v6546 = vunpack.c.h.b16 %v6324
    %v6547 = vunpack.c.l.b16 %v6325
    %v6548 = vunpack.c.h.b16 %v6325
    %v6549 = vunpack.c.l.b16 %v6326
    %v6550 = vunpack.c.h.b16 %v6326
    %v6551 = vunpack.c.l.b16 %v6327
    %v6552 = vunpack.c.h.b16 %v6327
    %v6553 = vunpack.c.l.b16 %v6328
    %v6554 = vunpack.c.h.b16 %v6328
    %v6555 = vunpack.c.l.b16 %v6329
    %v6556 = vunpack.c.h.b16 %v6329
    %v6557 = vunpack.c.l.b16 %v6330
    %v6558 = vunpack.c.h.b16 %v6330
    %v6559 = vunpack.c.l.b16 %v6331
    %v6560 = vunpack.c.h.b16 %v6331
    %v6561 = vunpack.c.l.b16 %v6332
    %v6562 = vunpack.c.h.b16 %v6332
    %v6563 = vunpack.c.l.b16 %v6333
    %v6564 = vunpack.c.h.b16 %v6333
    %v6565 = vunpack.c.l.b16 %v6334
    %v6566 = vunpack.c.h.b16 %v6334
    %v6567 = vunpack.c.l.b16 %v6335
    %v6568 = vunpack.c.h.b16 %v6335
    %v6569 = vunpack.c.l.b16 %v6336
    %v6570 = vunpack.c.h.b16 %v6336
    %v6571 = vunpack.c.l.b16 %v6337
    %v6572 = vunpack.c.h.b16 %v6337
    %v6573 = vunpack.c.l.b16 %v6338
    %v6574 = vunpack.c.h.b16 %v6338
    %v6575 = vunpack.c.l.b16 %v6339
    %v6576 = vunpack.c.h.b16 %v6339
    %v6577 = vunpack.c.l.b16 %v6340
    %v6578 = vunpack.c.h.b16 %v6340
    %v6579 = vunpack.c.l.b16 %v6341
    %v6580 = vunpack.c.h.b16 %v6341
    %v6581 = vunpack.c.l.b16 %v6342
    %v6582 = vunpack.c.h.b16 %v6342
    %v6583 = vunpack.c.l.b16 %v6343
    %v6584 = vunpack.c.h.b16 %v6343
    %v6585 = vunpack.c.l.b16 %v6344
    %v6586 = vunpack.c.h.b16 %v6344
    %v6587 = vunpack.c.l.b16 %v6345
    %v6588 = vunpack.c.h.b16 %v6345
    %v6589 = vunpack.c.l.b16 %v6346
    %v6590 = vunpack.c.h.b16 %v6346
    %v6591 = vunpack.c.l.b16 %v6347
    %v6592 = vunpack.c.h.b16 %v6347
    %v6593 = vunpack.c.l.b16 %v6348
    %v6594 = vunpack.c.h.b16 %v6348
    %v6595 = vunpack.c.l.b16 %v6349
    %v6596 = vunpack.c.h.b16 %v6349
    %v6597 = vunpack.c.l.b16 %v6350
    %v6598 = vunpack.c.h.b16 %v6350
    %v6599 = vunpack.c.l.b16 %v6351
    %v6600 = vunpack.c.h.b16 %v6351
    %v6601 = vunpack.c.l.b16 %v6352
    %v6602 = vunpack.c.h.b16 %v6352
    %v6603 = vunpack.c.l.b16 %v6353
    %v6604 = vunpack.c.h.b16 %v6353
    %v6605 = vunpack.c.l.b16 %v6354
    %v6606 = vunpack.c.h.b16 %v6354
    %v6607 = vunpack.c.l.b16 %v6355
    %v6608 = vunpack.c.h.b16 %v6355
    %v6609 = vunpack.c.l.b16 %v6356
    %v6610 = vunpack.c.h.b16 %v6356
    %v6611 = vunpack.c.l.b16 %v6357
    %v6612 = vunpack.c.h.b16 %v6357
    %v6613 = vunpack.c.l.b16 %v6358
    %v6614 = vunpack.c.h.b16 %v6358
    %v6615 = vunpack.c.l.b16 %v6359
    %v6616 = vunpack.c.h.b16 %v6359
    %v6617 = vunpack.c.l.b16 %v6360
    %v6618 = vunpack.c.h.b16 %v6360
    %v6619 = vunpack.c.l.b16 %v6361
    %v6620 = vunpack.c.h.b16 %v6361
    %v6621 = vunpack.c.l.b16 %v6362
    %v6622 = vunpack.c.h.b16 %v6362
    %v6623 = vunpack.c.l.b16 %v6363
    %v6624 = vunpack.c.h.b16 %v6363
    %v6625 = vunpack.c.l.b16 %v6364
    %v6626 = vunpack.c.h.b16 %v6364
    %v6627 = vunpack.c.l.b16 %v6365
    %v6628 = vunpack.c.h.b16 %v6365
    %v6629 = vunpack.c.l.b16 %v6366
    %v6630 = vunpack.c.h.b16 %v6366
    %v6631 = vunpack.c.l.b16 %v6367
    %v6632 = vunpack.c.h.b16 %v6367
    %v6633 = vunpack.c.l.b16 %v6368
    %v6634 = vunpack.c.h.b16 %v6368
    %v6635 = vunpack.c.l.b16 %v6369
    %v6636 = vunpack.c.h.b16 %v6369
    %v6637 = vunpack.c.l.b16 %v6370
    %v6638 = vunpack.c.h.b16 %v6370
    %v6639 = vunpack.c.l.b16 %v6371
    %v6640 = vunpack.c.h.b16 %v6371
    %v6641 = vunpack.c.l.b16 %v6372
    %v6642 = vunpack.c.h.b16 %v6372
    %v6643 = vunpack.c.l.b16 %v6373
    %v6644 = vunpack.c.h.b16 %v6373
    %v6645 = vunpack.c.l.b16 %v6374
    %v6646 = vunpack.c.h.b16 %v6374
    %v6647 = vunpack.c.l.b16 %v6375
    %v6648 = vunpack.c.h.b16 %v6375
    %v6649 = vunpack.c.l.b16 %v6376
    %v6650 = vunpack.c.h.b16 %v6376
    %v6651 = vunpack.c.l.b16 %v6377
    %v6652 = vunpack.c.h.b16 %v6377
    %v6653 = vunpack.c.l.b16 %v6378
    %v6654 = vunpack.c.h.b16 %v6378
    %v6655 = vunpack.c.l.b16 %v6379
    %v6656 = vunpack.c.h.b16 %v6379
    %v6657 = vunpack.c.l.b16 %v6380
    %v6658 = vunpack.c.h.b16 %v6380
    %v6659 = vunpack.c.l.b16 %v6381
    %v6660 = vunpack.c.h.b16 %v6381
    %v6661 = vunpack.c.l.b16 %v6382
    %v6662 = vunpack.c.h.b16 %v6382
    %v6663 = vunpack.c.l.b16 %v6383
    %v6664 = vunpack.c.h.b16 %v6383
    %v6665 = vunpack.c.l.b16 %v6384
    %v6666 = vunpack.c.h.b16 %v6384
    %v6667 = vpack.c.b16 %v6543, %v6539
    %v6668 = vpack.c.b16 %v6544, %v6540
    %v6669 = vpack.c.b16 %v6545, %v6541
    %v6670 = vpack.c.b16 %v6546, %v6542
    %v6671 = vpack.c.b16 %v6551, %v6547
    %v6672 = vpack.c.b16 %v6552, %v6548
    %v6673 = vpack.c.b16 %v6553, %v6549
    %v6674 = vpack.c.b16 %v6554, %v6550
    %v6675 = vpack.c.b16 %v6559, %v6555
    %v6676 = vpack.c.b16 %v6560, %v6556
    %v6677 = vpack.c.b16 %v6561, %v6557
    %v6678 = vpack.c.b16 %v6562, %v6558
    %v6679 = vpack.c.b16 %v6567, %v6563
    %v6680 = vpack.c.b16 %v6568, %v6564
    %v6681 = vpack.c.b16 %v6569, %v6565
    %v6682 = vpack.c.b16 %v6570, %v6566
    %v6683 = vpack.c.b16 %v6575, %v6571
    %v6684 = vpack.c.b16 %v6576, %v6572
    %v6685 = vpack.c.b16 %v6577, %v6573
    %v6686 = vpack.c.b16 %v6578, %v6574
    %v6687 = vpack.c.b16 %v6583, %v6579
    %v6688 = vpack.c.b16 %v6584, %v6580
    %v6689 = vpack.c.b16 %v6585, %v6581
    %v6690 = vpack.c.b16 %v6586, %v6582
    %v6691 = vpack.c.b16 %v6591, %v6587
    %v6692 = vpack.c.b16 %v6592, %v6588
    %v6693 = vpack.c.b16 %v6593, %v6589
    %v6694 = vpack.c.b16 %v6594, %v6590
    %v6695 = vpack.c.b16 %v6599, %v6595
    %v6696 = vpack.c.b16 %v6600, %v6596
    %v6697 = vpack.c.b16 %v6601, %v6597
    %v6698 = vpack.c.b16 %v6602, %v6598
    %v6699 = vpack.c.b16 %v6607, %v6603
    %v6700 = vpack.c.b16 %v6608, %v6604
    %v6701 = vpack.c.b16 %v6609, %v6605
    %v6702 = vpack.c.b16 %v6610, %v6606
    %v6703 = vpack.c.b16 %v6615, %v6611
    %v6704 = vpack.c.b16 %v6616, %v6612
    %v6705 = vpack.c.b16 %v6617, %v6613
    %v6706 = vpack.c.b16 %v6618, %v6614
    %v6707 = vpack.c.b16 %v6623, %v6619
    %v6708 = vpack.c.b16 %v6624, %v6620
    %v6709 = vpack.c.b16 %v6625, %v6621
    %v6710 = vpack.c.b16 %v6626, %v6622
    %v6711 = vpack.c.b16 %v6631, %v6627
    %v6712 = vpack.c.b16 %v6632, %v6628
    %v6713 = vpack.c.b16 %v6633, %v6629
    %v6714 = vpack.c.b16 %v6634, %v6630
    %v6715 = vpack.c.b16 %v6639, %v6635
    %v6716 = vpack.c.b16 %v6640, %v6636
    %v6717 = vpack.c.b16 %v6641, %v6637
    %v6718 = vpack.c.b16 %v6642, %v6638
    %v6719 = vpack.c.b16 %v6647, %v6643
    %v6720 = vpack.c.b16 %v6648, %v6644
    %v6721 = vpack.c.b16 %v6649, %v6645
    %v6722 = vpack.c.b16 %v6650, %v6646
    %v6723 = vpack.c.b16 %v6655, %v6651
    %v6724 = vpack.c.b16 %v6656, %v6652
    %v6725 = vpack.c.b16 %v6657, %v6653
    %v6726 = vpack.c.b16 %v6658, %v6654
    %v6727 = vpack.c.b16 %v6663, %v6659
    %v6728 = vpack.c.b16 %v6664, %v6660
    %v6729 = vpack.c.b16 %v6665, %v6661
    %v6730 = vpack.c.b16 %v6666, %v6662
    %6795 = vmatprep.subr.bf16.mxu0 %v6668
    %6796 = vmatpush1.bf16.msra.mxu0 %v6667
    %6797 = vmatprep.subr.bf16.mxu0 %v6672
    %6798 = vmatpush1.bf16.msra.mxu0 %v6671
    %6799 = vmatprep.subr.bf16.mxu0 %v6676
    %6800 = vmatpush1.bf16.msra.mxu0 %v6675
    %6801 = vmatprep.subr.bf16.mxu0 %v6680
    %6802 = vmatpush1.bf16.msra.mxu0 %v6679
    %6803 = vmatprep.subr.bf16.mxu0 %v6684
    %6804 = vmatpush1.bf16.msra.mxu0 %v6683
    %6805 = vmatprep.subr.bf16.mxu0 %v6688
    %6806 = vmatpush1.bf16.msra.mxu0 %v6687
    %6807 = vmatprep.subr.bf16.mxu0 %v6692
    %6808 = vmatpush1.bf16.msra.mxu0 %v6691
    %6809 = vmatprep.subr.bf16.mxu0 %v6696
    %6810 = vmatpush1.bf16.msra.mxu0 %v6695
    %6811 = vmatprep.subr.bf16.mxu0 %v6700
    %6812 = vmatpush1.bf16.msra.mxu0 %v6699
    %6813 = vmatprep.subr.bf16.mxu0 %v6704
    %6814 = vmatpush1.bf16.msra.mxu0 %v6703
    %6815 = vmatprep.subr.bf16.mxu0 %v6708
    %6816 = vmatpush1.bf16.msra.mxu0 %v6707
    %6817 = vmatprep.subr.bf16.mxu0 %v6712
    %6818 = vmatpush1.bf16.msra.mxu0 %v6711
    %6819 = vmatprep.subr.bf16.mxu0 %v6716
    %6820 = vmatpush1.bf16.msra.mxu0 %v6715
    %6821 = vmatprep.subr.bf16.mxu0 %v6720
    %6822 = vmatpush1.bf16.msra.mxu0 %v6719
    %6823 = vmatprep.subr.bf16.mxu0 %v6724
    %6824 = vmatpush1.bf16.msra.mxu0 %v6723
    %6825 = vmatprep.subr.bf16.mxu0 %v6728
    %6826 = vmatpush1.bf16.msra.mxu0 %v6727
    %6827 = vmatprep.mubr.bf16.mxu0 %v6418
    %6828 = vmatmul.mubr.bf16.gmra.mrb[0].mxu0 %v6406
    %v6829 = vpop.f32.mrb[0].mxu0
    %v6830 = vadd.f32 0.0, %v6829
    %v6831 = vpop.f32.mrb[0].mxu0
    %v6832 = vadd.f32 0.0, %v6831
    %v6833 = vpop.f32.mrb[0].mxu0
    %v6834 = vadd.f32 0.0, %v6833
    %v6835 = vpop.f32.mrb[0].mxu0
    %v6836 = vadd.f32 0.0, %v6835
    %6837 = vmatprep.mubr.bf16.mxu0 %v6434
    %6838 = vmatmul.mubr.bf16.gmra.mrb[0].mxu0 %v6426
    %v6839 = vpop.f32.mrb[0].mxu0
    %v6840 = vadd.f32 0.0, %v6839
    %v6841 = vpop.f32.mrb[0].mxu0
    %v6842 = vadd.f32 0.0, %v6841
    %v6843 = vpop.f32.mrb[0].mxu0
    %v6844 = vadd.f32 0.0, %v6843
    %v6845 = vpop.f32.mrb[0].mxu0
    %v6846 = vadd.f32 0.0, %v6845
    %6847 = vmatprep.mubr.bf16.mxu0 %v6450
    %6848 = vmatmul.mubr.bf16.gmra.mrb[0].mxu0 %v6442
    %v6849 = vpop.f32.mrb[0].mxu0
    %v6850 = vadd.f32 0.0, %v6849
    %v6851 = vpop.f32.mrb[0].mxu0
    %v6852 = vadd.f32 0.0, %v6851
    %v6853 = vpop.f32.mrb[0].mxu0
    %v6854 = vadd.f32 0.0, %v6853
    %v6855 = vpop.f32.mrb[0].mxu0
    %v6856 = vadd.f32 0.0, %v6855
    %6857 = vmatprep.mubr.bf16.mxu0 %v6466
    %6858 = vmatmul.mubr.bf16.gmra.mrb[0].mxu0 %v6458
    %v6859 = vpop.f32.mrb[0].mxu0
    %v6860 = vadd.f32 0.0, %v6859
    %v6861 = vpop.f32.mrb[0].mxu0
    %v6862 = vadd.f32 0.0, %v6861
    %v6863 = vpop.f32.mrb[0].mxu0
    %v6864 = vadd.f32 0.0, %v6863
    %v6865 = vpop.f32.mrb[0].mxu0
    %v6866 = vadd.f32 0.0, %v6865
    %6867 = vdwg.mxu0
    %6868 = vmatprep.subr.bf16.mxu0 %v6670
    %6869 = vmatpush1.bf16.msra.mxu0 %v6669
    %6870 = vmatprep.subr.bf16.mxu0 %v6674
    %6871 = vmatpush1.bf16.msra.mxu0 %v6673
    %6872 = vmatprep.subr.bf16.mxu0 %v6678
    %6873 = vmatpush1.bf16.msra.mxu0 %v6677
    %6874 = vmatprep.subr.bf16.mxu0 %v6682
    %6875 = vmatpush1.bf16.msra.mxu0 %v6681
    %6876 = vmatprep.subr.bf16.mxu0 %v6686
    %6877 = vmatpush1.bf16.msra.mxu0 %v6685
    %6878 = vmatprep.subr.bf16.mxu0 %v6690
    %6879 = vmatpush1.bf16.msra.mxu0 %v6689
    %6880 = vmatprep.subr.bf16.mxu0 %v6694
    %6881 = vmatpush1.bf16.msra.mxu0 %v6693
    %6882 = vmatprep.subr.bf16.mxu0 %v6698
    %6883 = vmatpush1.bf16.msra.mxu0 %v6697
    %6884 = vmatprep.subr.bf16.mxu0 %v6702
    %6885 = vmatpush1.bf16.msra.mxu0 %v6701
    %6886 = vmatprep.subr.bf16.mxu0 %v6706
    %6887 = vmatpush1.bf16.msra.mxu0 %v6705
    %6888 = vmatprep.subr.bf16.mxu0 %v6710
    %6889 = vmatpush1.bf16.msra.mxu0 %v6709
    %6890 = vmatprep.subr.bf16.mxu0 %v6714
    %6891 = vmatpush1.bf16.msra.mxu0 %v6713
    %6892 = vmatprep.subr.bf16.mxu0 %v6718
    %6893 = vmatpush1.bf16.msra.mxu0 %v6717
    %6894 = vmatprep.subr.bf16.mxu0 %v6722
    %6895 = vmatpush1.bf16.msra.mxu0 %v6721
    %6896 = vmatprep.subr.bf16.mxu0 %v6726
    %6897 = vmatpush1.bf16.msra.mxu0 %v6725
    %6898 = vmatprep.subr.bf16.mxu0 %v6730
    %6899 = vmatpush1.bf16.msra.mxu0 %v6729
    %6900 = vmatprep.mubr.bf16.mxu0 %v6418
    %6901 = vmatmul.mubr.bf16.gmra.mrb[0].mxu0 %v6406
    %v6902 = vpop.f32.mrb[0].mxu0
    %v6903 = vadd.f32 0.0, %v6902
    %v6904 = vpop.f32.mrb[0].mxu0
    %v6905 = vadd.f32 0.0, %v6904
    %v6906 = vpop.f32.mrb[0].mxu0
    %v6907 = vadd.f32 0.0, %v6906
    %v6908 = vpop.f32.mrb[0].mxu0
    %v6909 = vadd.f32 0.0, %v6908
    %6910 = vmatprep.mubr.bf16.mxu0 %v6434
    %6911 = vmatmul.mubr.bf16.gmra.mrb[0].mxu0 %v6426
    %v6912 = vpop.f32.mrb[0].mxu0
    %v6913 = vadd.f32 0.0, %v6912
    %v6914 = vpop.f32.mrb[0].mxu0
    %v6915 = vadd.f32 0.0, %v6914
    %v6916 = vpop.f32.mrb[0].mxu0
    %v6917 = vadd.f32 0.0, %v6916
    %v6918 = vpop.f32.mrb[0].mxu0
    %v6919 = vadd.f32 0.0, %v6918
    %6920 = vmatprep.mubr.bf16.mxu0 %v6450
    %6921 = vmatmul.mubr.bf16.gmra.mrb[0].mxu0 %v6442
    %v6922 = vpop.f32.mrb[0].mxu0
    %v6923 = vadd.f32 0.0, %v6922
    %v6924 = vpop.f32.mrb[0].mxu0
    %v6925 = vadd.f32 0.0, %v6924
    %v6926 = vpop.f32.mrb[0].mxu0
    %v6927 = vadd.f32 0.0, %v6926
    %v6928 = vpop.f32.mrb[0].mxu0
    %v6929 = vadd.f32 0.0, %v6928
    %6930 = vmatprep.mubr.bf16.mxu0 %v6466
    %6931 = vmatmul.mubr.bf16.gmra.mrb[0].mxu0 %v6458
    %v6932 = vpop.f32.mrb[0].mxu0
    %v6933 = vadd.f32 0.0, %v6932
    %v6934 = vpop.f32.mrb[0].mxu0
    %v6935 = vadd.f32 0.0, %v6934
    %v6936 = vpop.f32.mrb[0].mxu0
    %v6937 = vadd.f32 0.0, %v6936
    %v6938 = vpop.f32.mrb[0].mxu0
    %v6939 = vadd.f32 0.0, %v6938
    %6940 = vdwg.mxu0
    %v6941 = vadd.f32 %v6209, %v6830
    %v6942 = vadd.f32 %v6211, %v6832
    %v6943 = vadd.f32 %v6282, %v6903
    %v6944 = vadd.f32 %v6284, %v6905
    %v6945 = vadd.f32 %v6213, %v6834
    %v6946 = vadd.f32 %v6215, %v6836
    %v6947 = vadd.f32 %v6286, %v6907
    %v6948 = vadd.f32 %v6288, %v6909
    %v6949 = vadd.f32 %v6219, %v6840
    %v6950 = vadd.f32 %v6221, %v6842
    %v6951 = vadd.f32 %v6292, %v6913
    %v6952 = vadd.f32 %v6294, %v6915
    %v6953 = vadd.f32 %v6223, %v6844
    %v6954 = vadd.f32 %v6225, %v6846
    %v6955 = vadd.f32 %v6296, %v6917
    %v6956 = vadd.f32 %v6298, %v6919
    %v6957 = vadd.f32 %v6229, %v6850
    %v6958 = vadd.f32 %v6231, %v6852
    %v6959 = vadd.f32 %v6302, %v6923
    %v6960 = vadd.f32 %v6304, %v6925
    %v6961 = vadd.f32 %v6233, %v6854
    %v6962 = vadd.f32 %v6235, %v6856
    %v6963 = vadd.f32 %v6306, %v6927
    %v6964 = vadd.f32 %v6308, %v6929
    %v6965 = vadd.f32 %v6239, %v6860
    %v6966 = vadd.f32 %v6241, %v6862
    %v6967 = vadd.f32 %v6312, %v6933
    %v6968 = vadd.f32 %v6314, %v6935
    %v6969 = vadd.f32 %v6243, %v6864
    %v6970 = vadd.f32 %v6245, %v6866
    %v6971 = vadd.f32 %v6316, %v6937
    %v6972 = vadd.f32 %v6318, %v6939
    %v6973 = vld [vmem:[#allocation14] sm:$0xf]
    %v6975 = vlaneseq
    %v6976 = vshrl.u32 %v6975, 7
    %v6977 = vsub.s32 0, %v6976
    %v6978 = vrot.slane %v6973, %v6977
    %v6979 = vlaneseq
    %v6980 = vshrl.u32 %v6979, 7
    %v6981 = vsub.s32 1, %v6980
    %v6982 = vrot.slane %v6973, %v6981
    %v6983 = vlaneseq
    %v6984 = vshrl.u32 %v6983, 7
    %v6985 = vsub.s32 2, %v6984
    %v6986 = vrot.slane %v6973, %v6985
    %v6987 = vlaneseq
    %v6988 = vshrl.u32 %v6987, 7
    %v6989 = vsub.s32 3, %v6988
    %v6990 = vrot.slane %v6973, %v6989
    %v6995 = vadd.f32 %v6941, %v6978
    %v6996 = vadd.f32 %v6942, %v6982
    %v6997 = vadd.f32 %v6943, %v6986
    %v6998 = vadd.f32 %v6944, %v6990
    %v6999 = vadd.f32 %v6945, %v6978
    %v7000 = vadd.f32 %v6946, %v6982
    %v7001 = vadd.f32 %v6947, %v6986
    %v7002 = vadd.f32 %v6948, %v6990
    %v7003 = vadd.f32 %v6949, %v6978
    %v7004 = vadd.f32 %v6950, %v6982
    %v7005 = vadd.f32 %v6951, %v6986
    %v7006 = vadd.f32 %v6952, %v6990
    %v7007 = vadd.f32 %v6953, %v6978
    %v7008 = vadd.f32 %v6954, %v6982
    %v7009 = vadd.f32 %v6955, %v6986
    %v7010 = vadd.f32 %v6956, %v6990
    %v7011 = vadd.f32 %v6957, %v6978
    %v7012 = vadd.f32 %v6958, %v6982
    %v7013 = vadd.f32 %v6959, %v6986
    %v7014 = vadd.f32 %v6960, %v6990
    %v7015 = vadd.f32 %v6961, %v6978
    %v7016 = vadd.f32 %v6962, %v6982
    %v7017 = vadd.f32 %v6963, %v6986
    %v7018 = vadd.f32 %v6964, %v6990
    %v7019 = vadd.f32 %v6965, %v6978
    %v7020 = vadd.f32 %v6966, %v6982
    %v7021 = vadd.f32 %v6967, %v6986
    %v7022 = vadd.f32 %v6968, %v6990
    %v7023 = vadd.f32 %v6969, %v6978
    %v7024 = vadd.f32 %v6970, %v6982
    %v7025 = vadd.f32 %v6971, %v6986
    %v7026 = vadd.f32 %v6972, %v6990
    %v7027 = vmax.f32 %v6995, 0.0
    %v7028 = vmax.f32 %v6996, 0.0
    %v7029 = vmax.f32 %v6997, 0.0
    %v7030 = vmax.f32 %v6998, 0.0
    %v7031 = vmax.f32 %v6999, 0.0
    %v7032 = vmax.f32 %v7000, 0.0
    %v7033 = vmax.f32 %v7001, 0.0
    %v7034 = vmax.f32 %v7002, 0.0
    %v7035 = vmax.f32 %v7003, 0.0
    %v7036 = vmax.f32 %v7004, 0.0
    %v7037 = vmax.f32 %v7005, 0.0
    %v7038 = vmax.f32 %v7006, 0.0
    %v7039 = vmax.f32 %v7007, 0.0
    %v7040 = vmax.f32 %v7008, 0.0
    %v7041 = vmax.f32 %v7009, 0.0
    %v7042 = vmax.f32 %v7010, 0.0
    %v7043 = vmax.f32 %v7011, 0.0
    %v7044 = vmax.f32 %v7012, 0.0
    %v7045 = vmax.f32 %v7013, 0.0
    %v7046 = vmax.f32 %v7014, 0.0
    %v7047 = vmax.f32 %v7015, 0.0
    %v7048 = vmax.f32 %v7016, 0.0
    %v7049 = vmax.f32 %v7017, 0.0
    %v7050 = vmax.f32 %v7018, 0.0
    %v7051 = vmax.f32 %v7019, 0.0
    %v7052 = vmax.f32 %v7020, 0.0
    %v7053 = vmax.f32 %v7021, 0.0
    %v7054 = vmax.f32 %v7022, 0.0
    %v7055 = vmax.f32 %v7023, 0.0
    %v7056 = vmax.f32 %v7024, 0.0
    %v7057 = vmax.f32 %v7025, 0.0
    %v7058 = vmax.f32 %v7026, 0.0
    %7059 = vst [vmem:[#allocation4] sm:$0xff] %v7027
    %7060 = vst [vmem:[#allocation4 + $0x8] sm:$0xff] %v7028
    %7061 = vst [vmem:[#allocation4 + $0x10] sm:$0xff] %v7029
    %7062 = vst [vmem:[#allocation4 + $0x18] sm:$0xff] %v7030
    %7063 = vst [vmem:[#allocation4 + $0x20] sm:$0xff] %v7031
    %7064 = vst [vmem:[#allocation4 + $0x28] sm:$0xff] %v7032
    %7065 = vst [vmem:[#allocation4 + $0x30] sm:$0xff] %v7033
    %7066 = vst [vmem:[#allocation4 + $0x38] sm:$0xff] %v7034
    %7067 = vst [vmem:[#allocation4 + $0x40] sm:$0xff] %v7035
    %7068 = vst [vmem:[#allocation4 + $0x48] sm:$0xff] %v7036
    %7069 = vst [vmem:[#allocation4 + $0x50] sm:$0xff] %v7037
    %7070 = vst [vmem:[#allocation4 + $0x58] sm:$0xff] %v7038
    %7071 = vst [vmem:[#allocation4 + $0x60] sm:$0xff] %v7039
    %7072 = vst [vmem:[#allocation4 + $0x68] sm:$0xff] %v7040
    %7073 = vst [vmem:[#allocation4 + $0x70] sm:$0xff] %v7041
    %7074 = vst [vmem:[#allocation4 + $0x78] sm:$0xff] %v7042
    %7075 = vst [vmem:[#allocation4 + $0x80] sm:$0xff] %v7043
    %7076 = vst [vmem:[#allocation4 + $0x88] sm:$0xff] %v7044
    %7077 = vst [vmem:[#allocation4 + $0x90] sm:$0xff] %v7045
    %7078 = vst [vmem:[#allocation4 + $0x98] sm:$0xff] %v7046
    %7079 = vst [vmem:[#allocation4 + $0xa0] sm:$0xff] %v7047
    %7080 = vst [vmem:[#allocation4 + $0xa8] sm:$0xff] %v7048
    %7081 = vst [vmem:[#allocation4 + $0xb0] sm:$0xff] %v7049
    %7082 = vst [vmem:[#allocation4 + $0xb8] sm:$0xff] %v7050
    %7083 = vst [vmem:[#allocation4 + $0xc0] sm:$0xff] %v7051
    %7084 = vst [vmem:[#allocation4 + $0xc8] sm:$0xff] %v7052
    %7085 = vst [vmem:[#allocation4 + $0xd0] sm:$0xff] %v7053
    %7086 = vst [vmem:[#allocation4 + $0xd8] sm:$0xff] %v7054
    %7087 = vst [vmem:[#allocation4 + $0xe0] sm:$0xff] %v7055
    %7088 = vst [vmem:[#allocation4 + $0xe8] sm:$0xff] %v7056
    %7089 = vst [vmem:[#allocation4 + $0xf0] sm:$0xff] %v7057
    %7090 = vst [vmem:[#allocation4 + $0xf8] sm:$0xff] %v7058
    %s7091 = scalar_lea.vmem [#allocation4], 1
    %v7092 = vld [vmem:[%s7091] ss:$8 sm:$0xf]
    %s7093 = scalar_lea.vmem [#allocation4], 33
    %v7094 = vld [vmem:[%s7093] ss:$8 sm:$0xf]
    %s7095 = scalar_lea.vmem [#allocation4], 65
    %v7096 = vld [vmem:[%s7095] ss:$8 sm:$0xf]
    %s7097 = scalar_lea.vmem [#allocation4], 97
    %v7098 = vld [vmem:[%s7097] ss:$8 sm:$0xf]
    %s7099 = scalar_lea.vmem [#allocation4], 129
    %v7100 = vld [vmem:[%s7099] ss:$8 sm:$0xf]
    %s7101 = scalar_lea.vmem [#allocation4], 161
    %v7102 = vld [vmem:[%s7101] ss:$8 sm:$0xf]
    %s7103 = scalar_lea.vmem [#allocation4], 193
    %v7104 = vld [vmem:[%s7103] ss:$8 sm:$0xf]
    %s7105 = scalar_lea.vmem [#allocation4], 225
    %v7106 = vld [vmem:[%s7105] ss:$8 sm:$0xf]
    %v7107 = vld [vmem:[#allocation16] sm:$0xff]
    %v7108 = vld [vmem:[#allocation16 + $0x8] sm:$0xff]
    %v7109 = vld [vmem:[#allocation16 + $0x10] sm:$0xff]
    %v7110 = vld [vmem:[#allocation16 + $0x18] sm:$0xff]
    %v7111 = vld [vmem:[#allocation16 + $0x20] sm:$0xff]
    %v7112 = vld [vmem:[#allocation16 + $0x28] sm:$0xff]
    %v7113 = vld [vmem:[#allocation16 + $0x30] sm:$0xff]
    %v7114 = vld [vmem:[#allocation16 + $0x38] sm:$0xff]
    %v7115 = vld [vmem:[#allocation16 + $0x40] sm:$0xff]
    %v7116 = vld [vmem:[#allocation16 + $0x48] sm:$0xff]
    %v7117 = vld [vmem:[#allocation16 + $0x50] sm:$0xff]
    %v7118 = vld [vmem:[#allocation16 + $0x58] sm:$0xff]
    %v7119 = vld [vmem:[#allocation16 + $0x60] sm:$0xff]
    %v7120 = vld [vmem:[#allocation16 + $0x68] sm:$0xff]
    %v7121 = vld [vmem:[#allocation16 + $0x70] sm:$0xff]
    %v7122 = vld [vmem:[#allocation16 + $0x78] sm:$0xff]
    %v7123 = vld [vmem:[#allocation16 + $0x80] sm:$0xff]
    %v7124 = vld [vmem:[#allocation16 + $0x88] sm:$0xff]
    %v7125 = vld [vmem:[#allocation16 + $0x90] sm:$0xff]
    %v7126 = vld [vmem:[#allocation16 + $0x98] sm:$0xff]
    %v7127 = vld [vmem:[#allocation16 + $0xa0] sm:$0xff]
    %v7128 = vld [vmem:[#allocation16 + $0xa8] sm:$0xff]
    %v7129 = vld [vmem:[#allocation16 + $0xb0] sm:$0xff]
    %v7130 = vld [vmem:[#allocation16 + $0xb8] sm:$0xff]
    %v7131 = vld [vmem:[#allocation16 + $0xc0] sm:$0xff]
    %v7132 = vld [vmem:[#allocation16 + $0xc8] sm:$0xff]
    %v7133 = vld [vmem:[#allocation16 + $0xd0] sm:$0xff]
    %v7134 = vld [vmem:[#allocation16 + $0xd8] sm:$0xff]
    %v7135 = vld [vmem:[#allocation16 + $0xe0] sm:$0xff]
    %v7136 = vld [vmem:[#allocation16 + $0xe8] sm:$0xff]
    %v7137 = vld [vmem:[#allocation16 + $0xf0] sm:$0xff]
    %v7138 = vld [vmem:[#allocation16 + $0xf8] sm:$0xff]
    %v7139 = vld [vmem:[#allocation16 + $0x100] sm:$0xff]
    %v7140 = vld [vmem:[#allocation16 + $0x108] sm:$0xff]
    %v7141 = vld [vmem:[#allocation16 + $0x110] sm:$0xff]
    %v7142 = vld [vmem:[#allocation16 + $0x118] sm:$0xff]
    %v7143 = vld [vmem:[#allocation16 + $0x120] sm:$0xff]
    %v7144 = vld [vmem:[#allocation16 + $0x128] sm:$0xff]
    %v7145 = vld [vmem:[#allocation16 + $0x130] sm:$0xff]
    %v7146 = vld [vmem:[#allocation16 + $0x138] sm:$0xff]
    %v7147 = vld [vmem:[#allocation16 + $0x140] sm:$0xff]
    %v7148 = vld [vmem:[#allocation16 + $0x148] sm:$0xff]
    %v7149 = vld [vmem:[#allocation16 + $0x150] sm:$0xff]
    %v7150 = vld [vmem:[#allocation16 + $0x158] sm:$0xff]
    %v7151 = vld [vmem:[#allocation16 + $0x160] sm:$0xff]
    %v7152 = vld [vmem:[#allocation16 + $0x168] sm:$0xff]
    %v7153 = vld [vmem:[#allocation16 + $0x170] sm:$0xff]
    %v7154 = vld [vmem:[#allocation16 + $0x178] sm:$0xff]
    %v7155 = vld [vmem:[#allocation16 + $0x180] sm:$0xff]
    %v7156 = vld [vmem:[#allocation16 + $0x188] sm:$0xff]
    %v7157 = vld [vmem:[#allocation16 + $0x190] sm:$0xff]
    %v7158 = vld [vmem:[#allocation16 + $0x198] sm:$0xff]
    %v7159 = vld [vmem:[#allocation16 + $0x1a0] sm:$0xff]
    %v7160 = vld [vmem:[#allocation16 + $0x1a8] sm:$0xff]
    %v7161 = vld [vmem:[#allocation16 + $0x1b0] sm:$0xff]
    %v7162 = vld [vmem:[#allocation16 + $0x1b8] sm:$0xff]
    %v7163 = vld [vmem:[#allocation16 + $0x1c0] sm:$0xff]
    %v7164 = vld [vmem:[#allocation16 + $0x1c8] sm:$0xff]
    %v7165 = vld [vmem:[#allocation16 + $0x1d0] sm:$0xff]
    %v7166 = vld [vmem:[#allocation16 + $0x1d8] sm:$0xff]
    %v7167 = vld [vmem:[#allocation16 + $0x1e0] sm:$0xff]
    %v7168 = vld [vmem:[#allocation16 + $0x1e8] sm:$0xff]
    %v7169 = vld [vmem:[#allocation16 + $0x1f0] sm:$0xff]
    %v7170 = vld [vmem:[#allocation16 + $0x1f8] sm:$0xff]
    %s7171 = scalar_lea.vmem [#allocation4], 2
    %v7172 = vld [vmem:[%s7171] ss:$8 sm:$0xf]
    %s7173 = scalar_lea.vmem [#allocation4], 34
    %v7174 = vld [vmem:[%s7173] ss:$8 sm:$0xf]
    %s7175 = scalar_lea.vmem [#allocation4], 66
    %v7176 = vld [vmem:[%s7175] ss:$8 sm:$0xf]
    %s7177 = scalar_lea.vmem [#allocation4], 98
    %v7178 = vld [vmem:[%s7177] ss:$8 sm:$0xf]
    %s7179 = scalar_lea.vmem [#allocation4], 130
    %v7180 = vld [vmem:[%s7179] ss:$8 sm:$0xf]
    %s7181 = scalar_lea.vmem [#allocation4], 162
    %v7182 = vld [vmem:[%s7181] ss:$8 sm:$0xf]
    %s7183 = scalar_lea.vmem [#allocation4], 194
    %v7184 = vld [vmem:[%s7183] ss:$8 sm:$0xf]
    %s7185 = scalar_lea.vmem [#allocation4], 226
    %v7186 = vld [vmem:[%s7185] ss:$8 sm:$0xf]
    %s7187 = scalar_lea.vmem [#allocation16], 512
    %v7188 = vld [vmem:[%s7187] sm:$0xff]
    %v7189 = vld [vmem:[%s7187 + $0x8] sm:$0xff]
    %v7190 = vld [vmem:[%s7187 + $0x10] sm:$0xff]
    %v7191 = vld [vmem:[%s7187 + $0x18] sm:$0xff]
    %v7192 = vld [vmem:[%s7187 + $0x20] sm:$0xff]
    %v7193 = vld [vmem:[%s7187 + $0x28] sm:$0xff]
    %v7194 = vld [vmem:[%s7187 + $0x30] sm:$0xff]
    %v7195 = vld [vmem:[%s7187 + $0x38] sm:$0xff]
    %v7196 = vld [vmem:[%s7187 + $0x40] sm:$0xff]
    %v7197 = vld [vmem:[%s7187 + $0x48] sm:$0xff]
    %v7198 = vld [vmem:[%s7187 + $0x50] sm:$0xff]
    %v7199 = vld [vmem:[%s7187 + $0x58] sm:$0xff]
    %v7200 = vld [vmem:[%s7187 + $0x60] sm:$0xff]
    %v7201 = vld [vmem:[%s7187 + $0x68] sm:$0xff]
    %v7202 = vld [vmem:[%s7187 + $0x70] sm:$0xff]
    %v7203 = vld [vmem:[%s7187 + $0x78] sm:$0xff]
    %v7204 = vld [vmem:[%s7187 + $0x80] sm:$0xff]
    %v7205 = vld [vmem:[%s7187 + $0x88] sm:$0xff]
    %v7206 = vld [vmem:[%s7187 + $0x90] sm:$0xff]
    %v7207 = vld [vmem:[%s7187 + $0x98] sm:$0xff]
    %v7208 = vld [vmem:[%s7187 + $0xa0] sm:$0xff]
    %v7209 = vld [vmem:[%s7187 + $0xa8] sm:$0xff]
    %v7210 = vld [vmem:[%s7187 + $0xb0] sm:$0xff]
    %v7211 = vld [vmem:[%s7187 + $0xb8] sm:$0xff]
    %v7212 = vld [vmem:[%s7187 + $0xc0] sm:$0xff]
    %v7213 = vld [vmem:[%s7187 + $0xc8] sm:$0xff]
    %v7214 = vld [vmem:[%s7187 + $0xd0] sm:$0xff]
    %v7215 = vld [vmem:[%s7187 + $0xd8] sm:$0xff]
    %v7216 = vld [vmem:[%s7187 + $0xe0] sm:$0xff]
    %v7217 = vld [vmem:[%s7187 + $0xe8] sm:$0xff]
    %v7218 = vld [vmem:[%s7187 + $0xf0] sm:$0xff]
    %v7219 = vld [vmem:[%s7187 + $0xf8] sm:$0xff]
    %v7220 = vld [vmem:[%s7187 + $0x100] sm:$0xff]
    %v7221 = vld [vmem:[%s7187 + $0x108] sm:$0xff]
    %v7222 = vld [vmem:[%s7187 + $0x110] sm:$0xff]
    %v7223 = vld [vmem:[%s7187 + $0x118] sm:$0xff]
    %v7224 = vld [vmem:[%s7187 + $0x120] sm:$0xff]
    %v7225 = vld [vmem:[%s7187 + $0x128] sm:$0xff]
    %v7226 = vld [vmem:[%s7187 + $0x130] sm:$0xff]
    %v7227 = vld [vmem:[%s7187 + $0x138] sm:$0xff]
    %v7228 = vld [vmem:[%s7187 + $0x140] sm:$0xff]
    %v7229 = vld [vmem:[%s7187 + $0x148] sm:$0xff]
    %v7230 = vld [vmem:[%s7187 + $0x150] sm:$0xff]
    %v7231 = vld [vmem:[%s7187 + $0x158] sm:$0xff]
    %v7232 = vld [vmem:[%s7187 + $0x160] sm:$0xff]
    %v7233 = vld [vmem:[%s7187 + $0x168] sm:$0xff]
    %v7234 = vld [vmem:[%s7187 + $0x170] sm:$0xff]
    %v7235 = vld [vmem:[%s7187 + $0x178] sm:$0xff]
    %v7236 = vld [vmem:[%s7187 + $0x180] sm:$0xff]
    %v7237 = vld [vmem:[%s7187 + $0x188] sm:$0xff]
    %v7238 = vld [vmem:[%s7187 + $0x190] sm:$0xff]
    %v7239 = vld [vmem:[%s7187 + $0x198] sm:$0xff]
    %v7240 = vld [vmem:[%s7187 + $0x1a0] sm:$0xff]
    %v7241 = vld [vmem:[%s7187 + $0x1a8] sm:$0xff]
    %v7242 = vld [vmem:[%s7187 + $0x1b0] sm:$0xff]
    %v7243 = vld [vmem:[%s7187 + $0x1b8] sm:$0xff]
    %v7244 = vld [vmem:[%s7187 + $0x1c0] sm:$0xff]
    %v7245 = vld [vmem:[%s7187 + $0x1c8] sm:$0xff]
    %v7246 = vld [vmem:[%s7187 + $0x1d0] sm:$0xff]
    %v7247 = vld [vmem:[%s7187 + $0x1d8] sm:$0xff]
    %v7248 = vld [vmem:[%s7187 + $0x1e0] sm:$0xff]
    %v7249 = vld [vmem:[%s7187 + $0x1e8] sm:$0xff]
    %v7250 = vld [vmem:[%s7187 + $0x1f0] sm:$0xff]
    %v7251 = vld [vmem:[%s7187 + $0x1f8] sm:$0xff]
    %v7260 = vcombine.low %v7172, %v7174
    %v7261 = vcombine.low %v7176, %v7178
    %v7262 = vcombine.low %v7180, %v7182
    %v7263 = vcombine.low %v7184, %v7186
    %v7265 = vunpack.c.l.s4 1966171168
    %v7266 = vunpack.c.0.s8 %v7265
    %v7267 = vlaneseq
    %v7268 = vshrl.u32 %v7267, 7
    %v7269 = vsub.s32 %v7266, %v7268
    %v7270 = vrot.slane %v7260, %v7269
    %v7272 = vunpack.c.l.s4 1966171168
    %v7273 = vunpack.c.0.s8 %v7272
    %v7274 = vlaneseq
    %v7275 = vshrl.u32 %v7274, 7
    %v7276 = vsub.s32 %v7273, %v7275
    %v7277 = vrot.slane %v7261, %v7276
    %v7279 = vunpack.c.l.s4 1966171168
    %v7280 = vunpack.c.0.s8 %v7279
    %v7281 = vlaneseq
    %v7282 = vshrl.u32 %v7281, 7
    %v7283 = vsub.s32 %v7280, %v7282
    %v7284 = vrot.slane %v7262, %v7283
    %v7286 = vunpack.c.l.s4 1966171168
    %v7287 = vunpack.c.0.s8 %v7286
    %v7288 = vlaneseq
    %v7289 = vshrl.u32 %v7288, 7
    %v7290 = vsub.s32 %v7287, %v7289
    %v7291 = vrot.slane %v7263, %v7290
    %v7292 = vcombine.low %v7270, %v7277
    %v7293 = vcombine.high %v7270, %v7277
    %v7294 = vcombine.low %v7284, %v7291
    %v7295 = vcombine.high %v7284, %v7291
    %v7297 = vunpack.c.l.s4 1966171168
    %v7298 = vunpack.c.0.s8 %v7297
    %v7299 = vlaneseq
    %v7300 = vshrl.u32 %v7299, 7
    %v7301 = vsub.s32 %v7298, %v7300
    %v7302 = vrot.slane %v7292, %v7301
    %v7304 = vunpack.c.l.s4 1966171168
    %v7305 = vunpack.c.0.s8 %v7304
    %v7306 = vlaneseq
    %v7307 = vshrl.u32 %v7306, 7
    %v7308 = vsub.s32 %v7305, %v7307
    %v7309 = vrot.slane %v7293, %v7308
    %v7311 = vunpack.c.l.s4 1966171168
    %v7312 = vunpack.c.0.s8 %v7311
    %v7313 = vlaneseq
    %v7314 = vshrl.u32 %v7313, 7
    %v7315 = vsub.s32 %v7312, %v7314
    %v7316 = vrot.slane %v7294, %v7315
    %v7318 = vunpack.c.l.s4 1966171168
    %v7319 = vunpack.c.0.s8 %v7318
    %v7320 = vlaneseq
    %v7321 = vshrl.u32 %v7320, 7
    %v7322 = vsub.s32 %v7319, %v7321
    %v7323 = vrot.slane %v7295, %v7322
    %v7324 = vcombine.low %v7302, %v7316
    %v7325 = vcombine.high %v7302, %v7316
    %v7326 = vcombine.low %v7309, %v7323
    %v7327 = vcombine.high %v7309, %v7323
    %7332 = vmatprep.subr.mxu0 0.0
    %7333 = vmatpush1.msra.mxu0 %v7188
    %7334 = vmatprep.subr.mxu0 0.0
    %7335 = vmatpush1.msra.mxu0 %v7189
    %7336 = vmatprep.subr.mxu0 0.0
    %7337 = vmatpush1.msra.mxu0 %v7190
    %7338 = vmatprep.subr.mxu0 0.0
    %7339 = vmatpush1.msra.mxu0 %v7191
    %7340 = vmatprep.subr.mxu0 0.0
    %7341 = vmatpush1.msra.mxu0 %v7192
    %7342 = vmatprep.subr.mxu0 0.0
    %7343 = vmatpush1.msra.mxu0 %v7193
    %7344 = vmatprep.subr.mxu0 0.0
    %7345 = vmatpush1.msra.mxu0 %v7194
    %7346 = vmatprep.subr.mxu0 0.0
    %7347 = vmatpush1.msra.mxu0 %v7195
    %7348 = vmatprep.subr.mxu0 0.0
    %7349 = vmatpush1.msra.mxu0 %v7196
    %7350 = vmatprep.subr.mxu0 0.0
    %7351 = vmatpush1.msra.mxu0 %v7197
    %7352 = vmatprep.subr.mxu0 0.0
    %7353 = vmatpush1.msra.mxu0 %v7198
    %7354 = vmatprep.subr.mxu0 0.0
    %7355 = vmatpush1.msra.mxu0 %v7199
    %7356 = vmatprep.subr.mxu0 0.0
    %7357 = vmatpush1.msra.mxu0 %v7200
    %7358 = vmatprep.subr.mxu0 0.0
    %7359 = vmatpush1.msra.mxu0 %v7201
    %7360 = vmatprep.subr.mxu0 0.0
    %7361 = vmatpush1.msra.mxu0 %v7202
    %7362 = vmatprep.subr.mxu0 0.0
    %7363 = vmatpush1.msra.mxu0 %v7203
    %7364 = vmatprep.subr.mxu0 0.0
    %7365 = vmatpush1.msra.mxu0 %v7204
    %7366 = vmatprep.subr.mxu0 0.0
    %7367 = vmatpush1.msra.mxu0 %v7205
    %7368 = vmatprep.subr.mxu0 0.0
    %7369 = vmatpush1.msra.mxu0 %v7206
    %7370 = vmatprep.subr.mxu0 0.0
    %7371 = vmatpush1.msra.mxu0 %v7207
    %7372 = vmatprep.subr.mxu0 0.0
    %7373 = vmatpush1.msra.mxu0 %v7208
    %7374 = vmatprep.subr.mxu0 0.0
    %7375 = vmatpush1.msra.mxu0 %v7209
    %7376 = vmatprep.subr.mxu0 0.0
    %7377 = vmatpush1.msra.mxu0 %v7210
    %7378 = vmatprep.subr.mxu0 0.0
    %7379 = vmatpush1.msra.mxu0 %v7211
    %7380 = vmatprep.subr.mxu0 0.0
    %7381 = vmatpush1.msra.mxu0 %v7212
    %7382 = vmatprep.subr.mxu0 0.0
    %7383 = vmatpush1.msra.mxu0 %v7213
    %7384 = vmatprep.subr.mxu0 0.0
    %7385 = vmatpush1.msra.mxu0 %v7214
    %7386 = vmatprep.subr.mxu0 0.0
    %7387 = vmatpush1.msra.mxu0 %v7215
    %7388 = vmatprep.subr.mxu0 0.0
    %7389 = vmatpush1.msra.mxu0 %v7216
    %7390 = vmatprep.subr.mxu0 0.0
    %7391 = vmatpush1.msra.mxu0 %v7217
    %7392 = vmatprep.subr.mxu0 0.0
    %7393 = vmatpush1.msra.mxu0 %v7218
    %7394 = vmatprep.subr.mxu0 0.0
    %7395 = vmatpush1.msra.mxu0 %v7219
    %7396 = vmatprep.mubr.f32.mxu0 %v7326
    %7397 = vmatmul.mubr.f32.gmra.mrb[0].mxu0 %v7324
    %v7398 = vpop.f32.mrb[0].mxu0
    %v7399 = vadd.f32 0.0, %v7398
    %v7400 = vpop.f32.mrb[0].mxu0
    %7401 = vdwg.mxu0
    %7402 = vmatprep.subr.mxu0 0.0
    %7403 = vmatpush1.msra.mxu0 %v7220
    %7404 = vmatprep.subr.mxu0 0.0
    %7405 = vmatpush1.msra.mxu0 %v7221
    %7406 = vmatprep.subr.mxu0 0.0
    %7407 = vmatpush1.msra.mxu0 %v7222
    %7408 = vmatprep.subr.mxu0 0.0
    %7409 = vmatpush1.msra.mxu0 %v7223
    %7410 = vmatprep.subr.mxu0 0.0
    %7411 = vmatpush1.msra.mxu0 %v7224
    %7412 = vmatprep.subr.mxu0 0.0
    %7413 = vmatpush1.msra.mxu0 %v7225
    %7414 = vmatprep.subr.mxu0 0.0
    %7415 = vmatpush1.msra.mxu0 %v7226
    %7416 = vmatprep.subr.mxu0 0.0
    %7417 = vmatpush1.msra.mxu0 %v7227
    %7418 = vmatprep.subr.mxu0 0.0
    %7419 = vmatpush1.msra.mxu0 %v7228
    %7420 = vmatprep.subr.mxu0 0.0
    %7421 = vmatpush1.msra.mxu0 %v7229
    %7422 = vmatprep.subr.mxu0 0.0
    %7423 = vmatpush1.msra.mxu0 %v7230
    %7424 = vmatprep.subr.mxu0 0.0
    %7425 = vmatpush1.msra.mxu0 %v7231
    %7426 = vmatprep.subr.mxu0 0.0
    %7427 = vmatpush1.msra.mxu0 %v7232
    %7428 = vmatprep.subr.mxu0 0.0
    %7429 = vmatpush1.msra.mxu0 %v7233
    %7430 = vmatprep.subr.mxu0 0.0
    %7431 = vmatpush1.msra.mxu0 %v7234
    %7432 = vmatprep.subr.mxu0 0.0
    %7433 = vmatpush1.msra.mxu0 %v7235
    %7434 = vmatprep.subr.mxu0 0.0
    %7435 = vmatpush1.msra.mxu0 %v7236
    %7436 = vmatprep.subr.mxu0 0.0
    %7437 = vmatpush1.msra.mxu0 %v7237
    %7438 = vmatprep.subr.mxu0 0.0
    %7439 = vmatpush1.msra.mxu0 %v7238
    %7440 = vmatprep.subr.mxu0 0.0
    %7441 = vmatpush1.msra.mxu0 %v7239
    %7442 = vmatprep.subr.mxu0 0.0
    %7443 = vmatpush1.msra.mxu0 %v7240
    %7444 = vmatprep.subr.mxu0 0.0
    %7445 = vmatpush1.msra.mxu0 %v7241
    %7446 = vmatprep.subr.mxu0 0.0
    %7447 = vmatpush1.msra.mxu0 %v7242
    %7448 = vmatprep.subr.mxu0 0.0
    %7449 = vmatpush1.msra.mxu0 %v7243
    %7450 = vmatprep.subr.mxu0 0.0
    %7451 = vmatpush1.msra.mxu0 %v7244
    %7452 = vmatprep.subr.mxu0 0.0
    %7453 = vmatpush1.msra.mxu0 %v7245
    %7454 = vmatprep.subr.mxu0 0.0
    %7455 = vmatpush1.msra.mxu0 %v7246
    %7456 = vmatprep.subr.mxu0 0.0
    %7457 = vmatpush1.msra.mxu0 %v7247
    %7458 = vmatprep.subr.mxu0 0.0
    %7459 = vmatpush1.msra.mxu0 %v7248
    %7460 = vmatprep.subr.mxu0 0.0
    %7461 = vmatpush1.msra.mxu0 %v7249
    %7462 = vmatprep.subr.mxu0 0.0
    %7463 = vmatpush1.msra.mxu0 %v7250
    %7464 = vmatprep.subr.mxu0 0.0
    %7465 = vmatpush1.msra.mxu0 %v7251
    %7466 = vmatprep.mubr.f32.mxu0 %v7327
    %7467 = vmatmul.mubr.f32.gmra.mrb[0].mxu0 %v7325
    %v7468 = vpop.f32.mrb[0].mxu0
    %v7469 = vadd.f32 %v7399, %v7468
    %v7470 = vpop.f32.mrb[0].mxu0
    %7471 = vdwg.mxu0
    %v7480 = vcombine.low %v7092, %v7094
    %v7481 = vcombine.low %v7096, %v7098
    %v7482 = vcombine.low %v7100, %v7102
    %v7483 = vcombine.low %v7104, %v7106
    %v7485 = vunpack.c.l.s4 1966171168
    %v7486 = vunpack.c.0.s8 %v7485
    %v7487 = vlaneseq
    %v7488 = vshrl.u32 %v7487, 7
    %v7489 = vsub.s32 %v7486, %v7488
    %v7490 = vrot.slane %v7480, %v7489
    %v7492 = vunpack.c.l.s4 1966171168
    %v7493 = vunpack.c.0.s8 %v7492
    %v7494 = vlaneseq
    %v7495 = vshrl.u32 %v7494, 7
    %v7496 = vsub.s32 %v7493, %v7495
    %v7497 = vrot.slane %v7481, %v7496
    %v7499 = vunpack.c.l.s4 1966171168
    %v7500 = vunpack.c.0.s8 %v7499
    %v7501 = vlaneseq
    %v7502 = vshrl.u32 %v7501, 7
    %v7503 = vsub.s32 %v7500, %v7502
    %v7504 = vrot.slane %v7482, %v7503
    %v7506 = vunpack.c.l.s4 1966171168
    %v7507 = vunpack.c.0.s8 %v7506
    %v7508 = vlaneseq
    %v7509 = vshrl.u32 %v7508, 7
    %v7510 = vsub.s32 %v7507, %v7509
    %v7511 = vrot.slane %v7483, %v7510
    %v7512 = vcombine.low %v7490, %v7497
    %v7513 = vcombine.high %v7490, %v7497
    %v7514 = vcombine.low %v7504, %v7511
    %v7515 = vcombine.high %v7504, %v7511
    %v7517 = vunpack.c.l.s4 1966171168
    %v7518 = vunpack.c.0.s8 %v7517
    %v7519 = vlaneseq
    %v7520 = vshrl.u32 %v7519, 7
    %v7521 = vsub.s32 %v7518, %v7520
    %v7522 = vrot.slane %v7512, %v7521
    %v7524 = vunpack.c.l.s4 1966171168
    %v7525 = vunpack.c.0.s8 %v7524
    %v7526 = vlaneseq
    %v7527 = vshrl.u32 %v7526, 7
    %v7528 = vsub.s32 %v7525, %v7527
    %v7529 = vrot.slane %v7513, %v7528
    %v7531 = vunpack.c.l.s4 1966171168
    %v7532 = vunpack.c.0.s8 %v7531
    %v7533 = vlaneseq
    %v7534 = vshrl.u32 %v7533, 7
    %v7535 = vsub.s32 %v7532, %v7534
    %v7536 = vrot.slane %v7514, %v7535
    %v7538 = vunpack.c.l.s4 1966171168
    %v7539 = vunpack.c.0.s8 %v7538
    %v7540 = vlaneseq
    %v7541 = vshrl.u32 %v7540, 7
    %v7542 = vsub.s32 %v7539, %v7541
    %v7543 = vrot.slane %v7515, %v7542
    %v7544 = vcombine.low %v7522, %v7536
    %v7545 = vcombine.high %v7522, %v7536
    %v7546 = vcombine.low %v7529, %v7543
    %v7547 = vcombine.high %v7529, %v7543
    %7552 = vmatprep.subr.mxu0 0.0
    %7553 = vmatpush1.msra.mxu0 %v7107
    %7554 = vmatprep.subr.mxu0 0.0
    %7555 = vmatpush1.msra.mxu0 %v7108
    %7556 = vmatprep.subr.mxu0 0.0
    %7557 = vmatpush1.msra.mxu0 %v7109
    %7558 = vmatprep.subr.mxu0 0.0
    %7559 = vmatpush1.msra.mxu0 %v7110
    %7560 = vmatprep.subr.mxu0 0.0
    %7561 = vmatpush1.msra.mxu0 %v7111
    %7562 = vmatprep.subr.mxu0 0.0
    %7563 = vmatpush1.msra.mxu0 %v7112
    %7564 = vmatprep.subr.mxu0 0.0
    %7565 = vmatpush1.msra.mxu0 %v7113
    %7566 = vmatprep.subr.mxu0 0.0
    %7567 = vmatpush1.msra.mxu0 %v7114
    %7568 = vmatprep.subr.mxu0 0.0
    %7569 = vmatpush1.msra.mxu0 %v7115
    %7570 = vmatprep.subr.mxu0 0.0
    %7571 = vmatpush1.msra.mxu0 %v7116
    %7572 = vmatprep.subr.mxu0 0.0
    %7573 = vmatpush1.msra.mxu0 %v7117
    %7574 = vmatprep.subr.mxu0 0.0
    %7575 = vmatpush1.msra.mxu0 %v7118
    %7576 = vmatprep.subr.mxu0 0.0
    %7577 = vmatpush1.msra.mxu0 %v7119
    %7578 = vmatprep.subr.mxu0 0.0
    %7579 = vmatpush1.msra.mxu0 %v7120
    %7580 = vmatprep.subr.mxu0 0.0
    %7581 = vmatpush1.msra.mxu0 %v7121
    %7582 = vmatprep.subr.mxu0 0.0
    %7583 = vmatpush1.msra.mxu0 %v7122
    %7584 = vmatprep.subr.mxu0 0.0
    %7585 = vmatpush1.msra.mxu0 %v7123
    %7586 = vmatprep.subr.mxu0 0.0
    %7587 = vmatpush1.msra.mxu0 %v7124
    %7588 = vmatprep.subr.mxu0 0.0
    %7589 = vmatpush1.msra.mxu0 %v7125
    %7590 = vmatprep.subr.mxu0 0.0
    %7591 = vmatpush1.msra.mxu0 %v7126
    %7592 = vmatprep.subr.mxu0 0.0
    %7593 = vmatpush1.msra.mxu0 %v7127
    %7594 = vmatprep.subr.mxu0 0.0
    %7595 = vmatpush1.msra.mxu0 %v7128
    %7596 = vmatprep.subr.mxu0 0.0
    %7597 = vmatpush1.msra.mxu0 %v7129
    %7598 = vmatprep.subr.mxu0 0.0
    %7599 = vmatpush1.msra.mxu0 %v7130
    %7600 = vmatprep.subr.mxu0 0.0
    %7601 = vmatpush1.msra.mxu0 %v7131
    %7602 = vmatprep.subr.mxu0 0.0
    %7603 = vmatpush1.msra.mxu0 %v7132
    %7604 = vmatprep.subr.mxu0 0.0
    %7605 = vmatpush1.msra.mxu0 %v7133
    %7606 = vmatprep.subr.mxu0 0.0
    %7607 = vmatpush1.msra.mxu0 %v7134
    %7608 = vmatprep.subr.mxu0 0.0
    %7609 = vmatpush1.msra.mxu0 %v7135
    %7610 = vmatprep.subr.mxu0 0.0
    %7611 = vmatpush1.msra.mxu0 %v7136
    %7612 = vmatprep.subr.mxu0 0.0
    %7613 = vmatpush1.msra.mxu0 %v7137
    %7614 = vmatprep.subr.mxu0 0.0
    %7615 = vmatpush1.msra.mxu0 %v7138
    %7616 = vmatprep.mubr.f32.mxu0 %v7546
    %7617 = vmatmul.mubr.f32.gmra.mrb[0].mxu0 %v7544
    %v7618 = vpop.f32.mrb[0].mxu0
    %v7619 = vadd.f32 %v7469, %v7618
    %v7620 = vpop.f32.mrb[0].mxu0
    %7621 = vdwg.mxu0
    %7622 = vmatprep.subr.mxu0 0.0
    %7623 = vmatpush1.msra.mxu0 %v7139
    %7624 = vmatprep.subr.mxu0 0.0
    %7625 = vmatpush1.msra.mxu0 %v7140
    %7626 = vmatprep.subr.mxu0 0.0
    %7627 = vmatpush1.msra.mxu0 %v7141
    %7628 = vmatprep.subr.mxu0 0.0
    %7629 = vmatpush1.msra.mxu0 %v7142
    %7630 = vmatprep.subr.mxu0 0.0
    %7631 = vmatpush1.msra.mxu0 %v7143
    %7632 = vmatprep.subr.mxu0 0.0
    %7633 = vmatpush1.msra.mxu0 %v7144
    %7634 = vmatprep.subr.mxu0 0.0
    %7635 = vmatpush1.msra.mxu0 %v7145
    %7636 = vmatprep.subr.mxu0 0.0
    %7637 = vmatpush1.msra.mxu0 %v7146
    %7638 = vmatprep.subr.mxu0 0.0
    %7639 = vmatpush1.msra.mxu0 %v7147
    %7640 = vmatprep.subr.mxu0 0.0
    %7641 = vmatpush1.msra.mxu0 %v7148
    %7642 = vmatprep.subr.mxu0 0.0
    %7643 = vmatpush1.msra.mxu0 %v7149
    %7644 = vmatprep.subr.mxu0 0.0
    %7645 = vmatpush1.msra.mxu0 %v7150
    %7646 = vmatprep.subr.mxu0 0.0
    %7647 = vmatpush1.msra.mxu0 %v7151
    %7648 = vmatprep.subr.mxu0 0.0
    %7649 = vmatpush1.msra.mxu0 %v7152
    %7650 = vmatprep.subr.mxu0 0.0
    %7651 = vmatpush1.msra.mxu0 %v7153
    %7652 = vmatprep.subr.mxu0 0.0
    %7653 = vmatpush1.msra.mxu0 %v7154
    %7654 = vmatprep.subr.mxu0 0.0
    %7655 = vmatpush1.msra.mxu0 %v7155
    %7656 = vmatprep.subr.mxu0 0.0
    %7657 = vmatpush1.msra.mxu0 %v7156
    %7658 = vmatprep.subr.mxu0 0.0
    %7659 = vmatpush1.msra.mxu0 %v7157
    %7660 = vmatprep.subr.mxu0 0.0
    %7661 = vmatpush1.msra.mxu0 %v7158
    %7662 = vmatprep.subr.mxu0 0.0
    %7663 = vmatpush1.msra.mxu0 %v7159
    %7664 = vmatprep.subr.mxu0 0.0
    %7665 = vmatpush1.msra.mxu0 %v7160
    %7666 = vmatprep.subr.mxu0 0.0
    %7667 = vmatpush1.msra.mxu0 %v7161
    %7668 = vmatprep.subr.mxu0 0.0
    %7669 = vmatpush1.msra.mxu0 %v7162
    %7670 = vmatprep.subr.mxu0 0.0
    %7671 = vmatpush1.msra.mxu0 %v7163
    %7672 = vmatprep.subr.mxu0 0.0
    %7673 = vmatpush1.msra.mxu0 %v7164
    %7674 = vmatprep.subr.mxu0 0.0
    %7675 = vmatpush1.msra.mxu0 %v7165
    %7676 = vmatprep.subr.mxu0 0.0
    %7677 = vmatpush1.msra.mxu0 %v7166
    %7678 = vmatprep.subr.mxu0 0.0
    %7679 = vmatpush1.msra.mxu0 %v7167
    %7680 = vmatprep.subr.mxu0 0.0
    %7681 = vmatpush1.msra.mxu0 %v7168
    %7682 = vmatprep.subr.mxu0 0.0
    %7683 = vmatpush1.msra.mxu0 %v7169
    %7684 = vmatprep.subr.mxu0 0.0
    %7685 = vmatpush1.msra.mxu0 %v7170
    %7686 = vmatprep.mubr.f32.mxu0 %v7547
    %7687 = vmatmul.mubr.f32.gmra.mrb[0].mxu0 %v7545
    %v7688 = vpop.f32.mrb[0].mxu0
    %v7689 = vadd.f32 %v7619, %v7688
    %v7690 = vpop.f32.mrb[0].mxu0
    %7691 = vdwg.mxu0
    %s7692 = scalar_lea.vmem [#allocation4], 3
    %v7693 = vld [vmem:[%s7692] ss:$8 sm:$0xf]
    %s7694 = scalar_lea.vmem [#allocation4], 35
    %v7695 = vld [vmem:[%s7694] ss:$8 sm:$0xf]
    %s7696 = scalar_lea.vmem [#allocation4], 67
    %v7697 = vld [vmem:[%s7696] ss:$8 sm:$0xf]
    %s7698 = scalar_lea.vmem [#allocation4], 99
    %v7699 = vld [vmem:[%s7698] ss:$8 sm:$0xf]
    %s7700 = scalar_lea.vmem [#allocation4], 131
    %v7701 = vld [vmem:[%s7700] ss:$8 sm:$0xf]
    %s7702 = scalar_lea.vmem [#allocation4], 163
    %v7703 = vld [vmem:[%s7702] ss:$8 sm:$0xf]
    %s7704 = scalar_lea.vmem [#allocation4], 195
    %v7705 = vld [vmem:[%s7704] ss:$8 sm:$0xf]
    %s7706 = scalar_lea.vmem [#allocation4], 227
    %v7707 = vld [vmem:[%s7706] ss:$8 sm:$0xf]
    %s7708 = scalar_lea.vmem [#allocation16], 1024
    %v7709 = vld [vmem:[%s7708] sm:$0xff]
    %v7710 = vld [vmem:[%s7708 + $0x8] sm:$0xff]
    %v7711 = vld [vmem:[%s7708 + $0x10] sm:$0xff]
    %v7712 = vld [vmem:[%s7708 + $0x18] sm:$0xff]
    %v7713 = vld [vmem:[%s7708 + $0x20] sm:$0xff]
    %v7714 = vld [vmem:[%s7708 + $0x28] sm:$0xff]
    %v7715 = vld [vmem:[%s7708 + $0x30] sm:$0xff]
    %v7716 = vld [vmem:[%s7708 + $0x38] sm:$0xff]
    %v7717 = vld [vmem:[%s7708 + $0x40] sm:$0xff]
    %v7718 = vld [vmem:[%s7708 + $0x48] sm:$0xff]
    %v7719 = vld [vmem:[%s7708 + $0x50] sm:$0xff]
    %v7720 = vld [vmem:[%s7708 + $0x58] sm:$0xff]
    %v7721 = vld [vmem:[%s7708 + $0x60] sm:$0xff]
    %v7722 = vld [vmem:[%s7708 + $0x68] sm:$0xff]
    %v7723 = vld [vmem:[%s7708 + $0x70] sm:$0xff]
    %v7724 = vld [vmem:[%s7708 + $0x78] sm:$0xff]
    %v7725 = vld [vmem:[%s7708 + $0x80] sm:$0xff]
    %v7726 = vld [vmem:[%s7708 + $0x88] sm:$0xff]
    %v7727 = vld [vmem:[%s7708 + $0x90] sm:$0xff]
    %v7728 = vld [vmem:[%s7708 + $0x98] sm:$0xff]
    %v7729 = vld [vmem:[%s7708 + $0xa0] sm:$0xff]
    %v7730 = vld [vmem:[%s7708 + $0xa8] sm:$0xff]
    %v7731 = vld [vmem:[%s7708 + $0xb0] sm:$0xff]
    %v7732 = vld [vmem:[%s7708 + $0xb8] sm:$0xff]
    %v7733 = vld [vmem:[%s7708 + $0xc0] sm:$0xff]
    %v7734 = vld [vmem:[%s7708 + $0xc8] sm:$0xff]
    %v7735 = vld [vmem:[%s7708 + $0xd0] sm:$0xff]
    %v7736 = vld [vmem:[%s7708 + $0xd8] sm:$0xff]
    %v7737 = vld [vmem:[%s7708 + $0xe0] sm:$0xff]
    %v7738 = vld [vmem:[%s7708 + $0xe8] sm:$0xff]
    %v7739 = vld [vmem:[%s7708 + $0xf0] sm:$0xff]
    %v7740 = vld [vmem:[%s7708 + $0xf8] sm:$0xff]
    %v7741 = vld [vmem:[%s7708 + $0x100] sm:$0xff]
    %v7742 = vld [vmem:[%s7708 + $0x108] sm:$0xff]
    %v7743 = vld [vmem:[%s7708 + $0x110] sm:$0xff]
    %v7744 = vld [vmem:[%s7708 + $0x118] sm:$0xff]
    %v7745 = vld [vmem:[%s7708 + $0x120] sm:$0xff]
    %v7746 = vld [vmem:[%s7708 + $0x128] sm:$0xff]
    %v7747 = vld [vmem:[%s7708 + $0x130] sm:$0xff]
    %v7748 = vld [vmem:[%s7708 + $0x138] sm:$0xff]
    %v7749 = vld [vmem:[%s7708 + $0x140] sm:$0xff]
    %v7750 = vld [vmem:[%s7708 + $0x148] sm:$0xff]
    %v7751 = vld [vmem:[%s7708 + $0x150] sm:$0xff]
    %v7752 = vld [vmem:[%s7708 + $0x158] sm:$0xff]
    %v7753 = vld [vmem:[%s7708 + $0x160] sm:$0xff]
    %v7754 = vld [vmem:[%s7708 + $0x168] sm:$0xff]
    %v7755 = vld [vmem:[%s7708 + $0x170] sm:$0xff]
    %v7756 = vld [vmem:[%s7708 + $0x178] sm:$0xff]
    %v7757 = vld [vmem:[%s7708 + $0x180] sm:$0xff]
    %v7758 = vld [vmem:[%s7708 + $0x188] sm:$0xff]
    %v7759 = vld [vmem:[%s7708 + $0x190] sm:$0xff]
    %v7760 = vld [vmem:[%s7708 + $0x198] sm:$0xff]
    %v7761 = vld [vmem:[%s7708 + $0x1a0] sm:$0xff]
    %v7762 = vld [vmem:[%s7708 + $0x1a8] sm:$0xff]
    %v7763 = vld [vmem:[%s7708 + $0x1b0] sm:$0xff]
    %v7764 = vld [vmem:[%s7708 + $0x1b8] sm:$0xff]
    %v7765 = vld [vmem:[%s7708 + $0x1c0] sm:$0xff]
    %v7766 = vld [vmem:[%s7708 + $0x1c8] sm:$0xff]
    %v7767 = vld [vmem:[%s7708 + $0x1d0] sm:$0xff]
    %v7768 = vld [vmem:[%s7708 + $0x1d8] sm:$0xff]
    %v7769 = vld [vmem:[%s7708 + $0x1e0] sm:$0xff]
    %v7770 = vld [vmem:[%s7708 + $0x1e8] sm:$0xff]
    %v7771 = vld [vmem:[%s7708 + $0x1f0] sm:$0xff]
    %v7772 = vld [vmem:[%s7708 + $0x1f8] sm:$0xff]
    %v7781 = vcombine.low %v7693, %v7695
    %v7782 = vcombine.low %v7697, %v7699
    %v7783 = vcombine.low %v7701, %v7703
    %v7784 = vcombine.low %v7705, %v7707
    %v7786 = vunpack.c.l.s4 1966171168
    %v7787 = vunpack.c.0.s8 %v7786
    %v7788 = vlaneseq
    %v7789 = vshrl.u32 %v7788, 7
    %v7790 = vsub.s32 %v7787, %v7789
    %v7791 = vrot.slane %v7781, %v7790
    %v7793 = vunpack.c.l.s4 1966171168
    %v7794 = vunpack.c.0.s8 %v7793
    %v7795 = vlaneseq
    %v7796 = vshrl.u32 %v7795, 7
    %v7797 = vsub.s32 %v7794, %v7796
    %v7798 = vrot.slane %v7782, %v7797
    %v7800 = vunpack.c.l.s4 1966171168
    %v7801 = vunpack.c.0.s8 %v7800
    %v7802 = vlaneseq
    %v7803 = vshrl.u32 %v7802, 7
    %v7804 = vsub.s32 %v7801, %v7803
    %v7805 = vrot.slane %v7783, %v7804
    %v7807 = vunpack.c.l.s4 1966171168
    %v7808 = vunpack.c.0.s8 %v7807
    %v7809 = vlaneseq
    %v7810 = vshrl.u32 %v7809, 7
    %v7811 = vsub.s32 %v7808, %v7810
    %v7812 = vrot.slane %v7784, %v7811
    %v7813 = vcombine.low %v7791, %v7798
    %v7814 = vcombine.high %v7791, %v7798
    %v7815 = vcombine.low %v7805, %v7812
    %v7816 = vcombine.high %v7805, %v7812
    %v7818 = vunpack.c.l.s4 1966171168
    %v7819 = vunpack.c.0.s8 %v7818
    %v7820 = vlaneseq
    %v7821 = vshrl.u32 %v7820, 7
    %v7822 = vsub.s32 %v7819, %v7821
    %v7823 = vrot.slane %v7813, %v7822
    %v7825 = vunpack.c.l.s4 1966171168
    %v7826 = vunpack.c.0.s8 %v7825
    %v7827 = vlaneseq
    %v7828 = vshrl.u32 %v7827, 7
    %v7829 = vsub.s32 %v7826, %v7828
    %v7830 = vrot.slane %v7814, %v7829
    %v7832 = vunpack.c.l.s4 1966171168
    %v7833 = vunpack.c.0.s8 %v7832
    %v7834 = vlaneseq
    %v7835 = vshrl.u32 %v7834, 7
    %v7836 = vsub.s32 %v7833, %v7835
    %v7837 = vrot.slane %v7815, %v7836
    %v7839 = vunpack.c.l.s4 1966171168
    %v7840 = vunpack.c.0.s8 %v7839
    %v7841 = vlaneseq
    %v7842 = vshrl.u32 %v7841, 7
    %v7843 = vsub.s32 %v7840, %v7842
    %v7844 = vrot.slane %v7816, %v7843
    %v7845 = vcombine.low %v7823, %v7837
    %v7846 = vcombine.high %v7823, %v7837
    %v7847 = vcombine.low %v7830, %v7844
    %v7848 = vcombine.high %v7830, %v7844
    %7853 = vmatprep.subr.mxu0 0.0
    %7854 = vmatpush1.msra.mxu0 %v7709
    %7855 = vmatprep.subr.mxu0 0.0
    %7856 = vmatpush1.msra.mxu0 %v7710
    %7857 = vmatprep.subr.mxu0 0.0
    %7858 = vmatpush1.msra.mxu0 %v7711
    %7859 = vmatprep.subr.mxu0 0.0
    %7860 = vmatpush1.msra.mxu0 %v7712
    %7861 = vmatprep.subr.mxu0 0.0
    %7862 = vmatpush1.msra.mxu0 %v7713
    %7863 = vmatprep.subr.mxu0 0.0
    %7864 = vmatpush1.msra.mxu0 %v7714
    %7865 = vmatprep.subr.mxu0 0.0
    %7866 = vmatpush1.msra.mxu0 %v7715
    %7867 = vmatprep.subr.mxu0 0.0
    %7868 = vmatpush1.msra.mxu0 %v7716
    %7869 = vmatprep.subr.mxu0 0.0
    %7870 = vmatpush1.msra.mxu0 %v7717
    %7871 = vmatprep.subr.mxu0 0.0
    %7872 = vmatpush1.msra.mxu0 %v7718
    %7873 = vmatprep.subr.mxu0 0.0
    %7874 = vmatpush1.msra.mxu0 %v7719
    %7875 = vmatprep.subr.mxu0 0.0
    %7876 = vmatpush1.msra.mxu0 %v7720
    %7877 = vmatprep.subr.mxu0 0.0
    %7878 = vmatpush1.msra.mxu0 %v7721
    %7879 = vmatprep.subr.mxu0 0.0
    %7880 = vmatpush1.msra.mxu0 %v7722
    %7881 = vmatprep.subr.mxu0 0.0
    %7882 = vmatpush1.msra.mxu0 %v7723
    %7883 = vmatprep.subr.mxu0 0.0
    %7884 = vmatpush1.msra.mxu0 %v7724
    %7885 = vmatprep.subr.mxu0 0.0
    %7886 = vmatpush1.msra.mxu0 %v7725
    %7887 = vmatprep.subr.mxu0 0.0
    %7888 = vmatpush1.msra.mxu0 %v7726
    %7889 = vmatprep.subr.mxu0 0.0
    %7890 = vmatpush1.msra.mxu0 %v7727
    %7891 = vmatprep.subr.mxu0 0.0
    %7892 = vmatpush1.msra.mxu0 %v7728
    %7893 = vmatprep.subr.mxu0 0.0
    %7894 = vmatpush1.msra.mxu0 %v7729
    %7895 = vmatprep.subr.mxu0 0.0
    %7896 = vmatpush1.msra.mxu0 %v7730
    %7897 = vmatprep.subr.mxu0 0.0
    %7898 = vmatpush1.msra.mxu0 %v7731
    %7899 = vmatprep.subr.mxu0 0.0
    %7900 = vmatpush1.msra.mxu0 %v7732
    %7901 = vmatprep.subr.mxu0 0.0
    %7902 = vmatpush1.msra.mxu0 %v7733
    %7903 = vmatprep.subr.mxu0 0.0
    %7904 = vmatpush1.msra.mxu0 %v7734
    %7905 = vmatprep.subr.mxu0 0.0
    %7906 = vmatpush1.msra.mxu0 %v7735
    %7907 = vmatprep.subr.mxu0 0.0
    %7908 = vmatpush1.msra.mxu0 %v7736
    %7909 = vmatprep.subr.mxu0 0.0
    %7910 = vmatpush1.msra.mxu0 %v7737
    %7911 = vmatprep.subr.mxu0 0.0
    %7912 = vmatpush1.msra.mxu0 %v7738
    %7913 = vmatprep.subr.mxu0 0.0
    %7914 = vmatpush1.msra.mxu0 %v7739
    %7915 = vmatprep.subr.mxu0 0.0
    %7916 = vmatpush1.msra.mxu0 %v7740
    %7917 = vmatprep.mubr.f32.mxu0 %v7847
    %7918 = vmatmul.mubr.f32.gmra.mrb[0].mxu0 %v7845
    %v7919 = vpop.f32.mrb[0].mxu0
    %v7920 = vadd.f32 0.0, %v7919
    %v7921 = vpop.f32.mrb[0].mxu0
    %7922 = vdwg.mxu0
    %7923 = vmatprep.subr.mxu0 0.0
    %7924 = vmatpush1.msra.mxu0 %v7741
    %7925 = vmatprep.subr.mxu0 0.0
    %7926 = vmatpush1.msra.mxu0 %v7742
    %7927 = vmatprep.subr.mxu0 0.0
    %7928 = vmatpush1.msra.mxu0 %v7743
    %7929 = vmatprep.subr.mxu0 0.0
    %7930 = vmatpush1.msra.mxu0 %v7744
    %7931 = vmatprep.subr.mxu0 0.0
    %7932 = vmatpush1.msra.mxu0 %v7745
    %7933 = vmatprep.subr.mxu0 0.0
    %7934 = vmatpush1.msra.mxu0 %v7746
    %7935 = vmatprep.subr.mxu0 0.0
    %7936 = vmatpush1.msra.mxu0 %v7747
    %7937 = vmatprep.subr.mxu0 0.0
    %7938 = vmatpush1.msra.mxu0 %v7748
    %7939 = vmatprep.subr.mxu0 0.0
    %7940 = vmatpush1.msra.mxu0 %v7749
    %7941 = vmatprep.subr.mxu0 0.0
    %7942 = vmatpush1.msra.mxu0 %v7750
    %7943 = vmatprep.subr.mxu0 0.0
    %7944 = vmatpush1.msra.mxu0 %v7751
    %7945 = vmatprep.subr.mxu0 0.0
    %7946 = vmatpush1.msra.mxu0 %v7752
    %7947 = vmatprep.subr.mxu0 0.0
    %7948 = vmatpush1.msra.mxu0 %v7753
    %7949 = vmatprep.subr.mxu0 0.0
    %7950 = vmatpush1.msra.mxu0 %v7754
    %7951 = vmatprep.subr.mxu0 0.0
    %7952 = vmatpush1.msra.mxu0 %v7755
    %7953 = vmatprep.subr.mxu0 0.0
    %7954 = vmatpush1.msra.mxu0 %v7756
    %7955 = vmatprep.subr.mxu0 0.0
    %7956 = vmatpush1.msra.mxu0 %v7757
    %7957 = vmatprep.subr.mxu0 0.0
    %7958 = vmatpush1.msra.mxu0 %v7758
    %7959 = vmatprep.subr.mxu0 0.0
    %7960 = vmatpush1.msra.mxu0 %v7759
    %7961 = vmatprep.subr.mxu0 0.0
    %7962 = vmatpush1.msra.mxu0 %v7760
    %7963 = vmatprep.subr.mxu0 0.0
    %7964 = vmatpush1.msra.mxu0 %v7761
    %7965 = vmatprep.subr.mxu0 0.0
    %7966 = vmatpush1.msra.mxu0 %v7762
    %7967 = vmatprep.subr.mxu0 0.0
    %7968 = vmatpush1.msra.mxu0 %v7763
    %7969 = vmatprep.subr.mxu0 0.0
    %7970 = vmatpush1.msra.mxu0 %v7764
    %7971 = vmatprep.subr.mxu0 0.0
    %7972 = vmatpush1.msra.mxu0 %v7765
    %7973 = vmatprep.subr.mxu0 0.0
    %7974 = vmatpush1.msra.mxu0 %v7766
    %7975 = vmatprep.subr.mxu0 0.0
    %7976 = vmatpush1.msra.mxu0 %v7767
    %7977 = vmatprep.subr.mxu0 0.0
    %7978 = vmatpush1.msra.mxu0 %v7768
    %7979 = vmatprep.subr.mxu0 0.0
    %7980 = vmatpush1.msra.mxu0 %v7769
    %7981 = vmatprep.subr.mxu0 0.0
    %7982 = vmatpush1.msra.mxu0 %v7770
    %7983 = vmatprep.subr.mxu0 0.0
    %7984 = vmatpush1.msra.mxu0 %v7771
    %7985 = vmatprep.subr.mxu0 0.0
    %7986 = vmatpush1.msra.mxu0 %v7772
    %7987 = vmatprep.mubr.f32.mxu0 %v7848
    %7988 = vmatmul.mubr.f32.gmra.mrb[0].mxu0 %v7846
    %v7989 = vpop.f32.mrb[0].mxu0
    %v7990 = vadd.f32 %v7920, %v7989
    %v7991 = vpop.f32.mrb[0].mxu0
    %7992 = vdwg.mxu0
    %v7993 = vadd.f32 %v7689, %v7990
    %s7994 = scalar_lea.vmem [#allocation4], 4
    %v7995 = vld [vmem:[%s7994] ss:$8 sm:$0xf]
    %s7996 = scalar_lea.vmem [#allocation4], 36
    %v7997 = vld [vmem:[%s7996] ss:$8 sm:$0xf]
    %s7998 = scalar_lea.vmem [#allocation4], 68
    %v7999 = vld [vmem:[%s7998] ss:$8 sm:$0xf]
    %s8000 = scalar_lea.vmem [#allocation4], 100
    %v8001 = vld [vmem:[%s8000] ss:$8 sm:$0xf]
    %s8002 = scalar_lea.vmem [#allocation4], 132
    %v8003 = vld [vmem:[%s8002] ss:$8 sm:$0xf]
    %s8004 = scalar_lea.vmem [#allocation4], 164
    %v8005 = vld [vmem:[%s8004] ss:$8 sm:$0xf]
    %s8006 = scalar_lea.vmem [#allocation4], 196
    %v8007 = vld [vmem:[%s8006] ss:$8 sm:$0xf]
    %s8008 = scalar_lea.vmem [#allocation4], 228
    %v8009 = vld [vmem:[%s8008] ss:$8 sm:$0xf]
    %s8010 = scalar_lea.vmem [#allocation16], 1536
    %v8011 = vld [vmem:[%s8010] sm:$0xff]
    %v8012 = vld [vmem:[%s8010 + $0x8] sm:$0xff]
    %v8013 = vld [vmem:[%s8010 + $0x10] sm:$0xff]
    %v8014 = vld [vmem:[%s8010 + $0x18] sm:$0xff]
    %v8015 = vld [vmem:[%s8010 + $0x20] sm:$0xff]
    %v8016 = vld [vmem:[%s8010 + $0x28] sm:$0xff]
    %v8017 = vld [vmem:[%s8010 + $0x30] sm:$0xff]
    %v8018 = vld [vmem:[%s8010 + $0x38] sm:$0xff]
    %v8019 = vld [vmem:[%s8010 + $0x40] sm:$0xff]
    %v8020 = vld [vmem:[%s8010 + $0x48] sm:$0xff]
    %v8021 = vld [vmem:[%s8010 + $0x50] sm:$0xff]
    %v8022 = vld [vmem:[%s8010 + $0x58] sm:$0xff]
    %v8023 = vld [vmem:[%s8010 + $0x60] sm:$0xff]
    %v8024 = vld [vmem:[%s8010 + $0x68] sm:$0xff]
    %v8025 = vld [vmem:[%s8010 + $0x70] sm:$0xff]
    %v8026 = vld [vmem:[%s8010 + $0x78] sm:$0xff]
    %v8027 = vld [vmem:[%s8010 + $0x80] sm:$0xff]
    %v8028 = vld [vmem:[%s8010 + $0x88] sm:$0xff]
    %v8029 = vld [vmem:[%s8010 + $0x90] sm:$0xff]
    %v8030 = vld [vmem:[%s8010 + $0x98] sm:$0xff]
    %v8031 = vld [vmem:[%s8010 + $0xa0] sm:$0xff]
    %v8032 = vld [vmem:[%s8010 + $0xa8] sm:$0xff]
    %v8033 = vld [vmem:[%s8010 + $0xb0] sm:$0xff]
    %v8034 = vld [vmem:[%s8010 + $0xb8] sm:$0xff]
    %v8035 = vld [vmem:[%s8010 + $0xc0] sm:$0xff]
    %v8036 = vld [vmem:[%s8010 + $0xc8] sm:$0xff]
    %v8037 = vld [vmem:[%s8010 + $0xd0] sm:$0xff]
    %v8038 = vld [vmem:[%s8010 + $0xd8] sm:$0xff]
    %v8039 = vld [vmem:[%s8010 + $0xe0] sm:$0xff]
    %v8040 = vld [vmem:[%s8010 + $0xe8] sm:$0xff]
    %v8041 = vld [vmem:[%s8010 + $0xf0] sm:$0xff]
    %v8042 = vld [vmem:[%s8010 + $0xf8] sm:$0xff]
    %v8043 = vld [vmem:[%s8010 + $0x100] sm:$0xff]
    %v8044 = vld [vmem:[%s8010 + $0x108] sm:$0xff]
    %v8045 = vld [vmem:[%s8010 + $0x110] sm:$0xff]
    %v8046 = vld [vmem:[%s8010 + $0x118] sm:$0xff]
    %v8047 = vld [vmem:[%s8010 + $0x120] sm:$0xff]
    %v8048 = vld [vmem:[%s8010 + $0x128] sm:$0xff]
    %v8049 = vld [vmem:[%s8010 + $0x130] sm:$0xff]
    %v8050 = vld [vmem:[%s8010 + $0x138] sm:$0xff]
    %v8051 = vld [vmem:[%s8010 + $0x140] sm:$0xff]
    %v8052 = vld [vmem:[%s8010 + $0x148] sm:$0xff]
    %v8053 = vld [vmem:[%s8010 + $0x150] sm:$0xff]
    %v8054 = vld [vmem:[%s8010 + $0x158] sm:$0xff]
    %v8055 = vld [vmem:[%s8010 + $0x160] sm:$0xff]
    %v8056 = vld [vmem:[%s8010 + $0x168] sm:$0xff]
    %v8057 = vld [vmem:[%s8010 + $0x170] sm:$0xff]
    %v8058 = vld [vmem:[%s8010 + $0x178] sm:$0xff]
    %v8059 = vld [vmem:[%s8010 + $0x180] sm:$0xff]
    %v8060 = vld [vmem:[%s8010 + $0x188] sm:$0xff]
    %v8061 = vld [vmem:[%s8010 + $0x190] sm:$0xff]
    %v8062 = vld [vmem:[%s8010 + $0x198] sm:$0xff]
    %v8063 = vld [vmem:[%s8010 + $0x1a0] sm:$0xff]
    %v8064 = vld [vmem:[%s8010 + $0x1a8] sm:$0xff]
    %v8065 = vld [vmem:[%s8010 + $0x1b0] sm:$0xff]
    %v8066 = vld [vmem:[%s8010 + $0x1b8] sm:$0xff]
    %v8067 = vld [vmem:[%s8010 + $0x1c0] sm:$0xff]
    %v8068 = vld [vmem:[%s8010 + $0x1c8] sm:$0xff]
    %v8069 = vld [vmem:[%s8010 + $0x1d0] sm:$0xff]
    %v8070 = vld [vmem:[%s8010 + $0x1d8] sm:$0xff]
    %v8071 = vld [vmem:[%s8010 + $0x1e0] sm:$0xff]
    %v8072 = vld [vmem:[%s8010 + $0x1e8] sm:$0xff]
    %v8073 = vld [vmem:[%s8010 + $0x1f0] sm:$0xff]
    %v8074 = vld [vmem:[%s8010 + $0x1f8] sm:$0xff]
    %v8083 = vcombine.low %v7995, %v7997
    %v8084 = vcombine.low %v7999, %v8001
    %v8085 = vcombine.low %v8003, %v8005
    %v8086 = vcombine.low %v8007, %v8009
    %v8088 = vunpack.c.l.s4 1966171168
    %v8089 = vunpack.c.0.s8 %v8088
    %v8090 = vlaneseq
    %v8091 = vshrl.u32 %v8090, 7
    %v8092 = vsub.s32 %v8089, %v8091
    %v8093 = vrot.slane %v8083, %v8092
    %v8095 = vunpack.c.l.s4 1966171168
    %v8096 = vunpack.c.0.s8 %v8095
    %v8097 = vlaneseq
    %v8098 = vshrl.u32 %v8097, 7
    %v8099 = vsub.s32 %v8096, %v8098
    %v8100 = vrot.slane %v8084, %v8099
    %v8102 = vunpack.c.l.s4 1966171168
    %v8103 = vunpack.c.0.s8 %v8102
    %v8104 = vlaneseq
    %v8105 = vshrl.u32 %v8104, 7
    %v8106 = vsub.s32 %v8103, %v8105
    %v8107 = vrot.slane %v8085, %v8106
    %v8109 = vunpack.c.l.s4 1966171168
    %v8110 = vunpack.c.0.s8 %v8109
    %v8111 = vlaneseq
    %v8112 = vshrl.u32 %v8111, 7
    %v8113 = vsub.s32 %v8110, %v8112
    %v8114 = vrot.slane %v8086, %v8113
    %v8115 = vcombine.low %v8093, %v8100
    %v8116 = vcombine.high %v8093, %v8100
    %v8117 = vcombine.low %v8107, %v8114
    %v8118 = vcombine.high %v8107, %v8114
    %v8120 = vunpack.c.l.s4 1966171168
    %v8121 = vunpack.c.0.s8 %v8120
    %v8122 = vlaneseq
    %v8123 = vshrl.u32 %v8122, 7
    %v8124 = vsub.s32 %v8121, %v8123
    %v8125 = vrot.slane %v8115, %v8124
    %v8127 = vunpack.c.l.s4 1966171168
    %v8128 = vunpack.c.0.s8 %v8127
    %v8129 = vlaneseq
    %v8130 = vshrl.u32 %v8129, 7
    %v8131 = vsub.s32 %v8128, %v8130
    %v8132 = vrot.slane %v8116, %v8131
    %v8134 = vunpack.c.l.s4 1966171168
    %v8135 = vunpack.c.0.s8 %v8134
    %v8136 = vlaneseq
    %v8137 = vshrl.u32 %v8136, 7
    %v8138 = vsub.s32 %v8135, %v8137
    %v8139 = vrot.slane %v8117, %v8138
    %v8141 = vunpack.c.l.s4 1966171168
    %v8142 = vunpack.c.0.s8 %v8141
    %v8143 = vlaneseq
    %v8144 = vshrl.u32 %v8143, 7
    %v8145 = vsub.s32 %v8142, %v8144
    %v8146 = vrot.slane %v8118, %v8145
    %v8147 = vcombine.low %v8125, %v8139
    %v8148 = vcombine.high %v8125, %v8139
    %v8149 = vcombine.low %v8132, %v8146
    %v8150 = vcombine.high %v8132, %v8146
    %8155 = vmatprep.subr.mxu0 0.0
    %8156 = vmatpush1.msra.mxu0 %v8011
    %8157 = vmatprep.subr.mxu0 0.0
    %8158 = vmatpush1.msra.mxu0 %v8012
    %8159 = vmatprep.subr.mxu0 0.0
    %8160 = vmatpush1.msra.mxu0 %v8013
    %8161 = vmatprep.subr.mxu0 0.0
    %8162 = vmatpush1.msra.mxu0 %v8014
    %8163 = vmatprep.subr.mxu0 0.0
    %8164 = vmatpush1.msra.mxu0 %v8015
    %8165 = vmatprep.subr.mxu0 0.0
    %8166 = vmatpush1.msra.mxu0 %v8016
    %8167 = vmatprep.subr.mxu0 0.0
    %8168 = vmatpush1.msra.mxu0 %v8017
    %8169 = vmatprep.subr.mxu0 0.0
    %8170 = vmatpush1.msra.mxu0 %v8018
    %8171 = vmatprep.subr.mxu0 0.0
    %8172 = vmatpush1.msra.mxu0 %v8019
    %8173 = vmatprep.subr.mxu0 0.0
    %8174 = vmatpush1.msra.mxu0 %v8020
    %8175 = vmatprep.subr.mxu0 0.0
    %8176 = vmatpush1.msra.mxu0 %v8021
    %8177 = vmatprep.subr.mxu0 0.0
    %8178 = vmatpush1.msra.mxu0 %v8022
    %8179 = vmatprep.subr.mxu0 0.0
    %8180 = vmatpush1.msra.mxu0 %v8023
    %8181 = vmatprep.subr.mxu0 0.0
    %8182 = vmatpush1.msra.mxu0 %v8024
    %8183 = vmatprep.subr.mxu0 0.0
    %8184 = vmatpush1.msra.mxu0 %v8025
    %8185 = vmatprep.subr.mxu0 0.0
    %8186 = vmatpush1.msra.mxu0 %v8026
    %8187 = vmatprep.subr.mxu0 0.0
    %8188 = vmatpush1.msra.mxu0 %v8027
    %8189 = vmatprep.subr.mxu0 0.0
    %8190 = vmatpush1.msra.mxu0 %v8028
    %8191 = vmatprep.subr.mxu0 0.0
    %8192 = vmatpush1.msra.mxu0 %v8029
    %8193 = vmatprep.subr.mxu0 0.0
    %8194 = vmatpush1.msra.mxu0 %v8030
    %8195 = vmatprep.subr.mxu0 0.0
    %8196 = vmatpush1.msra.mxu0 %v8031
    %8197 = vmatprep.subr.mxu0 0.0
    %8198 = vmatpush1.msra.mxu0 %v8032
    %8199 = vmatprep.subr.mxu0 0.0
    %8200 = vmatpush1.msra.mxu0 %v8033
    %8201 = vmatprep.subr.mxu0 0.0
    %8202 = vmatpush1.msra.mxu0 %v8034
    %8203 = vmatprep.subr.mxu0 0.0
    %8204 = vmatpush1.msra.mxu0 %v8035
    %8205 = vmatprep.subr.mxu0 0.0
    %8206 = vmatpush1.msra.mxu0 %v8036
    %8207 = vmatprep.subr.mxu0 0.0
    %8208 = vmatpush1.msra.mxu0 %v8037
    %8209 = vmatprep.subr.mxu0 0.0
    %8210 = vmatpush1.msra.mxu0 %v8038
    %8211 = vmatprep.subr.mxu0 0.0
    %8212 = vmatpush1.msra.mxu0 %v8039
    %8213 = vmatprep.subr.mxu0 0.0
    %8214 = vmatpush1.msra.mxu0 %v8040
    %8215 = vmatprep.subr.mxu0 0.0
    %8216 = vmatpush1.msra.mxu0 %v8041
    %8217 = vmatprep.subr.mxu0 0.0
    %8218 = vmatpush1.msra.mxu0 %v8042
    %8219 = vmatprep.mubr.f32.mxu0 %v8149
    %8220 = vmatmul.mubr.f32.gmra.mrb[0].mxu0 %v8147
    %v8221 = vpop.f32.mrb[0].mxu0
    %v8222 = vadd.f32 0.0, %v8221
    %v8223 = vpop.f32.mrb[0].mxu0
    %8224 = vdwg.mxu0
    %8225 = vmatprep.subr.mxu0 0.0
    %8226 = vmatpush1.msra.mxu0 %v8043
    %8227 = vmatprep.subr.mxu0 0.0
    %8228 = vmatpush1.msra.mxu0 %v8044
    %8229 = vmatprep.subr.mxu0 0.0
    %8230 = vmatpush1.msra.mxu0 %v8045
    %8231 = vmatprep.subr.mxu0 0.0
    %8232 = vmatpush1.msra.mxu0 %v8046
    %8233 = vmatprep.subr.mxu0 0.0
    %8234 = vmatpush1.msra.mxu0 %v8047
    %8235 = vmatprep.subr.mxu0 0.0
    %8236 = vmatpush1.msra.mxu0 %v8048
    %8237 = vmatprep.subr.mxu0 0.0
    %8238 = vmatpush1.msra.mxu0 %v8049
    %8239 = vmatprep.subr.mxu0 0.0
    %8240 = vmatpush1.msra.mxu0 %v8050
    %8241 = vmatprep.subr.mxu0 0.0
    %8242 = vmatpush1.msra.mxu0 %v8051
    %8243 = vmatprep.subr.mxu0 0.0
    %8244 = vmatpush1.msra.mxu0 %v8052
    %8245 = vmatprep.subr.mxu0 0.0
    %8246 = vmatpush1.msra.mxu0 %v8053
    %8247 = vmatprep.subr.mxu0 0.0
    %8248 = vmatpush1.msra.mxu0 %v8054
    %8249 = vmatprep.subr.mxu0 0.0
    %8250 = vmatpush1.msra.mxu0 %v8055
    %8251 = vmatprep.subr.mxu0 0.0
    %8252 = vmatpush1.msra.mxu0 %v8056
    %8253 = vmatprep.subr.mxu0 0.0
    %8254 = vmatpush1.msra.mxu0 %v8057
    %8255 = vmatprep.subr.mxu0 0.0
    %8256 = vmatpush1.msra.mxu0 %v8058
    %8257 = vmatprep.subr.mxu0 0.0
    %8258 = vmatpush1.msra.mxu0 %v8059
    %8259 = vmatprep.subr.mxu0 0.0
    %8260 = vmatpush1.msra.mxu0 %v8060
    %8261 = vmatprep.subr.mxu0 0.0
    %8262 = vmatpush1.msra.mxu0 %v8061
    %8263 = vmatprep.subr.mxu0 0.0
    %8264 = vmatpush1.msra.mxu0 %v8062
    %8265 = vmatprep.subr.mxu0 0.0
    %8266 = vmatpush1.msra.mxu0 %v8063
    %8267 = vmatprep.subr.mxu0 0.0
    %8268 = vmatpush1.msra.mxu0 %v8064
    %8269 = vmatprep.subr.mxu0 0.0
    %8270 = vmatpush1.msra.mxu0 %v8065
    %8271 = vmatprep.subr.mxu0 0.0
    %8272 = vmatpush1.msra.mxu0 %v8066
    %8273 = vmatprep.subr.mxu0 0.0
    %8274 = vmatpush1.msra.mxu0 %v8067
    %8275 = vmatprep.subr.mxu0 0.0
    %8276 = vmatpush1.msra.mxu0 %v8068
    %8277 = vmatprep.subr.mxu0 0.0
    %8278 = vmatpush1.msra.mxu0 %v8069
    %8279 = vmatprep.subr.mxu0 0.0
    %8280 = vmatpush1.msra.mxu0 %v8070
    %8281 = vmatprep.subr.mxu0 0.0
    %8282 = vmatpush1.msra.mxu0 %v8071
    %8283 = vmatprep.subr.mxu0 0.0
    %8284 = vmatpush1.msra.mxu0 %v8072
    %8285 = vmatprep.subr.mxu0 0.0
    %8286 = vmatpush1.msra.mxu0 %v8073
    %8287 = vmatprep.subr.mxu0 0.0
    %8288 = vmatpush1.msra.mxu0 %v8074
    %8289 = vmatprep.mubr.f32.mxu0 %v8150
    %8290 = vmatmul.mubr.f32.gmra.mrb[0].mxu0 %v8148
    %v8291 = vpop.f32.mrb[0].mxu0
    %v8292 = vadd.f32 %v8222, %v8291
    %v8293 = vpop.f32.mrb[0].mxu0
    %8294 = vdwg.mxu0
    %v8295 = vadd.f32 %v7993, %v8292
    %s8296 = scalar_lea.vmem [#allocation4], 5
    %v8297 = vld [vmem:[%s8296] ss:$8 sm:$0xf]
    %s8298 = scalar_lea.vmem [#allocation4], 37
    %v8299 = vld [vmem:[%s8298] ss:$8 sm:$0xf]
    %s8300 = scalar_lea.vmem [#allocation4], 69
    %v8301 = vld [vmem:[%s8300] ss:$8 sm:$0xf]
    %s8302 = scalar_lea.vmem [#allocation4], 101
    %v8303 = vld [vmem:[%s8302] ss:$8 sm:$0xf]
    %s8304 = scalar_lea.vmem [#allocation4], 133
    %v8305 = vld [vmem:[%s8304] ss:$8 sm:$0xf]
    %s8306 = scalar_lea.vmem [#allocation4], 165
    %v8307 = vld [vmem:[%s8306] ss:$8 sm:$0xf]
    %s8308 = scalar_lea.vmem [#allocation4], 197
    %v8309 = vld [vmem:[%s8308] ss:$8 sm:$0xf]
    %s8310 = scalar_lea.vmem [#allocation4], 229
    %v8311 = vld [vmem:[%s8310] ss:$8 sm:$0xf]
    %s8312 = scalar_lea.vmem [#allocation16], 2048
    %v8313 = vld [vmem:[%s8312] sm:$0xff]
    %v8314 = vld [vmem:[%s8312 + $0x8] sm:$0xff]
    %v8315 = vld [vmem:[%s8312 + $0x10] sm:$0xff]
    %v8316 = vld [vmem:[%s8312 + $0x18] sm:$0xff]
    %v8317 = vld [vmem:[%s8312 + $0x20] sm:$0xff]
    %v8318 = vld [vmem:[%s8312 + $0x28] sm:$0xff]
    %v8319 = vld [vmem:[%s8312 + $0x30] sm:$0xff]
    %v8320 = vld [vmem:[%s8312 + $0x38] sm:$0xff]
    %v8321 = vld [vmem:[%s8312 + $0x40] sm:$0xff]
    %v8322 = vld [vmem:[%s8312 + $0x48] sm:$0xff]
    %v8323 = vld [vmem:[%s8312 + $0x50] sm:$0xff]
    %v8324 = vld [vmem:[%s8312 + $0x58] sm:$0xff]
    %v8325 = vld [vmem:[%s8312 + $0x60] sm:$0xff]
    %v8326 = vld [vmem:[%s8312 + $0x68] sm:$0xff]
    %v8327 = vld [vmem:[%s8312 + $0x70] sm:$0xff]
    %v8328 = vld [vmem:[%s8312 + $0x78] sm:$0xff]
    %v8329 = vld [vmem:[%s8312 + $0x80] sm:$0xff]
    %v8330 = vld [vmem:[%s8312 + $0x88] sm:$0xff]
    %v8331 = vld [vmem:[%s8312 + $0x90] sm:$0xff]
    %v8332 = vld [vmem:[%s8312 + $0x98] sm:$0xff]
    %v8333 = vld [vmem:[%s8312 + $0xa0] sm:$0xff]
    %v8334 = vld [vmem:[%s8312 + $0xa8] sm:$0xff]
    %v8335 = vld [vmem:[%s8312 + $0xb0] sm:$0xff]
    %v8336 = vld [vmem:[%s8312 + $0xb8] sm:$0xff]
    %v8337 = vld [vmem:[%s8312 + $0xc0] sm:$0xff]
    %v8338 = vld [vmem:[%s8312 + $0xc8] sm:$0xff]
    %v8339 = vld [vmem:[%s8312 + $0xd0] sm:$0xff]
    %v8340 = vld [vmem:[%s8312 + $0xd8] sm:$0xff]
    %v8341 = vld [vmem:[%s8312 + $0xe0] sm:$0xff]
    %v8342 = vld [vmem:[%s8312 + $0xe8] sm:$0xff]
    %v8343 = vld [vmem:[%s8312 + $0xf0] sm:$0xff]
    %v8344 = vld [vmem:[%s8312 + $0xf8] sm:$0xff]
    %v8345 = vld [vmem:[%s8312 + $0x100] sm:$0xff]
    %v8346 = vld [vmem:[%s8312 + $0x108] sm:$0xff]
    %v8347 = vld [vmem:[%s8312 + $0x110] sm:$0xff]
    %v8348 = vld [vmem:[%s8312 + $0x118] sm:$0xff]
    %v8349 = vld [vmem:[%s8312 + $0x120] sm:$0xff]
    %v8350 = vld [vmem:[%s8312 + $0x128] sm:$0xff]
    %v8351 = vld [vmem:[%s8312 + $0x130] sm:$0xff]
    %v8352 = vld [vmem:[%s8312 + $0x138] sm:$0xff]
    %v8353 = vld [vmem:[%s8312 + $0x140] sm:$0xff]
    %v8354 = vld [vmem:[%s8312 + $0x148] sm:$0xff]
    %v8355 = vld [vmem:[%s8312 + $0x150] sm:$0xff]
    %v8356 = vld [vmem:[%s8312 + $0x158] sm:$0xff]
    %v8357 = vld [vmem:[%s8312 + $0x160] sm:$0xff]
    %v8358 = vld [vmem:[%s8312 + $0x168] sm:$0xff]
    %v8359 = vld [vmem:[%s8312 + $0x170] sm:$0xff]
    %v8360 = vld [vmem:[%s8312 + $0x178] sm:$0xff]
    %v8361 = vld [vmem:[%s8312 + $0x180] sm:$0xff]
    %v8362 = vld [vmem:[%s8312 + $0x188] sm:$0xff]
    %v8363 = vld [vmem:[%s8312 + $0x190] sm:$0xff]
    %v8364 = vld [vmem:[%s8312 + $0x198] sm:$0xff]
    %v8365 = vld [vmem:[%s8312 + $0x1a0] sm:$0xff]
    %v8366 = vld [vmem:[%s8312 + $0x1a8] sm:$0xff]
    %v8367 = vld [vmem:[%s8312 + $0x1b0] sm:$0xff]
    %v8368 = vld [vmem:[%s8312 + $0x1b8] sm:$0xff]
    %v8369 = vld [vmem:[%s8312 + $0x1c0] sm:$0xff]
    %v8370 = vld [vmem:[%s8312 + $0x1c8] sm:$0xff]
    %v8371 = vld [vmem:[%s8312 + $0x1d0] sm:$0xff]
    %v8372 = vld [vmem:[%s8312 + $0x1d8] sm:$0xff]
    %v8373 = vld [vmem:[%s8312 + $0x1e0] sm:$0xff]
    %v8374 = vld [vmem:[%s8312 + $0x1e8] sm:$0xff]
    %v8375 = vld [vmem:[%s8312 + $0x1f0] sm:$0xff]
    %v8376 = vld [vmem:[%s8312 + $0x1f8] sm:$0xff]
    %v8385 = vcombine.low %v8297, %v8299
    %v8386 = vcombine.low %v8301, %v8303
    %v8387 = vcombine.low %v8305, %v8307
    %v8388 = vcombine.low %v8309, %v8311
    %v8390 = vunpack.c.l.s4 1966171168
    %v8391 = vunpack.c.0.s8 %v8390
    %v8392 = vlaneseq
    %v8393 = vshrl.u32 %v8392, 7
    %v8394 = vsub.s32 %v8391, %v8393
    %v8395 = vrot.slane %v8385, %v8394
    %v8397 = vunpack.c.l.s4 1966171168
    %v8398 = vunpack.c.0.s8 %v8397
    %v8399 = vlaneseq
    %v8400 = vshrl.u32 %v8399, 7
    %v8401 = vsub.s32 %v8398, %v8400
    %v8402 = vrot.slane %v8386, %v8401
    %v8404 = vunpack.c.l.s4 1966171168
    %v8405 = vunpack.c.0.s8 %v8404
    %v8406 = vlaneseq
    %v8407 = vshrl.u32 %v8406, 7
    %v8408 = vsub.s32 %v8405, %v8407
    %v8409 = vrot.slane %v8387, %v8408
    %v8411 = vunpack.c.l.s4 1966171168
    %v8412 = vunpack.c.0.s8 %v8411
    %v8413 = vlaneseq
    %v8414 = vshrl.u32 %v8413, 7
    %v8415 = vsub.s32 %v8412, %v8414
    %v8416 = vrot.slane %v8388, %v8415
    %v8417 = vcombine.low %v8395, %v8402
    %v8418 = vcombine.high %v8395, %v8402
    %v8419 = vcombine.low %v8409, %v8416
    %v8420 = vcombine.high %v8409, %v8416
    %v8422 = vunpack.c.l.s4 1966171168
    %v8423 = vunpack.c.0.s8 %v8422
    %v8424 = vlaneseq
    %v8425 = vshrl.u32 %v8424, 7
    %v8426 = vsub.s32 %v8423, %v8425
    %v8427 = vrot.slane %v8417, %v8426
    %v8429 = vunpack.c.l.s4 1966171168
    %v8430 = vunpack.c.0.s8 %v8429
    %v8431 = vlaneseq
    %v8432 = vshrl.u32 %v8431, 7
    %v8433 = vsub.s32 %v8430, %v8432
    %v8434 = vrot.slane %v8418, %v8433
    %v8436 = vunpack.c.l.s4 1966171168
    %v8437 = vunpack.c.0.s8 %v8436
    %v8438 = vlaneseq
    %v8439 = vshrl.u32 %v8438, 7
    %v8440 = vsub.s32 %v8437, %v8439
    %v8441 = vrot.slane %v8419, %v8440
    %v8443 = vunpack.c.l.s4 1966171168
    %v8444 = vunpack.c.0.s8 %v8443
    %v8445 = vlaneseq
    %v8446 = vshrl.u32 %v8445, 7
    %v8447 = vsub.s32 %v8444, %v8446
    %v8448 = vrot.slane %v8420, %v8447
    %v8449 = vcombine.low %v8427, %v8441
    %v8450 = vcombine.high %v8427, %v8441
    %v8451 = vcombine.low %v8434, %v8448
    %v8452 = vcombine.high %v8434, %v8448
    %8457 = vmatprep.subr.mxu0 0.0
    %8458 = vmatpush1.msra.mxu0 %v8313
    %8459 = vmatprep.subr.mxu0 0.0
    %8460 = vmatpush1.msra.mxu0 %v8314
    %8461 = vmatprep.subr.mxu0 0.0
    %8462 = vmatpush1.msra.mxu0 %v8315
    %8463 = vmatprep.subr.mxu0 0.0
    %8464 = vmatpush1.msra.mxu0 %v8316
    %8465 = vmatprep.subr.mxu0 0.0
    %8466 = vmatpush1.msra.mxu0 %v8317
    %8467 = vmatprep.subr.mxu0 0.0
    %8468 = vmatpush1.msra.mxu0 %v8318
    %8469 = vmatprep.subr.mxu0 0.0
    %8470 = vmatpush1.msra.mxu0 %v8319
    %8471 = vmatprep.subr.mxu0 0.0
    %8472 = vmatpush1.msra.mxu0 %v8320
    %8473 = vmatprep.subr.mxu0 0.0
    %8474 = vmatpush1.msra.mxu0 %v8321
    %8475 = vmatprep.subr.mxu0 0.0
    %8476 = vmatpush1.msra.mxu0 %v8322
    %8477 = vmatprep.subr.mxu0 0.0
    %8478 = vmatpush1.msra.mxu0 %v8323
    %8479 = vmatprep.subr.mxu0 0.0
    %8480 = vmatpush1.msra.mxu0 %v8324
    %8481 = vmatprep.subr.mxu0 0.0
    %8482 = vmatpush1.msra.mxu0 %v8325
    %8483 = vmatprep.subr.mxu0 0.0
    %8484 = vmatpush1.msra.mxu0 %v8326
    %8485 = vmatprep.subr.mxu0 0.0
    %8486 = vmatpush1.msra.mxu0 %v8327
    %8487 = vmatprep.subr.mxu0 0.0
    %8488 = vmatpush1.msra.mxu0 %v8328
    %8489 = vmatprep.subr.mxu0 0.0
    %8490 = vmatpush1.msra.mxu0 %v8329
    %8491 = vmatprep.subr.mxu0 0.0
    %8492 = vmatpush1.msra.mxu0 %v8330
    %8493 = vmatprep.subr.mxu0 0.0
    %8494 = vmatpush1.msra.mxu0 %v8331
    %8495 = vmatprep.subr.mxu0 0.0
    %8496 = vmatpush1.msra.mxu0 %v8332
    %8497 = vmatprep.subr.mxu0 0.0
    %8498 = vmatpush1.msra.mxu0 %v8333
    %8499 = vmatprep.subr.mxu0 0.0
    %8500 = vmatpush1.msra.mxu0 %v8334
    %8501 = vmatprep.subr.mxu0 0.0
    %8502 = vmatpush1.msra.mxu0 %v8335
    %8503 = vmatprep.subr.mxu0 0.0
    %8504 = vmatpush1.msra.mxu0 %v8336
    %8505 = vmatprep.subr.mxu0 0.0
    %8506 = vmatpush1.msra.mxu0 %v8337
    %8507 = vmatprep.subr.mxu0 0.0
    %8508 = vmatpush1.msra.mxu0 %v8338
    %8509 = vmatprep.subr.mxu0 0.0
    %8510 = vmatpush1.msra.mxu0 %v8339
    %8511 = vmatprep.subr.mxu0 0.0
    %8512 = vmatpush1.msra.mxu0 %v8340
    %8513 = vmatprep.subr.mxu0 0.0
    %8514 = vmatpush1.msra.mxu0 %v8341
    %8515 = vmatprep.subr.mxu0 0.0
    %8516 = vmatpush1.msra.mxu0 %v8342
    %8517 = vmatprep.subr.mxu0 0.0
    %8518 = vmatpush1.msra.mxu0 %v8343
    %8519 = vmatprep.subr.mxu0 0.0
    %8520 = vmatpush1.msra.mxu0 %v8344
    %8521 = vmatprep.mubr.f32.mxu0 %v8451
    %8522 = vmatmul.mubr.f32.gmra.mrb[0].mxu0 %v8449
    %v8523 = vpop.f32.mrb[0].mxu0
    %v8524 = vadd.f32 0.0, %v8523
    %v8525 = vpop.f32.mrb[0].mxu0
    %8526 = vdwg.mxu0
    %8527 = vmatprep.subr.mxu0 0.0
    %8528 = vmatpush1.msra.mxu0 %v8345
    %8529 = vmatprep.subr.mxu0 0.0
    %8530 = vmatpush1.msra.mxu0 %v8346
    %8531 = vmatprep.subr.mxu0 0.0
    %8532 = vmatpush1.msra.mxu0 %v8347
    %8533 = vmatprep.subr.mxu0 0.0
    %8534 = vmatpush1.msra.mxu0 %v8348
    %8535 = vmatprep.subr.mxu0 0.0
    %8536 = vmatpush1.msra.mxu0 %v8349
    %8537 = vmatprep.subr.mxu0 0.0
    %8538 = vmatpush1.msra.mxu0 %v8350
    %8539 = vmatprep.subr.mxu0 0.0
    %8540 = vmatpush1.msra.mxu0 %v8351
    %8541 = vmatprep.subr.mxu0 0.0
    %8542 = vmatpush1.msra.mxu0 %v8352
    %8543 = vmatprep.subr.mxu0 0.0
    %8544 = vmatpush1.msra.mxu0 %v8353
    %8545 = vmatprep.subr.mxu0 0.0
    %8546 = vmatpush1.msra.mxu0 %v8354
    %8547 = vmatprep.subr.mxu0 0.0
    %8548 = vmatpush1.msra.mxu0 %v8355
    %8549 = vmatprep.subr.mxu0 0.0
    %8550 = vmatpush1.msra.mxu0 %v8356
    %8551 = vmatprep.subr.mxu0 0.0
    %8552 = vmatpush1.msra.mxu0 %v8357
    %8553 = vmatprep.subr.mxu0 0.0
    %8554 = vmatpush1.msra.mxu0 %v8358
    %8555 = vmatprep.subr.mxu0 0.0
    %8556 = vmatpush1.msra.mxu0 %v8359
    %8557 = vmatprep.subr.mxu0 0.0
    %8558 = vmatpush1.msra.mxu0 %v8360
    %8559 = vmatprep.subr.mxu0 0.0
    %8560 = vmatpush1.msra.mxu0 %v8361
    %8561 = vmatprep.subr.mxu0 0.0
    %8562 = vmatpush1.msra.mxu0 %v8362
    %8563 = vmatprep.subr.mxu0 0.0
    %8564 = vmatpush1.msra.mxu0 %v8363
    %8565 = vmatprep.subr.mxu0 0.0
    %8566 = vmatpush1.msra.mxu0 %v8364
    %8567 = vmatprep.subr.mxu0 0.0
    %8568 = vmatpush1.msra.mxu0 %v8365
    %8569 = vmatprep.subr.mxu0 0.0
    %8570 = vmatpush1.msra.mxu0 %v8366
    %8571 = vmatprep.subr.mxu0 0.0
    %8572 = vmatpush1.msra.mxu0 %v8367
    %8573 = vmatprep.subr.mxu0 0.0
    %8574 = vmatpush1.msra.mxu0 %v8368
    %8575 = vmatprep.subr.mxu0 0.0
    %8576 = vmatpush1.msra.mxu0 %v8369
    %8577 = vmatprep.subr.mxu0 0.0
    %8578 = vmatpush1.msra.mxu0 %v8370
    %8579 = vmatprep.subr.mxu0 0.0
    %8580 = vmatpush1.msra.mxu0 %v8371
    %8581 = vmatprep.subr.mxu0 0.0
    %8582 = vmatpush1.msra.mxu0 %v8372
    %8583 = vmatprep.subr.mxu0 0.0
    %8584 = vmatpush1.msra.mxu0 %v8373
    %8585 = vmatprep.subr.mxu0 0.0
    %8586 = vmatpush1.msra.mxu0 %v8374
    %8587 = vmatprep.subr.mxu0 0.0
    %8588 = vmatpush1.msra.mxu0 %v8375
    %8589 = vmatprep.subr.mxu0 0.0
    %8590 = vmatpush1.msra.mxu0 %v8376
    %8591 = vmatprep.mubr.f32.mxu0 %v8452
    %8592 = vmatmul.mubr.f32.gmra.mrb[0].mxu0 %v8450
    %v8593 = vpop.f32.mrb[0].mxu0
    %v8594 = vadd.f32 %v8524, %v8593
    %v8595 = vpop.f32.mrb[0].mxu0
    %8596 = vdwg.mxu0
    %v8597 = vadd.f32 %v8295, %v8594
    %s8598 = scalar_lea.vmem [#allocation4], 6
    %v8599 = vld [vmem:[%s8598] ss:$8 sm:$0xf]
    %s8600 = scalar_lea.vmem [#allocation4], 38
    %v8601 = vld [vmem:[%s8600] ss:$8 sm:$0xf]
    %s8602 = scalar_lea.vmem [#allocation4], 70
    %v8603 = vld [vmem:[%s8602] ss:$8 sm:$0xf]
    %s8604 = scalar_lea.vmem [#allocation4], 102
    %v8605 = vld [vmem:[%s8604] ss:$8 sm:$0xf]
    %s8606 = scalar_lea.vmem [#allocation4], 134
    %v8607 = vld [vmem:[%s8606] ss:$8 sm:$0xf]
    %s8608 = scalar_lea.vmem [#allocation4], 166
    %v8609 = vld [vmem:[%s8608] ss:$8 sm:$0xf]
    %s8610 = scalar_lea.vmem [#allocation4], 198
    %v8611 = vld [vmem:[%s8610] ss:$8 sm:$0xf]
    %s8612 = scalar_lea.vmem [#allocation4], 230
    %v8613 = vld [vmem:[%s8612] ss:$8 sm:$0xf]
    %s8614 = scalar_lea.vmem [#allocation16], 2560
    %v8615 = vld [vmem:[%s8614] sm:$0xff]
    %v8616 = vld [vmem:[%s8614 + $0x8] sm:$0xff]
    %v8617 = vld [vmem:[%s8614 + $0x10] sm:$0xff]
    %v8618 = vld [vmem:[%s8614 + $0x18] sm:$0xff]
    %v8619 = vld [vmem:[%s8614 + $0x20] sm:$0xff]
    %v8620 = vld [vmem:[%s8614 + $0x28] sm:$0xff]
    %v8621 = vld [vmem:[%s8614 + $0x30] sm:$0xff]
    %v8622 = vld [vmem:[%s8614 + $0x38] sm:$0xff]
    %v8623 = vld [vmem:[%s8614 + $0x40] sm:$0xff]
    %v8624 = vld [vmem:[%s8614 + $0x48] sm:$0xff]
    %v8625 = vld [vmem:[%s8614 + $0x50] sm:$0xff]
    %v8626 = vld [vmem:[%s8614 + $0x58] sm:$0xff]
    %v8627 = vld [vmem:[%s8614 + $0x60] sm:$0xff]
    %v8628 = vld [vmem:[%s8614 + $0x68] sm:$0xff]
    %v8629 = vld [vmem:[%s8614 + $0x70] sm:$0xff]
    %v8630 = vld [vmem:[%s8614 + $0x78] sm:$0xff]
    %v8631 = vld [vmem:[%s8614 + $0x80] sm:$0xff]
    %v8632 = vld [vmem:[%s8614 + $0x88] sm:$0xff]
    %v8633 = vld [vmem:[%s8614 + $0x90] sm:$0xff]
    %v8634 = vld [vmem:[%s8614 + $0x98] sm:$0xff]
    %v8635 = vld [vmem:[%s8614 + $0xa0] sm:$0xff]
    %v8636 = vld [vmem:[%s8614 + $0xa8] sm:$0xff]
    %v8637 = vld [vmem:[%s8614 + $0xb0] sm:$0xff]
    %v8638 = vld [vmem:[%s8614 + $0xb8] sm:$0xff]
    %v8639 = vld [vmem:[%s8614 + $0xc0] sm:$0xff]
    %v8640 = vld [vmem:[%s8614 + $0xc8] sm:$0xff]
    %v8641 = vld [vmem:[%s8614 + $0xd0] sm:$0xff]
    %v8642 = vld [vmem:[%s8614 + $0xd8] sm:$0xff]
    %v8643 = vld [vmem:[%s8614 + $0xe0] sm:$0xff]
    %v8644 = vld [vmem:[%s8614 + $0xe8] sm:$0xff]
    %v8645 = vld [vmem:[%s8614 + $0xf0] sm:$0xff]
    %v8646 = vld [vmem:[%s8614 + $0xf8] sm:$0xff]
    %v8647 = vld [vmem:[%s8614 + $0x100] sm:$0xff]
    %v8648 = vld [vmem:[%s8614 + $0x108] sm:$0xff]
    %v8649 = vld [vmem:[%s8614 + $0x110] sm:$0xff]
    %v8650 = vld [vmem:[%s8614 + $0x118] sm:$0xff]
    %v8651 = vld [vmem:[%s8614 + $0x120] sm:$0xff]
    %v8652 = vld [vmem:[%s8614 + $0x128] sm:$0xff]
    %v8653 = vld [vmem:[%s8614 + $0x130] sm:$0xff]
    %v8654 = vld [vmem:[%s8614 + $0x138] sm:$0xff]
    %v8655 = vld [vmem:[%s8614 + $0x140] sm:$0xff]
    %v8656 = vld [vmem:[%s8614 + $0x148] sm:$0xff]
    %v8657 = vld [vmem:[%s8614 + $0x150] sm:$0xff]
    %v8658 = vld [vmem:[%s8614 + $0x158] sm:$0xff]
    %v8659 = vld [vmem:[%s8614 + $0x160] sm:$0xff]
    %v8660 = vld [vmem:[%s8614 + $0x168] sm:$0xff]
    %v8661 = vld [vmem:[%s8614 + $0x170] sm:$0xff]
    %v8662 = vld [vmem:[%s8614 + $0x178] sm:$0xff]
    %v8663 = vld [vmem:[%s8614 + $0x180] sm:$0xff]
    %v8664 = vld [vmem:[%s8614 + $0x188] sm:$0xff]
    %v8665 = vld [vmem:[%s8614 + $0x190] sm:$0xff]
    %v8666 = vld [vmem:[%s8614 + $0x198] sm:$0xff]
    %v8667 = vld [vmem:[%s8614 + $0x1a0] sm:$0xff]
    %v8668 = vld [vmem:[%s8614 + $0x1a8] sm:$0xff]
    %v8669 = vld [vmem:[%s8614 + $0x1b0] sm:$0xff]
    %v8670 = vld [vmem:[%s8614 + $0x1b8] sm:$0xff]
    %v8671 = vld [vmem:[%s8614 + $0x1c0] sm:$0xff]
    %v8672 = vld [vmem:[%s8614 + $0x1c8] sm:$0xff]
    %v8673 = vld [vmem:[%s8614 + $0x1d0] sm:$0xff]
    %v8674 = vld [vmem:[%s8614 + $0x1d8] sm:$0xff]
    %v8675 = vld [vmem:[%s8614 + $0x1e0] sm:$0xff]
    %v8676 = vld [vmem:[%s8614 + $0x1e8] sm:$0xff]
    %v8677 = vld [vmem:[%s8614 + $0x1f0] sm:$0xff]
    %v8678 = vld [vmem:[%s8614 + $0x1f8] sm:$0xff]
    %v8687 = vcombine.low %v8599, %v8601
    %v8688 = vcombine.low %v8603, %v8605
    %v8689 = vcombine.low %v8607, %v8609
    %v8690 = vcombine.low %v8611, %v8613
    %v8692 = vunpack.c.l.s4 1966171168
    %v8693 = vunpack.c.0.s8 %v8692
    %v8694 = vlaneseq
    %v8695 = vshrl.u32 %v8694, 7
    %v8696 = vsub.s32 %v8693, %v8695
    %v8697 = vrot.slane %v8687, %v8696
    %v8699 = vunpack.c.l.s4 1966171168
    %v8700 = vunpack.c.0.s8 %v8699
    %v8701 = vlaneseq
    %v8702 = vshrl.u32 %v8701, 7
    %v8703 = vsub.s32 %v8700, %v8702
    %v8704 = vrot.slane %v8688, %v8703
    %v8706 = vunpack.c.l.s4 1966171168
    %v8707 = vunpack.c.0.s8 %v8706
    %v8708 = vlaneseq
    %v8709 = vshrl.u32 %v8708, 7
    %v8710 = vsub.s32 %v8707, %v8709
    %v8711 = vrot.slane %v8689, %v8710
    %v8713 = vunpack.c.l.s4 1966171168
    %v8714 = vunpack.c.0.s8 %v8713
    %v8715 = vlaneseq
    %v8716 = vshrl.u32 %v8715, 7
    %v8717 = vsub.s32 %v8714, %v8716
    %v8718 = vrot.slane %v8690, %v8717
    %v8719 = vcombine.low %v8697, %v8704
    %v8720 = vcombine.high %v8697, %v8704
    %v8721 = vcombine.low %v8711, %v8718
    %v8722 = vcombine.high %v8711, %v8718
    %v8724 = vunpack.c.l.s4 1966171168
    %v8725 = vunpack.c.0.s8 %v8724
    %v8726 = vlaneseq
    %v8727 = vshrl.u32 %v8726, 7
    %v8728 = vsub.s32 %v8725, %v8727
    %v8729 = vrot.slane %v8719, %v8728
    %v8731 = vunpack.c.l.s4 1966171168
    %v8732 = vunpack.c.0.s8 %v8731
    %v8733 = vlaneseq
    %v8734 = vshrl.u32 %v8733, 7
    %v8735 = vsub.s32 %v8732, %v8734
    %v8736 = vrot.slane %v8720, %v8735
    %v8738 = vunpack.c.l.s4 1966171168
    %v8739 = vunpack.c.0.s8 %v8738
    %v8740 = vlaneseq
    %v8741 = vshrl.u32 %v8740, 7
    %v8742 = vsub.s32 %v8739, %v8741
    %v8743 = vrot.slane %v8721, %v8742
    %v8745 = vunpack.c.l.s4 1966171168
    %v8746 = vunpack.c.0.s8 %v8745
    %v8747 = vlaneseq
    %v8748 = vshrl.u32 %v8747, 7
    %v8749 = vsub.s32 %v8746, %v8748
    %v8750 = vrot.slane %v8722, %v8749
    %v8751 = vcombine.low %v8729, %v8743
    %v8752 = vcombine.high %v8729, %v8743
    %v8753 = vcombine.low %v8736, %v8750
    %v8754 = vcombine.high %v8736, %v8750
    %8759 = vmatprep.subr.mxu0 0.0
    %8760 = vmatpush1.msra.mxu0 %v8615
    %8761 = vmatprep.subr.mxu0 0.0
    %8762 = vmatpush1.msra.mxu0 %v8616
    %8763 = vmatprep.subr.mxu0 0.0
    %8764 = vmatpush1.msra.mxu0 %v8617
    %8765 = vmatprep.subr.mxu0 0.0
    %8766 = vmatpush1.msra.mxu0 %v8618
    %8767 = vmatprep.subr.mxu0 0.0
    %8768 = vmatpush1.msra.mxu0 %v8619
    %8769 = vmatprep.subr.mxu0 0.0
    %8770 = vmatpush1.msra.mxu0 %v8620
    %8771 = vmatprep.subr.mxu0 0.0
    %8772 = vmatpush1.msra.mxu0 %v8621
    %8773 = vmatprep.subr.mxu0 0.0
    %8774 = vmatpush1.msra.mxu0 %v8622
    %8775 = vmatprep.subr.mxu0 0.0
    %8776 = vmatpush1.msra.mxu0 %v8623
    %8777 = vmatprep.subr.mxu0 0.0
    %8778 = vmatpush1.msra.mxu0 %v8624
    %8779 = vmatprep.subr.mxu0 0.0
    %8780 = vmatpush1.msra.mxu0 %v8625
    %8781 = vmatprep.subr.mxu0 0.0
    %8782 = vmatpush1.msra.mxu0 %v8626
    %8783 = vmatprep.subr.mxu0 0.0
    %8784 = vmatpush1.msra.mxu0 %v8627
    %8785 = vmatprep.subr.mxu0 0.0
    %8786 = vmatpush1.msra.mxu0 %v8628
    %8787 = vmatprep.subr.mxu0 0.0
    %8788 = vmatpush1.msra.mxu0 %v8629
    %8789 = vmatprep.subr.mxu0 0.0
    %8790 = vmatpush1.msra.mxu0 %v8630
    %8791 = vmatprep.subr.mxu0 0.0
    %8792 = vmatpush1.msra.mxu0 %v8631
    %8793 = vmatprep.subr.mxu0 0.0
    %8794 = vmatpush1.msra.mxu0 %v8632
    %8795 = vmatprep.subr.mxu0 0.0
    %8796 = vmatpush1.msra.mxu0 %v8633
    %8797 = vmatprep.subr.mxu0 0.0
    %8798 = vmatpush1.msra.mxu0 %v8634
    %8799 = vmatprep.subr.mxu0 0.0
    %8800 = vmatpush1.msra.mxu0 %v8635
    %8801 = vmatprep.subr.mxu0 0.0
    %8802 = vmatpush1.msra.mxu0 %v8636
    %8803 = vmatprep.subr.mxu0 0.0
    %8804 = vmatpush1.msra.mxu0 %v8637
    %8805 = vmatprep.subr.mxu0 0.0
    %8806 = vmatpush1.msra.mxu0 %v8638
    %8807 = vmatprep.subr.mxu0 0.0
    %8808 = vmatpush1.msra.mxu0 %v8639
    %8809 = vmatprep.subr.mxu0 0.0
    %8810 = vmatpush1.msra.mxu0 %v8640
    %8811 = vmatprep.subr.mxu0 0.0
    %8812 = vmatpush1.msra.mxu0 %v8641
    %8813 = vmatprep.subr.mxu0 0.0
    %8814 = vmatpush1.msra.mxu0 %v8642
    %8815 = vmatprep.subr.mxu0 0.0
    %8816 = vmatpush1.msra.mxu0 %v8643
    %8817 = vmatprep.subr.mxu0 0.0
    %8818 = vmatpush1.msra.mxu0 %v8644
    %8819 = vmatprep.subr.mxu0 0.0
    %8820 = vmatpush1.msra.mxu0 %v8645
    %8821 = vmatprep.subr.mxu0 0.0
    %8822 = vmatpush1.msra.mxu0 %v8646
    %8823 = vmatprep.mubr.f32.mxu0 %v8753
    %8824 = vmatmul.mubr.f32.gmra.mrb[0].mxu0 %v8751
    %v8825 = vpop.f32.mrb[0].mxu0
    %v8826 = vadd.f32 0.0, %v8825
    %v8827 = vpop.f32.mrb[0].mxu0
    %8828 = vdwg.mxu0
    %8829 = vmatprep.subr.mxu0 0.0
    %8830 = vmatpush1.msra.mxu0 %v8647
    %8831 = vmatprep.subr.mxu0 0.0
    %8832 = vmatpush1.msra.mxu0 %v8648
    %8833 = vmatprep.subr.mxu0 0.0
    %8834 = vmatpush1.msra.mxu0 %v8649
    %8835 = vmatprep.subr.mxu0 0.0
    %8836 = vmatpush1.msra.mxu0 %v8650
    %8837 = vmatprep.subr.mxu0 0.0
    %8838 = vmatpush1.msra.mxu0 %v8651
    %8839 = vmatprep.subr.mxu0 0.0
    %8840 = vmatpush1.msra.mxu0 %v8652
    %8841 = vmatprep.subr.mxu0 0.0
    %8842 = vmatpush1.msra.mxu0 %v8653
    %8843 = vmatprep.subr.mxu0 0.0
    %8844 = vmatpush1.msra.mxu0 %v8654
    %8845 = vmatprep.subr.mxu0 0.0
    %8846 = vmatpush1.msra.mxu0 %v8655
    %8847 = vmatprep.subr.mxu0 0.0
    %8848 = vmatpush1.msra.mxu0 %v8656
    %8849 = vmatprep.subr.mxu0 0.0
    %8850 = vmatpush1.msra.mxu0 %v8657
    %8851 = vmatprep.subr.mxu0 0.0
    %8852 = vmatpush1.msra.mxu0 %v8658
    %8853 = vmatprep.subr.mxu0 0.0
    %8854 = vmatpush1.msra.mxu0 %v8659
    %8855 = vmatprep.subr.mxu0 0.0
    %8856 = vmatpush1.msra.mxu0 %v8660
    %8857 = vmatprep.subr.mxu0 0.0
    %8858 = vmatpush1.msra.mxu0 %v8661
    %8859 = vmatprep.subr.mxu0 0.0
    %8860 = vmatpush1.msra.mxu0 %v8662
    %8861 = vmatprep.subr.mxu0 0.0
    %8862 = vmatpush1.msra.mxu0 %v8663
    %8863 = vmatprep.subr.mxu0 0.0
    %8864 = vmatpush1.msra.mxu0 %v8664
    %8865 = vmatprep.subr.mxu0 0.0
    %8866 = vmatpush1.msra.mxu0 %v8665
    %8867 = vmatprep.subr.mxu0 0.0
    %8868 = vmatpush1.msra.mxu0 %v8666
    %8869 = vmatprep.subr.mxu0 0.0
    %8870 = vmatpush1.msra.mxu0 %v8667
    %8871 = vmatprep.subr.mxu0 0.0
    %8872 = vmatpush1.msra.mxu0 %v8668
    %8873 = vmatprep.subr.mxu0 0.0
    %8874 = vmatpush1.msra.mxu0 %v8669
    %8875 = vmatprep.subr.mxu0 0.0
    %8876 = vmatpush1.msra.mxu0 %v8670
    %8877 = vmatprep.subr.mxu0 0.0
    %8878 = vmatpush1.msra.mxu0 %v8671
    %8879 = vmatprep.subr.mxu0 0.0
    %8880 = vmatpush1.msra.mxu0 %v8672
    %8881 = vmatprep.subr.mxu0 0.0
    %8882 = vmatpush1.msra.mxu0 %v8673
    %8883 = vmatprep.subr.mxu0 0.0
    %8884 = vmatpush1.msra.mxu0 %v8674
    %8885 = vmatprep.subr.mxu0 0.0
    %8886 = vmatpush1.msra.mxu0 %v8675
    %8887 = vmatprep.subr.mxu0 0.0
    %8888 = vmatpush1.msra.mxu0 %v8676
    %8889 = vmatprep.subr.mxu0 0.0
    %8890 = vmatpush1.msra.mxu0 %v8677
    %8891 = vmatprep.subr.mxu0 0.0
    %8892 = vmatpush1.msra.mxu0 %v8678
    %8893 = vmatprep.mubr.f32.mxu0 %v8754
    %8894 = vmatmul.mubr.f32.gmra.mrb[0].mxu0 %v8752
    %v8895 = vpop.f32.mrb[0].mxu0
    %v8896 = vadd.f32 %v8826, %v8895
    %v8897 = vpop.f32.mrb[0].mxu0
    %8898 = vdwg.mxu0
    %v8899 = vadd.f32 %v8597, %v8896
    %v8900 = vld [vmem:[#allocation17] sm:$0x1]
    %v8902 = vlaneseq
    %v8903 = vshrl.u32 %v8902, 7
    %v8904 = vsub.s32 0, %v8903
    %v8905 = vrot.slane %v8900, %v8904
    %v8907 = vadd.f32 %v8899, %v8905
    %v8908 = vlaneseq
    %v8909 = vand.u32 %v8908, 127
    %vm8910 = vcmp.eq.s32.totalorder %v8909, 7
    %v8911 = vtanh.pop %v8907
    %v8912 = vsel %vm8910, %v8911, %v8907
    %vm8913 = vcmask 64512
    %8914 = vst.msk [vmem:[#allocation19] sm:$0xff] %vm8913, %v8912
    // Predicated region
    $region66: #{network_forward.1} parent=1 // pred_check
      _
    $region67: #{network_forward.1} parent=1 // pred_check_branch
      %8916 = sbr.rel (0) target = $region69
    $region68: #{network_forward.1} parent=1 // pred_region
      %s8918 = ssub.s32 128, 128
      %8919 = vsyncadd [#allocation7], %s8918
      %s8921 = sshll.u32 [#allocation19], 4
      %s8922 = int_to_ptr.vmem [resolvable:$true] %s8921
      %8924 = dma.vmem_to_hbm [thread:$0]  %s8922, 128, %s8, [#allocation7]
    $region69: #{network_forward.1} parent=1 // pred_fallthru
      _
    // Predicated region
    $region70: #{network_forward.1} parent=1 // pred_check
      _
    $region71: #{network_forward.1} parent=1 // pred_check_branch
      %8926 = sbr.rel (0) target = $region73
    $region72: #{network_forward.1} parent=1 // pred_region
      %8927 = dma.done [#allocation7], 128
    $region73: #{network_forward.1} parent=1 // pred_fallthru
      _
    %8928 = vsyncpa [#allocation6], 1
    %8929 = vsyncpa [#allocation9], 1
    %8930 = vsyncpa [#allocation12], 1
    %8931 = vsyncpa [#allocation15], 1
    %8932 = vsyncpa [#allocation18], 1
    %8933 = vsyncpa [#allocation7], 1

</llo_original>
